<compile_context>
chip_gen: v5e
topology: v5e:2x2
jax: 0.10.0
libtpu: 0.0.40
codegen_flags: <defaults>
</compile_context>

<pallas_src>
import jax
import jax.numpy as jnp
from jax.experimental import pallas as pl
from jax.experimental.pallas import tpu as pltpu


def _round_up(x, m):
    return (x + m - 1) // m * m


def _mm(x, w_ref, b_ref):
    """x: (R, Cin) @ w_ref: (Cin, Cout) + b_ref: (1, Cout) -> (R, Cout)."""
    return jnp.dot(x, w_ref[...], preferred_element_type=jnp.float32) + b_ref[...]


def pt_layer_kernel(feats_ref, gfeats_ref, pts_ref, gpts_ref,
                    w1_ref, b1_ref, w2_ref, b2_ref,
                    wk_ref, bk_ref, wqv_ref, bqv_ref,
                    wa1_ref, ba1_ref, wa2_ref, ba2_ref,
                    out_ref):
    tm, k, _ = gpts_ref.shape
    c = feats_ref.shape[1]
    tmk = tm * k

    feats = feats_ref[...].astype(jnp.float32)        # (TM, C)
    gf2 = gfeats_ref[...].astype(jnp.float32)         # (TM*K, C)  flat
    pts = pts_ref[...].astype(jnp.float32)            # (TM, 3)
    gpts = gpts_ref[...].astype(jnp.float32)          # (TM, K, 3)

    # --- position encoding layer 1 (Cin=3): three VPU multiply-adds, no MXU.
    dp = pts[:, None, :] - gpts                       # (TM, K, 3)
    w1 = w1_ref[...]                                  # (3, C)  pre-transposed
    h = (dp[:, :, 0:1] * w1[0:1]
         + dp[:, :, 1:2] * w1[1:2]
         + dp[:, :, 2:3] * w1[2:3]
         + b1_ref[...])                               # (TM, K, C)
    h = jnp.maximum(h, 0.0)

    # --- flat (TM*K, C) matmuls on the MXU.
    delta2 = _mm(h.reshape(tmk, c), w2_ref, b2_ref)   # (TM*K, C)

    qv = _mm(gf2, wqv_ref, bqv_ref)                   # (TM*K, 2C)  fused q|v
    qf2 = qv[:, :c]
    vf2 = qv[:, c:] + delta2

    kf = _mm(feats, wk_ref, bk_ref)                   # (TM, C)  center features

    # attention encoding MLP on (k - q + delta)
    a = kf[:, None, :] - qf2.reshape(tm, k, c) + delta2.reshape(tm, k, c)
    a2 = jnp.maximum(_mm(a.reshape(tmk, c), wa1_ref, ba1_ref), 0.0)
    a2 = _mm(a2, wa2_ref, ba2_ref)                    # (TM*K, C)

    s = a2.reshape(tm, k, c)
    vf = vf2.reshape(tm, k, c)

    # softmax over the neighbor axis (PyTorch dim=3 -> here axis=1) with the
    # normalization folded into the final weighted sum.
    s_max = jnp.max(s, axis=1, keepdims=True)
    e = jnp.exp(s - s_max)
    den = jnp.sum(e, axis=1)                          # (TM, C), >= 1
    num = jnp.sum(e * vf, axis=1)                     # (TM, C)
    out = num / den

    # --- lane-dense store: pack `pack` consecutive points into one 128-lane
    # row (row-major order preserved, so the host reshape back is free).
    rows, cols = out_ref.shape
    pack = cols // c
    if pack > 1:
        o3 = out.reshape(rows, pack, c)
        out = jnp.concatenate([o3[:, j, :] for j in range(pack)], axis=1)
    out_ref[...] = out.astype(out_ref.dtype)


def prepare_params(params):
    """Pre-transpose weights to (Cin, Cout) and fuse the q/v projections."""
    w1p, b1p = params['pos1']
    w2p, b2p = params['pos2']
    wq, bq = params['q']
    wk, bk = params['k']
    wv, bv = params['v']
    wa1, ba1 = params['att1']
    wa2, ba2 = params['att2']
    row = lambda b: b.reshape(1, -1)
    return (
        w1p.T, row(b1p),                                # pos1  (3, C)
        w2p.T, row(b2p),                                # pos2  (C, C)
        wk.T, row(bk),                                  # k     (C, C)
        jnp.concatenate([wq.T, wv.T], axis=1),          # q|v   (C, 2C)
        jnp.concatenate([bq, bv]).reshape(1, -1),       #       (1, 2C)
        wa1.T, row(ba1),                                # att1  (C, C)
        wa2.T, row(ba2),                                # att2  (C, C)
    )


def point_transformer_layer_flat(feats_f, gfeats_f, pts_f, gpts_f, weight_args,
                                 *, tile_m=256,
                                 vmem_limit_bytes=32 * 1024 * 1024):
    """Channels-last entry point (skips the NCHW layout pass).

    feats_f: (M, C), gfeats_f: (M, K, C), pts_f: (M, 3), gpts_f: (M, K, 3)
    -> (M, C).  tile_m ~256 is safe on v5e/v7x; v6e can use 512-1024 with a
    larger vmem_limit_bytes.
    """
    M, C = feats_f.shape
    K = gfeats_f.shape[1]

    # Lane-dense output packing: `pack` points per 128-lane output row.
    pack = 128 // C if (C < 128 and 128 % C == 0) else 1
    base = 8 * pack
    tile_m = max(base, _round_up(min(tile_m, _round_up(M, base)), base))
    M_pad = _round_up(M, tile_m)

    gfeats2 = gfeats_f.reshape(M * K, C)              # free row-major reshape
    if M_pad > M:
        pad = M_pad - M
        feats_f = jnp.pad(feats_f, ((0, pad), (0, 0)))
        gfeats2 = jnp.pad(gfeats2, ((0, pad * K), (0, 0)))
        pts_f = jnp.pad(pts_f, ((0, pad), (0, 0)))
        gpts_f = jnp.pad(gpts_f, ((0, pad), (0, 0), (0, 0)))

    grid = (M_pad // tile_m,)
    w_spec = lambda w: pl.BlockSpec(w.shape, lambda i: (0, 0))
    in_specs = [
        pl.BlockSpec((tile_m, C), lambda i: (i, 0)),
        pl.BlockSpec((tile_m * K, C), lambda i: (i, 0)),
        pl.BlockSpec((tile_m, 3), lambda i: (i, 0)),
        pl.BlockSpec((tile_m, K, 3), lambda i: (i, 0, 0)),
    ] + [w_spec(w) for w in weight_args]

    out_packed = pl.pallas_call(
        pt_layer_kernel,
        out_shape=jax.ShapeDtypeStruct((M_pad // pack, pack * C), feats_f.dtype),
        grid_spec=pltpu.PrefetchScalarGridSpec(
            num_scalar_prefetch=0,
            grid=grid,
            in_specs=in_specs,
            out_specs=pl.BlockSpec((tile_m // pack, pack * C), lambda i: (i, 0))),
        compiler_params=pltpu.CompilerParams(
            dimension_semantics=("parallel",),
            vmem_limit_bytes=vmem_limit_bytes),
    )(feats_f, gfeats2, pts_f, gpts_f, *weight_args)

    # (M_pad//pack, pack*C) -> (M_pad, C) is a free row-major reinterpretation.
    return out_packed.reshape(M_pad, C)[:M]


def point_transformer_layer(feats, grouped_feats, points, grouped_points,
                            params, *, tile_m=256):
    """NCHW wrapper matching the PyTorch module signature.

    feats: (B,C,N), grouped_feats: (B,C,N,K), points: (B,3,N),
    grouped_points: (B,3,N,K) -> (B,C,N).
    """
    B, C, N = feats.shape
    K = grouped_feats.shape[3]
    M = B * N

    # One-time NCHW -> channels-last layout pass.  Upstream code that already
    # produces channels-last data should call point_transformer_layer_flat
    # directly and skip this extra HBM pass over the grouped tensors.
    feats_f = jnp.transpose(feats, (0, 2, 1)).reshape(M, C)
    gfeats_f = jnp.transpose(grouped_feats, (0, 2, 3, 1)).reshape(M, K, C)
    pts_f = jnp.transpose(points, (0, 2, 1)).reshape(M, 3)
    gpts_f = jnp.transpose(grouped_points, (0, 2, 3, 1)).reshape(M, K, 3)

    out_flat = point_transformer_layer_flat(
        feats_f, gfeats_f, pts_f, gpts_f, prepare_params(params),
        tile_m=tile_m)
    return jnp.transpose(out_flat.reshape(B, N, C), (0, 2, 1))


def init_params(key, feature_dim):
    """Deterministic synthetic weights matching the Conv2d(1x1) shapes."""
    keys = jax.random.split(key, 14)

    def lin(kw, kb, co, ci):
        w = jax.random.normal(kw, (co, ci), jnp.float32) * 0.1
        b = jax.random.normal(kb, (co,), jnp.float32) * 0.1
        return (w, b)

    C = feature_dim
    return {
        'pos1': lin(keys[0], keys[1], C, 3),
        'pos2': lin(keys[2], keys[3], C, C),
        'q':    lin(keys[4], keys[5], C, C),
        'k':    lin(keys[6], keys[7], C, C),
        'v':    lin(keys[8], keys[9], C, C),
        'att1': lin(keys[10], keys[11], C, C),
        'att2': lin(keys[12], keys[13], C, C),
    }


def ref_forward(feats, grouped_feats, points, grouped_points, params):
    """Pure-JAX reference mirroring the PyTorch forward (NCHW semantics)."""
    def conv1x1(x, p):
        w, b = p
        return jnp.einsum('oi,binj->bonj', w, x) + b[None, :, None, None]

    f = feats[..., None]                       # (B,C,N,1)
    p = points[..., None]                      # (B,3,N,1)
    dp = p - grouped_points                    # (B,3,N,K)
    delta = conv1x1(jax.nn.relu(conv1x1(dp, params['pos1'])), params['pos2'])
    kf = conv1x1(f, params['k'])
    qf = conv1x1(grouped_feats, params['q'])
    vf = conv1x1(grouped_feats, params['v']) + delta
    a = conv1x1(jax.nn.relu(conv1x1(kf - qf + delta, params['att1'])),
                params['att2'])
    a = jax.nn.softmax(a, axis=3)
    return jnp.sum(a * vf, axis=3)             # (B,C,N)


if __name__ == "__main__":
    B, C, N, K = 2, 32, 50, 8    # feature_dim=32, 50 points, 8 neighbors

    key = jax.random.PRNGKey(0)
    k1, k2, k3, k4 = jax.random.split(key, 4)
    feats = jax.random.normal(k1, (B, C, N), jnp.float32)
    grouped_feats = jax.random.normal(k2, (B, C, N, K), jnp.float32)
    points = jax.random.normal(k3, (B, 3, N), jnp.float32)
    grouped_points = jax.random.normal(k4, (B, 3, N, K), jnp.float32)

    params = init_params(jax.random.PRNGKey(1), C)

    # Default tile (single padded block, M=100 -> M_pad=128).
    out = point_transformer_layer(feats, grouped_feats, points,
                                  grouped_points, params)
    out = jax.block_until_ready(out)

    # Smaller tile to exercise a multi-step grid with padded tail.
    out_small = point_transformer_layer(feats, grouped_feats, points,
                                        grouped_points, params, tile_m=64)
    out_small = jax.block_until_ready(out_small)

    ref = ref_forward(feats, grouped_feats, points, grouped_points, params)
    assert out.shape == (B, C, N)
    assert jnp.allclose(out, ref, atol=1e-4, rtol=1e-3), "mismatch vs reference"
    assert jnp.allclose(out_small, ref, atol=1e-4, rtol=1e-3), \
        "mismatch vs reference (tile_m=64)"

    print("KERNEL_OK")
</pallas_src>

<mosaic_0001>
module attributes {stable_mosaic.version = 11 : i64} {
  func.func @pt_layer_kernel(%arg0: i32, %arg1: memref<128x32xf32, #tpu.memory_space<vmem>>, %arg2: memref<1024x32xf32, #tpu.memory_space<vmem>>, %arg3: memref<128x3xf32, #tpu.memory_space<vmem>>, %arg4: memref<128x8x3xf32, #tpu.memory_space<vmem>>, %arg5: memref<3x32xf32, #tpu.memory_space<vmem>>, %arg6: memref<1x32xf32, #tpu.memory_space<vmem>>, %arg7: memref<32x32xf32, #tpu.memory_space<vmem>>, %arg8: memref<1x32xf32, #tpu.memory_space<vmem>>, %arg9: memref<32x32xf32, #tpu.memory_space<vmem>>, %arg10: memref<1x32xf32, #tpu.memory_space<vmem>>, %arg11: memref<32x64xf32, #tpu.memory_space<vmem>>, %arg12: memref<1x64xf32, #tpu.memory_space<vmem>>, %arg13: memref<32x32xf32, #tpu.memory_space<vmem>>, %arg14: memref<1x32xf32, #tpu.memory_space<vmem>>, %arg15: memref<32x32xf32, #tpu.memory_space<vmem>>, %arg16: memref<1x32xf32, #tpu.memory_space<vmem>>, %arg17: memref<32x128xf32, #tpu.memory_space<vmem>>) attributes {dimension_semantics = [#tpu.dimension_semantics<parallel>], iteration_bounds = array<i64: 1>, scalar_prefetch = 0 : i64, scratch_operands = 0 : i64, tpu.core_type = #tpu.core_type<tc>, window_params = [{transform_indices = @transform_0, window_bounds = array<i64: 128, 32>}, {transform_indices = @transform_1, window_bounds = array<i64: 1024, 32>}, {transform_indices = @transform_2, window_bounds = array<i64: 128, 3>}, {transform_indices = @transform_3, window_bounds = array<i64: 128, 8, 3>}, {pipeline_mode = #tpu.pipeline_mode<synchronous>, transform_indices = @transform_4, window_bounds = array<i64: 3, 32>}, {pipeline_mode = #tpu.pipeline_mode<synchronous>, transform_indices = @transform_5, window_bounds = array<i64: 1, 32>}, {pipeline_mode = #tpu.pipeline_mode<synchronous>, transform_indices = @transform_6, window_bounds = array<i64: 32, 32>}, {pipeline_mode = #tpu.pipeline_mode<synchronous>, transform_indices = @transform_7, window_bounds = array<i64: 1, 32>}, {pipeline_mode = #tpu.pipeline_mode<synchronous>, transform_indices = @transform_8, window_bounds = array<i64: 32, 32>}, {pipeline_mode = #tpu.pipeline_mode<synchronous>, transform_indices = @transform_9, window_bounds = array<i64: 1, 32>}, {pipeline_mode = #tpu.pipeline_mode<synchronous>, transform_indices = @transform_10, window_bounds = array<i64: 32, 64>}, {pipeline_mode = #tpu.pipeline_mode<synchronous>, transform_indices = @transform_11, window_bounds = array<i64: 1, 64>}, {pipeline_mode = #tpu.pipeline_mode<synchronous>, transform_indices = @transform_12, window_bounds = array<i64: 32, 32>}, {pipeline_mode = #tpu.pipeline_mode<synchronous>, transform_indices = @transform_13, window_bounds = array<i64: 1, 32>}, {pipeline_mode = #tpu.pipeline_mode<synchronous>, transform_indices = @transform_14, window_bounds = array<i64: 32, 32>}, {pipeline_mode = #tpu.pipeline_mode<synchronous>, transform_indices = @transform_15, window_bounds = array<i64: 1, 32>}, {transform_indices = @transform_16, window_bounds = array<i64: 32, 128>}]} {
    %c0 = arith.constant 0 : index
    %c0_0 = arith.constant 0 : index
    %0 = vector.load %arg1[%c0, %c0_0] : memref<128x32xf32, #tpu.memory_space<vmem>>, vector<128x32xf32>
    %c0_1 = arith.constant 0 : index
    %c0_2 = arith.constant 0 : index
    %1 = vector.load %arg2[%c0_1, %c0_2] : memref<1024x32xf32, #tpu.memory_space<vmem>>, vector<1024x32xf32>
    %c0_3 = arith.constant 0 : index
    %c0_4 = arith.constant 0 : index
    %2 = vector.load %arg3[%c0_3, %c0_4] : memref<128x3xf32, #tpu.memory_space<vmem>>, vector<128x3xf32>
    %c0_5 = arith.constant 0 : index
    %c0_6 = arith.constant 0 : index
    %c0_7 = arith.constant 0 : index
    %3 = vector.load %arg4[%c0_5, %c0_6, %c0_7] : memref<128x8x3xf32, #tpu.memory_space<vmem>>, vector<128x8x3xf32>
    %4 = vector.shape_cast %2 : vector<128x3xf32> to vector<128x1x3xf32>
    %5 = vector.broadcast %4 : vector<128x1x3xf32> to vector<128x8x3xf32>
    %6 = arith.subf %5, %3 : vector<128x8x3xf32>
    %c0_8 = arith.constant 0 : index
    %c0_9 = arith.constant 0 : index
    %7 = vector.load %arg5[%c0_8, %c0_9] : memref<3x32xf32, #tpu.memory_space<vmem>>, vector<3x32xf32>
    %8 = vector.extract_strided_slice %6 {offsets = [0, 0, 0], sizes = [128, 8, 1], strides = [1, 1, 1]} : vector<128x8x3xf32> to vector<128x8x1xf32>
    %9 = vector.extract_strided_slice %7 {offsets = [0, 0], sizes = [1, 32], strides = [1, 1]} : vector<3x32xf32> to vector<1x32xf32>
    %10 = vector.shape_cast %9 : vector<1x32xf32> to vector<1x1x32xf32>
    %11 = vector.broadcast %8 : vector<128x8x1xf32> to vector<128x8x32xf32>
    %12 = vector.broadcast %10 : vector<1x1x32xf32> to vector<128x8x32xf32>
    %13 = arith.mulf %11, %12 : vector<128x8x32xf32>
    %14 = vector.extract_strided_slice %6 {offsets = [0, 0, 1], sizes = [128, 8, 1], strides = [1, 1, 1]} : vector<128x8x3xf32> to vector<128x8x1xf32>
    %15 = vector.extract_strided_slice %7 {offsets = [1, 0], sizes = [1, 32], strides = [1, 1]} : vector<3x32xf32> to vector<1x32xf32>
    %16 = vector.shape_cast %15 : vector<1x32xf32> to vector<1x1x32xf32>
    %17 = vector.broadcast %14 : vector<128x8x1xf32> to vector<128x8x32xf32>
    %18 = vector.broadcast %16 : vector<1x1x32xf32> to vector<128x8x32xf32>
    %19 = arith.mulf %17, %18 : vector<128x8x32xf32>
    %20 = arith.addf %13, %19 : vector<128x8x32xf32>
    %21 = vector.extract_strided_slice %6 {offsets = [0, 0, 2], sizes = [128, 8, 1], strides = [1, 1, 1]} : vector<128x8x3xf32> to vector<128x8x1xf32>
    %22 = vector.extract_strided_slice %7 {offsets = [2, 0], sizes = [1, 32], strides = [1, 1]} : vector<3x32xf32> to vector<1x32xf32>
    %23 = vector.shape_cast %22 : vector<1x32xf32> to vector<1x1x32xf32>
    %24 = vector.broadcast %21 : vector<128x8x1xf32> to vector<128x8x32xf32>
    %25 = vector.broadcast %23 : vector<1x1x32xf32> to vector<128x8x32xf32>
    %26 = arith.mulf %24, %25 : vector<128x8x32xf32>
    %27 = arith.addf %20, %26 : vector<128x8x32xf32>
    %c0_10 = arith.constant 0 : index
    %c0_11 = arith.constant 0 : index
    %28 = vector.load %arg6[%c0_10, %c0_11] : memref<1x32xf32, #tpu.memory_space<vmem>>, vector<1x32xf32>
    %29 = vector.shape_cast %28 : vector<1x32xf32> to vector<1x1x32xf32>
    %30 = vector.broadcast %29 : vector<1x1x32xf32> to vector<128x8x32xf32>
    %31 = arith.addf %27, %30 : vector<128x8x32xf32>
    %cst = arith.constant 0.000000e+00 : f32
    %32 = vector.broadcast %cst : f32 to vector<128x8x32xf32>
    %33 = arith.maximumf %31, %32 : vector<128x8x32xf32>
    %34 = vector.shape_cast %33 : vector<128x8x32xf32> to vector<1024x32xf32>
    %c0_12 = arith.constant 0 : index
    %c0_13 = arith.constant 0 : index
    %35 = vector.load %arg7[%c0_12, %c0_13] : memref<32x32xf32, #tpu.memory_space<vmem>>, vector<32x32xf32>
    %cst_14 = arith.constant dense<0.000000e+00> : vector<1024x32xf32>
    %36 = tpu.matmul %34, %35, %cst_14 {dimension_numbers = #tpu.dot_dimension_numbers<[1], [0], [0], [1], [0, 0, 1, 1], [], []>} : vector<1024x32xf32>, vector<32x32xf32>, vector<1024x32xf32> -> vector<1024x32xf32>
    %c0_15 = arith.constant 0 : index
    %c0_16 = arith.constant 0 : index
    %37 = vector.load %arg8[%c0_15, %c0_16] : memref<1x32xf32, #tpu.memory_space<vmem>>, vector<1x32xf32>
    %38 = vector.broadcast %37 : vector<1x32xf32> to vector<1024x32xf32>
    %39 = arith.addf %36, %38 : vector<1024x32xf32>
    %c0_17 = arith.constant 0 : index
    %c0_18 = arith.constant 0 : index
    %40 = vector.load %arg11[%c0_17, %c0_18] : memref<32x64xf32, #tpu.memory_space<vmem>>, vector<32x64xf32>
    %cst_19 = arith.constant dense<0.000000e+00> : vector<1024x64xf32>
    %41 = tpu.matmul %1, %40, %cst_19 {dimension_numbers = #tpu.dot_dimension_numbers<[1], [0], [0], [1], [0, 0, 1, 1], [], []>} : vector<1024x32xf32>, vector<32x64xf32>, vector<1024x64xf32> -> vector<1024x64xf32>
    %c0_20 = arith.constant 0 : index
    %c0_21 = arith.constant 0 : index
    %42 = vector.load %arg12[%c0_20, %c0_21] : memref<1x64xf32, #tpu.memory_space<vmem>>, vector<1x64xf32>
    %43 = vector.broadcast %42 : vector<1x64xf32> to vector<1024x64xf32>
    %44 = arith.addf %41, %43 : vector<1024x64xf32>
    %45 = vector.extract_strided_slice %44 {offsets = [0, 0], sizes = [1024, 32], strides = [1, 1]} : vector<1024x64xf32> to vector<1024x32xf32>
    %46 = vector.extract_strided_slice %44 {offsets = [0, 32], sizes = [1024, 32], strides = [1, 1]} : vector<1024x64xf32> to vector<1024x32xf32>
    %47 = arith.addf %46, %39 : vector<1024x32xf32>
    %c0_22 = arith.constant 0 : index
    %c0_23 = arith.constant 0 : index
    %48 = vector.load %arg9[%c0_22, %c0_23] : memref<32x32xf32, #tpu.memory_space<vmem>>, vector<32x32xf32>
    %cst_24 = arith.constant dense<0.000000e+00> : vector<128x32xf32>
    %49 = tpu.matmul %0, %48, %cst_24 {dimension_numbers = #tpu.dot_dimension_numbers<[1], [0], [0], [1], [0, 0, 1, 1], [], []>} : vector<128x32xf32>, vector<32x32xf32>, vector<128x32xf32> -> vector<128x32xf32>
    %c0_25 = arith.constant 0 : index
    %c0_26 = arith.constant 0 : index
    %50 = vector.load %arg10[%c0_25, %c0_26] : memref<1x32xf32, #tpu.memory_space<vmem>>, vector<1x32xf32>
    %51 = vector.broadcast %50 : vector<1x32xf32> to vector<128x32xf32>
    %52 = arith.addf %49, %51 : vector<128x32xf32>
    %53 = vector.shape_cast %52 : vector<128x32xf32> to vector<128x1x32xf32>
    %54 = vector.shape_cast %45 : vector<1024x32xf32> to vector<128x8x32xf32>
    %55 = vector.broadcast %53 : vector<128x1x32xf32> to vector<128x8x32xf32>
    %56 = arith.subf %55, %54 : vector<128x8x32xf32>
    %57 = vector.shape_cast %39 : vector<1024x32xf32> to vector<128x8x32xf32>
    %58 = arith.addf %56, %57 : vector<128x8x32xf32>
    %59 = vector.shape_cast %58 : vector<128x8x32xf32> to vector<1024x32xf32>
    %c0_27 = arith.constant 0 : index
    %c0_28 = arith.constant 0 : index
    %60 = vector.load %arg13[%c0_27, %c0_28] : memref<32x32xf32, #tpu.memory_space<vmem>>, vector<32x32xf32>
    %cst_29 = arith.constant dense<0.000000e+00> : vector<1024x32xf32>
    %61 = tpu.matmul %59, %60, %cst_29 {dimension_numbers = #tpu.dot_dimension_numbers<[1], [0], [0], [1], [0, 0, 1, 1], [], []>} : vector<1024x32xf32>, vector<32x32xf32>, vector<1024x32xf32> -> vector<1024x32xf32>
    %c0_30 = arith.constant 0 : index
    %c0_31 = arith.constant 0 : index
    %62 = vector.load %arg14[%c0_30, %c0_31] : memref<1x32xf32, #tpu.memory_space<vmem>>, vector<1x32xf32>
    %63 = vector.broadcast %62 : vector<1x32xf32> to vector<1024x32xf32>
    %64 = arith.addf %61, %63 : vector<1024x32xf32>
    %cst_32 = arith.constant 0.000000e+00 : f32
    %65 = vector.broadcast %cst_32 : f32 to vector<1024x32xf32>
    %66 = arith.maximumf %64, %65 : vector<1024x32xf32>
    %c0_33 = arith.constant 0 : index
    %c0_34 = arith.constant 0 : index
    %67 = vector.load %arg15[%c0_33, %c0_34] : memref<32x32xf32, #tpu.memory_space<vmem>>, vector<32x32xf32>
    %cst_35 = arith.constant dense<0.000000e+00> : vector<1024x32xf32>
    %68 = tpu.matmul %66, %67, %cst_35 {dimension_numbers = #tpu.dot_dimension_numbers<[1], [0], [0], [1], [0, 0, 1, 1], [], []>} : vector<1024x32xf32>, vector<32x32xf32>, vector<1024x32xf32> -> vector<1024x32xf32>
    %c0_36 = arith.constant 0 : index
    %c0_37 = arith.constant 0 : index
    %69 = vector.load %arg16[%c0_36, %c0_37] : memref<1x32xf32, #tpu.memory_space<vmem>>, vector<1x32xf32>
    %70 = vector.broadcast %69 : vector<1x32xf32> to vector<1024x32xf32>
    %71 = arith.addf %68, %70 : vector<1024x32xf32>
    %72 = vector.shape_cast %71 : vector<1024x32xf32> to vector<128x8x32xf32>
    %73 = vector.shape_cast %47 : vector<1024x32xf32> to vector<128x8x32xf32>
    %cst_38 = arith.constant dense<0xFF800000> : vector<128x32xf32>
    %74 = vector.multi_reduction <maximumf>, %72, %cst_38 [1] : vector<128x8x32xf32> to vector<128x32xf32>
    %75 = vector.shape_cast %74 : vector<128x32xf32> to vector<128x1x32xf32>
    %76 = vector.broadcast %75 : vector<128x1x32xf32> to vector<128x8x32xf32>
    %77 = arith.subf %72, %76 : vector<128x8x32xf32>
    %78 = math.exp %77 : vector<128x8x32xf32>
    %cst_39 = arith.constant dense<0.000000e+00> : vector<128x32xf32>
    %79 = vector.multi_reduction <add>, %78, %cst_39 [1] : vector<128x8x32xf32> to vector<128x32xf32>
    %80 = arith.mulf %78, %73 : vector<128x8x32xf32>
    %cst_40 = arith.constant dense<0.000000e+00> : vector<128x32xf32>
    %81 = vector.multi_reduction <add>, %80, %cst_40 [1] : vector<128x8x32xf32> to vector<128x32xf32>
    %82 = arith.divf %81, %79 : vector<128x32xf32>
    %83 = vector.shape_cast %82 : vector<128x32xf32> to vector<32x4x32xf32>
    %84 = vector.extract_strided_slice %83 {offsets = [0, 0, 0], sizes = [32, 1, 32], strides = [1, 1, 1]} : vector<32x4x32xf32> to vector<32x1x32xf32>
    %85 = vector.shape_cast %84 : vector<32x1x32xf32> to vector<32x32xf32>
    %86 = vector.extract_strided_slice %83 {offsets = [0, 1, 0], sizes = [32, 1, 32], strides = [1, 1, 1]} : vector<32x4x32xf32> to vector<32x1x32xf32>
    %87 = vector.shape_cast %86 : vector<32x1x32xf32> to vector<32x32xf32>
    %88 = vector.extract_strided_slice %83 {offsets = [0, 2, 0], sizes = [32, 1, 32], strides = [1, 1, 1]} : vector<32x4x32xf32> to vector<32x1x32xf32>
    %89 = vector.shape_cast %88 : vector<32x1x32xf32> to vector<32x32xf32>
    %90 = vector.extract_strided_slice %83 {offsets = [0, 3, 0], sizes = [32, 1, 32], strides = [1, 1, 1]} : vector<32x4x32xf32> to vector<32x1x32xf32>
    %91 = vector.shape_cast %90 : vector<32x1x32xf32> to vector<32x32xf32>
    %92 = tpu.concatenate %85, %87, %89, %91 in 1 : vector<32x32xf32>, vector<32x32xf32>, vector<32x32xf32>, vector<32x32xf32> -> vector<32x128xf32>
    %c0_41 = arith.constant 0 : index
    %c0_42 = arith.constant 0 : index
    %93 = vector.load %arg17[%c0_41, %c0_42] : memref<32x128xf32, #tpu.memory_space<vmem>>, vector<32x128xf32>
    tpu.vector_store %arg17[%c0_41, %c0_42], %92 {strides = array<i32>} : memref<32x128xf32, #tpu.memory_space<vmem>>, vector<32x128xf32>,
    return
  }
  func.func @transform_0(%arg0: i32) -> (i32, i32) {
    %c0_i32 = arith.constant 0 : i32
    %c0_i32_0 = arith.constant 0 : i32
    return %arg0, %c0_i32 : i32, i32
  }
  func.func @transform_1(%arg0: i32) -> (i32, i32) {
    %c0_i32 = arith.constant 0 : i32
    %c0_i32_0 = arith.constant 0 : i32
    return %arg0, %c0_i32 : i32, i32
  }
  func.func @transform_2(%arg0: i32) -> (i32, i32) {
    %c0_i32 = arith.constant 0 : i32
    %c0_i32_0 = arith.constant 0 : i32
    return %arg0, %c0_i32 : i32, i32
  }
  func.func @transform_3(%arg0: i32) -> (i32, i32, i32) {
    %c0_i32 = arith.constant 0 : i32
    %c0_i32_0 = arith.constant 0 : i32
    %c0_i32_1 = arith.constant 0 : i32
    return %arg0, %c0_i32, %c0_i32_0 : i32, i32, i32
  }
  func.func @transform_4(%arg0: i32) -> (i32, i32) {
    %c0_i32 = arith.constant 0 : i32
    %c0_i32_0 = arith.constant 0 : i32
    %c0_i32_1 = arith.constant 0 : i32
    return %c0_i32, %c0_i32_0 : i32, i32
  }
  func.func @transform_5(%arg0: i32) -> (i32, i32) {
    %c0_i32 = arith.constant 0 : i32
    %c0_i32_0 = arith.constant 0 : i32
    %c0_i32_1 = arith.constant 0 : i32
    return %c0_i32, %c0_i32_0 : i32, i32
  }
  func.func @transform_6(%arg0: i32) -> (i32, i32) {
    %c0_i32 = arith.constant 0 : i32
    %c0_i32_0 = arith.constant 0 : i32
    %c0_i32_1 = arith.constant 0 : i32
    return %c0_i32, %c0_i32_0 : i32, i32
  }
  func.func @transform_7(%arg0: i32) -> (i32, i32) {
    %c0_i32 = arith.constant 0 : i32
    %c0_i32_0 = arith.constant 0 : i32
    %c0_i32_1 = arith.constant 0 : i32
    return %c0_i32, %c0_i32_0 : i32, i32
  }
  func.func @transform_8(%arg0: i32) -> (i32, i32) {
    %c0_i32 = arith.constant 0 : i32
    %c0_i32_0 = arith.constant 0 : i32
    %c0_i32_1 = arith.constant 0 : i32
    return %c0_i32, %c0_i32_0 : i32, i32
  }
  func.func @transform_9(%arg0: i32) -> (i32, i32) {
    %c0_i32 = arith.constant 0 : i32
    %c0_i32_0 = arith.constant 0 : i32
    %c0_i32_1 = arith.constant 0 : i32
    return %c0_i32, %c0_i32_0 : i32, i32
  }
  func.func @transform_10(%arg0: i32) -> (i32, i32) {
    %c0_i32 = arith.constant 0 : i32
    %c0_i32_0 = arith.constant 0 : i32
    %c0_i32_1 = arith.constant 0 : i32
    return %c0_i32, %c0_i32_0 : i32, i32
  }
  func.func @transform_11(%arg0: i32) -> (i32, i32) {
    %c0_i32 = arith.constant 0 : i32
    %c0_i32_0 = arith.constant 0 : i32
    %c0_i32_1 = arith.constant 0 : i32
    return %c0_i32, %c0_i32_0 : i32, i32
  }
  func.func @transform_12(%arg0: i32) -> (i32, i32) {
    %c0_i32 = arith.constant 0 : i32
    %c0_i32_0 = arith.constant 0 : i32
    %c0_i32_1 = arith.constant 0 : i32
    return %c0_i32, %c0_i32_0 : i32, i32
  }
  func.func @transform_13(%arg0: i32) -> (i32, i32) {
    %c0_i32 = arith.constant 0 : i32
    %c0_i32_0 = arith.constant 0 : i32
    %c0_i32_1 = arith.constant 0 : i32
    return %c0_i32, %c0_i32_0 : i32, i32
  }
  func.func @transform_14(%arg0: i32) -> (i32, i32) {
    %c0_i32 = arith.constant 0 : i32
    %c0_i32_0 = arith.constant 0 : i32
    %c0_i32_1 = arith.constant 0 : i32
    return %c0_i32, %c0_i32_0 : i32, i32
  }
  func.func @transform_15(%arg0: i32) -> (i32, i32) {
    %c0_i32 = arith.constant 0 : i32
    %c0_i32_0 = arith.constant 0 : i32
    %c0_i32_1 = arith.constant 0 : i32
    return %c0_i32, %c0_i32_0 : i32, i32
  }
  func.func @transform_16(%arg0: i32) -> (i32, i32) {
    %c0_i32 = arith.constant 0 : i32
    %c0_i32_0 = arith.constant 0 : i32
    return %arg0, %c0_i32 : i32, i32
  }
}

</mosaic_0001>

<llo_original>
// kernel: tpu_custom_call.1
$region0: #{tpu_custom_call.1}
  #allocation0 [shape = 'u32[]', space=smem, size = 0x4, offset = 0x4, fixed_abs, tag = 'smem constant byte address 0x4 - core index']
  #allocation1 [shape = 'u32[72,128]{1,0:T(1,128)}', space=vmem, size = 0x9000, scoped, tag = 'internal scratch']
  %s0 = inlined_call_operand.vmem [shape: f32[128,32], index: 0, kind: input, shape index: {}]
  %s1 = inlined_call_operand.vmem [shape: f32[1024,32], index: 1, kind: input, shape index: {}]
  %s2 = inlined_call_operand.vmem [shape: f32[128,3], index: 2, kind: input, shape index: {}]
  %s3 = inlined_call_operand.vmem [shape: f32[128,8,3], index: 3, kind: input, shape index: {}]
  %s4 = inlined_call_operand.vmem [shape: f32[3,32], index: 4, kind: input, shape index: {}]
  %s5 = inlined_call_operand.vmem [shape: f32[1,32], index: 5, kind: input, shape index: {}]
  %s6 = inlined_call_operand.vmem [shape: f32[32,32], index: 6, kind: input, shape index: {}]
  %s7 = inlined_call_operand.vmem [shape: f32[1,32], index: 7, kind: input, shape index: {}]
  %s8 = inlined_call_operand.vmem [shape: f32[32,32], index: 8, kind: input, shape index: {}]
  %s9 = inlined_call_operand.vmem [shape: f32[1,32], index: 9, kind: input, shape index: {}]
  %s10 = inlined_call_operand.vmem [shape: f32[32,64], index: 10, kind: input, shape index: {}]
  %s11 = inlined_call_operand.vmem [shape: f32[1,64], index: 11, kind: input, shape index: {}]
  %s12 = inlined_call_operand.vmem [shape: f32[32,32], index: 12, kind: input, shape index: {}]
  %s13 = inlined_call_operand.vmem [shape: f32[1,32], index: 13, kind: input, shape index: {}]
  %s14 = inlined_call_operand.vmem [shape: f32[32,32], index: 14, kind: input, shape index: {}]
  %s15 = inlined_call_operand.vmem [shape: f32[1,32], index: 15, kind: input, shape index: {}]
  %s16 = inlined_call_operand.hbm [shape: f32[32,128], index: 16, kind: output, shape index: {}]
  %s17 = sld [smem:[#allocation0]]
  $region74: #{tpu_custom_call.1} parent=0
    _
  %s19 = ssub.s32 1, %s17
  %s20 = scalar_select 0, %s19, %s17
  $region1: #{tpu_custom_call.1} parent=0
    #allocation2 [shape = 'u8[16384]{0}', space=vmem, size = 0x4000, scoped, tag = 'output window, operand 0, single buffered']
    #allocation3 [shape = 's32[1]{0}', space=sflag, size = 0x4, scoped, tag = 'scoped memory for tpu_custom_call.1']
    %21 = vsyncpa [#allocation3], 0
    // Predicated region
    $region2: #{tpu_custom_call.1} parent=1 // pred_check
      _
    $region3: #{tpu_custom_call.1} parent=1 // pred_check_branch
      %23 = sbr.rel (0) target = $region5
    $region4: #{tpu_custom_call.1} parent=1 // pred_region
      _
    $region5: #{tpu_custom_call.1} parent=1 // pred_fallthru
      _
    // Predicated region
    $region6: #{tpu_custom_call.1} parent=1 // pred_check
      _
    $region7: #{tpu_custom_call.1} parent=1 // pred_check_branch
      %25 = sbr.rel (0) target = $region9
    $region8: #{tpu_custom_call.1} parent=1 // pred_region
      _
    $region9: #{tpu_custom_call.1} parent=1 // pred_fallthru
      _
    // Predicated region
    $region10: #{tpu_custom_call.1} parent=1 // pred_check
      _
    $region11: #{tpu_custom_call.1} parent=1 // pred_check_branch
      %27 = sbr.rel (0) target = $region13
    $region12: #{tpu_custom_call.1} parent=1 // pred_region
      _
    $region13: #{tpu_custom_call.1} parent=1 // pred_fallthru
      _
    // Predicated region
    $region14: #{tpu_custom_call.1} parent=1 // pred_check
      _
    $region15: #{tpu_custom_call.1} parent=1 // pred_check_branch
      %29 = sbr.rel (0) target = $region17
    $region16: #{tpu_custom_call.1} parent=1 // pred_region
      _
    $region17: #{tpu_custom_call.1} parent=1 // pred_fallthru
      _
    // Predicated region
    $region18: #{tpu_custom_call.1} parent=1 // pred_check
      _
    $region19: #{tpu_custom_call.1} parent=1 // pred_check_branch
      %31 = sbr.rel (0) target = $region21
    $region20: #{tpu_custom_call.1} parent=1 // pred_region
      _
    $region21: #{tpu_custom_call.1} parent=1 // pred_fallthru
      _
    // Predicated region
    $region22: #{tpu_custom_call.1} parent=1 // pred_check
      _
    $region23: #{tpu_custom_call.1} parent=1 // pred_check_branch
      %33 = sbr.rel (0) target = $region25
    $region24: #{tpu_custom_call.1} parent=1 // pred_region
      _
    $region25: #{tpu_custom_call.1} parent=1 // pred_fallthru
      _
    // Predicated region
    $region26: #{tpu_custom_call.1} parent=1 // pred_check
      _
    $region27: #{tpu_custom_call.1} parent=1 // pred_check_branch
      %35 = sbr.rel (0) target = $region29
    $region28: #{tpu_custom_call.1} parent=1 // pred_region
      _
    $region29: #{tpu_custom_call.1} parent=1 // pred_fallthru
      _
    // Predicated region
    $region30: #{tpu_custom_call.1} parent=1 // pred_check
      _
    $region31: #{tpu_custom_call.1} parent=1 // pred_check_branch
      %37 = sbr.rel (0) target = $region33
    $region32: #{tpu_custom_call.1} parent=1 // pred_region
      _
    $region33: #{tpu_custom_call.1} parent=1 // pred_fallthru
      _
    // Predicated region
    $region34: #{tpu_custom_call.1} parent=1 // pred_check
      _
    $region35: #{tpu_custom_call.1} parent=1 // pred_check_branch
      %39 = sbr.rel (0) target = $region37
    $region36: #{tpu_custom_call.1} parent=1 // pred_region
      _
    $region37: #{tpu_custom_call.1} parent=1 // pred_fallthru
      _
    // Predicated region
    $region38: #{tpu_custom_call.1} parent=1 // pred_check
      _
    $region39: #{tpu_custom_call.1} parent=1 // pred_check_branch
      %41 = sbr.rel (0) target = $region41
    $region40: #{tpu_custom_call.1} parent=1 // pred_region
      _
    $region41: #{tpu_custom_call.1} parent=1 // pred_fallthru
      _
    // Predicated region
    $region42: #{tpu_custom_call.1} parent=1 // pred_check
      _
    $region43: #{tpu_custom_call.1} parent=1 // pred_check_branch
      %43 = sbr.rel (0) target = $region45
    $region44: #{tpu_custom_call.1} parent=1 // pred_region
      _
    $region45: #{tpu_custom_call.1} parent=1 // pred_fallthru
      _
    // Predicated region
    $region46: #{tpu_custom_call.1} parent=1 // pred_check
      _
    $region47: #{tpu_custom_call.1} parent=1 // pred_check_branch
      %45 = sbr.rel (0) target = $region49
    $region48: #{tpu_custom_call.1} parent=1 // pred_region
      _
    $region49: #{tpu_custom_call.1} parent=1 // pred_fallthru
      _
    // Predicated region
    $region50: #{tpu_custom_call.1} parent=1 // pred_check
      _
    $region51: #{tpu_custom_call.1} parent=1 // pred_check_branch
      %47 = sbr.rel (0) target = $region53
    $region52: #{tpu_custom_call.1} parent=1 // pred_region
      _
    $region53: #{tpu_custom_call.1} parent=1 // pred_fallthru
      _
    // Predicated region
    $region54: #{tpu_custom_call.1} parent=1 // pred_check
      _
    $region55: #{tpu_custom_call.1} parent=1 // pred_check_branch
      %49 = sbr.rel (0) target = $region57
    $region56: #{tpu_custom_call.1} parent=1 // pred_region
      _
    $region57: #{tpu_custom_call.1} parent=1 // pred_fallthru
      _
    // Predicated region
    $region58: #{tpu_custom_call.1} parent=1 // pred_check
      _
    $region59: #{tpu_custom_call.1} parent=1 // pred_check_branch
      %51 = sbr.rel (0) target = $region61
    $region60: #{tpu_custom_call.1} parent=1 // pred_region
      _
    $region61: #{tpu_custom_call.1} parent=1 // pred_fallthru
      _
    // Predicated region
    $region62: #{tpu_custom_call.1} parent=1 // pred_check
      _
    $region63: #{tpu_custom_call.1} parent=1 // pred_check_branch
      %53 = sbr.rel (0) target = $region65
    $region64: #{tpu_custom_call.1} parent=1 // pred_region
      _
    $region65: #{tpu_custom_call.1} parent=1 // pred_fallthru
      _
    %v54 = vld [vmem:[%s0] sm:$0xff]
    %v55 = vld [vmem:[%s0 + $0x8] sm:$0xff]
    %v56 = vld [vmem:[%s0 + $0x10] sm:$0xff]
    %v57 = vld [vmem:[%s0 + $0x18] sm:$0xff]
    %v58 = vld [vmem:[%s0 + $0x20] sm:$0xff]
    %v59 = vld [vmem:[%s0 + $0x28] sm:$0xff]
    %v60 = vld [vmem:[%s0 + $0x30] sm:$0xff]
    %v61 = vld [vmem:[%s0 + $0x38] sm:$0xff]
    %v62 = vld [vmem:[%s0 + $0x40] sm:$0xff]
    %v63 = vld [vmem:[%s0 + $0x48] sm:$0xff]
    %v64 = vld [vmem:[%s0 + $0x50] sm:$0xff]
    %v65 = vld [vmem:[%s0 + $0x58] sm:$0xff]
    %v66 = vld [vmem:[%s0 + $0x60] sm:$0xff]
    %v67 = vld [vmem:[%s0 + $0x68] sm:$0xff]
    %v68 = vld [vmem:[%s0 + $0x70] sm:$0xff]
    %v69 = vld [vmem:[%s0 + $0x78] sm:$0xff]
    %v70 = vld [vmem:[%s1] sm:$0xff]
    %v71 = vld [vmem:[%s1 + $0x8] sm:$0xff]
    %v72 = vld [vmem:[%s1 + $0x10] sm:$0xff]
    %v73 = vld [vmem:[%s1 + $0x18] sm:$0xff]
    %v74 = vld [vmem:[%s1 + $0x20] sm:$0xff]
    %v75 = vld [vmem:[%s1 + $0x28] sm:$0xff]
    %v76 = vld [vmem:[%s1 + $0x30] sm:$0xff]
    %v77 = vld [vmem:[%s1 + $0x38] sm:$0xff]
    %v78 = vld [vmem:[%s1 + $0x40] sm:$0xff]
    %v79 = vld [vmem:[%s1 + $0x48] sm:$0xff]
    %v80 = vld [vmem:[%s1 + $0x50] sm:$0xff]
    %v81 = vld [vmem:[%s1 + $0x58] sm:$0xff]
    %v82 = vld [vmem:[%s1 + $0x60] sm:$0xff]
    %v83 = vld [vmem:[%s1 + $0x68] sm:$0xff]
    %v84 = vld [vmem:[%s1 + $0x70] sm:$0xff]
    %v85 = vld [vmem:[%s1 + $0x78] sm:$0xff]
    %v86 = vld [vmem:[%s1 + $0x80] sm:$0xff]
    %v87 = vld [vmem:[%s1 + $0x88] sm:$0xff]
    %v88 = vld [vmem:[%s1 + $0x90] sm:$0xff]
    %v89 = vld [vmem:[%s1 + $0x98] sm:$0xff]
    %v90 = vld [vmem:[%s1 + $0xa0] sm:$0xff]
    %v91 = vld [vmem:[%s1 + $0xa8] sm:$0xff]
    %v92 = vld [vmem:[%s1 + $0xb0] sm:$0xff]
    %v93 = vld [vmem:[%s1 + $0xb8] sm:$0xff]
    %v94 = vld [vmem:[%s1 + $0xc0] sm:$0xff]
    %v95 = vld [vmem:[%s1 + $0xc8] sm:$0xff]
    %v96 = vld [vmem:[%s1 + $0xd0] sm:$0xff]
    %v97 = vld [vmem:[%s1 + $0xd8] sm:$0xff]
    %v98 = vld [vmem:[%s1 + $0xe0] sm:$0xff]
    %v99 = vld [vmem:[%s1 + $0xe8] sm:$0xff]
    %v100 = vld [vmem:[%s1 + $0xf0] sm:$0xff]
    %v101 = vld [vmem:[%s1 + $0xf8] sm:$0xff]
    %v102 = vld [vmem:[%s1 + $0x100] sm:$0xff]
    %v103 = vld [vmem:[%s1 + $0x108] sm:$0xff]
    %v104 = vld [vmem:[%s1 + $0x110] sm:$0xff]
    %v105 = vld [vmem:[%s1 + $0x118] sm:$0xff]
    %v106 = vld [vmem:[%s1 + $0x120] sm:$0xff]
    %v107 = vld [vmem:[%s1 + $0x128] sm:$0xff]
    %v108 = vld [vmem:[%s1 + $0x130] sm:$0xff]
    %v109 = vld [vmem:[%s1 + $0x138] sm:$0xff]
    %v110 = vld [vmem:[%s1 + $0x140] sm:$0xff]
    %v111 = vld [vmem:[%s1 + $0x148] sm:$0xff]
    %v112 = vld [vmem:[%s1 + $0x150] sm:$0xff]
    %v113 = vld [vmem:[%s1 + $0x158] sm:$0xff]
    %v114 = vld [vmem:[%s1 + $0x160] sm:$0xff]
    %v115 = vld [vmem:[%s1 + $0x168] sm:$0xff]
    %v116 = vld [vmem:[%s1 + $0x170] sm:$0xff]
    %v117 = vld [vmem:[%s1 + $0x178] sm:$0xff]
    %v118 = vld [vmem:[%s1 + $0x180] sm:$0xff]
    %v119 = vld [vmem:[%s1 + $0x188] sm:$0xff]
    %v120 = vld [vmem:[%s1 + $0x190] sm:$0xff]
    %v121 = vld [vmem:[%s1 + $0x198] sm:$0xff]
    %v122 = vld [vmem:[%s1 + $0x1a0] sm:$0xff]
    %v123 = vld [vmem:[%s1 + $0x1a8] sm:$0xff]
    %v124 = vld [vmem:[%s1 + $0x1b0] sm:$0xff]
    %v125 = vld [vmem:[%s1 + $0x1b8] sm:$0xff]
    %v126 = vld [vmem:[%s1 + $0x1c0] sm:$0xff]
    %v127 = vld [vmem:[%s1 + $0x1c8] sm:$0xff]
    %v128 = vld [vmem:[%s1 + $0x1d0] sm:$0xff]
    %v129 = vld [vmem:[%s1 + $0x1d8] sm:$0xff]
    %v130 = vld [vmem:[%s1 + $0x1e0] sm:$0xff]
    %v131 = vld [vmem:[%s1 + $0x1e8] sm:$0xff]
    %v132 = vld [vmem:[%s1 + $0x1f0] sm:$0xff]
    %v133 = vld [vmem:[%s1 + $0x1f8] sm:$0xff]
    %v134 = vld [vmem:[%s1 + $0x200] sm:$0xff]
    %v135 = vld [vmem:[%s1 + $0x208] sm:$0xff]
    %v136 = vld [vmem:[%s1 + $0x210] sm:$0xff]
    %v137 = vld [vmem:[%s1 + $0x218] sm:$0xff]
    %v138 = vld [vmem:[%s1 + $0x220] sm:$0xff]
    %v139 = vld [vmem:[%s1 + $0x228] sm:$0xff]
    %v140 = vld [vmem:[%s1 + $0x230] sm:$0xff]
    %v141 = vld [vmem:[%s1 + $0x238] sm:$0xff]
    %v142 = vld [vmem:[%s1 + $0x240] sm:$0xff]
    %v143 = vld [vmem:[%s1 + $0x248] sm:$0xff]
    %v144 = vld [vmem:[%s1 + $0x250] sm:$0xff]
    %v145 = vld [vmem:[%s1 + $0x258] sm:$0xff]
    %v146 = vld [vmem:[%s1 + $0x260] sm:$0xff]
    %v147 = vld [vmem:[%s1 + $0x268] sm:$0xff]
    %v148 = vld [vmem:[%s1 + $0x270] sm:$0xff]
    %v149 = vld [vmem:[%s1 + $0x278] sm:$0xff]
    %v150 = vld [vmem:[%s1 + $0x280] sm:$0xff]
    %v151 = vld [vmem:[%s1 + $0x288] sm:$0xff]
    %v152 = vld [vmem:[%s1 + $0x290] sm:$0xff]
    %v153 = vld [vmem:[%s1 + $0x298] sm:$0xff]
    %v154 = vld [vmem:[%s1 + $0x2a0] sm:$0xff]
    %v155 = vld [vmem:[%s1 + $0x2a8] sm:$0xff]
    %v156 = vld [vmem:[%s1 + $0x2b0] sm:$0xff]
    %v157 = vld [vmem:[%s1 + $0x2b8] sm:$0xff]
    %v158 = vld [vmem:[%s1 + $0x2c0] sm:$0xff]
    %v159 = vld [vmem:[%s1 + $0x2c8] sm:$0xff]
    %v160 = vld [vmem:[%s1 + $0x2d0] sm:$0xff]
    %v161 = vld [vmem:[%s1 + $0x2d8] sm:$0xff]
    %v162 = vld [vmem:[%s1 + $0x2e0] sm:$0xff]
    %v163 = vld [vmem:[%s1 + $0x2e8] sm:$0xff]
    %v164 = vld [vmem:[%s1 + $0x2f0] sm:$0xff]
    %v165 = vld [vmem:[%s1 + $0x2f8] sm:$0xff]
    %v166 = vld [vmem:[%s1 + $0x300] sm:$0xff]
    %v167 = vld [vmem:[%s1 + $0x308] sm:$0xff]
    %v168 = vld [vmem:[%s1 + $0x310] sm:$0xff]
    %v169 = vld [vmem:[%s1 + $0x318] sm:$0xff]
    %v170 = vld [vmem:[%s1 + $0x320] sm:$0xff]
    %v171 = vld [vmem:[%s1 + $0x328] sm:$0xff]
    %v172 = vld [vmem:[%s1 + $0x330] sm:$0xff]
    %v173 = vld [vmem:[%s1 + $0x338] sm:$0xff]
    %v174 = vld [vmem:[%s1 + $0x340] sm:$0xff]
    %v175 = vld [vmem:[%s1 + $0x348] sm:$0xff]
    %v176 = vld [vmem:[%s1 + $0x350] sm:$0xff]
    %v177 = vld [vmem:[%s1 + $0x358] sm:$0xff]
    %v178 = vld [vmem:[%s1 + $0x360] sm:$0xff]
    %v179 = vld [vmem:[%s1 + $0x368] sm:$0xff]
    %v180 = vld [vmem:[%s1 + $0x370] sm:$0xff]
    %v181 = vld [vmem:[%s1 + $0x378] sm:$0xff]
    %v182 = vld [vmem:[%s1 + $0x380] sm:$0xff]
    %v183 = vld [vmem:[%s1 + $0x388] sm:$0xff]
    %v184 = vld [vmem:[%s1 + $0x390] sm:$0xff]
    %v185 = vld [vmem:[%s1 + $0x398] sm:$0xff]
    %v186 = vld [vmem:[%s1 + $0x3a0] sm:$0xff]
    %v187 = vld [vmem:[%s1 + $0x3a8] sm:$0xff]
    %v188 = vld [vmem:[%s1 + $0x3b0] sm:$0xff]
    %v189 = vld [vmem:[%s1 + $0x3b8] sm:$0xff]
    %v190 = vld [vmem:[%s1 + $0x3c0] sm:$0xff]
    %v191 = vld [vmem:[%s1 + $0x3c8] sm:$0xff]
    %v192 = vld [vmem:[%s1 + $0x3d0] sm:$0xff]
    %v193 = vld [vmem:[%s1 + $0x3d8] sm:$0xff]
    %v194 = vld [vmem:[%s1 + $0x3e0] sm:$0xff]
    %v195 = vld [vmem:[%s1 + $0x3e8] sm:$0xff]
    %v196 = vld [vmem:[%s1 + $0x3f0] sm:$0xff]
    %v197 = vld [vmem:[%s1 + $0x3f8] sm:$0xff]
    %v198 = vld [vmem:[%s2] sm:$0xff]
    %v199 = vld [vmem:[%s2 + $0x8] sm:$0xff]
    %v200 = vld [vmem:[%s2 + $0x10] sm:$0xff]
    %v201 = vld [vmem:[%s2 + $0x18] sm:$0xff]
    %v202 = vld [vmem:[%s2 + $0x20] sm:$0xff]
    %v203 = vld [vmem:[%s2 + $0x28] sm:$0xff]
    %v204 = vld [vmem:[%s2 + $0x30] sm:$0xff]
    %v205 = vld [vmem:[%s2 + $0x38] sm:$0xff]
    %v206 = vld [vmem:[%s2 + $0x40] sm:$0xff]
    %v207 = vld [vmem:[%s2 + $0x48] sm:$0xff]
    %v208 = vld [vmem:[%s2 + $0x50] sm:$0xff]
    %v209 = vld [vmem:[%s2 + $0x58] sm:$0xff]
    %v210 = vld [vmem:[%s2 + $0x60] sm:$0xff]
    %v211 = vld [vmem:[%s2 + $0x68] sm:$0xff]
    %v212 = vld [vmem:[%s2 + $0x70] sm:$0xff]
    %v213 = vld [vmem:[%s2 + $0x78] sm:$0xff]
    %v214 = vld [vmem:[%s3] sm:$0xff]
    %v215 = vld [vmem:[%s3 + $0x8] sm:$0xff]
    %v216 = vld [vmem:[%s3 + $0x10] sm:$0xff]
    %v217 = vld [vmem:[%s3 + $0x18] sm:$0xff]
    %v218 = vld [vmem:[%s3 + $0x20] sm:$0xff]
    %v219 = vld [vmem:[%s3 + $0x28] sm:$0xff]
    %v220 = vld [vmem:[%s3 + $0x30] sm:$0xff]
    %v221 = vld [vmem:[%s3 + $0x38] sm:$0xff]
    %v222 = vld [vmem:[%s3 + $0x40] sm:$0xff]
    %v223 = vld [vmem:[%s3 + $0x48] sm:$0xff]
    %v224 = vld [vmem:[%s3 + $0x50] sm:$0xff]
    %v225 = vld [vmem:[%s3 + $0x58] sm:$0xff]
    %v226 = vld [vmem:[%s3 + $0x60] sm:$0xff]
    %v227 = vld [vmem:[%s3 + $0x68] sm:$0xff]
    %v228 = vld [vmem:[%s3 + $0x70] sm:$0xff]
    %v229 = vld [vmem:[%s3 + $0x78] sm:$0xff]
    %v230 = vld [vmem:[%s3 + $0x80] sm:$0xff]
    %v231 = vld [vmem:[%s3 + $0x88] sm:$0xff]
    %v232 = vld [vmem:[%s3 + $0x90] sm:$0xff]
    %v233 = vld [vmem:[%s3 + $0x98] sm:$0xff]
    %v234 = vld [vmem:[%s3 + $0xa0] sm:$0xff]
    %v235 = vld [vmem:[%s3 + $0xa8] sm:$0xff]
    %v236 = vld [vmem:[%s3 + $0xb0] sm:$0xff]
    %v237 = vld [vmem:[%s3 + $0xb8] sm:$0xff]
    %v238 = vld [vmem:[%s3 + $0xc0] sm:$0xff]
    %v239 = vld [vmem:[%s3 + $0xc8] sm:$0xff]
    %v240 = vld [vmem:[%s3 + $0xd0] sm:$0xff]
    %v241 = vld [vmem:[%s3 + $0xd8] sm:$0xff]
    %v242 = vld [vmem:[%s3 + $0xe0] sm:$0xff]
    %v243 = vld [vmem:[%s3 + $0xe8] sm:$0xff]
    %v244 = vld [vmem:[%s3 + $0xf0] sm:$0xff]
    %v245 = vld [vmem:[%s3 + $0xf8] sm:$0xff]
    %v246 = vld [vmem:[%s3 + $0x100] sm:$0xff]
    %v247 = vld [vmem:[%s3 + $0x108] sm:$0xff]
    %v248 = vld [vmem:[%s3 + $0x110] sm:$0xff]
    %v249 = vld [vmem:[%s3 + $0x118] sm:$0xff]
    %v250 = vld [vmem:[%s3 + $0x120] sm:$0xff]
    %v251 = vld [vmem:[%s3 + $0x128] sm:$0xff]
    %v252 = vld [vmem:[%s3 + $0x130] sm:$0xff]
    %v253 = vld [vmem:[%s3 + $0x138] sm:$0xff]
    %v254 = vld [vmem:[%s3 + $0x140] sm:$0xff]
    %v255 = vld [vmem:[%s3 + $0x148] sm:$0xff]
    %v256 = vld [vmem:[%s3 + $0x150] sm:$0xff]
    %v257 = vld [vmem:[%s3 + $0x158] sm:$0xff]
    %v258 = vld [vmem:[%s3 + $0x160] sm:$0xff]
    %v259 = vld [vmem:[%s3 + $0x168] sm:$0xff]
    %v260 = vld [vmem:[%s3 + $0x170] sm:$0xff]
    %v261 = vld [vmem:[%s3 + $0x178] sm:$0xff]
    %v262 = vld [vmem:[%s3 + $0x180] sm:$0xff]
    %v263 = vld [vmem:[%s3 + $0x188] sm:$0xff]
    %v264 = vld [vmem:[%s3 + $0x190] sm:$0xff]
    %v265 = vld [vmem:[%s3 + $0x198] sm:$0xff]
    %v266 = vld [vmem:[%s3 + $0x1a0] sm:$0xff]
    %v267 = vld [vmem:[%s3 + $0x1a8] sm:$0xff]
    %v268 = vld [vmem:[%s3 + $0x1b0] sm:$0xff]
    %v269 = vld [vmem:[%s3 + $0x1b8] sm:$0xff]
    %v270 = vld [vmem:[%s3 + $0x1c0] sm:$0xff]
    %v271 = vld [vmem:[%s3 + $0x1c8] sm:$0xff]
    %v272 = vld [vmem:[%s3 + $0x1d0] sm:$0xff]
    %v273 = vld [vmem:[%s3 + $0x1d8] sm:$0xff]
    %v274 = vld [vmem:[%s3 + $0x1e0] sm:$0xff]
    %v275 = vld [vmem:[%s3 + $0x1e8] sm:$0xff]
    %v276 = vld [vmem:[%s3 + $0x1f0] sm:$0xff]
    %v277 = vld [vmem:[%s3 + $0x1f8] sm:$0xff]
    %v278 = vld [vmem:[%s3 + $0x200] sm:$0xff]
    %v279 = vld [vmem:[%s3 + $0x208] sm:$0xff]
    %v280 = vld [vmem:[%s3 + $0x210] sm:$0xff]
    %v281 = vld [vmem:[%s3 + $0x218] sm:$0xff]
    %v282 = vld [vmem:[%s3 + $0x220] sm:$0xff]
    %v283 = vld [vmem:[%s3 + $0x228] sm:$0xff]
    %v284 = vld [vmem:[%s3 + $0x230] sm:$0xff]
    %v285 = vld [vmem:[%s3 + $0x238] sm:$0xff]
    %v286 = vld [vmem:[%s3 + $0x240] sm:$0xff]
    %v287 = vld [vmem:[%s3 + $0x248] sm:$0xff]
    %v288 = vld [vmem:[%s3 + $0x250] sm:$0xff]
    %v289 = vld [vmem:[%s3 + $0x258] sm:$0xff]
    %v290 = vld [vmem:[%s3 + $0x260] sm:$0xff]
    %v291 = vld [vmem:[%s3 + $0x268] sm:$0xff]
    %v292 = vld [vmem:[%s3 + $0x270] sm:$0xff]
    %v293 = vld [vmem:[%s3 + $0x278] sm:$0xff]
    %v294 = vld [vmem:[%s3 + $0x280] sm:$0xff]
    %v295 = vld [vmem:[%s3 + $0x288] sm:$0xff]
    %v296 = vld [vmem:[%s3 + $0x290] sm:$0xff]
    %v297 = vld [vmem:[%s3 + $0x298] sm:$0xff]
    %v298 = vld [vmem:[%s3 + $0x2a0] sm:$0xff]
    %v299 = vld [vmem:[%s3 + $0x2a8] sm:$0xff]
    %v300 = vld [vmem:[%s3 + $0x2b0] sm:$0xff]
    %v301 = vld [vmem:[%s3 + $0x2b8] sm:$0xff]
    %v302 = vld [vmem:[%s3 + $0x2c0] sm:$0xff]
    %v303 = vld [vmem:[%s3 + $0x2c8] sm:$0xff]
    %v304 = vld [vmem:[%s3 + $0x2d0] sm:$0xff]
    %v305 = vld [vmem:[%s3 + $0x2d8] sm:$0xff]
    %v306 = vld [vmem:[%s3 + $0x2e0] sm:$0xff]
    %v307 = vld [vmem:[%s3 + $0x2e8] sm:$0xff]
    %v308 = vld [vmem:[%s3 + $0x2f0] sm:$0xff]
    %v309 = vld [vmem:[%s3 + $0x2f8] sm:$0xff]
    %v310 = vld [vmem:[%s3 + $0x300] sm:$0xff]
    %v311 = vld [vmem:[%s3 + $0x308] sm:$0xff]
    %v312 = vld [vmem:[%s3 + $0x310] sm:$0xff]
    %v313 = vld [vmem:[%s3 + $0x318] sm:$0xff]
    %v314 = vld [vmem:[%s3 + $0x320] sm:$0xff]
    %v315 = vld [vmem:[%s3 + $0x328] sm:$0xff]
    %v316 = vld [vmem:[%s3 + $0x330] sm:$0xff]
    %v317 = vld [vmem:[%s3 + $0x338] sm:$0xff]
    %v318 = vld [vmem:[%s3 + $0x340] sm:$0xff]
    %v319 = vld [vmem:[%s3 + $0x348] sm:$0xff]
    %v320 = vld [vmem:[%s3 + $0x350] sm:$0xff]
    %v321 = vld [vmem:[%s3 + $0x358] sm:$0xff]
    %v322 = vld [vmem:[%s3 + $0x360] sm:$0xff]
    %v323 = vld [vmem:[%s3 + $0x368] sm:$0xff]
    %v324 = vld [vmem:[%s3 + $0x370] sm:$0xff]
    %v325 = vld [vmem:[%s3 + $0x378] sm:$0xff]
    %v326 = vld [vmem:[%s3 + $0x380] sm:$0xff]
    %v327 = vld [vmem:[%s3 + $0x388] sm:$0xff]
    %v328 = vld [vmem:[%s3 + $0x390] sm:$0xff]
    %v329 = vld [vmem:[%s3 + $0x398] sm:$0xff]
    %v330 = vld [vmem:[%s3 + $0x3a0] sm:$0xff]
    %v331 = vld [vmem:[%s3 + $0x3a8] sm:$0xff]
    %v332 = vld [vmem:[%s3 + $0x3b0] sm:$0xff]
    %v333 = vld [vmem:[%s3 + $0x3b8] sm:$0xff]
    %v334 = vld [vmem:[%s3 + $0x3c0] sm:$0xff]
    %v335 = vld [vmem:[%s3 + $0x3c8] sm:$0xff]
    %v336 = vld [vmem:[%s3 + $0x3d0] sm:$0xff]
    %v337 = vld [vmem:[%s3 + $0x3d8] sm:$0xff]
    %v338 = vld [vmem:[%s3 + $0x3e0] sm:$0xff]
    %v339 = vld [vmem:[%s3 + $0x3e8] sm:$0xff]
    %v340 = vld [vmem:[%s3 + $0x3f0] sm:$0xff]
    %v341 = vld [vmem:[%s3 + $0x3f8] sm:$0xff]
    %v358 = vrot.slane %v198, 1
    %v359 = vrot.slane %v198, 2
    %v360 = vrot.slane %v198, 3
    %v361 = vrot.slane %v198, 4
    %v362 = vrot.slane %v198, 5
    %v363 = vrot.slane %v198, 6
    %v364 = vrot.slane %v198, 7
    %v365 = vrot.slane %v199, 1
    %v366 = vrot.slane %v199, 2
    %v367 = vrot.slane %v199, 3
    %v368 = vrot.slane %v199, 4
    %v369 = vrot.slane %v199, 5
    %v370 = vrot.slane %v199, 6
    %v371 = vrot.slane %v199, 7
    %v372 = vrot.slane %v200, 1
    %v373 = vrot.slane %v200, 2
    %v374 = vrot.slane %v200, 3
    %v375 = vrot.slane %v200, 4
    %v376 = vrot.slane %v200, 5
    %v377 = vrot.slane %v200, 6
    %v378 = vrot.slane %v200, 7
    %v379 = vrot.slane %v201, 1
    %v380 = vrot.slane %v201, 2
    %v381 = vrot.slane %v201, 3
    %v382 = vrot.slane %v201, 4
    %v383 = vrot.slane %v201, 5
    %v384 = vrot.slane %v201, 6
    %v385 = vrot.slane %v201, 7
    %v386 = vrot.slane %v202, 1
    %v387 = vrot.slane %v202, 2
    %v388 = vrot.slane %v202, 3
    %v389 = vrot.slane %v202, 4
    %v390 = vrot.slane %v202, 5
    %v391 = vrot.slane %v202, 6
    %v392 = vrot.slane %v202, 7
    %v393 = vrot.slane %v203, 1
    %v394 = vrot.slane %v203, 2
    %v395 = vrot.slane %v203, 3
    %v396 = vrot.slane %v203, 4
    %v397 = vrot.slane %v203, 5
    %v398 = vrot.slane %v203, 6
    %v399 = vrot.slane %v203, 7
    %v400 = vrot.slane %v204, 1
    %v401 = vrot.slane %v204, 2
    %v402 = vrot.slane %v204, 3
    %v403 = vrot.slane %v204, 4
    %v404 = vrot.slane %v204, 5
    %v405 = vrot.slane %v204, 6
    %v406 = vrot.slane %v204, 7
    %v407 = vrot.slane %v205, 1
    %v408 = vrot.slane %v205, 2
    %v409 = vrot.slane %v205, 3
    %v410 = vrot.slane %v205, 4
    %v411 = vrot.slane %v205, 5
    %v412 = vrot.slane %v205, 6
    %v413 = vrot.slane %v205, 7
    %v414 = vrot.slane %v206, 1
    %v415 = vrot.slane %v206, 2
    %v416 = vrot.slane %v206, 3
    %v417 = vrot.slane %v206, 4
    %v418 = vrot.slane %v206, 5
    %v419 = vrot.slane %v206, 6
    %v420 = vrot.slane %v206, 7
    %v421 = vrot.slane %v207, 1
    %v422 = vrot.slane %v207, 2
    %v423 = vrot.slane %v207, 3
    %v424 = vrot.slane %v207, 4
    %v425 = vrot.slane %v207, 5
    %v426 = vrot.slane %v207, 6
    %v427 = vrot.slane %v207, 7
    %v428 = vrot.slane %v208, 1
    %v429 = vrot.slane %v208, 2
    %v430 = vrot.slane %v208, 3
    %v431 = vrot.slane %v208, 4
    %v432 = vrot.slane %v208, 5
    %v433 = vrot.slane %v208, 6
    %v434 = vrot.slane %v208, 7
    %v435 = vrot.slane %v209, 1
    %v436 = vrot.slane %v209, 2
    %v437 = vrot.slane %v209, 3
    %v438 = vrot.slane %v209, 4
    %v439 = vrot.slane %v209, 5
    %v440 = vrot.slane %v209, 6
    %v441 = vrot.slane %v209, 7
    %v442 = vrot.slane %v210, 1
    %v443 = vrot.slane %v210, 2
    %v444 = vrot.slane %v210, 3
    %v445 = vrot.slane %v210, 4
    %v446 = vrot.slane %v210, 5
    %v447 = vrot.slane %v210, 6
    %v448 = vrot.slane %v210, 7
    %v449 = vrot.slane %v211, 1
    %v450 = vrot.slane %v211, 2
    %v451 = vrot.slane %v211, 3
    %v452 = vrot.slane %v211, 4
    %v453 = vrot.slane %v211, 5
    %v454 = vrot.slane %v211, 6
    %v455 = vrot.slane %v211, 7
    %v456 = vrot.slane %v212, 1
    %v457 = vrot.slane %v212, 2
    %v458 = vrot.slane %v212, 3
    %v459 = vrot.slane %v212, 4
    %v460 = vrot.slane %v212, 5
    %v461 = vrot.slane %v212, 6
    %v462 = vrot.slane %v212, 7
    %v463 = vrot.slane %v213, 1
    %v464 = vrot.slane %v213, 2
    %v465 = vrot.slane %v213, 3
    %v466 = vrot.slane %v213, 4
    %v467 = vrot.slane %v213, 5
    %v468 = vrot.slane %v213, 6
    %v469 = vrot.slane %v213, 7
    %v470 = vperm.slane %v198, 0
    %v471 = vperm.slane %v358, 0
    %v472 = vperm.slane %v359, 0
    %v473 = vperm.slane %v360, 0
    %v474 = vperm.slane %v361, 0
    %v475 = vperm.slane %v362, 0
    %v476 = vperm.slane %v363, 0
    %v477 = vperm.slane %v364, 0
    %v478 = vperm.slane %v199, 0
    %v479 = vperm.slane %v365, 0
    %v480 = vperm.slane %v366, 0
    %v481 = vperm.slane %v367, 0
    %v482 = vperm.slane %v368, 0
    %v483 = vperm.slane %v369, 0
    %v484 = vperm.slane %v370, 0
    %v485 = vperm.slane %v371, 0
    %v486 = vperm.slane %v200, 0
    %v487 = vperm.slane %v372, 0
    %v488 = vperm.slane %v373, 0
    %v489 = vperm.slane %v374, 0
    %v490 = vperm.slane %v375, 0
    %v491 = vperm.slane %v376, 0
    %v492 = vperm.slane %v377, 0
    %v493 = vperm.slane %v378, 0
    %v494 = vperm.slane %v201, 0
    %v495 = vperm.slane %v379, 0
    %v496 = vperm.slane %v380, 0
    %v497 = vperm.slane %v381, 0
    %v498 = vperm.slane %v382, 0
    %v499 = vperm.slane %v383, 0
    %v500 = vperm.slane %v384, 0
    %v501 = vperm.slane %v385, 0
    %v502 = vperm.slane %v202, 0
    %v503 = vperm.slane %v386, 0
    %v504 = vperm.slane %v387, 0
    %v505 = vperm.slane %v388, 0
    %v506 = vperm.slane %v389, 0
    %v507 = vperm.slane %v390, 0
    %v508 = vperm.slane %v391, 0
    %v509 = vperm.slane %v392, 0
    %v510 = vperm.slane %v203, 0
    %v511 = vperm.slane %v393, 0
    %v512 = vperm.slane %v394, 0
    %v513 = vperm.slane %v395, 0
    %v514 = vperm.slane %v396, 0
    %v515 = vperm.slane %v397, 0
    %v516 = vperm.slane %v398, 0
    %v517 = vperm.slane %v399, 0
    %v518 = vperm.slane %v204, 0
    %v519 = vperm.slane %v400, 0
    %v520 = vperm.slane %v401, 0
    %v521 = vperm.slane %v402, 0
    %v522 = vperm.slane %v403, 0
    %v523 = vperm.slane %v404, 0
    %v524 = vperm.slane %v405, 0
    %v525 = vperm.slane %v406, 0
    %v526 = vperm.slane %v205, 0
    %v527 = vperm.slane %v407, 0
    %v528 = vperm.slane %v408, 0
    %v529 = vperm.slane %v409, 0
    %v530 = vperm.slane %v410, 0
    %v531 = vperm.slane %v411, 0
    %v532 = vperm.slane %v412, 0
    %v533 = vperm.slane %v413, 0
    %v534 = vperm.slane %v206, 0
    %v535 = vperm.slane %v414, 0
    %v536 = vperm.slane %v415, 0
    %v537 = vperm.slane %v416, 0
    %v538 = vperm.slane %v417, 0
    %v539 = vperm.slane %v418, 0
    %v540 = vperm.slane %v419, 0
    %v541 = vperm.slane %v420, 0
    %v542 = vperm.slane %v207, 0
    %v543 = vperm.slane %v421, 0
    %v544 = vperm.slane %v422, 0
    %v545 = vperm.slane %v423, 0
    %v546 = vperm.slane %v424, 0
    %v547 = vperm.slane %v425, 0
    %v548 = vperm.slane %v426, 0
    %v549 = vperm.slane %v427, 0
    %v550 = vperm.slane %v208, 0
    %v551 = vperm.slane %v428, 0
    %v552 = vperm.slane %v429, 0
    %v553 = vperm.slane %v430, 0
    %v554 = vperm.slane %v431, 0
    %v555 = vperm.slane %v432, 0
    %v556 = vperm.slane %v433, 0
    %v557 = vperm.slane %v434, 0
    %v558 = vperm.slane %v209, 0
    %v559 = vperm.slane %v435, 0
    %v560 = vperm.slane %v436, 0
    %v561 = vperm.slane %v437, 0
    %v562 = vperm.slane %v438, 0
    %v563 = vperm.slane %v439, 0
    %v564 = vperm.slane %v440, 0
    %v565 = vperm.slane %v441, 0
    %v566 = vperm.slane %v210, 0
    %v567 = vperm.slane %v442, 0
    %v568 = vperm.slane %v443, 0
    %v569 = vperm.slane %v444, 0
    %v570 = vperm.slane %v445, 0
    %v571 = vperm.slane %v446, 0
    %v572 = vperm.slane %v447, 0
    %v573 = vperm.slane %v448, 0
    %v574 = vperm.slane %v211, 0
    %v575 = vperm.slane %v449, 0
    %v576 = vperm.slane %v450, 0
    %v577 = vperm.slane %v451, 0
    %v578 = vperm.slane %v452, 0
    %v579 = vperm.slane %v453, 0
    %v580 = vperm.slane %v454, 0
    %v581 = vperm.slane %v455, 0
    %v582 = vperm.slane %v212, 0
    %v583 = vperm.slane %v456, 0
    %v584 = vperm.slane %v457, 0
    %v585 = vperm.slane %v458, 0
    %v586 = vperm.slane %v459, 0
    %v587 = vperm.slane %v460, 0
    %v588 = vperm.slane %v461, 0
    %v589 = vperm.slane %v462, 0
    %v590 = vperm.slane %v213, 0
    %v591 = vperm.slane %v463, 0
    %v592 = vperm.slane %v464, 0
    %v593 = vperm.slane %v465, 0
    %v594 = vperm.slane %v466, 0
    %v595 = vperm.slane %v467, 0
    %v596 = vperm.slane %v468, 0
    %v597 = vperm.slane %v469, 0
    %v726 = vsub.f32 %v470, %v214
    %v727 = vsub.f32 %v471, %v215
    %v728 = vsub.f32 %v472, %v216
    %v729 = vsub.f32 %v473, %v217
    %v730 = vsub.f32 %v474, %v218
    %v731 = vsub.f32 %v475, %v219
    %v732 = vsub.f32 %v476, %v220
    %v733 = vsub.f32 %v477, %v221
    %v734 = vsub.f32 %v478, %v222
    %v735 = vsub.f32 %v479, %v223
    %v736 = vsub.f32 %v480, %v224
    %v737 = vsub.f32 %v481, %v225
    %v738 = vsub.f32 %v482, %v226
    %v739 = vsub.f32 %v483, %v227
    %v740 = vsub.f32 %v484, %v228
    %v741 = vsub.f32 %v485, %v229
    %v742 = vsub.f32 %v486, %v230
    %v743 = vsub.f32 %v487, %v231
    %v744 = vsub.f32 %v488, %v232
    %v745 = vsub.f32 %v489, %v233
    %v746 = vsub.f32 %v490, %v234
    %v747 = vsub.f32 %v491, %v235
    %v748 = vsub.f32 %v492, %v236
    %v749 = vsub.f32 %v493, %v237
    %v750 = vsub.f32 %v494, %v238
    %v751 = vsub.f32 %v495, %v239
    %v752 = vsub.f32 %v496, %v240
    %v753 = vsub.f32 %v497, %v241
    %v754 = vsub.f32 %v498, %v242
    %v755 = vsub.f32 %v499, %v243
    %v756 = vsub.f32 %v500, %v244
    %v757 = vsub.f32 %v501, %v245
    %v758 = vsub.f32 %v502, %v246
    %v759 = vsub.f32 %v503, %v247
    %v760 = vsub.f32 %v504, %v248
    %v761 = vsub.f32 %v505, %v249
    %v762 = vsub.f32 %v506, %v250
    %v763 = vsub.f32 %v507, %v251
    %v764 = vsub.f32 %v508, %v252
    %v765 = vsub.f32 %v509, %v253
    %v766 = vsub.f32 %v510, %v254
    %v767 = vsub.f32 %v511, %v255
    %v768 = vsub.f32 %v512, %v256
    %v769 = vsub.f32 %v513, %v257
    %v770 = vsub.f32 %v514, %v258
    %v771 = vsub.f32 %v515, %v259
    %v772 = vsub.f32 %v516, %v260
    %v773 = vsub.f32 %v517, %v261
    %v774 = vsub.f32 %v518, %v262
    %v775 = vsub.f32 %v519, %v263
    %v776 = vsub.f32 %v520, %v264
    %v777 = vsub.f32 %v521, %v265
    %v778 = vsub.f32 %v522, %v266
    %v779 = vsub.f32 %v523, %v267
    %v780 = vsub.f32 %v524, %v268
    %v781 = vsub.f32 %v525, %v269
    %v782 = vsub.f32 %v526, %v270
    %v783 = vsub.f32 %v527, %v271
    %v784 = vsub.f32 %v528, %v272
    %v785 = vsub.f32 %v529, %v273
    %v786 = vsub.f32 %v530, %v274
    %v787 = vsub.f32 %v531, %v275
    %v788 = vsub.f32 %v532, %v276
    %v789 = vsub.f32 %v533, %v277
    %v790 = vsub.f32 %v534, %v278
    %v791 = vsub.f32 %v535, %v279
    %v792 = vsub.f32 %v536, %v280
    %v793 = vsub.f32 %v537, %v281
    %v794 = vsub.f32 %v538, %v282
    %v795 = vsub.f32 %v539, %v283
    %v796 = vsub.f32 %v540, %v284
    %v797 = vsub.f32 %v541, %v285
    %v798 = vsub.f32 %v542, %v286
    %v799 = vsub.f32 %v543, %v287
    %v800 = vsub.f32 %v544, %v288
    %v801 = vsub.f32 %v545, %v289
    %v802 = vsub.f32 %v546, %v290
    %v803 = vsub.f32 %v547, %v291
    %v804 = vsub.f32 %v548, %v292
    %v805 = vsub.f32 %v549, %v293
    %v806 = vsub.f32 %v550, %v294
    %v807 = vsub.f32 %v551, %v295
    %v808 = vsub.f32 %v552, %v296
    %v809 = vsub.f32 %v553, %v297
    %v810 = vsub.f32 %v554, %v298
    %v811 = vsub.f32 %v555, %v299
    %v812 = vsub.f32 %v556, %v300
    %v813 = vsub.f32 %v557, %v301
    %v814 = vsub.f32 %v558, %v302
    %v815 = vsub.f32 %v559, %v303
    %v816 = vsub.f32 %v560, %v304
    %v817 = vsub.f32 %v561, %v305
    %v818 = vsub.f32 %v562, %v306
    %v819 = vsub.f32 %v563, %v307
    %v820 = vsub.f32 %v564, %v308
    %v821 = vsub.f32 %v565, %v309
    %v822 = vsub.f32 %v566, %v310
    %v823 = vsub.f32 %v567, %v311
    %v824 = vsub.f32 %v568, %v312
    %v825 = vsub.f32 %v569, %v313
    %v826 = vsub.f32 %v570, %v314
    %v827 = vsub.f32 %v571, %v315
    %v828 = vsub.f32 %v572, %v316
    %v829 = vsub.f32 %v573, %v317
    %v830 = vsub.f32 %v574, %v318
    %v831 = vsub.f32 %v575, %v319
    %v832 = vsub.f32 %v576, %v320
    %v833 = vsub.f32 %v577, %v321
    %v834 = vsub.f32 %v578, %v322
    %v835 = vsub.f32 %v579, %v323
    %v836 = vsub.f32 %v580, %v324
    %v837 = vsub.f32 %v581, %v325
    %v838 = vsub.f32 %v582, %v326
    %v839 = vsub.f32 %v583, %v327
    %v840 = vsub.f32 %v584, %v328
    %v841 = vsub.f32 %v585, %v329
    %v842 = vsub.f32 %v586, %v330
    %v843 = vsub.f32 %v587, %v331
    %v844 = vsub.f32 %v588, %v332
    %v845 = vsub.f32 %v589, %v333
    %v846 = vsub.f32 %v590, %v334
    %v847 = vsub.f32 %v591, %v335
    %v848 = vsub.f32 %v592, %v336
    %v849 = vsub.f32 %v593, %v337
    %v850 = vsub.f32 %v594, %v338
    %v851 = vsub.f32 %v595, %v339
    %v852 = vsub.f32 %v596, %v340
    %v853 = vsub.f32 %v597, %v341
    %v854 = vld [vmem:[%s4] sm:$0x7]
    %856 = vset.pattern.permute.xlu0 0
    %857 = vperm.xlu0 %856, %v726
    %v858 = vpop.permute.xlu0 %857
    %861 = vset.pattern.permute.xlu0 0
    %862 = vperm.xlu0 %861, %v727
    %v863 = vpop.permute.xlu0 %862
    %866 = vset.pattern.permute.xlu0 0
    %867 = vperm.xlu0 %866, %v728
    %v868 = vpop.permute.xlu0 %867
    %871 = vset.pattern.permute.xlu0 0
    %872 = vperm.xlu0 %871, %v729
    %v873 = vpop.permute.xlu0 %872
    %876 = vset.pattern.permute.xlu0 0
    %877 = vperm.xlu0 %876, %v730
    %v878 = vpop.permute.xlu0 %877
    %881 = vset.pattern.permute.xlu0 0
    %882 = vperm.xlu0 %881, %v731
    %v883 = vpop.permute.xlu0 %882
    %886 = vset.pattern.permute.xlu0 0
    %887 = vperm.xlu0 %886, %v732
    %v888 = vpop.permute.xlu0 %887
    %891 = vset.pattern.permute.xlu0 0
    %892 = vperm.xlu0 %891, %v733
    %v893 = vpop.permute.xlu0 %892
    %896 = vset.pattern.permute.xlu0 0
    %897 = vperm.xlu0 %896, %v734
    %v898 = vpop.permute.xlu0 %897
    %901 = vset.pattern.permute.xlu0 0
    %902 = vperm.xlu0 %901, %v735
    %v903 = vpop.permute.xlu0 %902
    %906 = vset.pattern.permute.xlu0 0
    %907 = vperm.xlu0 %906, %v736
    %v908 = vpop.permute.xlu0 %907
    %911 = vset.pattern.permute.xlu0 0
    %912 = vperm.xlu0 %911, %v737
    %v913 = vpop.permute.xlu0 %912
    %916 = vset.pattern.permute.xlu0 0
    %917 = vperm.xlu0 %916, %v738
    %v918 = vpop.permute.xlu0 %917
    %921 = vset.pattern.permute.xlu0 0
    %922 = vperm.xlu0 %921, %v739
    %v923 = vpop.permute.xlu0 %922
    %926 = vset.pattern.permute.xlu0 0
    %927 = vperm.xlu0 %926, %v740
    %v928 = vpop.permute.xlu0 %927
    %931 = vset.pattern.permute.xlu0 0
    %932 = vperm.xlu0 %931, %v741
    %v933 = vpop.permute.xlu0 %932
    %936 = vset.pattern.permute.xlu0 0
    %937 = vperm.xlu0 %936, %v742
    %v938 = vpop.permute.xlu0 %937
    %941 = vset.pattern.permute.xlu0 0
    %942 = vperm.xlu0 %941, %v743
    %v943 = vpop.permute.xlu0 %942
    %946 = vset.pattern.permute.xlu0 0
    %947 = vperm.xlu0 %946, %v744
    %v948 = vpop.permute.xlu0 %947
    %951 = vset.pattern.permute.xlu0 0
    %952 = vperm.xlu0 %951, %v745
    %v953 = vpop.permute.xlu0 %952
    %956 = vset.pattern.permute.xlu0 0
    %957 = vperm.xlu0 %956, %v746
    %v958 = vpop.permute.xlu0 %957
    %961 = vset.pattern.permute.xlu0 0
    %962 = vperm.xlu0 %961, %v747
    %v963 = vpop.permute.xlu0 %962
    %966 = vset.pattern.permute.xlu0 0
    %967 = vperm.xlu0 %966, %v748
    %v968 = vpop.permute.xlu0 %967
    %971 = vset.pattern.permute.xlu0 0
    %972 = vperm.xlu0 %971, %v749
    %v973 = vpop.permute.xlu0 %972
    %976 = vset.pattern.permute.xlu0 0
    %977 = vperm.xlu0 %976, %v750
    %v978 = vpop.permute.xlu0 %977
    %981 = vset.pattern.permute.xlu0 0
    %982 = vperm.xlu0 %981, %v751
    %v983 = vpop.permute.xlu0 %982
    %986 = vset.pattern.permute.xlu0 0
    %987 = vperm.xlu0 %986, %v752
    %v988 = vpop.permute.xlu0 %987
    %991 = vset.pattern.permute.xlu0 0
    %992 = vperm.xlu0 %991, %v753
    %v993 = vpop.permute.xlu0 %992
    %996 = vset.pattern.permute.xlu0 0
    %997 = vperm.xlu0 %996, %v754
    %v998 = vpop.permute.xlu0 %997
    %1001 = vset.pattern.permute.xlu0 0
    %1002 = vperm.xlu0 %1001, %v755
    %v1003 = vpop.permute.xlu0 %1002
    %1006 = vset.pattern.permute.xlu0 0
    %1007 = vperm.xlu0 %1006, %v756
    %v1008 = vpop.permute.xlu0 %1007
    %1011 = vset.pattern.permute.xlu0 0
    %1012 = vperm.xlu0 %1011, %v757
    %v1013 = vpop.permute.xlu0 %1012
    %1016 = vset.pattern.permute.xlu0 0
    %1017 = vperm.xlu0 %1016, %v758
    %v1018 = vpop.permute.xlu0 %1017
    %1021 = vset.pattern.permute.xlu0 0
    %1022 = vperm.xlu0 %1021, %v759
    %v1023 = vpop.permute.xlu0 %1022
    %1026 = vset.pattern.permute.xlu0 0
    %1027 = vperm.xlu0 %1026, %v760
    %v1028 = vpop.permute.xlu0 %1027
    %1031 = vset.pattern.permute.xlu0 0
    %1032 = vperm.xlu0 %1031, %v761
    %v1033 = vpop.permute.xlu0 %1032
    %1036 = vset.pattern.permute.xlu0 0
    %1037 = vperm.xlu0 %1036, %v762
    %v1038 = vpop.permute.xlu0 %1037
    %1041 = vset.pattern.permute.xlu0 0
    %1042 = vperm.xlu0 %1041, %v763
    %v1043 = vpop.permute.xlu0 %1042
    %1046 = vset.pattern.permute.xlu0 0
    %1047 = vperm.xlu0 %1046, %v764
    %v1048 = vpop.permute.xlu0 %1047
    %1051 = vset.pattern.permute.xlu0 0
    %1052 = vperm.xlu0 %1051, %v765
    %v1053 = vpop.permute.xlu0 %1052
    %1056 = vset.pattern.permute.xlu0 0
    %1057 = vperm.xlu0 %1056, %v766
    %v1058 = vpop.permute.xlu0 %1057
    %1061 = vset.pattern.permute.xlu0 0
    %1062 = vperm.xlu0 %1061, %v767
    %v1063 = vpop.permute.xlu0 %1062
    %1066 = vset.pattern.permute.xlu0 0
    %1067 = vperm.xlu0 %1066, %v768
    %v1068 = vpop.permute.xlu0 %1067
    %1071 = vset.pattern.permute.xlu0 0
    %1072 = vperm.xlu0 %1071, %v769
    %v1073 = vpop.permute.xlu0 %1072
    %1076 = vset.pattern.permute.xlu0 0
    %1077 = vperm.xlu0 %1076, %v770
    %v1078 = vpop.permute.xlu0 %1077
    %1081 = vset.pattern.permute.xlu0 0
    %1082 = vperm.xlu0 %1081, %v771
    %v1083 = vpop.permute.xlu0 %1082
    %1086 = vset.pattern.permute.xlu0 0
    %1087 = vperm.xlu0 %1086, %v772
    %v1088 = vpop.permute.xlu0 %1087
    %1091 = vset.pattern.permute.xlu0 0
    %1092 = vperm.xlu0 %1091, %v773
    %v1093 = vpop.permute.xlu0 %1092
    %1096 = vset.pattern.permute.xlu0 0
    %1097 = vperm.xlu0 %1096, %v774
    %v1098 = vpop.permute.xlu0 %1097
    %1101 = vset.pattern.permute.xlu0 0
    %1102 = vperm.xlu0 %1101, %v775
    %v1103 = vpop.permute.xlu0 %1102
    %1106 = vset.pattern.permute.xlu0 0
    %1107 = vperm.xlu0 %1106, %v776
    %v1108 = vpop.permute.xlu0 %1107
    %1111 = vset.pattern.permute.xlu0 0
    %1112 = vperm.xlu0 %1111, %v777
    %v1113 = vpop.permute.xlu0 %1112
    %1116 = vset.pattern.permute.xlu0 0
    %1117 = vperm.xlu0 %1116, %v778
    %v1118 = vpop.permute.xlu0 %1117
    %1121 = vset.pattern.permute.xlu0 0
    %1122 = vperm.xlu0 %1121, %v779
    %v1123 = vpop.permute.xlu0 %1122
    %1126 = vset.pattern.permute.xlu0 0
    %1127 = vperm.xlu0 %1126, %v780
    %v1128 = vpop.permute.xlu0 %1127
    %1131 = vset.pattern.permute.xlu0 0
    %1132 = vperm.xlu0 %1131, %v781
    %v1133 = vpop.permute.xlu0 %1132
    %1136 = vset.pattern.permute.xlu0 0
    %1137 = vperm.xlu0 %1136, %v782
    %v1138 = vpop.permute.xlu0 %1137
    %1141 = vset.pattern.permute.xlu0 0
    %1142 = vperm.xlu0 %1141, %v783
    %v1143 = vpop.permute.xlu0 %1142
    %1146 = vset.pattern.permute.xlu0 0
    %1147 = vperm.xlu0 %1146, %v784
    %v1148 = vpop.permute.xlu0 %1147
    %1151 = vset.pattern.permute.xlu0 0
    %1152 = vperm.xlu0 %1151, %v785
    %v1153 = vpop.permute.xlu0 %1152
    %1156 = vset.pattern.permute.xlu0 0
    %1157 = vperm.xlu0 %1156, %v786
    %v1158 = vpop.permute.xlu0 %1157
    %1161 = vset.pattern.permute.xlu0 0
    %1162 = vperm.xlu0 %1161, %v787
    %v1163 = vpop.permute.xlu0 %1162
    %1166 = vset.pattern.permute.xlu0 0
    %1167 = vperm.xlu0 %1166, %v788
    %v1168 = vpop.permute.xlu0 %1167
    %1171 = vset.pattern.permute.xlu0 0
    %1172 = vperm.xlu0 %1171, %v789
    %v1173 = vpop.permute.xlu0 %1172
    %1176 = vset.pattern.permute.xlu0 0
    %1177 = vperm.xlu0 %1176, %v790
    %v1178 = vpop.permute.xlu0 %1177
    %1181 = vset.pattern.permute.xlu0 0
    %1182 = vperm.xlu0 %1181, %v791
    %v1183 = vpop.permute.xlu0 %1182
    %1186 = vset.pattern.permute.xlu0 0
    %1187 = vperm.xlu0 %1186, %v792
    %v1188 = vpop.permute.xlu0 %1187
    %1191 = vset.pattern.permute.xlu0 0
    %1192 = vperm.xlu0 %1191, %v793
    %v1193 = vpop.permute.xlu0 %1192
    %1196 = vset.pattern.permute.xlu0 0
    %1197 = vperm.xlu0 %1196, %v794
    %v1198 = vpop.permute.xlu0 %1197
    %1201 = vset.pattern.permute.xlu0 0
    %1202 = vperm.xlu0 %1201, %v795
    %v1203 = vpop.permute.xlu0 %1202
    %1206 = vset.pattern.permute.xlu0 0
    %1207 = vperm.xlu0 %1206, %v796
    %v1208 = vpop.permute.xlu0 %1207
    %1211 = vset.pattern.permute.xlu0 0
    %1212 = vperm.xlu0 %1211, %v797
    %v1213 = vpop.permute.xlu0 %1212
    %1216 = vset.pattern.permute.xlu0 0
    %1217 = vperm.xlu0 %1216, %v798
    %v1218 = vpop.permute.xlu0 %1217
    %1221 = vset.pattern.permute.xlu0 0
    %1222 = vperm.xlu0 %1221, %v799
    %v1223 = vpop.permute.xlu0 %1222
    %1226 = vset.pattern.permute.xlu0 0
    %1227 = vperm.xlu0 %1226, %v800
    %v1228 = vpop.permute.xlu0 %1227
    %1231 = vset.pattern.permute.xlu0 0
    %1232 = vperm.xlu0 %1231, %v801
    %v1233 = vpop.permute.xlu0 %1232
    %1236 = vset.pattern.permute.xlu0 0
    %1237 = vperm.xlu0 %1236, %v802
    %v1238 = vpop.permute.xlu0 %1237
    %1241 = vset.pattern.permute.xlu0 0
    %1242 = vperm.xlu0 %1241, %v803
    %v1243 = vpop.permute.xlu0 %1242
    %1246 = vset.pattern.permute.xlu0 0
    %1247 = vperm.xlu0 %1246, %v804
    %v1248 = vpop.permute.xlu0 %1247
    %1251 = vset.pattern.permute.xlu0 0
    %1252 = vperm.xlu0 %1251, %v805
    %v1253 = vpop.permute.xlu0 %1252
    %1256 = vset.pattern.permute.xlu0 0
    %1257 = vperm.xlu0 %1256, %v806
    %v1258 = vpop.permute.xlu0 %1257
    %1261 = vset.pattern.permute.xlu0 0
    %1262 = vperm.xlu0 %1261, %v807
    %v1263 = vpop.permute.xlu0 %1262
    %1266 = vset.pattern.permute.xlu0 0
    %1267 = vperm.xlu0 %1266, %v808
    %v1268 = vpop.permute.xlu0 %1267
    %1271 = vset.pattern.permute.xlu0 0
    %1272 = vperm.xlu0 %1271, %v809
    %v1273 = vpop.permute.xlu0 %1272
    %1276 = vset.pattern.permute.xlu0 0
    %1277 = vperm.xlu0 %1276, %v810
    %v1278 = vpop.permute.xlu0 %1277
    %1281 = vset.pattern.permute.xlu0 0
    %1282 = vperm.xlu0 %1281, %v811
    %v1283 = vpop.permute.xlu0 %1282
    %1286 = vset.pattern.permute.xlu0 0
    %1287 = vperm.xlu0 %1286, %v812
    %v1288 = vpop.permute.xlu0 %1287
    %1291 = vset.pattern.permute.xlu0 0
    %1292 = vperm.xlu0 %1291, %v813
    %v1293 = vpop.permute.xlu0 %1292
    %1296 = vset.pattern.permute.xlu0 0
    %1297 = vperm.xlu0 %1296, %v814
    %v1298 = vpop.permute.xlu0 %1297
    %1301 = vset.pattern.permute.xlu0 0
    %1302 = vperm.xlu0 %1301, %v815
    %v1303 = vpop.permute.xlu0 %1302
    %1306 = vset.pattern.permute.xlu0 0
    %1307 = vperm.xlu0 %1306, %v816
    %v1308 = vpop.permute.xlu0 %1307
    %1311 = vset.pattern.permute.xlu0 0
    %1312 = vperm.xlu0 %1311, %v817
    %v1313 = vpop.permute.xlu0 %1312
    %1316 = vset.pattern.permute.xlu0 0
    %1317 = vperm.xlu0 %1316, %v818
    %v1318 = vpop.permute.xlu0 %1317
    %1321 = vset.pattern.permute.xlu0 0
    %1322 = vperm.xlu0 %1321, %v819
    %v1323 = vpop.permute.xlu0 %1322
    %1326 = vset.pattern.permute.xlu0 0
    %1327 = vperm.xlu0 %1326, %v820
    %v1328 = vpop.permute.xlu0 %1327
    %1331 = vset.pattern.permute.xlu0 0
    %1332 = vperm.xlu0 %1331, %v821
    %v1333 = vpop.permute.xlu0 %1332
    %1336 = vset.pattern.permute.xlu0 0
    %1337 = vperm.xlu0 %1336, %v822
    %v1338 = vpop.permute.xlu0 %1337
    %1341 = vset.pattern.permute.xlu0 0
    %1342 = vperm.xlu0 %1341, %v823
    %v1343 = vpop.permute.xlu0 %1342
    %1346 = vset.pattern.permute.xlu0 0
    %1347 = vperm.xlu0 %1346, %v824
    %v1348 = vpop.permute.xlu0 %1347
    %1351 = vset.pattern.permute.xlu0 0
    %1352 = vperm.xlu0 %1351, %v825
    %v1353 = vpop.permute.xlu0 %1352
    %1356 = vset.pattern.permute.xlu0 0
    %1357 = vperm.xlu0 %1356, %v826
    %v1358 = vpop.permute.xlu0 %1357
    %1361 = vset.pattern.permute.xlu0 0
    %1362 = vperm.xlu0 %1361, %v827
    %v1363 = vpop.permute.xlu0 %1362
    %1366 = vset.pattern.permute.xlu0 0
    %1367 = vperm.xlu0 %1366, %v828
    %v1368 = vpop.permute.xlu0 %1367
    %1371 = vset.pattern.permute.xlu0 0
    %1372 = vperm.xlu0 %1371, %v829
    %v1373 = vpop.permute.xlu0 %1372
    %1376 = vset.pattern.permute.xlu0 0
    %1377 = vperm.xlu0 %1376, %v830
    %v1378 = vpop.permute.xlu0 %1377
    %1381 = vset.pattern.permute.xlu0 0
    %1382 = vperm.xlu0 %1381, %v831
    %v1383 = vpop.permute.xlu0 %1382
    %1386 = vset.pattern.permute.xlu0 0
    %1387 = vperm.xlu0 %1386, %v832
    %v1388 = vpop.permute.xlu0 %1387
    %1391 = vset.pattern.permute.xlu0 0
    %1392 = vperm.xlu0 %1391, %v833
    %v1393 = vpop.permute.xlu0 %1392
    %1396 = vset.pattern.permute.xlu0 0
    %1397 = vperm.xlu0 %1396, %v834
    %v1398 = vpop.permute.xlu0 %1397
    %1401 = vset.pattern.permute.xlu0 0
    %1402 = vperm.xlu0 %1401, %v835
    %v1403 = vpop.permute.xlu0 %1402
    %1406 = vset.pattern.permute.xlu0 0
    %1407 = vperm.xlu0 %1406, %v836
    %v1408 = vpop.permute.xlu0 %1407
    %1411 = vset.pattern.permute.xlu0 0
    %1412 = vperm.xlu0 %1411, %v837
    %v1413 = vpop.permute.xlu0 %1412
    %1416 = vset.pattern.permute.xlu0 0
    %1417 = vperm.xlu0 %1416, %v838
    %v1418 = vpop.permute.xlu0 %1417
    %1421 = vset.pattern.permute.xlu0 0
    %1422 = vperm.xlu0 %1421, %v839
    %v1423 = vpop.permute.xlu0 %1422
    %1426 = vset.pattern.permute.xlu0 0
    %1427 = vperm.xlu0 %1426, %v840
    %v1428 = vpop.permute.xlu0 %1427
    %1431 = vset.pattern.permute.xlu0 0
    %1432 = vperm.xlu0 %1431, %v841
    %v1433 = vpop.permute.xlu0 %1432
    %1436 = vset.pattern.permute.xlu0 0
    %1437 = vperm.xlu0 %1436, %v842
    %v1438 = vpop.permute.xlu0 %1437
    %1441 = vset.pattern.permute.xlu0 0
    %1442 = vperm.xlu0 %1441, %v843
    %v1443 = vpop.permute.xlu0 %1442
    %1446 = vset.pattern.permute.xlu0 0
    %1447 = vperm.xlu0 %1446, %v844
    %v1448 = vpop.permute.xlu0 %1447
    %1451 = vset.pattern.permute.xlu0 0
    %1452 = vperm.xlu0 %1451, %v845
    %v1453 = vpop.permute.xlu0 %1452
    %1456 = vset.pattern.permute.xlu0 0
    %1457 = vperm.xlu0 %1456, %v846
    %v1458 = vpop.permute.xlu0 %1457
    %1461 = vset.pattern.permute.xlu0 0
    %1462 = vperm.xlu0 %1461, %v847
    %v1463 = vpop.permute.xlu0 %1462
    %1466 = vset.pattern.permute.xlu0 0
    %1467 = vperm.xlu0 %1466, %v848
    %v1468 = vpop.permute.xlu0 %1467
    %1471 = vset.pattern.permute.xlu0 0
    %1472 = vperm.xlu0 %1471, %v849
    %v1473 = vpop.permute.xlu0 %1472
    %1476 = vset.pattern.permute.xlu0 0
    %1477 = vperm.xlu0 %1476, %v850
    %v1478 = vpop.permute.xlu0 %1477
    %1481 = vset.pattern.permute.xlu0 0
    %1482 = vperm.xlu0 %1481, %v851
    %v1483 = vpop.permute.xlu0 %1482
    %1486 = vset.pattern.permute.xlu0 0
    %1487 = vperm.xlu0 %1486, %v852
    %v1488 = vpop.permute.xlu0 %1487
    %1491 = vset.pattern.permute.xlu0 0
    %1492 = vperm.xlu0 %1491, %v853
    %v1493 = vpop.permute.xlu0 %1492
    %v1495 = vperm.slane %v854, 0
    %v1496 = vmul.f32 %v858, %v1495
    %v1497 = vmul.f32 %v863, %v1495
    %v1498 = vmul.f32 %v868, %v1495
    %v1499 = vmul.f32 %v873, %v1495
    %v1500 = vmul.f32 %v878, %v1495
    %v1501 = vmul.f32 %v883, %v1495
    %v1502 = vmul.f32 %v888, %v1495
    %v1503 = vmul.f32 %v893, %v1495
    %v1504 = vmul.f32 %v898, %v1495
    %v1505 = vmul.f32 %v903, %v1495
    %v1506 = vmul.f32 %v908, %v1495
    %v1507 = vmul.f32 %v913, %v1495
    %v1508 = vmul.f32 %v918, %v1495
    %v1509 = vmul.f32 %v923, %v1495
    %v1510 = vmul.f32 %v928, %v1495
    %v1511 = vmul.f32 %v933, %v1495
    %v1512 = vmul.f32 %v938, %v1495
    %v1513 = vmul.f32 %v943, %v1495
    %v1514 = vmul.f32 %v948, %v1495
    %v1515 = vmul.f32 %v953, %v1495
    %v1516 = vmul.f32 %v958, %v1495
    %v1517 = vmul.f32 %v963, %v1495
    %v1518 = vmul.f32 %v968, %v1495
    %v1519 = vmul.f32 %v973, %v1495
    %v1520 = vmul.f32 %v978, %v1495
    %v1521 = vmul.f32 %v983, %v1495
    %v1522 = vmul.f32 %v988, %v1495
    %v1523 = vmul.f32 %v993, %v1495
    %v1524 = vmul.f32 %v998, %v1495
    %v1525 = vmul.f32 %v1003, %v1495
    %v1526 = vmul.f32 %v1008, %v1495
    %v1527 = vmul.f32 %v1013, %v1495
    %v1528 = vmul.f32 %v1018, %v1495
    %v1529 = vmul.f32 %v1023, %v1495
    %v1530 = vmul.f32 %v1028, %v1495
    %v1531 = vmul.f32 %v1033, %v1495
    %v1532 = vmul.f32 %v1038, %v1495
    %v1533 = vmul.f32 %v1043, %v1495
    %v1534 = vmul.f32 %v1048, %v1495
    %v1535 = vmul.f32 %v1053, %v1495
    %v1536 = vmul.f32 %v1058, %v1495
    %v1537 = vmul.f32 %v1063, %v1495
    %v1538 = vmul.f32 %v1068, %v1495
    %v1539 = vmul.f32 %v1073, %v1495
    %v1540 = vmul.f32 %v1078, %v1495
    %v1541 = vmul.f32 %v1083, %v1495
    %v1542 = vmul.f32 %v1088, %v1495
    %v1543 = vmul.f32 %v1093, %v1495
    %v1544 = vmul.f32 %v1098, %v1495
    %v1545 = vmul.f32 %v1103, %v1495
    %v1546 = vmul.f32 %v1108, %v1495
    %v1547 = vmul.f32 %v1113, %v1495
    %v1548 = vmul.f32 %v1118, %v1495
    %v1549 = vmul.f32 %v1123, %v1495
    %v1550 = vmul.f32 %v1128, %v1495
    %v1551 = vmul.f32 %v1133, %v1495
    %v1552 = vmul.f32 %v1138, %v1495
    %v1553 = vmul.f32 %v1143, %v1495
    %v1554 = vmul.f32 %v1148, %v1495
    %v1555 = vmul.f32 %v1153, %v1495
    %v1556 = vmul.f32 %v1158, %v1495
    %v1557 = vmul.f32 %v1163, %v1495
    %v1558 = vmul.f32 %v1168, %v1495
    %v1559 = vmul.f32 %v1173, %v1495
    %v1560 = vmul.f32 %v1178, %v1495
    %v1561 = vmul.f32 %v1183, %v1495
    %v1562 = vmul.f32 %v1188, %v1495
    %v1563 = vmul.f32 %v1193, %v1495
    %v1564 = vmul.f32 %v1198, %v1495
    %v1565 = vmul.f32 %v1203, %v1495
    %v1566 = vmul.f32 %v1208, %v1495
    %v1567 = vmul.f32 %v1213, %v1495
    %v1568 = vmul.f32 %v1218, %v1495
    %v1569 = vmul.f32 %v1223, %v1495
    %v1570 = vmul.f32 %v1228, %v1495
    %v1571 = vmul.f32 %v1233, %v1495
    %v1572 = vmul.f32 %v1238, %v1495
    %v1573 = vmul.f32 %v1243, %v1495
    %v1574 = vmul.f32 %v1248, %v1495
    %v1575 = vmul.f32 %v1253, %v1495
    %v1576 = vmul.f32 %v1258, %v1495
    %v1577 = vmul.f32 %v1263, %v1495
    %v1578 = vmul.f32 %v1268, %v1495
    %v1579 = vmul.f32 %v1273, %v1495
    %v1580 = vmul.f32 %v1278, %v1495
    %v1581 = vmul.f32 %v1283, %v1495
    %v1582 = vmul.f32 %v1288, %v1495
    %v1583 = vmul.f32 %v1293, %v1495
    %v1584 = vmul.f32 %v1298, %v1495
    %v1585 = vmul.f32 %v1303, %v1495
    %v1586 = vmul.f32 %v1308, %v1495
    %v1587 = vmul.f32 %v1313, %v1495
    %v1588 = vmul.f32 %v1318, %v1495
    %v1589 = vmul.f32 %v1323, %v1495
    %v1590 = vmul.f32 %v1328, %v1495
    %v1591 = vmul.f32 %v1333, %v1495
    %v1592 = vmul.f32 %v1338, %v1495
    %v1593 = vmul.f32 %v1343, %v1495
    %v1594 = vmul.f32 %v1348, %v1495
    %v1595 = vmul.f32 %v1353, %v1495
    %v1596 = vmul.f32 %v1358, %v1495
    %v1597 = vmul.f32 %v1363, %v1495
    %v1598 = vmul.f32 %v1368, %v1495
    %v1599 = vmul.f32 %v1373, %v1495
    %v1600 = vmul.f32 %v1378, %v1495
    %v1601 = vmul.f32 %v1383, %v1495
    %v1602 = vmul.f32 %v1388, %v1495
    %v1603 = vmul.f32 %v1393, %v1495
    %v1604 = vmul.f32 %v1398, %v1495
    %v1605 = vmul.f32 %v1403, %v1495
    %v1606 = vmul.f32 %v1408, %v1495
    %v1607 = vmul.f32 %v1413, %v1495
    %v1608 = vmul.f32 %v1418, %v1495
    %v1609 = vmul.f32 %v1423, %v1495
    %v1610 = vmul.f32 %v1428, %v1495
    %v1611 = vmul.f32 %v1433, %v1495
    %v1612 = vmul.f32 %v1438, %v1495
    %v1613 = vmul.f32 %v1443, %v1495
    %v1614 = vmul.f32 %v1448, %v1495
    %v1615 = vmul.f32 %v1453, %v1495
    %v1616 = vmul.f32 %v1458, %v1495
    %v1617 = vmul.f32 %v1463, %v1495
    %v1618 = vmul.f32 %v1468, %v1495
    %v1619 = vmul.f32 %v1473, %v1495
    %v1620 = vmul.f32 %v1478, %v1495
    %v1621 = vmul.f32 %v1483, %v1495
    %v1622 = vmul.f32 %v1488, %v1495
    %v1623 = vmul.f32 %v1493, %v1495
    %1624 = vset.pattern.permute.xlu0 1
    %1625 = vperm.xlu0 %1624, %v726
    %v1626 = vpop.permute.xlu0 %1625
    %1628 = vset.pattern.permute.xlu0 1
    %1629 = vperm.xlu0 %1628, %v727
    %v1630 = vpop.permute.xlu0 %1629
    %1632 = vset.pattern.permute.xlu0 1
    %1633 = vperm.xlu0 %1632, %v728
    %v1634 = vpop.permute.xlu0 %1633
    %1636 = vset.pattern.permute.xlu0 1
    %1637 = vperm.xlu0 %1636, %v729
    %v1638 = vpop.permute.xlu0 %1637
    %1640 = vset.pattern.permute.xlu0 1
    %1641 = vperm.xlu0 %1640, %v730
    %v1642 = vpop.permute.xlu0 %1641
    %1644 = vset.pattern.permute.xlu0 1
    %1645 = vperm.xlu0 %1644, %v731
    %v1646 = vpop.permute.xlu0 %1645
    %1648 = vset.pattern.permute.xlu0 1
    %1649 = vperm.xlu0 %1648, %v732
    %v1650 = vpop.permute.xlu0 %1649
    %1652 = vset.pattern.permute.xlu0 1
    %1653 = vperm.xlu0 %1652, %v733
    %v1654 = vpop.permute.xlu0 %1653
    %1656 = vset.pattern.permute.xlu0 1
    %1657 = vperm.xlu0 %1656, %v734
    %v1658 = vpop.permute.xlu0 %1657
    %1660 = vset.pattern.permute.xlu0 1
    %1661 = vperm.xlu0 %1660, %v735
    %v1662 = vpop.permute.xlu0 %1661
    %1664 = vset.pattern.permute.xlu0 1
    %1665 = vperm.xlu0 %1664, %v736
    %v1666 = vpop.permute.xlu0 %1665
    %1668 = vset.pattern.permute.xlu0 1
    %1669 = vperm.xlu0 %1668, %v737
    %v1670 = vpop.permute.xlu0 %1669
    %1672 = vset.pattern.permute.xlu0 1
    %1673 = vperm.xlu0 %1672, %v738
    %v1674 = vpop.permute.xlu0 %1673
    %1676 = vset.pattern.permute.xlu0 1
    %1677 = vperm.xlu0 %1676, %v739
    %v1678 = vpop.permute.xlu0 %1677
    %1680 = vset.pattern.permute.xlu0 1
    %1681 = vperm.xlu0 %1680, %v740
    %v1682 = vpop.permute.xlu0 %1681
    %1684 = vset.pattern.permute.xlu0 1
    %1685 = vperm.xlu0 %1684, %v741
    %v1686 = vpop.permute.xlu0 %1685
    %1688 = vset.pattern.permute.xlu0 1
    %1689 = vperm.xlu0 %1688, %v742
    %v1690 = vpop.permute.xlu0 %1689
    %1692 = vset.pattern.permute.xlu0 1
    %1693 = vperm.xlu0 %1692, %v743
    %v1694 = vpop.permute.xlu0 %1693
    %1696 = vset.pattern.permute.xlu0 1
    %1697 = vperm.xlu0 %1696, %v744
    %v1698 = vpop.permute.xlu0 %1697
    %1700 = vset.pattern.permute.xlu0 1
    %1701 = vperm.xlu0 %1700, %v745
    %v1702 = vpop.permute.xlu0 %1701
    %1704 = vset.pattern.permute.xlu0 1
    %1705 = vperm.xlu0 %1704, %v746
    %v1706 = vpop.permute.xlu0 %1705
    %1708 = vset.pattern.permute.xlu0 1
    %1709 = vperm.xlu0 %1708, %v747
    %v1710 = vpop.permute.xlu0 %1709
    %1712 = vset.pattern.permute.xlu0 1
    %1713 = vperm.xlu0 %1712, %v748
    %v1714 = vpop.permute.xlu0 %1713
    %1716 = vset.pattern.permute.xlu0 1
    %1717 = vperm.xlu0 %1716, %v749
    %v1718 = vpop.permute.xlu0 %1717
    %1720 = vset.pattern.permute.xlu0 1
    %1721 = vperm.xlu0 %1720, %v750
    %v1722 = vpop.permute.xlu0 %1721
    %1724 = vset.pattern.permute.xlu0 1
    %1725 = vperm.xlu0 %1724, %v751
    %v1726 = vpop.permute.xlu0 %1725
    %1728 = vset.pattern.permute.xlu0 1
    %1729 = vperm.xlu0 %1728, %v752
    %v1730 = vpop.permute.xlu0 %1729
    %1732 = vset.pattern.permute.xlu0 1
    %1733 = vperm.xlu0 %1732, %v753
    %v1734 = vpop.permute.xlu0 %1733
    %1736 = vset.pattern.permute.xlu0 1
    %1737 = vperm.xlu0 %1736, %v754
    %v1738 = vpop.permute.xlu0 %1737
    %1740 = vset.pattern.permute.xlu0 1
    %1741 = vperm.xlu0 %1740, %v755
    %v1742 = vpop.permute.xlu0 %1741
    %1744 = vset.pattern.permute.xlu0 1
    %1745 = vperm.xlu0 %1744, %v756
    %v1746 = vpop.permute.xlu0 %1745
    %1748 = vset.pattern.permute.xlu0 1
    %1749 = vperm.xlu0 %1748, %v757
    %v1750 = vpop.permute.xlu0 %1749
    %1752 = vset.pattern.permute.xlu0 1
    %1753 = vperm.xlu0 %1752, %v758
    %v1754 = vpop.permute.xlu0 %1753
    %1756 = vset.pattern.permute.xlu0 1
    %1757 = vperm.xlu0 %1756, %v759
    %v1758 = vpop.permute.xlu0 %1757
    %1760 = vset.pattern.permute.xlu0 1
    %1761 = vperm.xlu0 %1760, %v760
    %v1762 = vpop.permute.xlu0 %1761
    %1764 = vset.pattern.permute.xlu0 1
    %1765 = vperm.xlu0 %1764, %v761
    %v1766 = vpop.permute.xlu0 %1765
    %1768 = vset.pattern.permute.xlu0 1
    %1769 = vperm.xlu0 %1768, %v762
    %v1770 = vpop.permute.xlu0 %1769
    %1772 = vset.pattern.permute.xlu0 1
    %1773 = vperm.xlu0 %1772, %v763
    %v1774 = vpop.permute.xlu0 %1773
    %1776 = vset.pattern.permute.xlu0 1
    %1777 = vperm.xlu0 %1776, %v764
    %v1778 = vpop.permute.xlu0 %1777
    %1780 = vset.pattern.permute.xlu0 1
    %1781 = vperm.xlu0 %1780, %v765
    %v1782 = vpop.permute.xlu0 %1781
    %1784 = vset.pattern.permute.xlu0 1
    %1785 = vperm.xlu0 %1784, %v766
    %v1786 = vpop.permute.xlu0 %1785
    %1788 = vset.pattern.permute.xlu0 1
    %1789 = vperm.xlu0 %1788, %v767
    %v1790 = vpop.permute.xlu0 %1789
    %1792 = vset.pattern.permute.xlu0 1
    %1793 = vperm.xlu0 %1792, %v768
    %v1794 = vpop.permute.xlu0 %1793
    %1796 = vset.pattern.permute.xlu0 1
    %1797 = vperm.xlu0 %1796, %v769
    %v1798 = vpop.permute.xlu0 %1797
    %1800 = vset.pattern.permute.xlu0 1
    %1801 = vperm.xlu0 %1800, %v770
    %v1802 = vpop.permute.xlu0 %1801
    %1804 = vset.pattern.permute.xlu0 1
    %1805 = vperm.xlu0 %1804, %v771
    %v1806 = vpop.permute.xlu0 %1805
    %1808 = vset.pattern.permute.xlu0 1
    %1809 = vperm.xlu0 %1808, %v772
    %v1810 = vpop.permute.xlu0 %1809
    %1812 = vset.pattern.permute.xlu0 1
    %1813 = vperm.xlu0 %1812, %v773
    %v1814 = vpop.permute.xlu0 %1813
    %1816 = vset.pattern.permute.xlu0 1
    %1817 = vperm.xlu0 %1816, %v774
    %v1818 = vpop.permute.xlu0 %1817
    %1820 = vset.pattern.permute.xlu0 1
    %1821 = vperm.xlu0 %1820, %v775
    %v1822 = vpop.permute.xlu0 %1821
    %1824 = vset.pattern.permute.xlu0 1
    %1825 = vperm.xlu0 %1824, %v776
    %v1826 = vpop.permute.xlu0 %1825
    %1828 = vset.pattern.permute.xlu0 1
    %1829 = vperm.xlu0 %1828, %v777
    %v1830 = vpop.permute.xlu0 %1829
    %1832 = vset.pattern.permute.xlu0 1
    %1833 = vperm.xlu0 %1832, %v778
    %v1834 = vpop.permute.xlu0 %1833
    %1836 = vset.pattern.permute.xlu0 1
    %1837 = vperm.xlu0 %1836, %v779
    %v1838 = vpop.permute.xlu0 %1837
    %1840 = vset.pattern.permute.xlu0 1
    %1841 = vperm.xlu0 %1840, %v780
    %v1842 = vpop.permute.xlu0 %1841
    %1844 = vset.pattern.permute.xlu0 1
    %1845 = vperm.xlu0 %1844, %v781
    %v1846 = vpop.permute.xlu0 %1845
    %1848 = vset.pattern.permute.xlu0 1
    %1849 = vperm.xlu0 %1848, %v782
    %v1850 = vpop.permute.xlu0 %1849
    %1852 = vset.pattern.permute.xlu0 1
    %1853 = vperm.xlu0 %1852, %v783
    %v1854 = vpop.permute.xlu0 %1853
    %1856 = vset.pattern.permute.xlu0 1
    %1857 = vperm.xlu0 %1856, %v784
    %v1858 = vpop.permute.xlu0 %1857
    %1860 = vset.pattern.permute.xlu0 1
    %1861 = vperm.xlu0 %1860, %v785
    %v1862 = vpop.permute.xlu0 %1861
    %1864 = vset.pattern.permute.xlu0 1
    %1865 = vperm.xlu0 %1864, %v786
    %v1866 = vpop.permute.xlu0 %1865
    %1868 = vset.pattern.permute.xlu0 1
    %1869 = vperm.xlu0 %1868, %v787
    %v1870 = vpop.permute.xlu0 %1869
    %1872 = vset.pattern.permute.xlu0 1
    %1873 = vperm.xlu0 %1872, %v788
    %v1874 = vpop.permute.xlu0 %1873
    %1876 = vset.pattern.permute.xlu0 1
    %1877 = vperm.xlu0 %1876, %v789
    %v1878 = vpop.permute.xlu0 %1877
    %1880 = vset.pattern.permute.xlu0 1
    %1881 = vperm.xlu0 %1880, %v790
    %v1882 = vpop.permute.xlu0 %1881
    %1884 = vset.pattern.permute.xlu0 1
    %1885 = vperm.xlu0 %1884, %v791
    %v1886 = vpop.permute.xlu0 %1885
    %1888 = vset.pattern.permute.xlu0 1
    %1889 = vperm.xlu0 %1888, %v792
    %v1890 = vpop.permute.xlu0 %1889
    %1892 = vset.pattern.permute.xlu0 1
    %1893 = vperm.xlu0 %1892, %v793
    %v1894 = vpop.permute.xlu0 %1893
    %1896 = vset.pattern.permute.xlu0 1
    %1897 = vperm.xlu0 %1896, %v794
    %v1898 = vpop.permute.xlu0 %1897
    %1900 = vset.pattern.permute.xlu0 1
    %1901 = vperm.xlu0 %1900, %v795
    %v1902 = vpop.permute.xlu0 %1901
    %1904 = vset.pattern.permute.xlu0 1
    %1905 = vperm.xlu0 %1904, %v796
    %v1906 = vpop.permute.xlu0 %1905
    %1908 = vset.pattern.permute.xlu0 1
    %1909 = vperm.xlu0 %1908, %v797
    %v1910 = vpop.permute.xlu0 %1909
    %1912 = vset.pattern.permute.xlu0 1
    %1913 = vperm.xlu0 %1912, %v798
    %v1914 = vpop.permute.xlu0 %1913
    %1916 = vset.pattern.permute.xlu0 1
    %1917 = vperm.xlu0 %1916, %v799
    %v1918 = vpop.permute.xlu0 %1917
    %1920 = vset.pattern.permute.xlu0 1
    %1921 = vperm.xlu0 %1920, %v800
    %v1922 = vpop.permute.xlu0 %1921
    %1924 = vset.pattern.permute.xlu0 1
    %1925 = vperm.xlu0 %1924, %v801
    %v1926 = vpop.permute.xlu0 %1925
    %1928 = vset.pattern.permute.xlu0 1
    %1929 = vperm.xlu0 %1928, %v802
    %v1930 = vpop.permute.xlu0 %1929
    %1932 = vset.pattern.permute.xlu0 1
    %1933 = vperm.xlu0 %1932, %v803
    %v1934 = vpop.permute.xlu0 %1933
    %1936 = vset.pattern.permute.xlu0 1
    %1937 = vperm.xlu0 %1936, %v804
    %v1938 = vpop.permute.xlu0 %1937
    %1940 = vset.pattern.permute.xlu0 1
    %1941 = vperm.xlu0 %1940, %v805
    %v1942 = vpop.permute.xlu0 %1941
    %1944 = vset.pattern.permute.xlu0 1
    %1945 = vperm.xlu0 %1944, %v806
    %v1946 = vpop.permute.xlu0 %1945
    %1948 = vset.pattern.permute.xlu0 1
    %1949 = vperm.xlu0 %1948, %v807
    %v1950 = vpop.permute.xlu0 %1949
    %1952 = vset.pattern.permute.xlu0 1
    %1953 = vperm.xlu0 %1952, %v808
    %v1954 = vpop.permute.xlu0 %1953
    %1956 = vset.pattern.permute.xlu0 1
    %1957 = vperm.xlu0 %1956, %v809
    %v1958 = vpop.permute.xlu0 %1957
    %1960 = vset.pattern.permute.xlu0 1
    %1961 = vperm.xlu0 %1960, %v810
    %v1962 = vpop.permute.xlu0 %1961
    %1964 = vset.pattern.permute.xlu0 1
    %1965 = vperm.xlu0 %1964, %v811
    %v1966 = vpop.permute.xlu0 %1965
    %1968 = vset.pattern.permute.xlu0 1
    %1969 = vperm.xlu0 %1968, %v812
    %v1970 = vpop.permute.xlu0 %1969
    %1972 = vset.pattern.permute.xlu0 1
    %1973 = vperm.xlu0 %1972, %v813
    %v1974 = vpop.permute.xlu0 %1973
    %1976 = vset.pattern.permute.xlu0 1
    %1977 = vperm.xlu0 %1976, %v814
    %v1978 = vpop.permute.xlu0 %1977
    %1980 = vset.pattern.permute.xlu0 1
    %1981 = vperm.xlu0 %1980, %v815
    %v1982 = vpop.permute.xlu0 %1981
    %1984 = vset.pattern.permute.xlu0 1
    %1985 = vperm.xlu0 %1984, %v816
    %v1986 = vpop.permute.xlu0 %1985
    %1988 = vset.pattern.permute.xlu0 1
    %1989 = vperm.xlu0 %1988, %v817
    %v1990 = vpop.permute.xlu0 %1989
    %1992 = vset.pattern.permute.xlu0 1
    %1993 = vperm.xlu0 %1992, %v818
    %v1994 = vpop.permute.xlu0 %1993
    %1996 = vset.pattern.permute.xlu0 1
    %1997 = vperm.xlu0 %1996, %v819
    %v1998 = vpop.permute.xlu0 %1997
    %2000 = vset.pattern.permute.xlu0 1
    %2001 = vperm.xlu0 %2000, %v820
    %v2002 = vpop.permute.xlu0 %2001
    %2004 = vset.pattern.permute.xlu0 1
    %2005 = vperm.xlu0 %2004, %v821
    %v2006 = vpop.permute.xlu0 %2005
    %2008 = vset.pattern.permute.xlu0 1
    %2009 = vperm.xlu0 %2008, %v822
    %v2010 = vpop.permute.xlu0 %2009
    %2012 = vset.pattern.permute.xlu0 1
    %2013 = vperm.xlu0 %2012, %v823
    %v2014 = vpop.permute.xlu0 %2013
    %2016 = vset.pattern.permute.xlu0 1
    %2017 = vperm.xlu0 %2016, %v824
    %v2018 = vpop.permute.xlu0 %2017
    %2020 = vset.pattern.permute.xlu0 1
    %2021 = vperm.xlu0 %2020, %v825
    %v2022 = vpop.permute.xlu0 %2021
    %2024 = vset.pattern.permute.xlu0 1
    %2025 = vperm.xlu0 %2024, %v826
    %v2026 = vpop.permute.xlu0 %2025
    %2028 = vset.pattern.permute.xlu0 1
    %2029 = vperm.xlu0 %2028, %v827
    %v2030 = vpop.permute.xlu0 %2029
    %2032 = vset.pattern.permute.xlu0 1
    %2033 = vperm.xlu0 %2032, %v828
    %v2034 = vpop.permute.xlu0 %2033
    %2036 = vset.pattern.permute.xlu0 1
    %2037 = vperm.xlu0 %2036, %v829
    %v2038 = vpop.permute.xlu0 %2037
    %2040 = vset.pattern.permute.xlu0 1
    %2041 = vperm.xlu0 %2040, %v830
    %v2042 = vpop.permute.xlu0 %2041
    %2044 = vset.pattern.permute.xlu0 1
    %2045 = vperm.xlu0 %2044, %v831
    %v2046 = vpop.permute.xlu0 %2045
    %2048 = vset.pattern.permute.xlu0 1
    %2049 = vperm.xlu0 %2048, %v832
    %v2050 = vpop.permute.xlu0 %2049
    %2052 = vset.pattern.permute.xlu0 1
    %2053 = vperm.xlu0 %2052, %v833
    %v2054 = vpop.permute.xlu0 %2053
    %2056 = vset.pattern.permute.xlu0 1
    %2057 = vperm.xlu0 %2056, %v834
    %v2058 = vpop.permute.xlu0 %2057
    %2060 = vset.pattern.permute.xlu0 1
    %2061 = vperm.xlu0 %2060, %v835
    %v2062 = vpop.permute.xlu0 %2061
    %2064 = vset.pattern.permute.xlu0 1
    %2065 = vperm.xlu0 %2064, %v836
    %v2066 = vpop.permute.xlu0 %2065
    %2068 = vset.pattern.permute.xlu0 1
    %2069 = vperm.xlu0 %2068, %v837
    %v2070 = vpop.permute.xlu0 %2069
    %2072 = vset.pattern.permute.xlu0 1
    %2073 = vperm.xlu0 %2072, %v838
    %v2074 = vpop.permute.xlu0 %2073
    %2076 = vset.pattern.permute.xlu0 1
    %2077 = vperm.xlu0 %2076, %v839
    %v2078 = vpop.permute.xlu0 %2077
    %2080 = vset.pattern.permute.xlu0 1
    %2081 = vperm.xlu0 %2080, %v840
    %v2082 = vpop.permute.xlu0 %2081
    %2084 = vset.pattern.permute.xlu0 1
    %2085 = vperm.xlu0 %2084, %v841
    %v2086 = vpop.permute.xlu0 %2085
    %2088 = vset.pattern.permute.xlu0 1
    %2089 = vperm.xlu0 %2088, %v842
    %v2090 = vpop.permute.xlu0 %2089
    %2092 = vset.pattern.permute.xlu0 1
    %2093 = vperm.xlu0 %2092, %v843
    %v2094 = vpop.permute.xlu0 %2093
    %2096 = vset.pattern.permute.xlu0 1
    %2097 = vperm.xlu0 %2096, %v844
    %v2098 = vpop.permute.xlu0 %2097
    %2100 = vset.pattern.permute.xlu0 1
    %2101 = vperm.xlu0 %2100, %v845
    %v2102 = vpop.permute.xlu0 %2101
    %2104 = vset.pattern.permute.xlu0 1
    %2105 = vperm.xlu0 %2104, %v846
    %v2106 = vpop.permute.xlu0 %2105
    %2108 = vset.pattern.permute.xlu0 1
    %2109 = vperm.xlu0 %2108, %v847
    %v2110 = vpop.permute.xlu0 %2109
    %2112 = vset.pattern.permute.xlu0 1
    %2113 = vperm.xlu0 %2112, %v848
    %v2114 = vpop.permute.xlu0 %2113
    %2116 = vset.pattern.permute.xlu0 1
    %2117 = vperm.xlu0 %2116, %v849
    %v2118 = vpop.permute.xlu0 %2117
    %2120 = vset.pattern.permute.xlu0 1
    %2121 = vperm.xlu0 %2120, %v850
    %v2122 = vpop.permute.xlu0 %2121
    %2124 = vset.pattern.permute.xlu0 1
    %2125 = vperm.xlu0 %2124, %v851
    %v2126 = vpop.permute.xlu0 %2125
    %2128 = vset.pattern.permute.xlu0 1
    %2129 = vperm.xlu0 %2128, %v852
    %v2130 = vpop.permute.xlu0 %2129
    %2132 = vset.pattern.permute.xlu0 1
    %2133 = vperm.xlu0 %2132, %v853
    %v2134 = vpop.permute.xlu0 %2133
    %v2136 = vperm.slane %v854, 1
    %v2137 = vmul.f32 %v1626, %v2136
    %v2138 = vmul.f32 %v1630, %v2136
    %v2139 = vmul.f32 %v1634, %v2136
    %v2140 = vmul.f32 %v1638, %v2136
    %v2141 = vmul.f32 %v1642, %v2136
    %v2142 = vmul.f32 %v1646, %v2136
    %v2143 = vmul.f32 %v1650, %v2136
    %v2144 = vmul.f32 %v1654, %v2136
    %v2145 = vmul.f32 %v1658, %v2136
    %v2146 = vmul.f32 %v1662, %v2136
    %v2147 = vmul.f32 %v1666, %v2136
    %v2148 = vmul.f32 %v1670, %v2136
    %v2149 = vmul.f32 %v1674, %v2136
    %v2150 = vmul.f32 %v1678, %v2136
    %v2151 = vmul.f32 %v1682, %v2136
    %v2152 = vmul.f32 %v1686, %v2136
    %v2153 = vmul.f32 %v1690, %v2136
    %v2154 = vmul.f32 %v1694, %v2136
    %v2155 = vmul.f32 %v1698, %v2136
    %v2156 = vmul.f32 %v1702, %v2136
    %v2157 = vmul.f32 %v1706, %v2136
    %v2158 = vmul.f32 %v1710, %v2136
    %v2159 = vmul.f32 %v1714, %v2136
    %v2160 = vmul.f32 %v1718, %v2136
    %v2161 = vmul.f32 %v1722, %v2136
    %v2162 = vmul.f32 %v1726, %v2136
    %v2163 = vmul.f32 %v1730, %v2136
    %v2164 = vmul.f32 %v1734, %v2136
    %v2165 = vmul.f32 %v1738, %v2136
    %v2166 = vmul.f32 %v1742, %v2136
    %v2167 = vmul.f32 %v1746, %v2136
    %v2168 = vmul.f32 %v1750, %v2136
    %v2169 = vmul.f32 %v1754, %v2136
    %v2170 = vmul.f32 %v1758, %v2136
    %v2171 = vmul.f32 %v1762, %v2136
    %v2172 = vmul.f32 %v1766, %v2136
    %v2173 = vmul.f32 %v1770, %v2136
    %v2174 = vmul.f32 %v1774, %v2136
    %v2175 = vmul.f32 %v1778, %v2136
    %v2176 = vmul.f32 %v1782, %v2136
    %v2177 = vmul.f32 %v1786, %v2136
    %v2178 = vmul.f32 %v1790, %v2136
    %v2179 = vmul.f32 %v1794, %v2136
    %v2180 = vmul.f32 %v1798, %v2136
    %v2181 = vmul.f32 %v1802, %v2136
    %v2182 = vmul.f32 %v1806, %v2136
    %v2183 = vmul.f32 %v1810, %v2136
    %v2184 = vmul.f32 %v1814, %v2136
    %v2185 = vmul.f32 %v1818, %v2136
    %v2186 = vmul.f32 %v1822, %v2136
    %v2187 = vmul.f32 %v1826, %v2136
    %v2188 = vmul.f32 %v1830, %v2136
    %v2189 = vmul.f32 %v1834, %v2136
    %v2190 = vmul.f32 %v1838, %v2136
    %v2191 = vmul.f32 %v1842, %v2136
    %v2192 = vmul.f32 %v1846, %v2136
    %v2193 = vmul.f32 %v1850, %v2136
    %v2194 = vmul.f32 %v1854, %v2136
    %v2195 = vmul.f32 %v1858, %v2136
    %v2196 = vmul.f32 %v1862, %v2136
    %v2197 = vmul.f32 %v1866, %v2136
    %v2198 = vmul.f32 %v1870, %v2136
    %v2199 = vmul.f32 %v1874, %v2136
    %v2200 = vmul.f32 %v1878, %v2136
    %v2201 = vmul.f32 %v1882, %v2136
    %v2202 = vmul.f32 %v1886, %v2136
    %v2203 = vmul.f32 %v1890, %v2136
    %v2204 = vmul.f32 %v1894, %v2136
    %v2205 = vmul.f32 %v1898, %v2136
    %v2206 = vmul.f32 %v1902, %v2136
    %v2207 = vmul.f32 %v1906, %v2136
    %v2208 = vmul.f32 %v1910, %v2136
    %v2209 = vmul.f32 %v1914, %v2136
    %v2210 = vmul.f32 %v1918, %v2136
    %v2211 = vmul.f32 %v1922, %v2136
    %v2212 = vmul.f32 %v1926, %v2136
    %v2213 = vmul.f32 %v1930, %v2136
    %v2214 = vmul.f32 %v1934, %v2136
    %v2215 = vmul.f32 %v1938, %v2136
    %v2216 = vmul.f32 %v1942, %v2136
    %v2217 = vmul.f32 %v1946, %v2136
    %v2218 = vmul.f32 %v1950, %v2136
    %v2219 = vmul.f32 %v1954, %v2136
    %v2220 = vmul.f32 %v1958, %v2136
    %v2221 = vmul.f32 %v1962, %v2136
    %v2222 = vmul.f32 %v1966, %v2136
    %v2223 = vmul.f32 %v1970, %v2136
    %v2224 = vmul.f32 %v1974, %v2136
    %v2225 = vmul.f32 %v1978, %v2136
    %v2226 = vmul.f32 %v1982, %v2136
    %v2227 = vmul.f32 %v1986, %v2136
    %v2228 = vmul.f32 %v1990, %v2136
    %v2229 = vmul.f32 %v1994, %v2136
    %v2230 = vmul.f32 %v1998, %v2136
    %v2231 = vmul.f32 %v2002, %v2136
    %v2232 = vmul.f32 %v2006, %v2136
    %v2233 = vmul.f32 %v2010, %v2136
    %v2234 = vmul.f32 %v2014, %v2136
    %v2235 = vmul.f32 %v2018, %v2136
    %v2236 = vmul.f32 %v2022, %v2136
    %v2237 = vmul.f32 %v2026, %v2136
    %v2238 = vmul.f32 %v2030, %v2136
    %v2239 = vmul.f32 %v2034, %v2136
    %v2240 = vmul.f32 %v2038, %v2136
    %v2241 = vmul.f32 %v2042, %v2136
    %v2242 = vmul.f32 %v2046, %v2136
    %v2243 = vmul.f32 %v2050, %v2136
    %v2244 = vmul.f32 %v2054, %v2136
    %v2245 = vmul.f32 %v2058, %v2136
    %v2246 = vmul.f32 %v2062, %v2136
    %v2247 = vmul.f32 %v2066, %v2136
    %v2248 = vmul.f32 %v2070, %v2136
    %v2249 = vmul.f32 %v2074, %v2136
    %v2250 = vmul.f32 %v2078, %v2136
    %v2251 = vmul.f32 %v2082, %v2136
    %v2252 = vmul.f32 %v2086, %v2136
    %v2253 = vmul.f32 %v2090, %v2136
    %v2254 = vmul.f32 %v2094, %v2136
    %v2255 = vmul.f32 %v2098, %v2136
    %v2256 = vmul.f32 %v2102, %v2136
    %v2257 = vmul.f32 %v2106, %v2136
    %v2258 = vmul.f32 %v2110, %v2136
    %v2259 = vmul.f32 %v2114, %v2136
    %v2260 = vmul.f32 %v2118, %v2136
    %v2261 = vmul.f32 %v2122, %v2136
    %v2262 = vmul.f32 %v2126, %v2136
    %v2263 = vmul.f32 %v2130, %v2136
    %v2264 = vmul.f32 %v2134, %v2136
    %v2265 = vadd.f32 %v1496, %v2137
    %v2266 = vadd.f32 %v1497, %v2138
    %v2267 = vadd.f32 %v1498, %v2139
    %v2268 = vadd.f32 %v1499, %v2140
    %v2269 = vadd.f32 %v1500, %v2141
    %v2270 = vadd.f32 %v1501, %v2142
    %v2271 = vadd.f32 %v1502, %v2143
    %v2272 = vadd.f32 %v1503, %v2144
    %v2273 = vadd.f32 %v1504, %v2145
    %v2274 = vadd.f32 %v1505, %v2146
    %v2275 = vadd.f32 %v1506, %v2147
    %v2276 = vadd.f32 %v1507, %v2148
    %v2277 = vadd.f32 %v1508, %v2149
    %v2278 = vadd.f32 %v1509, %v2150
    %v2279 = vadd.f32 %v1510, %v2151
    %v2280 = vadd.f32 %v1511, %v2152
    %v2281 = vadd.f32 %v1512, %v2153
    %v2282 = vadd.f32 %v1513, %v2154
    %v2283 = vadd.f32 %v1514, %v2155
    %v2284 = vadd.f32 %v1515, %v2156
    %v2285 = vadd.f32 %v1516, %v2157
    %v2286 = vadd.f32 %v1517, %v2158
    %v2287 = vadd.f32 %v1518, %v2159
    %v2288 = vadd.f32 %v1519, %v2160
    %v2289 = vadd.f32 %v1520, %v2161
    %v2290 = vadd.f32 %v1521, %v2162
    %v2291 = vadd.f32 %v1522, %v2163
    %v2292 = vadd.f32 %v1523, %v2164
    %v2293 = vadd.f32 %v1524, %v2165
    %v2294 = vadd.f32 %v1525, %v2166
    %v2295 = vadd.f32 %v1526, %v2167
    %v2296 = vadd.f32 %v1527, %v2168
    %v2297 = vadd.f32 %v1528, %v2169
    %v2298 = vadd.f32 %v1529, %v2170
    %v2299 = vadd.f32 %v1530, %v2171
    %v2300 = vadd.f32 %v1531, %v2172
    %v2301 = vadd.f32 %v1532, %v2173
    %v2302 = vadd.f32 %v1533, %v2174
    %v2303 = vadd.f32 %v1534, %v2175
    %v2304 = vadd.f32 %v1535, %v2176
    %v2305 = vadd.f32 %v1536, %v2177
    %v2306 = vadd.f32 %v1537, %v2178
    %v2307 = vadd.f32 %v1538, %v2179
    %v2308 = vadd.f32 %v1539, %v2180
    %v2309 = vadd.f32 %v1540, %v2181
    %v2310 = vadd.f32 %v1541, %v2182
    %v2311 = vadd.f32 %v1542, %v2183
    %v2312 = vadd.f32 %v1543, %v2184
    %v2313 = vadd.f32 %v1544, %v2185
    %v2314 = vadd.f32 %v1545, %v2186
    %v2315 = vadd.f32 %v1546, %v2187
    %v2316 = vadd.f32 %v1547, %v2188
    %v2317 = vadd.f32 %v1548, %v2189
    %v2318 = vadd.f32 %v1549, %v2190
    %v2319 = vadd.f32 %v1550, %v2191
    %v2320 = vadd.f32 %v1551, %v2192
    %v2321 = vadd.f32 %v1552, %v2193
    %v2322 = vadd.f32 %v1553, %v2194
    %v2323 = vadd.f32 %v1554, %v2195
    %v2324 = vadd.f32 %v1555, %v2196
    %v2325 = vadd.f32 %v1556, %v2197
    %v2326 = vadd.f32 %v1557, %v2198
    %v2327 = vadd.f32 %v1558, %v2199
    %v2328 = vadd.f32 %v1559, %v2200
    %v2329 = vadd.f32 %v1560, %v2201
    %v2330 = vadd.f32 %v1561, %v2202
    %v2331 = vadd.f32 %v1562, %v2203
    %v2332 = vadd.f32 %v1563, %v2204
    %v2333 = vadd.f32 %v1564, %v2205
    %v2334 = vadd.f32 %v1565, %v2206
    %v2335 = vadd.f32 %v1566, %v2207
    %v2336 = vadd.f32 %v1567, %v2208
    %v2337 = vadd.f32 %v1568, %v2209
    %v2338 = vadd.f32 %v1569, %v2210
    %v2339 = vadd.f32 %v1570, %v2211
    %v2340 = vadd.f32 %v1571, %v2212
    %v2341 = vadd.f32 %v1572, %v2213
    %v2342 = vadd.f32 %v1573, %v2214
    %v2343 = vadd.f32 %v1574, %v2215
    %v2344 = vadd.f32 %v1575, %v2216
    %v2345 = vadd.f32 %v1576, %v2217
    %v2346 = vadd.f32 %v1577, %v2218
    %v2347 = vadd.f32 %v1578, %v2219
    %v2348 = vadd.f32 %v1579, %v2220
    %v2349 = vadd.f32 %v1580, %v2221
    %v2350 = vadd.f32 %v1581, %v2222
    %v2351 = vadd.f32 %v1582, %v2223
    %v2352 = vadd.f32 %v1583, %v2224
    %v2353 = vadd.f32 %v1584, %v2225
    %v2354 = vadd.f32 %v1585, %v2226
    %v2355 = vadd.f32 %v1586, %v2227
    %v2356 = vadd.f32 %v1587, %v2228
    %v2357 = vadd.f32 %v1588, %v2229
    %v2358 = vadd.f32 %v1589, %v2230
    %v2359 = vadd.f32 %v1590, %v2231
    %v2360 = vadd.f32 %v1591, %v2232
    %v2361 = vadd.f32 %v1592, %v2233
    %v2362 = vadd.f32 %v1593, %v2234
    %v2363 = vadd.f32 %v1594, %v2235
    %v2364 = vadd.f32 %v1595, %v2236
    %v2365 = vadd.f32 %v1596, %v2237
    %v2366 = vadd.f32 %v1597, %v2238
    %v2367 = vadd.f32 %v1598, %v2239
    %v2368 = vadd.f32 %v1599, %v2240
    %v2369 = vadd.f32 %v1600, %v2241
    %v2370 = vadd.f32 %v1601, %v2242
    %v2371 = vadd.f32 %v1602, %v2243
    %v2372 = vadd.f32 %v1603, %v2244
    %v2373 = vadd.f32 %v1604, %v2245
    %v2374 = vadd.f32 %v1605, %v2246
    %v2375 = vadd.f32 %v1606, %v2247
    %v2376 = vadd.f32 %v1607, %v2248
    %v2377 = vadd.f32 %v1608, %v2249
    %v2378 = vadd.f32 %v1609, %v2250
    %v2379 = vadd.f32 %v1610, %v2251
    %v2380 = vadd.f32 %v1611, %v2252
    %v2381 = vadd.f32 %v1612, %v2253
    %v2382 = vadd.f32 %v1613, %v2254
    %v2383 = vadd.f32 %v1614, %v2255
    %v2384 = vadd.f32 %v1615, %v2256
    %v2385 = vadd.f32 %v1616, %v2257
    %v2386 = vadd.f32 %v1617, %v2258
    %v2387 = vadd.f32 %v1618, %v2259
    %v2388 = vadd.f32 %v1619, %v2260
    %v2389 = vadd.f32 %v1620, %v2261
    %v2390 = vadd.f32 %v1621, %v2262
    %v2391 = vadd.f32 %v1622, %v2263
    %v2392 = vadd.f32 %v1623, %v2264
    %2393 = vset.pattern.permute.xlu0 2
    %2394 = vperm.xlu0 %2393, %v726
    %v2395 = vpop.permute.xlu0 %2394
    %2397 = vset.pattern.permute.xlu0 2
    %2398 = vperm.xlu0 %2397, %v727
    %v2399 = vpop.permute.xlu0 %2398
    %2401 = vset.pattern.permute.xlu0 2
    %2402 = vperm.xlu0 %2401, %v728
    %v2403 = vpop.permute.xlu0 %2402
    %2405 = vset.pattern.permute.xlu0 2
    %2406 = vperm.xlu0 %2405, %v729
    %v2407 = vpop.permute.xlu0 %2406
    %2409 = vset.pattern.permute.xlu0 2
    %2410 = vperm.xlu0 %2409, %v730
    %v2411 = vpop.permute.xlu0 %2410
    %2413 = vset.pattern.permute.xlu0 2
    %2414 = vperm.xlu0 %2413, %v731
    %v2415 = vpop.permute.xlu0 %2414
    %2417 = vset.pattern.permute.xlu0 2
    %2418 = vperm.xlu0 %2417, %v732
    %v2419 = vpop.permute.xlu0 %2418
    %2421 = vset.pattern.permute.xlu0 2
    %2422 = vperm.xlu0 %2421, %v733
    %v2423 = vpop.permute.xlu0 %2422
    %2425 = vset.pattern.permute.xlu0 2
    %2426 = vperm.xlu0 %2425, %v734
    %v2427 = vpop.permute.xlu0 %2426
    %2429 = vset.pattern.permute.xlu0 2
    %2430 = vperm.xlu0 %2429, %v735
    %v2431 = vpop.permute.xlu0 %2430
    %2433 = vset.pattern.permute.xlu0 2
    %2434 = vperm.xlu0 %2433, %v736
    %v2435 = vpop.permute.xlu0 %2434
    %2437 = vset.pattern.permute.xlu0 2
    %2438 = vperm.xlu0 %2437, %v737
    %v2439 = vpop.permute.xlu0 %2438
    %2441 = vset.pattern.permute.xlu0 2
    %2442 = vperm.xlu0 %2441, %v738
    %v2443 = vpop.permute.xlu0 %2442
    %2445 = vset.pattern.permute.xlu0 2
    %2446 = vperm.xlu0 %2445, %v739
    %v2447 = vpop.permute.xlu0 %2446
    %2449 = vset.pattern.permute.xlu0 2
    %2450 = vperm.xlu0 %2449, %v740
    %v2451 = vpop.permute.xlu0 %2450
    %2453 = vset.pattern.permute.xlu0 2
    %2454 = vperm.xlu0 %2453, %v741
    %v2455 = vpop.permute.xlu0 %2454
    %2457 = vset.pattern.permute.xlu0 2
    %2458 = vperm.xlu0 %2457, %v742
    %v2459 = vpop.permute.xlu0 %2458
    %2461 = vset.pattern.permute.xlu0 2
    %2462 = vperm.xlu0 %2461, %v743
    %v2463 = vpop.permute.xlu0 %2462
    %2465 = vset.pattern.permute.xlu0 2
    %2466 = vperm.xlu0 %2465, %v744
    %v2467 = vpop.permute.xlu0 %2466
    %2469 = vset.pattern.permute.xlu0 2
    %2470 = vperm.xlu0 %2469, %v745
    %v2471 = vpop.permute.xlu0 %2470
    %2473 = vset.pattern.permute.xlu0 2
    %2474 = vperm.xlu0 %2473, %v746
    %v2475 = vpop.permute.xlu0 %2474
    %2477 = vset.pattern.permute.xlu0 2
    %2478 = vperm.xlu0 %2477, %v747
    %v2479 = vpop.permute.xlu0 %2478
    %2481 = vset.pattern.permute.xlu0 2
    %2482 = vperm.xlu0 %2481, %v748
    %v2483 = vpop.permute.xlu0 %2482
    %2485 = vset.pattern.permute.xlu0 2
    %2486 = vperm.xlu0 %2485, %v749
    %v2487 = vpop.permute.xlu0 %2486
    %2489 = vset.pattern.permute.xlu0 2
    %2490 = vperm.xlu0 %2489, %v750
    %v2491 = vpop.permute.xlu0 %2490
    %2493 = vset.pattern.permute.xlu0 2
    %2494 = vperm.xlu0 %2493, %v751
    %v2495 = vpop.permute.xlu0 %2494
    %2497 = vset.pattern.permute.xlu0 2
    %2498 = vperm.xlu0 %2497, %v752
    %v2499 = vpop.permute.xlu0 %2498
    %2501 = vset.pattern.permute.xlu0 2
    %2502 = vperm.xlu0 %2501, %v753
    %v2503 = vpop.permute.xlu0 %2502
    %2505 = vset.pattern.permute.xlu0 2
    %2506 = vperm.xlu0 %2505, %v754
    %v2507 = vpop.permute.xlu0 %2506
    %2509 = vset.pattern.permute.xlu0 2
    %2510 = vperm.xlu0 %2509, %v755
    %v2511 = vpop.permute.xlu0 %2510
    %2513 = vset.pattern.permute.xlu0 2
    %2514 = vperm.xlu0 %2513, %v756
    %v2515 = vpop.permute.xlu0 %2514
    %2517 = vset.pattern.permute.xlu0 2
    %2518 = vperm.xlu0 %2517, %v757
    %v2519 = vpop.permute.xlu0 %2518
    %2521 = vset.pattern.permute.xlu0 2
    %2522 = vperm.xlu0 %2521, %v758
    %v2523 = vpop.permute.xlu0 %2522
    %2525 = vset.pattern.permute.xlu0 2
    %2526 = vperm.xlu0 %2525, %v759
    %v2527 = vpop.permute.xlu0 %2526
    %2529 = vset.pattern.permute.xlu0 2
    %2530 = vperm.xlu0 %2529, %v760
    %v2531 = vpop.permute.xlu0 %2530
    %2533 = vset.pattern.permute.xlu0 2
    %2534 = vperm.xlu0 %2533, %v761
    %v2535 = vpop.permute.xlu0 %2534
    %2537 = vset.pattern.permute.xlu0 2
    %2538 = vperm.xlu0 %2537, %v762
    %v2539 = vpop.permute.xlu0 %2538
    %2541 = vset.pattern.permute.xlu0 2
    %2542 = vperm.xlu0 %2541, %v763
    %v2543 = vpop.permute.xlu0 %2542
    %2545 = vset.pattern.permute.xlu0 2
    %2546 = vperm.xlu0 %2545, %v764
    %v2547 = vpop.permute.xlu0 %2546
    %2549 = vset.pattern.permute.xlu0 2
    %2550 = vperm.xlu0 %2549, %v765
    %v2551 = vpop.permute.xlu0 %2550
    %2553 = vset.pattern.permute.xlu0 2
    %2554 = vperm.xlu0 %2553, %v766
    %v2555 = vpop.permute.xlu0 %2554
    %2557 = vset.pattern.permute.xlu0 2
    %2558 = vperm.xlu0 %2557, %v767
    %v2559 = vpop.permute.xlu0 %2558
    %2561 = vset.pattern.permute.xlu0 2
    %2562 = vperm.xlu0 %2561, %v768
    %v2563 = vpop.permute.xlu0 %2562
    %2565 = vset.pattern.permute.xlu0 2
    %2566 = vperm.xlu0 %2565, %v769
    %v2567 = vpop.permute.xlu0 %2566
    %2569 = vset.pattern.permute.xlu0 2
    %2570 = vperm.xlu0 %2569, %v770
    %v2571 = vpop.permute.xlu0 %2570
    %2573 = vset.pattern.permute.xlu0 2
    %2574 = vperm.xlu0 %2573, %v771
    %v2575 = vpop.permute.xlu0 %2574
    %2577 = vset.pattern.permute.xlu0 2
    %2578 = vperm.xlu0 %2577, %v772
    %v2579 = vpop.permute.xlu0 %2578
    %2581 = vset.pattern.permute.xlu0 2
    %2582 = vperm.xlu0 %2581, %v773
    %v2583 = vpop.permute.xlu0 %2582
    %2585 = vset.pattern.permute.xlu0 2
    %2586 = vperm.xlu0 %2585, %v774
    %v2587 = vpop.permute.xlu0 %2586
    %2589 = vset.pattern.permute.xlu0 2
    %2590 = vperm.xlu0 %2589, %v775
    %v2591 = vpop.permute.xlu0 %2590
    %2593 = vset.pattern.permute.xlu0 2
    %2594 = vperm.xlu0 %2593, %v776
    %v2595 = vpop.permute.xlu0 %2594
    %2597 = vset.pattern.permute.xlu0 2
    %2598 = vperm.xlu0 %2597, %v777
    %v2599 = vpop.permute.xlu0 %2598
    %2601 = vset.pattern.permute.xlu0 2
    %2602 = vperm.xlu0 %2601, %v778
    %v2603 = vpop.permute.xlu0 %2602
    %2605 = vset.pattern.permute.xlu0 2
    %2606 = vperm.xlu0 %2605, %v779
    %v2607 = vpop.permute.xlu0 %2606
    %2609 = vset.pattern.permute.xlu0 2
    %2610 = vperm.xlu0 %2609, %v780
    %v2611 = vpop.permute.xlu0 %2610
    %2613 = vset.pattern.permute.xlu0 2
    %2614 = vperm.xlu0 %2613, %v781
    %v2615 = vpop.permute.xlu0 %2614
    %2617 = vset.pattern.permute.xlu0 2
    %2618 = vperm.xlu0 %2617, %v782
    %v2619 = vpop.permute.xlu0 %2618
    %2621 = vset.pattern.permute.xlu0 2
    %2622 = vperm.xlu0 %2621, %v783
    %v2623 = vpop.permute.xlu0 %2622
    %2625 = vset.pattern.permute.xlu0 2
    %2626 = vperm.xlu0 %2625, %v784
    %v2627 = vpop.permute.xlu0 %2626
    %2629 = vset.pattern.permute.xlu0 2
    %2630 = vperm.xlu0 %2629, %v785
    %v2631 = vpop.permute.xlu0 %2630
    %2633 = vset.pattern.permute.xlu0 2
    %2634 = vperm.xlu0 %2633, %v786
    %v2635 = vpop.permute.xlu0 %2634
    %2637 = vset.pattern.permute.xlu0 2
    %2638 = vperm.xlu0 %2637, %v787
    %v2639 = vpop.permute.xlu0 %2638
    %2641 = vset.pattern.permute.xlu0 2
    %2642 = vperm.xlu0 %2641, %v788
    %v2643 = vpop.permute.xlu0 %2642
    %2645 = vset.pattern.permute.xlu0 2
    %2646 = vperm.xlu0 %2645, %v789
    %v2647 = vpop.permute.xlu0 %2646
    %2649 = vset.pattern.permute.xlu0 2
    %2650 = vperm.xlu0 %2649, %v790
    %v2651 = vpop.permute.xlu0 %2650
    %2653 = vset.pattern.permute.xlu0 2
    %2654 = vperm.xlu0 %2653, %v791
    %v2655 = vpop.permute.xlu0 %2654
    %2657 = vset.pattern.permute.xlu0 2
    %2658 = vperm.xlu0 %2657, %v792
    %v2659 = vpop.permute.xlu0 %2658
    %2661 = vset.pattern.permute.xlu0 2
    %2662 = vperm.xlu0 %2661, %v793
    %v2663 = vpop.permute.xlu0 %2662
    %2665 = vset.pattern.permute.xlu0 2
    %2666 = vperm.xlu0 %2665, %v794
    %v2667 = vpop.permute.xlu0 %2666
    %2669 = vset.pattern.permute.xlu0 2
    %2670 = vperm.xlu0 %2669, %v795
    %v2671 = vpop.permute.xlu0 %2670
    %2673 = vset.pattern.permute.xlu0 2
    %2674 = vperm.xlu0 %2673, %v796
    %v2675 = vpop.permute.xlu0 %2674
    %2677 = vset.pattern.permute.xlu0 2
    %2678 = vperm.xlu0 %2677, %v797
    %v2679 = vpop.permute.xlu0 %2678
    %2681 = vset.pattern.permute.xlu0 2
    %2682 = vperm.xlu0 %2681, %v798
    %v2683 = vpop.permute.xlu0 %2682
    %2685 = vset.pattern.permute.xlu0 2
    %2686 = vperm.xlu0 %2685, %v799
    %v2687 = vpop.permute.xlu0 %2686
    %2689 = vset.pattern.permute.xlu0 2
    %2690 = vperm.xlu0 %2689, %v800
    %v2691 = vpop.permute.xlu0 %2690
    %2693 = vset.pattern.permute.xlu0 2
    %2694 = vperm.xlu0 %2693, %v801
    %v2695 = vpop.permute.xlu0 %2694
    %2697 = vset.pattern.permute.xlu0 2
    %2698 = vperm.xlu0 %2697, %v802
    %v2699 = vpop.permute.xlu0 %2698
    %2701 = vset.pattern.permute.xlu0 2
    %2702 = vperm.xlu0 %2701, %v803
    %v2703 = vpop.permute.xlu0 %2702
    %2705 = vset.pattern.permute.xlu0 2
    %2706 = vperm.xlu0 %2705, %v804
    %v2707 = vpop.permute.xlu0 %2706
    %2709 = vset.pattern.permute.xlu0 2
    %2710 = vperm.xlu0 %2709, %v805
    %v2711 = vpop.permute.xlu0 %2710
    %2713 = vset.pattern.permute.xlu0 2
    %2714 = vperm.xlu0 %2713, %v806
    %v2715 = vpop.permute.xlu0 %2714
    %2717 = vset.pattern.permute.xlu0 2
    %2718 = vperm.xlu0 %2717, %v807
    %v2719 = vpop.permute.xlu0 %2718
    %2721 = vset.pattern.permute.xlu0 2
    %2722 = vperm.xlu0 %2721, %v808
    %v2723 = vpop.permute.xlu0 %2722
    %2725 = vset.pattern.permute.xlu0 2
    %2726 = vperm.xlu0 %2725, %v809
    %v2727 = vpop.permute.xlu0 %2726
    %2729 = vset.pattern.permute.xlu0 2
    %2730 = vperm.xlu0 %2729, %v810
    %v2731 = vpop.permute.xlu0 %2730
    %2733 = vset.pattern.permute.xlu0 2
    %2734 = vperm.xlu0 %2733, %v811
    %v2735 = vpop.permute.xlu0 %2734
    %2737 = vset.pattern.permute.xlu0 2
    %2738 = vperm.xlu0 %2737, %v812
    %v2739 = vpop.permute.xlu0 %2738
    %2741 = vset.pattern.permute.xlu0 2
    %2742 = vperm.xlu0 %2741, %v813
    %v2743 = vpop.permute.xlu0 %2742
    %2745 = vset.pattern.permute.xlu0 2
    %2746 = vperm.xlu0 %2745, %v814
    %v2747 = vpop.permute.xlu0 %2746
    %2749 = vset.pattern.permute.xlu0 2
    %2750 = vperm.xlu0 %2749, %v815
    %v2751 = vpop.permute.xlu0 %2750
    %2753 = vset.pattern.permute.xlu0 2
    %2754 = vperm.xlu0 %2753, %v816
    %v2755 = vpop.permute.xlu0 %2754
    %2757 = vset.pattern.permute.xlu0 2
    %2758 = vperm.xlu0 %2757, %v817
    %v2759 = vpop.permute.xlu0 %2758
    %2761 = vset.pattern.permute.xlu0 2
    %2762 = vperm.xlu0 %2761, %v818
    %v2763 = vpop.permute.xlu0 %2762
    %2765 = vset.pattern.permute.xlu0 2
    %2766 = vperm.xlu0 %2765, %v819
    %v2767 = vpop.permute.xlu0 %2766
    %2769 = vset.pattern.permute.xlu0 2
    %2770 = vperm.xlu0 %2769, %v820
    %v2771 = vpop.permute.xlu0 %2770
    %2773 = vset.pattern.permute.xlu0 2
    %2774 = vperm.xlu0 %2773, %v821
    %v2775 = vpop.permute.xlu0 %2774
    %2777 = vset.pattern.permute.xlu0 2
    %2778 = vperm.xlu0 %2777, %v822
    %v2779 = vpop.permute.xlu0 %2778
    %2781 = vset.pattern.permute.xlu0 2
    %2782 = vperm.xlu0 %2781, %v823
    %v2783 = vpop.permute.xlu0 %2782
    %2785 = vset.pattern.permute.xlu0 2
    %2786 = vperm.xlu0 %2785, %v824
    %v2787 = vpop.permute.xlu0 %2786
    %2789 = vset.pattern.permute.xlu0 2
    %2790 = vperm.xlu0 %2789, %v825
    %v2791 = vpop.permute.xlu0 %2790
    %2793 = vset.pattern.permute.xlu0 2
    %2794 = vperm.xlu0 %2793, %v826
    %v2795 = vpop.permute.xlu0 %2794
    %2797 = vset.pattern.permute.xlu0 2
    %2798 = vperm.xlu0 %2797, %v827
    %v2799 = vpop.permute.xlu0 %2798
    %2801 = vset.pattern.permute.xlu0 2
    %2802 = vperm.xlu0 %2801, %v828
    %v2803 = vpop.permute.xlu0 %2802
    %2805 = vset.pattern.permute.xlu0 2
    %2806 = vperm.xlu0 %2805, %v829
    %v2807 = vpop.permute.xlu0 %2806
    %2809 = vset.pattern.permute.xlu0 2
    %2810 = vperm.xlu0 %2809, %v830
    %v2811 = vpop.permute.xlu0 %2810
    %2813 = vset.pattern.permute.xlu0 2
    %2814 = vperm.xlu0 %2813, %v831
    %v2815 = vpop.permute.xlu0 %2814
    %2817 = vset.pattern.permute.xlu0 2
    %2818 = vperm.xlu0 %2817, %v832
    %v2819 = vpop.permute.xlu0 %2818
    %2821 = vset.pattern.permute.xlu0 2
    %2822 = vperm.xlu0 %2821, %v833
    %v2823 = vpop.permute.xlu0 %2822
    %2825 = vset.pattern.permute.xlu0 2
    %2826 = vperm.xlu0 %2825, %v834
    %v2827 = vpop.permute.xlu0 %2826
    %2829 = vset.pattern.permute.xlu0 2
    %2830 = vperm.xlu0 %2829, %v835
    %v2831 = vpop.permute.xlu0 %2830
    %2833 = vset.pattern.permute.xlu0 2
    %2834 = vperm.xlu0 %2833, %v836
    %v2835 = vpop.permute.xlu0 %2834
    %2837 = vset.pattern.permute.xlu0 2
    %2838 = vperm.xlu0 %2837, %v837
    %v2839 = vpop.permute.xlu0 %2838
    %2841 = vset.pattern.permute.xlu0 2
    %2842 = vperm.xlu0 %2841, %v838
    %v2843 = vpop.permute.xlu0 %2842
    %2845 = vset.pattern.permute.xlu0 2
    %2846 = vperm.xlu0 %2845, %v839
    %v2847 = vpop.permute.xlu0 %2846
    %2849 = vset.pattern.permute.xlu0 2
    %2850 = vperm.xlu0 %2849, %v840
    %v2851 = vpop.permute.xlu0 %2850
    %2853 = vset.pattern.permute.xlu0 2
    %2854 = vperm.xlu0 %2853, %v841
    %v2855 = vpop.permute.xlu0 %2854
    %2857 = vset.pattern.permute.xlu0 2
    %2858 = vperm.xlu0 %2857, %v842
    %v2859 = vpop.permute.xlu0 %2858
    %2861 = vset.pattern.permute.xlu0 2
    %2862 = vperm.xlu0 %2861, %v843
    %v2863 = vpop.permute.xlu0 %2862
    %2865 = vset.pattern.permute.xlu0 2
    %2866 = vperm.xlu0 %2865, %v844
    %v2867 = vpop.permute.xlu0 %2866
    %2869 = vset.pattern.permute.xlu0 2
    %2870 = vperm.xlu0 %2869, %v845
    %v2871 = vpop.permute.xlu0 %2870
    %2873 = vset.pattern.permute.xlu0 2
    %2874 = vperm.xlu0 %2873, %v846
    %v2875 = vpop.permute.xlu0 %2874
    %2877 = vset.pattern.permute.xlu0 2
    %2878 = vperm.xlu0 %2877, %v847
    %v2879 = vpop.permute.xlu0 %2878
    %2881 = vset.pattern.permute.xlu0 2
    %2882 = vperm.xlu0 %2881, %v848
    %v2883 = vpop.permute.xlu0 %2882
    %2885 = vset.pattern.permute.xlu0 2
    %2886 = vperm.xlu0 %2885, %v849
    %v2887 = vpop.permute.xlu0 %2886
    %2889 = vset.pattern.permute.xlu0 2
    %2890 = vperm.xlu0 %2889, %v850
    %v2891 = vpop.permute.xlu0 %2890
    %2893 = vset.pattern.permute.xlu0 2
    %2894 = vperm.xlu0 %2893, %v851
    %v2895 = vpop.permute.xlu0 %2894
    %2897 = vset.pattern.permute.xlu0 2
    %2898 = vperm.xlu0 %2897, %v852
    %v2899 = vpop.permute.xlu0 %2898
    %2901 = vset.pattern.permute.xlu0 2
    %2902 = vperm.xlu0 %2901, %v853
    %v2903 = vpop.permute.xlu0 %2902
    %v2905 = vperm.slane %v854, 2
    %v2906 = vmul.f32 %v2395, %v2905
    %v2907 = vmul.f32 %v2399, %v2905
    %v2908 = vmul.f32 %v2403, %v2905
    %v2909 = vmul.f32 %v2407, %v2905
    %v2910 = vmul.f32 %v2411, %v2905
    %v2911 = vmul.f32 %v2415, %v2905
    %v2912 = vmul.f32 %v2419, %v2905
    %v2913 = vmul.f32 %v2423, %v2905
    %v2914 = vmul.f32 %v2427, %v2905
    %v2915 = vmul.f32 %v2431, %v2905
    %v2916 = vmul.f32 %v2435, %v2905
    %v2917 = vmul.f32 %v2439, %v2905
    %v2918 = vmul.f32 %v2443, %v2905
    %v2919 = vmul.f32 %v2447, %v2905
    %v2920 = vmul.f32 %v2451, %v2905
    %v2921 = vmul.f32 %v2455, %v2905
    %v2922 = vmul.f32 %v2459, %v2905
    %v2923 = vmul.f32 %v2463, %v2905
    %v2924 = vmul.f32 %v2467, %v2905
    %v2925 = vmul.f32 %v2471, %v2905
    %v2926 = vmul.f32 %v2475, %v2905
    %v2927 = vmul.f32 %v2479, %v2905
    %v2928 = vmul.f32 %v2483, %v2905
    %v2929 = vmul.f32 %v2487, %v2905
    %v2930 = vmul.f32 %v2491, %v2905
    %v2931 = vmul.f32 %v2495, %v2905
    %v2932 = vmul.f32 %v2499, %v2905
    %v2933 = vmul.f32 %v2503, %v2905
    %v2934 = vmul.f32 %v2507, %v2905
    %v2935 = vmul.f32 %v2511, %v2905
    %v2936 = vmul.f32 %v2515, %v2905
    %v2937 = vmul.f32 %v2519, %v2905
    %v2938 = vmul.f32 %v2523, %v2905
    %v2939 = vmul.f32 %v2527, %v2905
    %v2940 = vmul.f32 %v2531, %v2905
    %v2941 = vmul.f32 %v2535, %v2905
    %v2942 = vmul.f32 %v2539, %v2905
    %v2943 = vmul.f32 %v2543, %v2905
    %v2944 = vmul.f32 %v2547, %v2905
    %v2945 = vmul.f32 %v2551, %v2905
    %v2946 = vmul.f32 %v2555, %v2905
    %v2947 = vmul.f32 %v2559, %v2905
    %v2948 = vmul.f32 %v2563, %v2905
    %v2949 = vmul.f32 %v2567, %v2905
    %v2950 = vmul.f32 %v2571, %v2905
    %v2951 = vmul.f32 %v2575, %v2905
    %v2952 = vmul.f32 %v2579, %v2905
    %v2953 = vmul.f32 %v2583, %v2905
    %v2954 = vmul.f32 %v2587, %v2905
    %v2955 = vmul.f32 %v2591, %v2905
    %v2956 = vmul.f32 %v2595, %v2905
    %v2957 = vmul.f32 %v2599, %v2905
    %v2958 = vmul.f32 %v2603, %v2905
    %v2959 = vmul.f32 %v2607, %v2905
    %v2960 = vmul.f32 %v2611, %v2905
    %v2961 = vmul.f32 %v2615, %v2905
    %v2962 = vmul.f32 %v2619, %v2905
    %v2963 = vmul.f32 %v2623, %v2905
    %v2964 = vmul.f32 %v2627, %v2905
    %v2965 = vmul.f32 %v2631, %v2905
    %v2966 = vmul.f32 %v2635, %v2905
    %v2967 = vmul.f32 %v2639, %v2905
    %v2968 = vmul.f32 %v2643, %v2905
    %v2969 = vmul.f32 %v2647, %v2905
    %v2970 = vmul.f32 %v2651, %v2905
    %v2971 = vmul.f32 %v2655, %v2905
    %v2972 = vmul.f32 %v2659, %v2905
    %v2973 = vmul.f32 %v2663, %v2905
    %v2974 = vmul.f32 %v2667, %v2905
    %v2975 = vmul.f32 %v2671, %v2905
    %v2976 = vmul.f32 %v2675, %v2905
    %v2977 = vmul.f32 %v2679, %v2905
    %v2978 = vmul.f32 %v2683, %v2905
    %v2979 = vmul.f32 %v2687, %v2905
    %v2980 = vmul.f32 %v2691, %v2905
    %v2981 = vmul.f32 %v2695, %v2905
    %v2982 = vmul.f32 %v2699, %v2905
    %v2983 = vmul.f32 %v2703, %v2905
    %v2984 = vmul.f32 %v2707, %v2905
    %v2985 = vmul.f32 %v2711, %v2905
    %v2986 = vmul.f32 %v2715, %v2905
    %v2987 = vmul.f32 %v2719, %v2905
    %v2988 = vmul.f32 %v2723, %v2905
    %v2989 = vmul.f32 %v2727, %v2905
    %v2990 = vmul.f32 %v2731, %v2905
    %v2991 = vmul.f32 %v2735, %v2905
    %v2992 = vmul.f32 %v2739, %v2905
    %v2993 = vmul.f32 %v2743, %v2905
    %v2994 = vmul.f32 %v2747, %v2905
    %v2995 = vmul.f32 %v2751, %v2905
    %v2996 = vmul.f32 %v2755, %v2905
    %v2997 = vmul.f32 %v2759, %v2905
    %v2998 = vmul.f32 %v2763, %v2905
    %v2999 = vmul.f32 %v2767, %v2905
    %v3000 = vmul.f32 %v2771, %v2905
    %v3001 = vmul.f32 %v2775, %v2905
    %v3002 = vmul.f32 %v2779, %v2905
    %v3003 = vmul.f32 %v2783, %v2905
    %v3004 = vmul.f32 %v2787, %v2905
    %v3005 = vmul.f32 %v2791, %v2905
    %v3006 = vmul.f32 %v2795, %v2905
    %v3007 = vmul.f32 %v2799, %v2905
    %v3008 = vmul.f32 %v2803, %v2905
    %v3009 = vmul.f32 %v2807, %v2905
    %v3010 = vmul.f32 %v2811, %v2905
    %v3011 = vmul.f32 %v2815, %v2905
    %v3012 = vmul.f32 %v2819, %v2905
    %v3013 = vmul.f32 %v2823, %v2905
    %v3014 = vmul.f32 %v2827, %v2905
    %v3015 = vmul.f32 %v2831, %v2905
    %v3016 = vmul.f32 %v2835, %v2905
    %v3017 = vmul.f32 %v2839, %v2905
    %v3018 = vmul.f32 %v2843, %v2905
    %v3019 = vmul.f32 %v2847, %v2905
    %v3020 = vmul.f32 %v2851, %v2905
    %v3021 = vmul.f32 %v2855, %v2905
    %v3022 = vmul.f32 %v2859, %v2905
    %v3023 = vmul.f32 %v2863, %v2905
    %v3024 = vmul.f32 %v2867, %v2905
    %v3025 = vmul.f32 %v2871, %v2905
    %v3026 = vmul.f32 %v2875, %v2905
    %v3027 = vmul.f32 %v2879, %v2905
    %v3028 = vmul.f32 %v2883, %v2905
    %v3029 = vmul.f32 %v2887, %v2905
    %v3030 = vmul.f32 %v2891, %v2905
    %v3031 = vmul.f32 %v2895, %v2905
    %v3032 = vmul.f32 %v2899, %v2905
    %v3033 = vmul.f32 %v2903, %v2905
    %v3034 = vadd.f32 %v2265, %v2906
    %v3035 = vadd.f32 %v2266, %v2907
    %v3036 = vadd.f32 %v2267, %v2908
    %v3037 = vadd.f32 %v2268, %v2909
    %v3038 = vadd.f32 %v2269, %v2910
    %v3039 = vadd.f32 %v2270, %v2911
    %v3040 = vadd.f32 %v2271, %v2912
    %v3041 = vadd.f32 %v2272, %v2913
    %v3042 = vadd.f32 %v2273, %v2914
    %v3043 = vadd.f32 %v2274, %v2915
    %v3044 = vadd.f32 %v2275, %v2916
    %v3045 = vadd.f32 %v2276, %v2917
    %v3046 = vadd.f32 %v2277, %v2918
    %v3047 = vadd.f32 %v2278, %v2919
    %v3048 = vadd.f32 %v2279, %v2920
    %v3049 = vadd.f32 %v2280, %v2921
    %v3050 = vadd.f32 %v2281, %v2922
    %v3051 = vadd.f32 %v2282, %v2923
    %v3052 = vadd.f32 %v2283, %v2924
    %v3053 = vadd.f32 %v2284, %v2925
    %v3054 = vadd.f32 %v2285, %v2926
    %v3055 = vadd.f32 %v2286, %v2927
    %v3056 = vadd.f32 %v2287, %v2928
    %v3057 = vadd.f32 %v2288, %v2929
    %v3058 = vadd.f32 %v2289, %v2930
    %v3059 = vadd.f32 %v2290, %v2931
    %v3060 = vadd.f32 %v2291, %v2932
    %v3061 = vadd.f32 %v2292, %v2933
    %v3062 = vadd.f32 %v2293, %v2934
    %v3063 = vadd.f32 %v2294, %v2935
    %v3064 = vadd.f32 %v2295, %v2936
    %v3065 = vadd.f32 %v2296, %v2937
    %v3066 = vadd.f32 %v2297, %v2938
    %v3067 = vadd.f32 %v2298, %v2939
    %v3068 = vadd.f32 %v2299, %v2940
    %v3069 = vadd.f32 %v2300, %v2941
    %v3070 = vadd.f32 %v2301, %v2942
    %v3071 = vadd.f32 %v2302, %v2943
    %v3072 = vadd.f32 %v2303, %v2944
    %v3073 = vadd.f32 %v2304, %v2945
    %v3074 = vadd.f32 %v2305, %v2946
    %v3075 = vadd.f32 %v2306, %v2947
    %v3076 = vadd.f32 %v2307, %v2948
    %v3077 = vadd.f32 %v2308, %v2949
    %v3078 = vadd.f32 %v2309, %v2950
    %v3079 = vadd.f32 %v2310, %v2951
    %v3080 = vadd.f32 %v2311, %v2952
    %v3081 = vadd.f32 %v2312, %v2953
    %v3082 = vadd.f32 %v2313, %v2954
    %v3083 = vadd.f32 %v2314, %v2955
    %v3084 = vadd.f32 %v2315, %v2956
    %v3085 = vadd.f32 %v2316, %v2957
    %v3086 = vadd.f32 %v2317, %v2958
    %v3087 = vadd.f32 %v2318, %v2959
    %v3088 = vadd.f32 %v2319, %v2960
    %v3089 = vadd.f32 %v2320, %v2961
    %v3090 = vadd.f32 %v2321, %v2962
    %v3091 = vadd.f32 %v2322, %v2963
    %v3092 = vadd.f32 %v2323, %v2964
    %v3093 = vadd.f32 %v2324, %v2965
    %v3094 = vadd.f32 %v2325, %v2966
    %v3095 = vadd.f32 %v2326, %v2967
    %v3096 = vadd.f32 %v2327, %v2968
    %v3097 = vadd.f32 %v2328, %v2969
    %v3098 = vadd.f32 %v2329, %v2970
    %v3099 = vadd.f32 %v2330, %v2971
    %v3100 = vadd.f32 %v2331, %v2972
    %v3101 = vadd.f32 %v2332, %v2973
    %v3102 = vadd.f32 %v2333, %v2974
    %v3103 = vadd.f32 %v2334, %v2975
    %v3104 = vadd.f32 %v2335, %v2976
    %v3105 = vadd.f32 %v2336, %v2977
    %v3106 = vadd.f32 %v2337, %v2978
    %v3107 = vadd.f32 %v2338, %v2979
    %v3108 = vadd.f32 %v2339, %v2980
    %v3109 = vadd.f32 %v2340, %v2981
    %v3110 = vadd.f32 %v2341, %v2982
    %v3111 = vadd.f32 %v2342, %v2983
    %v3112 = vadd.f32 %v2343, %v2984
    %v3113 = vadd.f32 %v2344, %v2985
    %v3114 = vadd.f32 %v2345, %v2986
    %v3115 = vadd.f32 %v2346, %v2987
    %v3116 = vadd.f32 %v2347, %v2988
    %v3117 = vadd.f32 %v2348, %v2989
    %v3118 = vadd.f32 %v2349, %v2990
    %v3119 = vadd.f32 %v2350, %v2991
    %v3120 = vadd.f32 %v2351, %v2992
    %v3121 = vadd.f32 %v2352, %v2993
    %v3122 = vadd.f32 %v2353, %v2994
    %v3123 = vadd.f32 %v2354, %v2995
    %v3124 = vadd.f32 %v2355, %v2996
    %v3125 = vadd.f32 %v2356, %v2997
    %v3126 = vadd.f32 %v2357, %v2998
    %v3127 = vadd.f32 %v2358, %v2999
    %v3128 = vadd.f32 %v2359, %v3000
    %v3129 = vadd.f32 %v2360, %v3001
    %v3130 = vadd.f32 %v2361, %v3002
    %v3131 = vadd.f32 %v2362, %v3003
    %v3132 = vadd.f32 %v2363, %v3004
    %v3133 = vadd.f32 %v2364, %v3005
    %v3134 = vadd.f32 %v2365, %v3006
    %v3135 = vadd.f32 %v2366, %v3007
    %v3136 = vadd.f32 %v2367, %v3008
    %v3137 = vadd.f32 %v2368, %v3009
    %v3138 = vadd.f32 %v2369, %v3010
    %v3139 = vadd.f32 %v2370, %v3011
    %v3140 = vadd.f32 %v2371, %v3012
    %v3141 = vadd.f32 %v2372, %v3013
    %v3142 = vadd.f32 %v2373, %v3014
    %v3143 = vadd.f32 %v2374, %v3015
    %v3144 = vadd.f32 %v2375, %v3016
    %v3145 = vadd.f32 %v2376, %v3017
    %v3146 = vadd.f32 %v2377, %v3018
    %v3147 = vadd.f32 %v2378, %v3019
    %v3148 = vadd.f32 %v2379, %v3020
    %v3149 = vadd.f32 %v2380, %v3021
    %v3150 = vadd.f32 %v2381, %v3022
    %v3151 = vadd.f32 %v2382, %v3023
    %v3152 = vadd.f32 %v2383, %v3024
    %v3153 = vadd.f32 %v2384, %v3025
    %v3154 = vadd.f32 %v2385, %v3026
    %v3155 = vadd.f32 %v2386, %v3027
    %v3156 = vadd.f32 %v2387, %v3028
    %v3157 = vadd.f32 %v2388, %v3029
    %v3158 = vadd.f32 %v2389, %v3030
    %v3159 = vadd.f32 %v2390, %v3031
    %v3160 = vadd.f32 %v2391, %v3032
    %v3161 = vadd.f32 %v2392, %v3033
    %v3162 = vld [vmem:[%s5] sm:$0x1]
    %v3164 = vperm.slane %v3162, 0
    %v3166 = vadd.f32 %v3034, %v3164
    %v3167 = vadd.f32 %v3035, %v3164
    %v3168 = vadd.f32 %v3036, %v3164
    %v3169 = vadd.f32 %v3037, %v3164
    %v3170 = vadd.f32 %v3038, %v3164
    %v3171 = vadd.f32 %v3039, %v3164
    %v3172 = vadd.f32 %v3040, %v3164
    %v3173 = vadd.f32 %v3041, %v3164
    %v3174 = vadd.f32 %v3042, %v3164
    %v3175 = vadd.f32 %v3043, %v3164
    %v3176 = vadd.f32 %v3044, %v3164
    %v3177 = vadd.f32 %v3045, %v3164
    %v3178 = vadd.f32 %v3046, %v3164
    %v3179 = vadd.f32 %v3047, %v3164
    %v3180 = vadd.f32 %v3048, %v3164
    %v3181 = vadd.f32 %v3049, %v3164
    %v3182 = vadd.f32 %v3050, %v3164
    %v3183 = vadd.f32 %v3051, %v3164
    %v3184 = vadd.f32 %v3052, %v3164
    %v3185 = vadd.f32 %v3053, %v3164
    %v3186 = vadd.f32 %v3054, %v3164
    %v3187 = vadd.f32 %v3055, %v3164
    %v3188 = vadd.f32 %v3056, %v3164
    %v3189 = vadd.f32 %v3057, %v3164
    %v3190 = vadd.f32 %v3058, %v3164
    %v3191 = vadd.f32 %v3059, %v3164
    %v3192 = vadd.f32 %v3060, %v3164
    %v3193 = vadd.f32 %v3061, %v3164
    %v3194 = vadd.f32 %v3062, %v3164
    %v3195 = vadd.f32 %v3063, %v3164
    %v3196 = vadd.f32 %v3064, %v3164
    %v3197 = vadd.f32 %v3065, %v3164
    %v3198 = vadd.f32 %v3066, %v3164
    %v3199 = vadd.f32 %v3067, %v3164
    %v3200 = vadd.f32 %v3068, %v3164
    %v3201 = vadd.f32 %v3069, %v3164
    %v3202 = vadd.f32 %v3070, %v3164
    %v3203 = vadd.f32 %v3071, %v3164
    %v3204 = vadd.f32 %v3072, %v3164
    %v3205 = vadd.f32 %v3073, %v3164
    %v3206 = vadd.f32 %v3074, %v3164
    %v3207 = vadd.f32 %v3075, %v3164
    %v3208 = vadd.f32 %v3076, %v3164
    %v3209 = vadd.f32 %v3077, %v3164
    %v3210 = vadd.f32 %v3078, %v3164
    %v3211 = vadd.f32 %v3079, %v3164
    %v3212 = vadd.f32 %v3080, %v3164
    %v3213 = vadd.f32 %v3081, %v3164
    %v3214 = vadd.f32 %v3082, %v3164
    %v3215 = vadd.f32 %v3083, %v3164
    %v3216 = vadd.f32 %v3084, %v3164
    %v3217 = vadd.f32 %v3085, %v3164
    %v3218 = vadd.f32 %v3086, %v3164
    %v3219 = vadd.f32 %v3087, %v3164
    %v3220 = vadd.f32 %v3088, %v3164
    %v3221 = vadd.f32 %v3089, %v3164
    %v3222 = vadd.f32 %v3090, %v3164
    %v3223 = vadd.f32 %v3091, %v3164
    %v3224 = vadd.f32 %v3092, %v3164
    %v3225 = vadd.f32 %v3093, %v3164
    %v3226 = vadd.f32 %v3094, %v3164
    %v3227 = vadd.f32 %v3095, %v3164
    %v3228 = vadd.f32 %v3096, %v3164
    %v3229 = vadd.f32 %v3097, %v3164
    %v3230 = vadd.f32 %v3098, %v3164
    %v3231 = vadd.f32 %v3099, %v3164
    %v3232 = vadd.f32 %v3100, %v3164
    %v3233 = vadd.f32 %v3101, %v3164
    %v3234 = vadd.f32 %v3102, %v3164
    %v3235 = vadd.f32 %v3103, %v3164
    %v3236 = vadd.f32 %v3104, %v3164
    %v3237 = vadd.f32 %v3105, %v3164
    %v3238 = vadd.f32 %v3106, %v3164
    %v3239 = vadd.f32 %v3107, %v3164
    %v3240 = vadd.f32 %v3108, %v3164
    %v3241 = vadd.f32 %v3109, %v3164
    %v3242 = vadd.f32 %v3110, %v3164
    %v3243 = vadd.f32 %v3111, %v3164
    %v3244 = vadd.f32 %v3112, %v3164
    %v3245 = vadd.f32 %v3113, %v3164
    %v3246 = vadd.f32 %v3114, %v3164
    %v3247 = vadd.f32 %v3115, %v3164
    %v3248 = vadd.f32 %v3116, %v3164
    %v3249 = vadd.f32 %v3117, %v3164
    %v3250 = vadd.f32 %v3118, %v3164
    %v3251 = vadd.f32 %v3119, %v3164
    %v3252 = vadd.f32 %v3120, %v3164
    %v3253 = vadd.f32 %v3121, %v3164
    %v3254 = vadd.f32 %v3122, %v3164
    %v3255 = vadd.f32 %v3123, %v3164
    %v3256 = vadd.f32 %v3124, %v3164
    %v3257 = vadd.f32 %v3125, %v3164
    %v3258 = vadd.f32 %v3126, %v3164
    %v3259 = vadd.f32 %v3127, %v3164
    %v3260 = vadd.f32 %v3128, %v3164
    %v3261 = vadd.f32 %v3129, %v3164
    %v3262 = vadd.f32 %v3130, %v3164
    %v3263 = vadd.f32 %v3131, %v3164
    %v3264 = vadd.f32 %v3132, %v3164
    %v3265 = vadd.f32 %v3133, %v3164
    %v3266 = vadd.f32 %v3134, %v3164
    %v3267 = vadd.f32 %v3135, %v3164
    %v3268 = vadd.f32 %v3136, %v3164
    %v3269 = vadd.f32 %v3137, %v3164
    %v3270 = vadd.f32 %v3138, %v3164
    %v3271 = vadd.f32 %v3139, %v3164
    %v3272 = vadd.f32 %v3140, %v3164
    %v3273 = vadd.f32 %v3141, %v3164
    %v3274 = vadd.f32 %v3142, %v3164
    %v3275 = vadd.f32 %v3143, %v3164
    %v3276 = vadd.f32 %v3144, %v3164
    %v3277 = vadd.f32 %v3145, %v3164
    %v3278 = vadd.f32 %v3146, %v3164
    %v3279 = vadd.f32 %v3147, %v3164
    %v3280 = vadd.f32 %v3148, %v3164
    %v3281 = vadd.f32 %v3149, %v3164
    %v3282 = vadd.f32 %v3150, %v3164
    %v3283 = vadd.f32 %v3151, %v3164
    %v3284 = vadd.f32 %v3152, %v3164
    %v3285 = vadd.f32 %v3153, %v3164
    %v3286 = vadd.f32 %v3154, %v3164
    %v3287 = vadd.f32 %v3155, %v3164
    %v3288 = vadd.f32 %v3156, %v3164
    %v3289 = vadd.f32 %v3157, %v3164
    %v3290 = vadd.f32 %v3158, %v3164
    %v3291 = vadd.f32 %v3159, %v3164
    %v3292 = vadd.f32 %v3160, %v3164
    %v3293 = vadd.f32 %v3161, %v3164
    %v3294 = vmax.f32 %v3166, 0.0
    %v3295 = vmax.f32 %v3167, 0.0
    %v3296 = vmax.f32 %v3168, 0.0
    %v3297 = vmax.f32 %v3169, 0.0
    %v3298 = vmax.f32 %v3170, 0.0
    %v3299 = vmax.f32 %v3171, 0.0
    %v3300 = vmax.f32 %v3172, 0.0
    %v3301 = vmax.f32 %v3173, 0.0
    %v3302 = vmax.f32 %v3174, 0.0
    %v3303 = vmax.f32 %v3175, 0.0
    %v3304 = vmax.f32 %v3176, 0.0
    %v3305 = vmax.f32 %v3177, 0.0
    %v3306 = vmax.f32 %v3178, 0.0
    %v3307 = vmax.f32 %v3179, 0.0
    %v3308 = vmax.f32 %v3180, 0.0
    %v3309 = vmax.f32 %v3181, 0.0
    %v3310 = vmax.f32 %v3182, 0.0
    %v3311 = vmax.f32 %v3183, 0.0
    %v3312 = vmax.f32 %v3184, 0.0
    %v3313 = vmax.f32 %v3185, 0.0
    %v3314 = vmax.f32 %v3186, 0.0
    %v3315 = vmax.f32 %v3187, 0.0
    %v3316 = vmax.f32 %v3188, 0.0
    %v3317 = vmax.f32 %v3189, 0.0
    %v3318 = vmax.f32 %v3190, 0.0
    %v3319 = vmax.f32 %v3191, 0.0
    %v3320 = vmax.f32 %v3192, 0.0
    %v3321 = vmax.f32 %v3193, 0.0
    %v3322 = vmax.f32 %v3194, 0.0
    %v3323 = vmax.f32 %v3195, 0.0
    %v3324 = vmax.f32 %v3196, 0.0
    %v3325 = vmax.f32 %v3197, 0.0
    %v3326 = vmax.f32 %v3198, 0.0
    %v3327 = vmax.f32 %v3199, 0.0
    %v3328 = vmax.f32 %v3200, 0.0
    %v3329 = vmax.f32 %v3201, 0.0
    %v3330 = vmax.f32 %v3202, 0.0
    %v3331 = vmax.f32 %v3203, 0.0
    %v3332 = vmax.f32 %v3204, 0.0
    %v3333 = vmax.f32 %v3205, 0.0
    %v3334 = vmax.f32 %v3206, 0.0
    %v3335 = vmax.f32 %v3207, 0.0
    %v3336 = vmax.f32 %v3208, 0.0
    %v3337 = vmax.f32 %v3209, 0.0
    %v3338 = vmax.f32 %v3210, 0.0
    %v3339 = vmax.f32 %v3211, 0.0
    %v3340 = vmax.f32 %v3212, 0.0
    %v3341 = vmax.f32 %v3213, 0.0
    %v3342 = vmax.f32 %v3214, 0.0
    %v3343 = vmax.f32 %v3215, 0.0
    %v3344 = vmax.f32 %v3216, 0.0
    %v3345 = vmax.f32 %v3217, 0.0
    %v3346 = vmax.f32 %v3218, 0.0
    %v3347 = vmax.f32 %v3219, 0.0
    %v3348 = vmax.f32 %v3220, 0.0
    %v3349 = vmax.f32 %v3221, 0.0
    %v3350 = vmax.f32 %v3222, 0.0
    %v3351 = vmax.f32 %v3223, 0.0
    %v3352 = vmax.f32 %v3224, 0.0
    %v3353 = vmax.f32 %v3225, 0.0
    %v3354 = vmax.f32 %v3226, 0.0
    %v3355 = vmax.f32 %v3227, 0.0
    %v3356 = vmax.f32 %v3228, 0.0
    %v3357 = vmax.f32 %v3229, 0.0
    %v3358 = vmax.f32 %v3230, 0.0
    %v3359 = vmax.f32 %v3231, 0.0
    %v3360 = vmax.f32 %v3232, 0.0
    %v3361 = vmax.f32 %v3233, 0.0
    %v3362 = vmax.f32 %v3234, 0.0
    %v3363 = vmax.f32 %v3235, 0.0
    %v3364 = vmax.f32 %v3236, 0.0
    %v3365 = vmax.f32 %v3237, 0.0
    %v3366 = vmax.f32 %v3238, 0.0
    %v3367 = vmax.f32 %v3239, 0.0
    %v3368 = vmax.f32 %v3240, 0.0
    %v3369 = vmax.f32 %v3241, 0.0
    %v3370 = vmax.f32 %v3242, 0.0
    %v3371 = vmax.f32 %v3243, 0.0
    %v3372 = vmax.f32 %v3244, 0.0
    %v3373 = vmax.f32 %v3245, 0.0
    %v3374 = vmax.f32 %v3246, 0.0
    %v3375 = vmax.f32 %v3247, 0.0
    %v3376 = vmax.f32 %v3248, 0.0
    %v3377 = vmax.f32 %v3249, 0.0
    %v3378 = vmax.f32 %v3250, 0.0
    %v3379 = vmax.f32 %v3251, 0.0
    %v3380 = vmax.f32 %v3252, 0.0
    %v3381 = vmax.f32 %v3253, 0.0
    %v3382 = vmax.f32 %v3254, 0.0
    %v3383 = vmax.f32 %v3255, 0.0
    %v3384 = vmax.f32 %v3256, 0.0
    %v3385 = vmax.f32 %v3257, 0.0
    %v3386 = vmax.f32 %v3258, 0.0
    %v3387 = vmax.f32 %v3259, 0.0
    %v3388 = vmax.f32 %v3260, 0.0
    %v3389 = vmax.f32 %v3261, 0.0
    %v3390 = vmax.f32 %v3262, 0.0
    %v3391 = vmax.f32 %v3263, 0.0
    %v3392 = vmax.f32 %v3264, 0.0
    %v3393 = vmax.f32 %v3265, 0.0
    %v3394 = vmax.f32 %v3266, 0.0
    %v3395 = vmax.f32 %v3267, 0.0
    %v3396 = vmax.f32 %v3268, 0.0
    %v3397 = vmax.f32 %v3269, 0.0
    %v3398 = vmax.f32 %v3270, 0.0
    %v3399 = vmax.f32 %v3271, 0.0
    %v3400 = vmax.f32 %v3272, 0.0
    %v3401 = vmax.f32 %v3273, 0.0
    %v3402 = vmax.f32 %v3274, 0.0
    %v3403 = vmax.f32 %v3275, 0.0
    %v3404 = vmax.f32 %v3276, 0.0
    %v3405 = vmax.f32 %v3277, 0.0
    %v3406 = vmax.f32 %v3278, 0.0
    %v3407 = vmax.f32 %v3279, 0.0
    %v3408 = vmax.f32 %v3280, 0.0
    %v3409 = vmax.f32 %v3281, 0.0
    %v3410 = vmax.f32 %v3282, 0.0
    %v3411 = vmax.f32 %v3283, 0.0
    %v3412 = vmax.f32 %v3284, 0.0
    %v3413 = vmax.f32 %v3285, 0.0
    %v3414 = vmax.f32 %v3286, 0.0
    %v3415 = vmax.f32 %v3287, 0.0
    %v3416 = vmax.f32 %v3288, 0.0
    %v3417 = vmax.f32 %v3289, 0.0
    %v3418 = vmax.f32 %v3290, 0.0
    %v3419 = vmax.f32 %v3291, 0.0
    %v3420 = vmax.f32 %v3292, 0.0
    %v3421 = vmax.f32 %v3293, 0.0
    %v3422 = vld [vmem:[%s6] sm:$0xff]
    %v3423 = vld [vmem:[%s6 + $0x8] sm:$0xff]
    %v3424 = vld [vmem:[%s6 + $0x10] sm:$0xff]
    %v3425 = vld [vmem:[%s6 + $0x18] sm:$0xff]
    %v3426 = vld [vmem:[%s7] sm:$0x1]
    %v3428 = vperm.slane %v3426, 0
    %vm3430 = vcmask 261120
    %v3432 = vsel %vm3430, %v3294, 0
    %v3435 = vsel %vm3430, %v3295, 0
    %v3438 = vsel %vm3430, %v3296, 0
    %v3441 = vsel %vm3430, %v3297, 0
    %v3444 = vsel %vm3430, %v3298, 0
    %v3447 = vsel %vm3430, %v3299, 0
    %v3450 = vsel %vm3430, %v3300, 0
    %v3453 = vsel %vm3430, %v3301, 0
    %v3456 = vsel %vm3430, %v3302, 0
    %v3459 = vsel %vm3430, %v3303, 0
    %v3462 = vsel %vm3430, %v3304, 0
    %v3465 = vsel %vm3430, %v3305, 0
    %v3468 = vsel %vm3430, %v3306, 0
    %v3471 = vsel %vm3430, %v3307, 0
    %v3474 = vsel %vm3430, %v3308, 0
    %v3477 = vsel %vm3430, %v3309, 0
    %v3480 = vsel %vm3430, %v3310, 0
    %v3483 = vsel %vm3430, %v3311, 0
    %v3486 = vsel %vm3430, %v3312, 0
    %v3489 = vsel %vm3430, %v3313, 0
    %v3492 = vsel %vm3430, %v3314, 0
    %v3495 = vsel %vm3430, %v3315, 0
    %v3498 = vsel %vm3430, %v3316, 0
    %v3501 = vsel %vm3430, %v3317, 0
    %v3504 = vsel %vm3430, %v3318, 0
    %v3507 = vsel %vm3430, %v3319, 0
    %v3510 = vsel %vm3430, %v3320, 0
    %v3513 = vsel %vm3430, %v3321, 0
    %v3516 = vsel %vm3430, %v3322, 0
    %v3519 = vsel %vm3430, %v3323, 0
    %v3522 = vsel %vm3430, %v3324, 0
    %v3525 = vsel %vm3430, %v3325, 0
    %v3528 = vsel %vm3430, %v3326, 0
    %v3531 = vsel %vm3430, %v3327, 0
    %v3534 = vsel %vm3430, %v3328, 0
    %v3537 = vsel %vm3430, %v3329, 0
    %v3540 = vsel %vm3430, %v3330, 0
    %v3543 = vsel %vm3430, %v3331, 0
    %v3546 = vsel %vm3430, %v3332, 0
    %v3549 = vsel %vm3430, %v3333, 0
    %v3552 = vsel %vm3430, %v3334, 0
    %v3555 = vsel %vm3430, %v3335, 0
    %v3558 = vsel %vm3430, %v3336, 0
    %v3561 = vsel %vm3430, %v3337, 0
    %v3564 = vsel %vm3430, %v3338, 0
    %v3567 = vsel %vm3430, %v3339, 0
    %v3570 = vsel %vm3430, %v3340, 0
    %v3573 = vsel %vm3430, %v3341, 0
    %v3576 = vsel %vm3430, %v3342, 0
    %v3579 = vsel %vm3430, %v3343, 0
    %v3582 = vsel %vm3430, %v3344, 0
    %v3585 = vsel %vm3430, %v3345, 0
    %v3588 = vsel %vm3430, %v3346, 0
    %v3591 = vsel %vm3430, %v3347, 0
    %v3594 = vsel %vm3430, %v3348, 0
    %v3597 = vsel %vm3430, %v3349, 0
    %v3600 = vsel %vm3430, %v3350, 0
    %v3603 = vsel %vm3430, %v3351, 0
    %v3606 = vsel %vm3430, %v3352, 0
    %v3609 = vsel %vm3430, %v3353, 0
    %v3612 = vsel %vm3430, %v3354, 0
    %v3615 = vsel %vm3430, %v3355, 0
    %v3618 = vsel %vm3430, %v3356, 0
    %v3621 = vsel %vm3430, %v3357, 0
    %v3624 = vsel %vm3430, %v3358, 0
    %v3627 = vsel %vm3430, %v3359, 0
    %v3630 = vsel %vm3430, %v3360, 0
    %v3633 = vsel %vm3430, %v3361, 0
    %v3636 = vsel %vm3430, %v3362, 0
    %v3639 = vsel %vm3430, %v3363, 0
    %v3642 = vsel %vm3430, %v3364, 0
    %v3645 = vsel %vm3430, %v3365, 0
    %v3648 = vsel %vm3430, %v3366, 0
    %v3651 = vsel %vm3430, %v3367, 0
    %v3654 = vsel %vm3430, %v3368, 0
    %v3657 = vsel %vm3430, %v3369, 0
    %v3660 = vsel %vm3430, %v3370, 0
    %v3663 = vsel %vm3430, %v3371, 0
    %v3666 = vsel %vm3430, %v3372, 0
    %v3669 = vsel %vm3430, %v3373, 0
    %v3672 = vsel %vm3430, %v3374, 0
    %v3675 = vsel %vm3430, %v3375, 0
    %v3678 = vsel %vm3430, %v3376, 0
    %v3681 = vsel %vm3430, %v3377, 0
    %v3684 = vsel %vm3430, %v3378, 0
    %v3687 = vsel %vm3430, %v3379, 0
    %v3690 = vsel %vm3430, %v3380, 0
    %v3693 = vsel %vm3430, %v3381, 0
    %v3696 = vsel %vm3430, %v3382, 0
    %v3699 = vsel %vm3430, %v3383, 0
    %v3702 = vsel %vm3430, %v3384, 0
    %v3705 = vsel %vm3430, %v3385, 0
    %v3708 = vsel %vm3430, %v3386, 0
    %v3711 = vsel %vm3430, %v3387, 0
    %v3714 = vsel %vm3430, %v3388, 0
    %v3717 = vsel %vm3430, %v3389, 0
    %v3720 = vsel %vm3430, %v3390, 0
    %v3723 = vsel %vm3430, %v3391, 0
    %v3726 = vsel %vm3430, %v3392, 0
    %v3729 = vsel %vm3430, %v3393, 0
    %v3732 = vsel %vm3430, %v3394, 0
    %v3735 = vsel %vm3430, %v3395, 0
    %v3738 = vsel %vm3430, %v3396, 0
    %v3741 = vsel %vm3430, %v3397, 0
    %v3744 = vsel %vm3430, %v3398, 0
    %v3747 = vsel %vm3430, %v3399, 0
    %v3750 = vsel %vm3430, %v3400, 0
    %v3753 = vsel %vm3430, %v3401, 0
    %v3756 = vsel %vm3430, %v3402, 0
    %v3759 = vsel %vm3430, %v3403, 0
    %v3762 = vsel %vm3430, %v3404, 0
    %v3765 = vsel %vm3430, %v3405, 0
    %v3768 = vsel %vm3430, %v3406, 0
    %v3771 = vsel %vm3430, %v3407, 0
    %v3774 = vsel %vm3430, %v3408, 0
    %v3777 = vsel %vm3430, %v3409, 0
    %v3780 = vsel %vm3430, %v3410, 0
    %v3783 = vsel %vm3430, %v3411, 0
    %v3786 = vsel %vm3430, %v3412, 0
    %v3789 = vsel %vm3430, %v3413, 0
    %v3792 = vsel %vm3430, %v3414, 0
    %v3795 = vsel %vm3430, %v3415, 0
    %v3798 = vsel %vm3430, %v3416, 0
    %v3801 = vsel %vm3430, %v3417, 0
    %v3804 = vsel %vm3430, %v3418, 0
    %v3807 = vsel %vm3430, %v3419, 0
    %v3810 = vsel %vm3430, %v3420, 0
    %v3813 = vsel %vm3430, %v3421, 0
    %3815 = vmatpush.msra.mxu0 0.0
    %3816 = vmatpush.msra.mxu0 0.0
    %3817 = vmatpush.msra.mxu0 0.0
    %3818 = vmatpush.msra.mxu0 0.0
    %3819 = vmatpush.msra.mxu0 0.0
    %3820 = vmatpush.msra.mxu0 0.0
    %3821 = vmatpush.msra.mxu0 0.0
    %3822 = vmatpush.msra.mxu0 0.0
    %3823 = vmatpush.msra.mxu0 0.0
    %3824 = vmatpush.msra.mxu0 0.0
    %3825 = vmatpush.msra.mxu0 0.0
    %3826 = vmatpush.msra.mxu0 0.0
    %3827 = vmatpush.msra.mxu0 %v3425
    %3828 = vmatpush.msra.mxu0 %v3424
    %3829 = vmatpush.msra.mxu0 %v3423
    %3830 = vmatpush.msra.mxu0 %v3422
    %3831 = vmatmul.f32.gmra.mxu0 %v3432
    %v3832 = vpop.f32.mrf.mxu0
    %v3833 = vadd.f32 %v3428, %v3832
    %3834 = vmatmul.f32.gmra.mxu0 %v3435
    %v3835 = vpop.f32.mrf.mxu0
    %v3836 = vadd.f32 %v3428, %v3835
    %3837 = vmatmul.f32.gmra.mxu0 %v3438
    %v3838 = vpop.f32.mrf.mxu0
    %v3839 = vadd.f32 %v3428, %v3838
    %3840 = vmatmul.f32.gmra.mxu0 %v3441
    %v3841 = vpop.f32.mrf.mxu0
    %v3842 = vadd.f32 %v3428, %v3841
    %3843 = vmatmul.f32.gmra.mxu0 %v3444
    %v3844 = vpop.f32.mrf.mxu0
    %v3845 = vadd.f32 %v3428, %v3844
    %3846 = vmatmul.f32.gmra.mxu0 %v3447
    %v3847 = vpop.f32.mrf.mxu0
    %v3848 = vadd.f32 %v3428, %v3847
    %3849 = vmatmul.f32.gmra.mxu0 %v3450
    %v3850 = vpop.f32.mrf.mxu0
    %v3851 = vadd.f32 %v3428, %v3850
    %3852 = vmatmul.f32.gmra.mxu0 %v3453
    %v3853 = vpop.f32.mrf.mxu0
    %v3854 = vadd.f32 %v3428, %v3853
    %3855 = vmatmul.f32.gmra.mxu0 %v3456
    %v3856 = vpop.f32.mrf.mxu0
    %v3857 = vadd.f32 %v3428, %v3856
    %3858 = vmatmul.f32.gmra.mxu0 %v3459
    %v3859 = vpop.f32.mrf.mxu0
    %v3860 = vadd.f32 %v3428, %v3859
    %3861 = vmatmul.f32.gmra.mxu0 %v3462
    %v3862 = vpop.f32.mrf.mxu0
    %v3863 = vadd.f32 %v3428, %v3862
    %3864 = vmatmul.f32.gmra.mxu0 %v3465
    %v3865 = vpop.f32.mrf.mxu0
    %v3866 = vadd.f32 %v3428, %v3865
    %3867 = vmatmul.f32.gmra.mxu0 %v3468
    %v3868 = vpop.f32.mrf.mxu0
    %v3869 = vadd.f32 %v3428, %v3868
    %3870 = vmatmul.f32.gmra.mxu0 %v3471
    %v3871 = vpop.f32.mrf.mxu0
    %v3872 = vadd.f32 %v3428, %v3871
    %3873 = vmatmul.f32.gmra.mxu0 %v3474
    %v3874 = vpop.f32.mrf.mxu0
    %v3875 = vadd.f32 %v3428, %v3874
    %3876 = vmatmul.f32.gmra.mxu0 %v3477
    %v3877 = vpop.f32.mrf.mxu0
    %v3878 = vadd.f32 %v3428, %v3877
    %3879 = vmatmul.f32.gmra.mxu0 %v3480
    %v3880 = vpop.f32.mrf.mxu0
    %v3881 = vadd.f32 %v3428, %v3880
    %3882 = vmatmul.f32.gmra.mxu0 %v3483
    %v3883 = vpop.f32.mrf.mxu0
    %v3884 = vadd.f32 %v3428, %v3883
    %3885 = vmatmul.f32.gmra.mxu0 %v3486
    %v3886 = vpop.f32.mrf.mxu0
    %v3887 = vadd.f32 %v3428, %v3886
    %3888 = vmatmul.f32.gmra.mxu0 %v3489
    %v3889 = vpop.f32.mrf.mxu0
    %v3890 = vadd.f32 %v3428, %v3889
    %3891 = vmatmul.f32.gmra.mxu0 %v3492
    %v3892 = vpop.f32.mrf.mxu0
    %v3893 = vadd.f32 %v3428, %v3892
    %3894 = vmatmul.f32.gmra.mxu0 %v3495
    %v3895 = vpop.f32.mrf.mxu0
    %v3896 = vadd.f32 %v3428, %v3895
    %3897 = vmatmul.f32.gmra.mxu0 %v3498
    %v3898 = vpop.f32.mrf.mxu0
    %v3899 = vadd.f32 %v3428, %v3898
    %3900 = vmatmul.f32.gmra.mxu0 %v3501
    %v3901 = vpop.f32.mrf.mxu0
    %v3902 = vadd.f32 %v3428, %v3901
    %3903 = vmatmul.f32.gmra.mxu0 %v3504
    %v3904 = vpop.f32.mrf.mxu0
    %v3905 = vadd.f32 %v3428, %v3904
    %3906 = vmatmul.f32.gmra.mxu0 %v3507
    %v3907 = vpop.f32.mrf.mxu0
    %v3908 = vadd.f32 %v3428, %v3907
    %3909 = vmatmul.f32.gmra.mxu0 %v3510
    %v3910 = vpop.f32.mrf.mxu0
    %v3911 = vadd.f32 %v3428, %v3910
    %3912 = vmatmul.f32.gmra.mxu0 %v3513
    %v3913 = vpop.f32.mrf.mxu0
    %v3914 = vadd.f32 %v3428, %v3913
    %3915 = vmatmul.f32.gmra.mxu0 %v3516
    %v3916 = vpop.f32.mrf.mxu0
    %v3917 = vadd.f32 %v3428, %v3916
    %3918 = vmatmul.f32.gmra.mxu0 %v3519
    %v3919 = vpop.f32.mrf.mxu0
    %v3920 = vadd.f32 %v3428, %v3919
    %3921 = vmatmul.f32.gmra.mxu0 %v3522
    %v3922 = vpop.f32.mrf.mxu0
    %v3923 = vadd.f32 %v3428, %v3922
    %3924 = vmatmul.f32.gmra.mxu0 %v3525
    %v3925 = vpop.f32.mrf.mxu0
    %v3926 = vadd.f32 %v3428, %v3925
    %3927 = vmatmul.f32.gmra.mxu0 %v3528
    %v3928 = vpop.f32.mrf.mxu0
    %v3929 = vadd.f32 %v3428, %v3928
    %3930 = vmatmul.f32.gmra.mxu0 %v3531
    %v3931 = vpop.f32.mrf.mxu0
    %v3932 = vadd.f32 %v3428, %v3931
    %3933 = vmatmul.f32.gmra.mxu0 %v3534
    %v3934 = vpop.f32.mrf.mxu0
    %v3935 = vadd.f32 %v3428, %v3934
    %3936 = vmatmul.f32.gmra.mxu0 %v3537
    %v3937 = vpop.f32.mrf.mxu0
    %v3938 = vadd.f32 %v3428, %v3937
    %3939 = vmatmul.f32.gmra.mxu0 %v3540
    %v3940 = vpop.f32.mrf.mxu0
    %v3941 = vadd.f32 %v3428, %v3940
    %3942 = vmatmul.f32.gmra.mxu0 %v3543
    %v3943 = vpop.f32.mrf.mxu0
    %v3944 = vadd.f32 %v3428, %v3943
    %3945 = vmatmul.f32.gmra.mxu0 %v3546
    %v3946 = vpop.f32.mrf.mxu0
    %v3947 = vadd.f32 %v3428, %v3946
    %3948 = vmatmul.f32.gmra.mxu0 %v3549
    %v3949 = vpop.f32.mrf.mxu0
    %v3950 = vadd.f32 %v3428, %v3949
    %3951 = vmatmul.f32.gmra.mxu0 %v3552
    %v3952 = vpop.f32.mrf.mxu0
    %v3953 = vadd.f32 %v3428, %v3952
    %3954 = vmatmul.f32.gmra.mxu0 %v3555
    %v3955 = vpop.f32.mrf.mxu0
    %v3956 = vadd.f32 %v3428, %v3955
    %3957 = vmatmul.f32.gmra.mxu0 %v3558
    %v3958 = vpop.f32.mrf.mxu0
    %v3959 = vadd.f32 %v3428, %v3958
    %3960 = vmatmul.f32.gmra.mxu0 %v3561
    %v3961 = vpop.f32.mrf.mxu0
    %v3962 = vadd.f32 %v3428, %v3961
    %3963 = vmatmul.f32.gmra.mxu0 %v3564
    %v3964 = vpop.f32.mrf.mxu0
    %v3965 = vadd.f32 %v3428, %v3964
    %3966 = vmatmul.f32.gmra.mxu0 %v3567
    %v3967 = vpop.f32.mrf.mxu0
    %v3968 = vadd.f32 %v3428, %v3967
    %3969 = vmatmul.f32.gmra.mxu0 %v3570
    %v3970 = vpop.f32.mrf.mxu0
    %v3971 = vadd.f32 %v3428, %v3970
    %3972 = vmatmul.f32.gmra.mxu0 %v3573
    %v3973 = vpop.f32.mrf.mxu0
    %v3974 = vadd.f32 %v3428, %v3973
    %3975 = vmatmul.f32.gmra.mxu0 %v3576
    %v3976 = vpop.f32.mrf.mxu0
    %v3977 = vadd.f32 %v3428, %v3976
    %3978 = vmatmul.f32.gmra.mxu0 %v3579
    %v3979 = vpop.f32.mrf.mxu0
    %v3980 = vadd.f32 %v3428, %v3979
    %3981 = vmatmul.f32.gmra.mxu0 %v3582
    %v3982 = vpop.f32.mrf.mxu0
    %v3983 = vadd.f32 %v3428, %v3982
    %3984 = vmatmul.f32.gmra.mxu0 %v3585
    %v3985 = vpop.f32.mrf.mxu0
    %v3986 = vadd.f32 %v3428, %v3985
    %3987 = vmatmul.f32.gmra.mxu0 %v3588
    %v3988 = vpop.f32.mrf.mxu0
    %v3989 = vadd.f32 %v3428, %v3988
    %3990 = vmatmul.f32.gmra.mxu0 %v3591
    %v3991 = vpop.f32.mrf.mxu0
    %v3992 = vadd.f32 %v3428, %v3991
    %3993 = vmatmul.f32.gmra.mxu0 %v3594
    %v3994 = vpop.f32.mrf.mxu0
    %v3995 = vadd.f32 %v3428, %v3994
    %3996 = vmatmul.f32.gmra.mxu0 %v3597
    %v3997 = vpop.f32.mrf.mxu0
    %v3998 = vadd.f32 %v3428, %v3997
    %3999 = vmatmul.f32.gmra.mxu0 %v3600
    %v4000 = vpop.f32.mrf.mxu0
    %v4001 = vadd.f32 %v3428, %v4000
    %4002 = vmatmul.f32.gmra.mxu0 %v3603
    %v4003 = vpop.f32.mrf.mxu0
    %v4004 = vadd.f32 %v3428, %v4003
    %4005 = vmatmul.f32.gmra.mxu0 %v3606
    %v4006 = vpop.f32.mrf.mxu0
    %v4007 = vadd.f32 %v3428, %v4006
    %4008 = vmatmul.f32.gmra.mxu0 %v3609
    %v4009 = vpop.f32.mrf.mxu0
    %v4010 = vadd.f32 %v3428, %v4009
    %4011 = vmatmul.f32.gmra.mxu0 %v3612
    %v4012 = vpop.f32.mrf.mxu0
    %v4013 = vadd.f32 %v3428, %v4012
    %4014 = vmatmul.f32.gmra.mxu0 %v3615
    %v4015 = vpop.f32.mrf.mxu0
    %v4016 = vadd.f32 %v3428, %v4015
    %4017 = vmatmul.f32.gmra.mxu0 %v3618
    %v4018 = vpop.f32.mrf.mxu0
    %v4019 = vadd.f32 %v3428, %v4018
    %4020 = vmatmul.f32.gmra.mxu0 %v3621
    %v4021 = vpop.f32.mrf.mxu0
    %v4022 = vadd.f32 %v3428, %v4021
    %4023 = vmatmul.f32.gmra.mxu0 %v3624
    %v4024 = vpop.f32.mrf.mxu0
    %v4025 = vadd.f32 %v3428, %v4024
    %4026 = vmatmul.f32.gmra.mxu0 %v3627
    %v4027 = vpop.f32.mrf.mxu0
    %v4028 = vadd.f32 %v3428, %v4027
    %4029 = vmatmul.f32.gmra.mxu0 %v3630
    %v4030 = vpop.f32.mrf.mxu0
    %v4031 = vadd.f32 %v3428, %v4030
    %4032 = vmatmul.f32.gmra.mxu0 %v3633
    %v4033 = vpop.f32.mrf.mxu0
    %v4034 = vadd.f32 %v3428, %v4033
    %4035 = vmatmul.f32.gmra.mxu0 %v3636
    %v4036 = vpop.f32.mrf.mxu0
    %v4037 = vadd.f32 %v3428, %v4036
    %4038 = vmatmul.f32.gmra.mxu0 %v3639
    %v4039 = vpop.f32.mrf.mxu0
    %v4040 = vadd.f32 %v3428, %v4039
    %4041 = vmatmul.f32.gmra.mxu0 %v3642
    %v4042 = vpop.f32.mrf.mxu0
    %v4043 = vadd.f32 %v3428, %v4042
    %4044 = vmatmul.f32.gmra.mxu0 %v3645
    %v4045 = vpop.f32.mrf.mxu0
    %v4046 = vadd.f32 %v3428, %v4045
    %4047 = vmatmul.f32.gmra.mxu0 %v3648
    %v4048 = vpop.f32.mrf.mxu0
    %v4049 = vadd.f32 %v3428, %v4048
    %4050 = vmatmul.f32.gmra.mxu0 %v3651
    %v4051 = vpop.f32.mrf.mxu0
    %v4052 = vadd.f32 %v3428, %v4051
    %4053 = vmatmul.f32.gmra.mxu0 %v3654
    %v4054 = vpop.f32.mrf.mxu0
    %v4055 = vadd.f32 %v3428, %v4054
    %4056 = vmatmul.f32.gmra.mxu0 %v3657
    %v4057 = vpop.f32.mrf.mxu0
    %v4058 = vadd.f32 %v3428, %v4057
    %4059 = vmatmul.f32.gmra.mxu0 %v3660
    %v4060 = vpop.f32.mrf.mxu0
    %v4061 = vadd.f32 %v3428, %v4060
    %4062 = vmatmul.f32.gmra.mxu0 %v3663
    %v4063 = vpop.f32.mrf.mxu0
    %v4064 = vadd.f32 %v3428, %v4063
    %4065 = vmatmul.f32.gmra.mxu0 %v3666
    %v4066 = vpop.f32.mrf.mxu0
    %v4067 = vadd.f32 %v3428, %v4066
    %4068 = vmatmul.f32.gmra.mxu0 %v3669
    %v4069 = vpop.f32.mrf.mxu0
    %v4070 = vadd.f32 %v3428, %v4069
    %4071 = vmatmul.f32.gmra.mxu0 %v3672
    %v4072 = vpop.f32.mrf.mxu0
    %v4073 = vadd.f32 %v3428, %v4072
    %4074 = vmatmul.f32.gmra.mxu0 %v3675
    %v4075 = vpop.f32.mrf.mxu0
    %v4076 = vadd.f32 %v3428, %v4075
    %4077 = vmatmul.f32.gmra.mxu0 %v3678
    %v4078 = vpop.f32.mrf.mxu0
    %v4079 = vadd.f32 %v3428, %v4078
    %4080 = vmatmul.f32.gmra.mxu0 %v3681
    %v4081 = vpop.f32.mrf.mxu0
    %v4082 = vadd.f32 %v3428, %v4081
    %4083 = vmatmul.f32.gmra.mxu0 %v3684
    %v4084 = vpop.f32.mrf.mxu0
    %v4085 = vadd.f32 %v3428, %v4084
    %4086 = vmatmul.f32.gmra.mxu0 %v3687
    %v4087 = vpop.f32.mrf.mxu0
    %v4088 = vadd.f32 %v3428, %v4087
    %4089 = vmatmul.f32.gmra.mxu0 %v3690
    %v4090 = vpop.f32.mrf.mxu0
    %v4091 = vadd.f32 %v3428, %v4090
    %4092 = vmatmul.f32.gmra.mxu0 %v3693
    %v4093 = vpop.f32.mrf.mxu0
    %v4094 = vadd.f32 %v3428, %v4093
    %4095 = vmatmul.f32.gmra.mxu0 %v3696
    %v4096 = vpop.f32.mrf.mxu0
    %v4097 = vadd.f32 %v3428, %v4096
    %4098 = vmatmul.f32.gmra.mxu0 %v3699
    %v4099 = vpop.f32.mrf.mxu0
    %v4100 = vadd.f32 %v3428, %v4099
    %4101 = vmatmul.f32.gmra.mxu0 %v3702
    %v4102 = vpop.f32.mrf.mxu0
    %v4103 = vadd.f32 %v3428, %v4102
    %4104 = vmatmul.f32.gmra.mxu0 %v3705
    %v4105 = vpop.f32.mrf.mxu0
    %v4106 = vadd.f32 %v3428, %v4105
    %4107 = vmatmul.f32.gmra.mxu0 %v3708
    %v4108 = vpop.f32.mrf.mxu0
    %v4109 = vadd.f32 %v3428, %v4108
    %4110 = vmatmul.f32.gmra.mxu0 %v3711
    %v4111 = vpop.f32.mrf.mxu0
    %v4112 = vadd.f32 %v3428, %v4111
    %4113 = vmatmul.f32.gmra.mxu0 %v3714
    %v4114 = vpop.f32.mrf.mxu0
    %v4115 = vadd.f32 %v3428, %v4114
    %4116 = vmatmul.f32.gmra.mxu0 %v3717
    %v4117 = vpop.f32.mrf.mxu0
    %v4118 = vadd.f32 %v3428, %v4117
    %4119 = vmatmul.f32.gmra.mxu0 %v3720
    %v4120 = vpop.f32.mrf.mxu0
    %v4121 = vadd.f32 %v3428, %v4120
    %4122 = vmatmul.f32.gmra.mxu0 %v3723
    %v4123 = vpop.f32.mrf.mxu0
    %v4124 = vadd.f32 %v3428, %v4123
    %4125 = vmatmul.f32.gmra.mxu0 %v3726
    %v4126 = vpop.f32.mrf.mxu0
    %v4127 = vadd.f32 %v3428, %v4126
    %4128 = vmatmul.f32.gmra.mxu0 %v3729
    %v4129 = vpop.f32.mrf.mxu0
    %v4130 = vadd.f32 %v3428, %v4129
    %4131 = vmatmul.f32.gmra.mxu0 %v3732
    %v4132 = vpop.f32.mrf.mxu0
    %v4133 = vadd.f32 %v3428, %v4132
    %4134 = vmatmul.f32.gmra.mxu0 %v3735
    %v4135 = vpop.f32.mrf.mxu0
    %v4136 = vadd.f32 %v3428, %v4135
    %4137 = vmatmul.f32.gmra.mxu0 %v3738
    %v4138 = vpop.f32.mrf.mxu0
    %v4139 = vadd.f32 %v3428, %v4138
    %4140 = vmatmul.f32.gmra.mxu0 %v3741
    %v4141 = vpop.f32.mrf.mxu0
    %v4142 = vadd.f32 %v3428, %v4141
    %4143 = vmatmul.f32.gmra.mxu0 %v3744
    %v4144 = vpop.f32.mrf.mxu0
    %v4145 = vadd.f32 %v3428, %v4144
    %4146 = vmatmul.f32.gmra.mxu0 %v3747
    %v4147 = vpop.f32.mrf.mxu0
    %v4148 = vadd.f32 %v3428, %v4147
    %4149 = vmatmul.f32.gmra.mxu0 %v3750
    %v4150 = vpop.f32.mrf.mxu0
    %v4151 = vadd.f32 %v3428, %v4150
    %4152 = vmatmul.f32.gmra.mxu0 %v3753
    %v4153 = vpop.f32.mrf.mxu0
    %v4154 = vadd.f32 %v3428, %v4153
    %4155 = vmatmul.f32.gmra.mxu0 %v3756
    %v4156 = vpop.f32.mrf.mxu0
    %v4157 = vadd.f32 %v3428, %v4156
    %4158 = vmatmul.f32.gmra.mxu0 %v3759
    %v4159 = vpop.f32.mrf.mxu0
    %v4160 = vadd.f32 %v3428, %v4159
    %4161 = vmatmul.f32.gmra.mxu0 %v3762
    %v4162 = vpop.f32.mrf.mxu0
    %v4163 = vadd.f32 %v3428, %v4162
    %4164 = vmatmul.f32.gmra.mxu0 %v3765
    %v4165 = vpop.f32.mrf.mxu0
    %v4166 = vadd.f32 %v3428, %v4165
    %4167 = vmatmul.f32.gmra.mxu0 %v3768
    %v4168 = vpop.f32.mrf.mxu0
    %v4169 = vadd.f32 %v3428, %v4168
    %4170 = vmatmul.f32.gmra.mxu0 %v3771
    %v4171 = vpop.f32.mrf.mxu0
    %v4172 = vadd.f32 %v3428, %v4171
    %4173 = vmatmul.f32.gmra.mxu0 %v3774
    %v4174 = vpop.f32.mrf.mxu0
    %v4175 = vadd.f32 %v3428, %v4174
    %4176 = vmatmul.f32.gmra.mxu0 %v3777
    %v4177 = vpop.f32.mrf.mxu0
    %v4178 = vadd.f32 %v3428, %v4177
    %4179 = vmatmul.f32.gmra.mxu0 %v3780
    %v4180 = vpop.f32.mrf.mxu0
    %v4181 = vadd.f32 %v3428, %v4180
    %4182 = vmatmul.f32.gmra.mxu0 %v3783
    %v4183 = vpop.f32.mrf.mxu0
    %v4184 = vadd.f32 %v3428, %v4183
    %4185 = vmatmul.f32.gmra.mxu0 %v3786
    %v4186 = vpop.f32.mrf.mxu0
    %v4187 = vadd.f32 %v3428, %v4186
    %4188 = vmatmul.f32.gmra.mxu0 %v3789
    %v4189 = vpop.f32.mrf.mxu0
    %v4190 = vadd.f32 %v3428, %v4189
    %4191 = vmatmul.f32.gmra.mxu0 %v3792
    %v4192 = vpop.f32.mrf.mxu0
    %v4193 = vadd.f32 %v3428, %v4192
    %4194 = vmatmul.f32.gmra.mxu0 %v3795
    %v4195 = vpop.f32.mrf.mxu0
    %v4196 = vadd.f32 %v3428, %v4195
    %4197 = vmatmul.f32.gmra.mxu0 %v3798
    %v4198 = vpop.f32.mrf.mxu0
    %v4199 = vadd.f32 %v3428, %v4198
    %4200 = vmatmul.f32.gmra.mxu0 %v3801
    %v4201 = vpop.f32.mrf.mxu0
    %v4202 = vadd.f32 %v3428, %v4201
    %4203 = vmatmul.f32.gmra.mxu0 %v3804
    %v4204 = vpop.f32.mrf.mxu0
    %v4205 = vadd.f32 %v3428, %v4204
    %4206 = vmatmul.f32.gmra.mxu0 %v3807
    %v4207 = vpop.f32.mrf.mxu0
    %v4208 = vadd.f32 %v3428, %v4207
    %4209 = vmatmul.f32.gmra.mxu0 %v3810
    %v4210 = vpop.f32.mrf.mxu0
    %v4211 = vadd.f32 %v3428, %v4210
    %4212 = vmatmul.f32.gmra.mxu0 %v3813
    %v4213 = vpop.f32.mrf.mxu0
    %v4214 = vadd.f32 %v3428, %v4213
    %4215 = vdwg.mxu0
    %v4216 = vld [vmem:[%s10] sm:$0xff]
    %v4217 = vld [vmem:[%s10 + $0x8] sm:$0xff]
    %v4218 = vld [vmem:[%s10 + $0x10] sm:$0xff]
    %v4219 = vld [vmem:[%s10 + $0x18] sm:$0xff]
    %v4220 = vld [vmem:[%s11] sm:$0x1]
    %v4222 = vperm.slane %v4220, 0
    %v4225 = vsel %vm3430, %v70, 0
    %v4228 = vsel %vm3430, %v71, 0
    %v4231 = vsel %vm3430, %v72, 0
    %v4234 = vsel %vm3430, %v73, 0
    %v4237 = vsel %vm3430, %v74, 0
    %v4240 = vsel %vm3430, %v75, 0
    %v4243 = vsel %vm3430, %v76, 0
    %v4246 = vsel %vm3430, %v77, 0
    %v4249 = vsel %vm3430, %v78, 0
    %v4252 = vsel %vm3430, %v79, 0
    %v4255 = vsel %vm3430, %v80, 0
    %v4258 = vsel %vm3430, %v81, 0
    %v4261 = vsel %vm3430, %v82, 0
    %v4264 = vsel %vm3430, %v83, 0
    %v4267 = vsel %vm3430, %v84, 0
    %v4270 = vsel %vm3430, %v85, 0
    %v4273 = vsel %vm3430, %v86, 0
    %v4276 = vsel %vm3430, %v87, 0
    %v4279 = vsel %vm3430, %v88, 0
    %v4282 = vsel %vm3430, %v89, 0
    %v4285 = vsel %vm3430, %v90, 0
    %v4288 = vsel %vm3430, %v91, 0
    %v4291 = vsel %vm3430, %v92, 0
    %v4294 = vsel %vm3430, %v93, 0
    %v4297 = vsel %vm3430, %v94, 0
    %v4300 = vsel %vm3430, %v95, 0
    %v4303 = vsel %vm3430, %v96, 0
    %v4306 = vsel %vm3430, %v97, 0
    %v4309 = vsel %vm3430, %v98, 0
    %v4312 = vsel %vm3430, %v99, 0
    %v4315 = vsel %vm3430, %v100, 0
    %v4318 = vsel %vm3430, %v101, 0
    %v4321 = vsel %vm3430, %v102, 0
    %v4324 = vsel %vm3430, %v103, 0
    %v4327 = vsel %vm3430, %v104, 0
    %v4330 = vsel %vm3430, %v105, 0
    %v4333 = vsel %vm3430, %v106, 0
    %v4336 = vsel %vm3430, %v107, 0
    %v4339 = vsel %vm3430, %v108, 0
    %v4342 = vsel %vm3430, %v109, 0
    %v4345 = vsel %vm3430, %v110, 0
    %v4348 = vsel %vm3430, %v111, 0
    %v4351 = vsel %vm3430, %v112, 0
    %v4354 = vsel %vm3430, %v113, 0
    %v4357 = vsel %vm3430, %v114, 0
    %v4360 = vsel %vm3430, %v115, 0
    %v4363 = vsel %vm3430, %v116, 0
    %v4366 = vsel %vm3430, %v117, 0
    %v4369 = vsel %vm3430, %v118, 0
    %v4372 = vsel %vm3430, %v119, 0
    %v4375 = vsel %vm3430, %v120, 0
    %v4378 = vsel %vm3430, %v121, 0
    %v4381 = vsel %vm3430, %v122, 0
    %v4384 = vsel %vm3430, %v123, 0
    %v4387 = vsel %vm3430, %v124, 0
    %v4390 = vsel %vm3430, %v125, 0
    %v4393 = vsel %vm3430, %v126, 0
    %v4396 = vsel %vm3430, %v127, 0
    %v4399 = vsel %vm3430, %v128, 0
    %v4402 = vsel %vm3430, %v129, 0
    %v4405 = vsel %vm3430, %v130, 0
    %v4408 = vsel %vm3430, %v131, 0
    %v4411 = vsel %vm3430, %v132, 0
    %v4414 = vsel %vm3430, %v133, 0
    %v4417 = vsel %vm3430, %v134, 0
    %v4420 = vsel %vm3430, %v135, 0
    %v4423 = vsel %vm3430, %v136, 0
    %v4426 = vsel %vm3430, %v137, 0
    %v4429 = vsel %vm3430, %v138, 0
    %v4432 = vsel %vm3430, %v139, 0
    %v4435 = vsel %vm3430, %v140, 0
    %v4438 = vsel %vm3430, %v141, 0
    %v4441 = vsel %vm3430, %v142, 0
    %v4444 = vsel %vm3430, %v143, 0
    %v4447 = vsel %vm3430, %v144, 0
    %v4450 = vsel %vm3430, %v145, 0
    %v4453 = vsel %vm3430, %v146, 0
    %v4456 = vsel %vm3430, %v147, 0
    %v4459 = vsel %vm3430, %v148, 0
    %v4462 = vsel %vm3430, %v149, 0
    %v4465 = vsel %vm3430, %v150, 0
    %v4468 = vsel %vm3430, %v151, 0
    %v4471 = vsel %vm3430, %v152, 0
    %v4474 = vsel %vm3430, %v153, 0
    %v4477 = vsel %vm3430, %v154, 0
    %v4480 = vsel %vm3430, %v155, 0
    %v4483 = vsel %vm3430, %v156, 0
    %v4486 = vsel %vm3430, %v157, 0
    %v4489 = vsel %vm3430, %v158, 0
    %v4492 = vsel %vm3430, %v159, 0
    %v4495 = vsel %vm3430, %v160, 0
    %v4498 = vsel %vm3430, %v161, 0
    %v4501 = vsel %vm3430, %v162, 0
    %v4504 = vsel %vm3430, %v163, 0
    %v4507 = vsel %vm3430, %v164, 0
    %v4510 = vsel %vm3430, %v165, 0
    %v4513 = vsel %vm3430, %v166, 0
    %v4516 = vsel %vm3430, %v167, 0
    %v4519 = vsel %vm3430, %v168, 0
    %v4522 = vsel %vm3430, %v169, 0
    %v4525 = vsel %vm3430, %v170, 0
    %v4528 = vsel %vm3430, %v171, 0
    %v4531 = vsel %vm3430, %v172, 0
    %v4534 = vsel %vm3430, %v173, 0
    %v4537 = vsel %vm3430, %v174, 0
    %v4540 = vsel %vm3430, %v175, 0
    %v4543 = vsel %vm3430, %v176, 0
    %v4546 = vsel %vm3430, %v177, 0
    %v4549 = vsel %vm3430, %v178, 0
    %v4552 = vsel %vm3430, %v179, 0
    %v4555 = vsel %vm3430, %v180, 0
    %v4558 = vsel %vm3430, %v181, 0
    %v4561 = vsel %vm3430, %v182, 0
    %v4564 = vsel %vm3430, %v183, 0
    %v4567 = vsel %vm3430, %v184, 0
    %v4570 = vsel %vm3430, %v185, 0
    %v4573 = vsel %vm3430, %v186, 0
    %v4576 = vsel %vm3430, %v187, 0
    %v4579 = vsel %vm3430, %v188, 0
    %v4582 = vsel %vm3430, %v189, 0
    %v4585 = vsel %vm3430, %v190, 0
    %v4588 = vsel %vm3430, %v191, 0
    %v4591 = vsel %vm3430, %v192, 0
    %v4594 = vsel %vm3430, %v193, 0
    %v4597 = vsel %vm3430, %v194, 0
    %v4600 = vsel %vm3430, %v195, 0
    %v4603 = vsel %vm3430, %v196, 0
    %v4606 = vsel %vm3430, %v197, 0
    %4608 = vmatpush.msra.mxu0 0.0
    %4609 = vmatpush.msra.mxu0 0.0
    %4610 = vmatpush.msra.mxu0 0.0
    %4611 = vmatpush.msra.mxu0 0.0
    %4612 = vmatpush.msra.mxu0 0.0
    %4613 = vmatpush.msra.mxu0 0.0
    %4614 = vmatpush.msra.mxu0 0.0
    %4615 = vmatpush.msra.mxu0 0.0
    %4616 = vmatpush.msra.mxu0 0.0
    %4617 = vmatpush.msra.mxu0 0.0
    %4618 = vmatpush.msra.mxu0 0.0
    %4619 = vmatpush.msra.mxu0 0.0
    %4620 = vmatpush.msra.mxu0 %v4219
    %4621 = vmatpush.msra.mxu0 %v4218
    %4622 = vmatpush.msra.mxu0 %v4217
    %4623 = vmatpush.msra.mxu0 %v4216
    %4624 = vmatmul.f32.gmra.mxu0 %v4225
    %v4625 = vpop.f32.mrf.mxu0
    %v4626 = vadd.f32 %v4222, %v4625
    %4627 = vmatmul.f32.gmra.mxu0 %v4228
    %v4628 = vpop.f32.mrf.mxu0
    %v4629 = vadd.f32 %v4222, %v4628
    %4630 = vmatmul.f32.gmra.mxu0 %v4231
    %v4631 = vpop.f32.mrf.mxu0
    %v4632 = vadd.f32 %v4222, %v4631
    %4633 = vmatmul.f32.gmra.mxu0 %v4234
    %v4634 = vpop.f32.mrf.mxu0
    %v4635 = vadd.f32 %v4222, %v4634
    %4636 = vmatmul.f32.gmra.mxu0 %v4237
    %v4637 = vpop.f32.mrf.mxu0
    %v4638 = vadd.f32 %v4222, %v4637
    %4639 = vmatmul.f32.gmra.mxu0 %v4240
    %v4640 = vpop.f32.mrf.mxu0
    %v4641 = vadd.f32 %v4222, %v4640
    %4642 = vmatmul.f32.gmra.mxu0 %v4243
    %v4643 = vpop.f32.mrf.mxu0
    %v4644 = vadd.f32 %v4222, %v4643
    %4645 = vmatmul.f32.gmra.mxu0 %v4246
    %v4646 = vpop.f32.mrf.mxu0
    %v4647 = vadd.f32 %v4222, %v4646
    %4648 = vmatmul.f32.gmra.mxu0 %v4249
    %v4649 = vpop.f32.mrf.mxu0
    %v4650 = vadd.f32 %v4222, %v4649
    %4651 = vmatmul.f32.gmra.mxu0 %v4252
    %v4652 = vpop.f32.mrf.mxu0
    %v4653 = vadd.f32 %v4222, %v4652
    %4654 = vmatmul.f32.gmra.mxu0 %v4255
    %v4655 = vpop.f32.mrf.mxu0
    %v4656 = vadd.f32 %v4222, %v4655
    %4657 = vmatmul.f32.gmra.mxu0 %v4258
    %v4658 = vpop.f32.mrf.mxu0
    %v4659 = vadd.f32 %v4222, %v4658
    %4660 = vmatmul.f32.gmra.mxu0 %v4261
    %v4661 = vpop.f32.mrf.mxu0
    %v4662 = vadd.f32 %v4222, %v4661
    %4663 = vmatmul.f32.gmra.mxu0 %v4264
    %v4664 = vpop.f32.mrf.mxu0
    %v4665 = vadd.f32 %v4222, %v4664
    %4666 = vmatmul.f32.gmra.mxu0 %v4267
    %v4667 = vpop.f32.mrf.mxu0
    %v4668 = vadd.f32 %v4222, %v4667
    %4669 = vmatmul.f32.gmra.mxu0 %v4270
    %v4670 = vpop.f32.mrf.mxu0
    %v4671 = vadd.f32 %v4222, %v4670
    %4672 = vmatmul.f32.gmra.mxu0 %v4273
    %v4673 = vpop.f32.mrf.mxu0
    %v4674 = vadd.f32 %v4222, %v4673
    %4675 = vmatmul.f32.gmra.mxu0 %v4276
    %v4676 = vpop.f32.mrf.mxu0
    %v4677 = vadd.f32 %v4222, %v4676
    %4678 = vmatmul.f32.gmra.mxu0 %v4279
    %v4679 = vpop.f32.mrf.mxu0
    %v4680 = vadd.f32 %v4222, %v4679
    %4681 = vmatmul.f32.gmra.mxu0 %v4282
    %v4682 = vpop.f32.mrf.mxu0
    %v4683 = vadd.f32 %v4222, %v4682
    %4684 = vmatmul.f32.gmra.mxu0 %v4285
    %v4685 = vpop.f32.mrf.mxu0
    %v4686 = vadd.f32 %v4222, %v4685
    %4687 = vmatmul.f32.gmra.mxu0 %v4288
    %v4688 = vpop.f32.mrf.mxu0
    %v4689 = vadd.f32 %v4222, %v4688
    %4690 = vmatmul.f32.gmra.mxu0 %v4291
    %v4691 = vpop.f32.mrf.mxu0
    %v4692 = vadd.f32 %v4222, %v4691
    %4693 = vmatmul.f32.gmra.mxu0 %v4294
    %v4694 = vpop.f32.mrf.mxu0
    %v4695 = vadd.f32 %v4222, %v4694
    %4696 = vmatmul.f32.gmra.mxu0 %v4297
    %v4697 = vpop.f32.mrf.mxu0
    %v4698 = vadd.f32 %v4222, %v4697
    %4699 = vmatmul.f32.gmra.mxu0 %v4300
    %v4700 = vpop.f32.mrf.mxu0
    %v4701 = vadd.f32 %v4222, %v4700
    %4702 = vmatmul.f32.gmra.mxu0 %v4303
    %v4703 = vpop.f32.mrf.mxu0
    %v4704 = vadd.f32 %v4222, %v4703
    %4705 = vmatmul.f32.gmra.mxu0 %v4306
    %v4706 = vpop.f32.mrf.mxu0
    %v4707 = vadd.f32 %v4222, %v4706
    %4708 = vmatmul.f32.gmra.mxu0 %v4309
    %v4709 = vpop.f32.mrf.mxu0
    %v4710 = vadd.f32 %v4222, %v4709
    %4711 = vmatmul.f32.gmra.mxu0 %v4312
    %v4712 = vpop.f32.mrf.mxu0
    %v4713 = vadd.f32 %v4222, %v4712
    %4714 = vmatmul.f32.gmra.mxu0 %v4315
    %v4715 = vpop.f32.mrf.mxu0
    %v4716 = vadd.f32 %v4222, %v4715
    %4717 = vmatmul.f32.gmra.mxu0 %v4318
    %v4718 = vpop.f32.mrf.mxu0
    %v4719 = vadd.f32 %v4222, %v4718
    %4720 = vmatmul.f32.gmra.mxu0 %v4321
    %v4721 = vpop.f32.mrf.mxu0
    %v4722 = vadd.f32 %v4222, %v4721
    %4723 = vmatmul.f32.gmra.mxu0 %v4324
    %v4724 = vpop.f32.mrf.mxu0
    %v4725 = vadd.f32 %v4222, %v4724
    %4726 = vmatmul.f32.gmra.mxu0 %v4327
    %v4727 = vpop.f32.mrf.mxu0
    %v4728 = vadd.f32 %v4222, %v4727
    %4729 = vmatmul.f32.gmra.mxu0 %v4330
    %v4730 = vpop.f32.mrf.mxu0
    %v4731 = vadd.f32 %v4222, %v4730
    %4732 = vmatmul.f32.gmra.mxu0 %v4333
    %v4733 = vpop.f32.mrf.mxu0
    %v4734 = vadd.f32 %v4222, %v4733
    %4735 = vmatmul.f32.gmra.mxu0 %v4336
    %v4736 = vpop.f32.mrf.mxu0
    %v4737 = vadd.f32 %v4222, %v4736
    %4738 = vmatmul.f32.gmra.mxu0 %v4339
    %v4739 = vpop.f32.mrf.mxu0
    %v4740 = vadd.f32 %v4222, %v4739
    %4741 = vmatmul.f32.gmra.mxu0 %v4342
    %v4742 = vpop.f32.mrf.mxu0
    %v4743 = vadd.f32 %v4222, %v4742
    %4744 = vmatmul.f32.gmra.mxu0 %v4345
    %v4745 = vpop.f32.mrf.mxu0
    %v4746 = vadd.f32 %v4222, %v4745
    %4747 = vmatmul.f32.gmra.mxu0 %v4348
    %v4748 = vpop.f32.mrf.mxu0
    %v4749 = vadd.f32 %v4222, %v4748
    %4750 = vmatmul.f32.gmra.mxu0 %v4351
    %v4751 = vpop.f32.mrf.mxu0
    %v4752 = vadd.f32 %v4222, %v4751
    %4753 = vmatmul.f32.gmra.mxu0 %v4354
    %v4754 = vpop.f32.mrf.mxu0
    %v4755 = vadd.f32 %v4222, %v4754
    %4756 = vmatmul.f32.gmra.mxu0 %v4357
    %v4757 = vpop.f32.mrf.mxu0
    %v4758 = vadd.f32 %v4222, %v4757
    %4759 = vmatmul.f32.gmra.mxu0 %v4360
    %v4760 = vpop.f32.mrf.mxu0
    %v4761 = vadd.f32 %v4222, %v4760
    %4762 = vmatmul.f32.gmra.mxu0 %v4363
    %v4763 = vpop.f32.mrf.mxu0
    %v4764 = vadd.f32 %v4222, %v4763
    %4765 = vmatmul.f32.gmra.mxu0 %v4366
    %v4766 = vpop.f32.mrf.mxu0
    %v4767 = vadd.f32 %v4222, %v4766
    %4768 = vmatmul.f32.gmra.mxu0 %v4369
    %v4769 = vpop.f32.mrf.mxu0
    %v4770 = vadd.f32 %v4222, %v4769
    %4771 = vmatmul.f32.gmra.mxu0 %v4372
    %v4772 = vpop.f32.mrf.mxu0
    %v4773 = vadd.f32 %v4222, %v4772
    %4774 = vmatmul.f32.gmra.mxu0 %v4375
    %v4775 = vpop.f32.mrf.mxu0
    %v4776 = vadd.f32 %v4222, %v4775
    %4777 = vmatmul.f32.gmra.mxu0 %v4378
    %v4778 = vpop.f32.mrf.mxu0
    %v4779 = vadd.f32 %v4222, %v4778
    %4780 = vmatmul.f32.gmra.mxu0 %v4381
    %v4781 = vpop.f32.mrf.mxu0
    %v4782 = vadd.f32 %v4222, %v4781
    %4783 = vmatmul.f32.gmra.mxu0 %v4384
    %v4784 = vpop.f32.mrf.mxu0
    %v4785 = vadd.f32 %v4222, %v4784
    %4786 = vmatmul.f32.gmra.mxu0 %v4387
    %v4787 = vpop.f32.mrf.mxu0
    %v4788 = vadd.f32 %v4222, %v4787
    %4789 = vmatmul.f32.gmra.mxu0 %v4390
    %v4790 = vpop.f32.mrf.mxu0
    %v4791 = vadd.f32 %v4222, %v4790
    %4792 = vmatmul.f32.gmra.mxu0 %v4393
    %v4793 = vpop.f32.mrf.mxu0
    %v4794 = vadd.f32 %v4222, %v4793
    %4795 = vmatmul.f32.gmra.mxu0 %v4396
    %v4796 = vpop.f32.mrf.mxu0
    %v4797 = vadd.f32 %v4222, %v4796
    %4798 = vmatmul.f32.gmra.mxu0 %v4399
    %v4799 = vpop.f32.mrf.mxu0
    %v4800 = vadd.f32 %v4222, %v4799
    %4801 = vmatmul.f32.gmra.mxu0 %v4402
    %v4802 = vpop.f32.mrf.mxu0
    %v4803 = vadd.f32 %v4222, %v4802
    %4804 = vmatmul.f32.gmra.mxu0 %v4405
    %v4805 = vpop.f32.mrf.mxu0
    %v4806 = vadd.f32 %v4222, %v4805
    %4807 = vmatmul.f32.gmra.mxu0 %v4408
    %v4808 = vpop.f32.mrf.mxu0
    %v4809 = vadd.f32 %v4222, %v4808
    %4810 = vmatmul.f32.gmra.mxu0 %v4411
    %v4811 = vpop.f32.mrf.mxu0
    %v4812 = vadd.f32 %v4222, %v4811
    %4813 = vmatmul.f32.gmra.mxu0 %v4414
    %v4814 = vpop.f32.mrf.mxu0
    %v4815 = vadd.f32 %v4222, %v4814
    %4816 = vmatmul.f32.gmra.mxu0 %v4417
    %v4817 = vpop.f32.mrf.mxu0
    %v4818 = vadd.f32 %v4222, %v4817
    %4819 = vmatmul.f32.gmra.mxu0 %v4420
    %v4820 = vpop.f32.mrf.mxu0
    %v4821 = vadd.f32 %v4222, %v4820
    %4822 = vmatmul.f32.gmra.mxu0 %v4423
    %v4823 = vpop.f32.mrf.mxu0
    %v4824 = vadd.f32 %v4222, %v4823
    %4825 = vmatmul.f32.gmra.mxu0 %v4426
    %v4826 = vpop.f32.mrf.mxu0
    %v4827 = vadd.f32 %v4222, %v4826
    %4828 = vmatmul.f32.gmra.mxu0 %v4429
    %v4829 = vpop.f32.mrf.mxu0
    %v4830 = vadd.f32 %v4222, %v4829
    %4831 = vmatmul.f32.gmra.mxu0 %v4432
    %v4832 = vpop.f32.mrf.mxu0
    %v4833 = vadd.f32 %v4222, %v4832
    %4834 = vmatmul.f32.gmra.mxu0 %v4435
    %v4835 = vpop.f32.mrf.mxu0
    %v4836 = vadd.f32 %v4222, %v4835
    %4837 = vmatmul.f32.gmra.mxu0 %v4438
    %v4838 = vpop.f32.mrf.mxu0
    %v4839 = vadd.f32 %v4222, %v4838
    %4840 = vmatmul.f32.gmra.mxu0 %v4441
    %v4841 = vpop.f32.mrf.mxu0
    %v4842 = vadd.f32 %v4222, %v4841
    %4843 = vmatmul.f32.gmra.mxu0 %v4444
    %v4844 = vpop.f32.mrf.mxu0
    %v4845 = vadd.f32 %v4222, %v4844
    %4846 = vmatmul.f32.gmra.mxu0 %v4447
    %v4847 = vpop.f32.mrf.mxu0
    %v4848 = vadd.f32 %v4222, %v4847
    %4849 = vmatmul.f32.gmra.mxu0 %v4450
    %v4850 = vpop.f32.mrf.mxu0
    %v4851 = vadd.f32 %v4222, %v4850
    %4852 = vmatmul.f32.gmra.mxu0 %v4453
    %v4853 = vpop.f32.mrf.mxu0
    %v4854 = vadd.f32 %v4222, %v4853
    %4855 = vmatmul.f32.gmra.mxu0 %v4456
    %v4856 = vpop.f32.mrf.mxu0
    %v4857 = vadd.f32 %v4222, %v4856
    %4858 = vmatmul.f32.gmra.mxu0 %v4459
    %v4859 = vpop.f32.mrf.mxu0
    %v4860 = vadd.f32 %v4222, %v4859
    %4861 = vmatmul.f32.gmra.mxu0 %v4462
    %v4862 = vpop.f32.mrf.mxu0
    %v4863 = vadd.f32 %v4222, %v4862
    %4864 = vmatmul.f32.gmra.mxu0 %v4465
    %v4865 = vpop.f32.mrf.mxu0
    %v4866 = vadd.f32 %v4222, %v4865
    %4867 = vmatmul.f32.gmra.mxu0 %v4468
    %v4868 = vpop.f32.mrf.mxu0
    %v4869 = vadd.f32 %v4222, %v4868
    %4870 = vmatmul.f32.gmra.mxu0 %v4471
    %v4871 = vpop.f32.mrf.mxu0
    %v4872 = vadd.f32 %v4222, %v4871
    %4873 = vmatmul.f32.gmra.mxu0 %v4474
    %v4874 = vpop.f32.mrf.mxu0
    %v4875 = vadd.f32 %v4222, %v4874
    %4876 = vmatmul.f32.gmra.mxu0 %v4477
    %v4877 = vpop.f32.mrf.mxu0
    %v4878 = vadd.f32 %v4222, %v4877
    %4879 = vmatmul.f32.gmra.mxu0 %v4480
    %v4880 = vpop.f32.mrf.mxu0
    %v4881 = vadd.f32 %v4222, %v4880
    %4882 = vmatmul.f32.gmra.mxu0 %v4483
    %v4883 = vpop.f32.mrf.mxu0
    %v4884 = vadd.f32 %v4222, %v4883
    %4885 = vmatmul.f32.gmra.mxu0 %v4486
    %v4886 = vpop.f32.mrf.mxu0
    %v4887 = vadd.f32 %v4222, %v4886
    %4888 = vmatmul.f32.gmra.mxu0 %v4489
    %v4889 = vpop.f32.mrf.mxu0
    %v4890 = vadd.f32 %v4222, %v4889
    %4891 = vmatmul.f32.gmra.mxu0 %v4492
    %v4892 = vpop.f32.mrf.mxu0
    %v4893 = vadd.f32 %v4222, %v4892
    %4894 = vmatmul.f32.gmra.mxu0 %v4495
    %v4895 = vpop.f32.mrf.mxu0
    %v4896 = vadd.f32 %v4222, %v4895
    %4897 = vmatmul.f32.gmra.mxu0 %v4498
    %v4898 = vpop.f32.mrf.mxu0
    %v4899 = vadd.f32 %v4222, %v4898
    %4900 = vmatmul.f32.gmra.mxu0 %v4501
    %v4901 = vpop.f32.mrf.mxu0
    %v4902 = vadd.f32 %v4222, %v4901
    %4903 = vmatmul.f32.gmra.mxu0 %v4504
    %v4904 = vpop.f32.mrf.mxu0
    %v4905 = vadd.f32 %v4222, %v4904
    %4906 = vmatmul.f32.gmra.mxu0 %v4507
    %v4907 = vpop.f32.mrf.mxu0
    %v4908 = vadd.f32 %v4222, %v4907
    %4909 = vmatmul.f32.gmra.mxu0 %v4510
    %v4910 = vpop.f32.mrf.mxu0
    %v4911 = vadd.f32 %v4222, %v4910
    %4912 = vmatmul.f32.gmra.mxu0 %v4513
    %v4913 = vpop.f32.mrf.mxu0
    %v4914 = vadd.f32 %v4222, %v4913
    %4915 = vmatmul.f32.gmra.mxu0 %v4516
    %v4916 = vpop.f32.mrf.mxu0
    %v4917 = vadd.f32 %v4222, %v4916
    %4918 = vmatmul.f32.gmra.mxu0 %v4519
    %v4919 = vpop.f32.mrf.mxu0
    %v4920 = vadd.f32 %v4222, %v4919
    %4921 = vmatmul.f32.gmra.mxu0 %v4522
    %v4922 = vpop.f32.mrf.mxu0
    %v4923 = vadd.f32 %v4222, %v4922
    %4924 = vmatmul.f32.gmra.mxu0 %v4525
    %v4925 = vpop.f32.mrf.mxu0
    %v4926 = vadd.f32 %v4222, %v4925
    %4927 = vmatmul.f32.gmra.mxu0 %v4528
    %v4928 = vpop.f32.mrf.mxu0
    %v4929 = vadd.f32 %v4222, %v4928
    %4930 = vmatmul.f32.gmra.mxu0 %v4531
    %v4931 = vpop.f32.mrf.mxu0
    %v4932 = vadd.f32 %v4222, %v4931
    %4933 = vmatmul.f32.gmra.mxu0 %v4534
    %v4934 = vpop.f32.mrf.mxu0
    %v4935 = vadd.f32 %v4222, %v4934
    %4936 = vmatmul.f32.gmra.mxu0 %v4537
    %v4937 = vpop.f32.mrf.mxu0
    %v4938 = vadd.f32 %v4222, %v4937
    %4939 = vmatmul.f32.gmra.mxu0 %v4540
    %v4940 = vpop.f32.mrf.mxu0
    %v4941 = vadd.f32 %v4222, %v4940
    %4942 = vmatmul.f32.gmra.mxu0 %v4543
    %v4943 = vpop.f32.mrf.mxu0
    %v4944 = vadd.f32 %v4222, %v4943
    %4945 = vmatmul.f32.gmra.mxu0 %v4546
    %v4946 = vpop.f32.mrf.mxu0
    %v4947 = vadd.f32 %v4222, %v4946
    %4948 = vmatmul.f32.gmra.mxu0 %v4549
    %v4949 = vpop.f32.mrf.mxu0
    %v4950 = vadd.f32 %v4222, %v4949
    %4951 = vmatmul.f32.gmra.mxu0 %v4552
    %v4952 = vpop.f32.mrf.mxu0
    %v4953 = vadd.f32 %v4222, %v4952
    %4954 = vmatmul.f32.gmra.mxu0 %v4555
    %v4955 = vpop.f32.mrf.mxu0
    %v4956 = vadd.f32 %v4222, %v4955
    %4957 = vmatmul.f32.gmra.mxu0 %v4558
    %v4958 = vpop.f32.mrf.mxu0
    %v4959 = vadd.f32 %v4222, %v4958
    %4960 = vmatmul.f32.gmra.mxu0 %v4561
    %v4961 = vpop.f32.mrf.mxu0
    %v4962 = vadd.f32 %v4222, %v4961
    %4963 = vmatmul.f32.gmra.mxu0 %v4564
    %v4964 = vpop.f32.mrf.mxu0
    %v4965 = vadd.f32 %v4222, %v4964
    %4966 = vmatmul.f32.gmra.mxu0 %v4567
    %v4967 = vpop.f32.mrf.mxu0
    %v4968 = vadd.f32 %v4222, %v4967
    %4969 = vmatmul.f32.gmra.mxu0 %v4570
    %v4970 = vpop.f32.mrf.mxu0
    %v4971 = vadd.f32 %v4222, %v4970
    %4972 = vmatmul.f32.gmra.mxu0 %v4573
    %v4973 = vpop.f32.mrf.mxu0
    %v4974 = vadd.f32 %v4222, %v4973
    %4975 = vmatmul.f32.gmra.mxu0 %v4576
    %v4976 = vpop.f32.mrf.mxu0
    %v4977 = vadd.f32 %v4222, %v4976
    %4978 = vmatmul.f32.gmra.mxu0 %v4579
    %v4979 = vpop.f32.mrf.mxu0
    %v4980 = vadd.f32 %v4222, %v4979
    %4981 = vmatmul.f32.gmra.mxu0 %v4582
    %v4982 = vpop.f32.mrf.mxu0
    %v4983 = vadd.f32 %v4222, %v4982
    %4984 = vmatmul.f32.gmra.mxu0 %v4585
    %v4985 = vpop.f32.mrf.mxu0
    %v4986 = vadd.f32 %v4222, %v4985
    %4987 = vmatmul.f32.gmra.mxu0 %v4588
    %v4988 = vpop.f32.mrf.mxu0
    %v4989 = vadd.f32 %v4222, %v4988
    %4990 = vmatmul.f32.gmra.mxu0 %v4591
    %v4991 = vpop.f32.mrf.mxu0
    %v4992 = vadd.f32 %v4222, %v4991
    %4993 = vmatmul.f32.gmra.mxu0 %v4594
    %v4994 = vpop.f32.mrf.mxu0
    %v4995 = vadd.f32 %v4222, %v4994
    %4996 = vmatmul.f32.gmra.mxu0 %v4597
    %v4997 = vpop.f32.mrf.mxu0
    %v4998 = vadd.f32 %v4222, %v4997
    %4999 = vmatmul.f32.gmra.mxu0 %v4600
    %v5000 = vpop.f32.mrf.mxu0
    %v5001 = vadd.f32 %v4222, %v5000
    %5002 = vmatmul.f32.gmra.mxu0 %v4603
    %v5003 = vpop.f32.mrf.mxu0
    %v5004 = vadd.f32 %v4222, %v5003
    %5005 = vmatmul.f32.gmra.mxu0 %v4606
    %v5006 = vpop.f32.mrf.mxu0
    %v5007 = vadd.f32 %v4222, %v5006
    %5008 = vdwg.mxu0
    %5137 = vrot.lane.b32.xlu0 %v3833, 32
    %v5138 = vpop.permute.xlu0 %5137
    %5139 = vrot.lane.b32.xlu0 %v3836, 32
    %v5140 = vpop.permute.xlu0 %5139
    %5141 = vrot.lane.b32.xlu0 %v3839, 32
    %v5142 = vpop.permute.xlu0 %5141
    %5143 = vrot.lane.b32.xlu0 %v3842, 32
    %v5144 = vpop.permute.xlu0 %5143
    %5145 = vrot.lane.b32.xlu0 %v3845, 32
    %v5146 = vpop.permute.xlu0 %5145
    %5147 = vrot.lane.b32.xlu0 %v3848, 32
    %v5148 = vpop.permute.xlu0 %5147
    %5149 = vrot.lane.b32.xlu0 %v3851, 32
    %v5150 = vpop.permute.xlu0 %5149
    %5151 = vrot.lane.b32.xlu0 %v3854, 32
    %v5152 = vpop.permute.xlu0 %5151
    %5153 = vrot.lane.b32.xlu0 %v3857, 32
    %v5154 = vpop.permute.xlu0 %5153
    %5155 = vrot.lane.b32.xlu0 %v3860, 32
    %v5156 = vpop.permute.xlu0 %5155
    %5157 = vrot.lane.b32.xlu0 %v3863, 32
    %v5158 = vpop.permute.xlu0 %5157
    %5159 = vrot.lane.b32.xlu0 %v3866, 32
    %v5160 = vpop.permute.xlu0 %5159
    %5161 = vrot.lane.b32.xlu0 %v3869, 32
    %v5162 = vpop.permute.xlu0 %5161
    %5163 = vrot.lane.b32.xlu0 %v3872, 32
    %v5164 = vpop.permute.xlu0 %5163
    %5165 = vrot.lane.b32.xlu0 %v3875, 32
    %v5166 = vpop.permute.xlu0 %5165
    %5167 = vrot.lane.b32.xlu0 %v3878, 32
    %v5168 = vpop.permute.xlu0 %5167
    %5169 = vrot.lane.b32.xlu0 %v3881, 32
    %v5170 = vpop.permute.xlu0 %5169
    %5171 = vrot.lane.b32.xlu0 %v3884, 32
    %v5172 = vpop.permute.xlu0 %5171
    %5173 = vrot.lane.b32.xlu0 %v3887, 32
    %v5174 = vpop.permute.xlu0 %5173
    %5175 = vrot.lane.b32.xlu0 %v3890, 32
    %v5176 = vpop.permute.xlu0 %5175
    %5177 = vrot.lane.b32.xlu0 %v3893, 32
    %v5178 = vpop.permute.xlu0 %5177
    %5179 = vrot.lane.b32.xlu0 %v3896, 32
    %v5180 = vpop.permute.xlu0 %5179
    %5181 = vrot.lane.b32.xlu0 %v3899, 32
    %v5182 = vpop.permute.xlu0 %5181
    %5183 = vrot.lane.b32.xlu0 %v3902, 32
    %v5184 = vpop.permute.xlu0 %5183
    %5185 = vrot.lane.b32.xlu0 %v3905, 32
    %v5186 = vpop.permute.xlu0 %5185
    %5187 = vrot.lane.b32.xlu0 %v3908, 32
    %v5188 = vpop.permute.xlu0 %5187
    %5189 = vrot.lane.b32.xlu0 %v3911, 32
    %v5190 = vpop.permute.xlu0 %5189
    %5191 = vrot.lane.b32.xlu0 %v3914, 32
    %v5192 = vpop.permute.xlu0 %5191
    %5193 = vrot.lane.b32.xlu0 %v3917, 32
    %v5194 = vpop.permute.xlu0 %5193
    %5195 = vrot.lane.b32.xlu0 %v3920, 32
    %v5196 = vpop.permute.xlu0 %5195
    %5197 = vrot.lane.b32.xlu0 %v3923, 32
    %v5198 = vpop.permute.xlu0 %5197
    %5199 = vrot.lane.b32.xlu0 %v3926, 32
    %v5200 = vpop.permute.xlu0 %5199
    %5201 = vrot.lane.b32.xlu0 %v3929, 32
    %v5202 = vpop.permute.xlu0 %5201
    %5203 = vrot.lane.b32.xlu0 %v3932, 32
    %v5204 = vpop.permute.xlu0 %5203
    %5205 = vrot.lane.b32.xlu0 %v3935, 32
    %v5206 = vpop.permute.xlu0 %5205
    %5207 = vrot.lane.b32.xlu0 %v3938, 32
    %v5208 = vpop.permute.xlu0 %5207
    %5209 = vrot.lane.b32.xlu0 %v3941, 32
    %v5210 = vpop.permute.xlu0 %5209
    %5211 = vrot.lane.b32.xlu0 %v3944, 32
    %v5212 = vpop.permute.xlu0 %5211
    %5213 = vrot.lane.b32.xlu0 %v3947, 32
    %v5214 = vpop.permute.xlu0 %5213
    %5215 = vrot.lane.b32.xlu0 %v3950, 32
    %v5216 = vpop.permute.xlu0 %5215
    %5217 = vrot.lane.b32.xlu0 %v3953, 32
    %v5218 = vpop.permute.xlu0 %5217
    %5219 = vrot.lane.b32.xlu0 %v3956, 32
    %v5220 = vpop.permute.xlu0 %5219
    %5221 = vrot.lane.b32.xlu0 %v3959, 32
    %v5222 = vpop.permute.xlu0 %5221
    %5223 = vrot.lane.b32.xlu0 %v3962, 32
    %v5224 = vpop.permute.xlu0 %5223
    %5225 = vrot.lane.b32.xlu0 %v3965, 32
    %v5226 = vpop.permute.xlu0 %5225
    %5227 = vrot.lane.b32.xlu0 %v3968, 32
    %v5228 = vpop.permute.xlu0 %5227
    %5229 = vrot.lane.b32.xlu0 %v3971, 32
    %v5230 = vpop.permute.xlu0 %5229
    %5231 = vrot.lane.b32.xlu0 %v3974, 32
    %v5232 = vpop.permute.xlu0 %5231
    %5233 = vrot.lane.b32.xlu0 %v3977, 32
    %v5234 = vpop.permute.xlu0 %5233
    %5235 = vrot.lane.b32.xlu0 %v3980, 32
    %v5236 = vpop.permute.xlu0 %5235
    %5237 = vrot.lane.b32.xlu0 %v3983, 32
    %v5238 = vpop.permute.xlu0 %5237
    %5239 = vrot.lane.b32.xlu0 %v3986, 32
    %v5240 = vpop.permute.xlu0 %5239
    %5241 = vrot.lane.b32.xlu0 %v3989, 32
    %v5242 = vpop.permute.xlu0 %5241
    %5243 = vrot.lane.b32.xlu0 %v3992, 32
    %v5244 = vpop.permute.xlu0 %5243
    %5245 = vrot.lane.b32.xlu0 %v3995, 32
    %v5246 = vpop.permute.xlu0 %5245
    %5247 = vrot.lane.b32.xlu0 %v3998, 32
    %v5248 = vpop.permute.xlu0 %5247
    %5249 = vrot.lane.b32.xlu0 %v4001, 32
    %v5250 = vpop.permute.xlu0 %5249
    %5251 = vrot.lane.b32.xlu0 %v4004, 32
    %v5252 = vpop.permute.xlu0 %5251
    %5253 = vrot.lane.b32.xlu0 %v4007, 32
    %v5254 = vpop.permute.xlu0 %5253
    %5255 = vrot.lane.b32.xlu0 %v4010, 32
    %v5256 = vpop.permute.xlu0 %5255
    %5257 = vrot.lane.b32.xlu0 %v4013, 32
    %v5258 = vpop.permute.xlu0 %5257
    %5259 = vrot.lane.b32.xlu0 %v4016, 32
    %v5260 = vpop.permute.xlu0 %5259
    %5261 = vrot.lane.b32.xlu0 %v4019, 32
    %v5262 = vpop.permute.xlu0 %5261
    %5263 = vrot.lane.b32.xlu0 %v4022, 32
    %v5264 = vpop.permute.xlu0 %5263
    %5265 = vrot.lane.b32.xlu0 %v4025, 32
    %v5266 = vpop.permute.xlu0 %5265
    %5267 = vrot.lane.b32.xlu0 %v4028, 32
    %v5268 = vpop.permute.xlu0 %5267
    %5269 = vrot.lane.b32.xlu0 %v4031, 32
    %v5270 = vpop.permute.xlu0 %5269
    %5271 = vrot.lane.b32.xlu0 %v4034, 32
    %v5272 = vpop.permute.xlu0 %5271
    %5273 = vrot.lane.b32.xlu0 %v4037, 32
    %v5274 = vpop.permute.xlu0 %5273
    %5275 = vrot.lane.b32.xlu0 %v4040, 32
    %v5276 = vpop.permute.xlu0 %5275
    %5277 = vrot.lane.b32.xlu0 %v4043, 32
    %v5278 = vpop.permute.xlu0 %5277
    %5279 = vrot.lane.b32.xlu0 %v4046, 32
    %v5280 = vpop.permute.xlu0 %5279
    %5281 = vrot.lane.b32.xlu0 %v4049, 32
    %v5282 = vpop.permute.xlu0 %5281
    %5283 = vrot.lane.b32.xlu0 %v4052, 32
    %v5284 = vpop.permute.xlu0 %5283
    %5285 = vrot.lane.b32.xlu0 %v4055, 32
    %v5286 = vpop.permute.xlu0 %5285
    %5287 = vrot.lane.b32.xlu0 %v4058, 32
    %v5288 = vpop.permute.xlu0 %5287
    %5289 = vrot.lane.b32.xlu0 %v4061, 32
    %v5290 = vpop.permute.xlu0 %5289
    %5291 = vrot.lane.b32.xlu0 %v4064, 32
    %v5292 = vpop.permute.xlu0 %5291
    %5293 = vrot.lane.b32.xlu0 %v4067, 32
    %v5294 = vpop.permute.xlu0 %5293
    %5295 = vrot.lane.b32.xlu0 %v4070, 32
    %v5296 = vpop.permute.xlu0 %5295
    %5297 = vrot.lane.b32.xlu0 %v4073, 32
    %v5298 = vpop.permute.xlu0 %5297
    %5299 = vrot.lane.b32.xlu0 %v4076, 32
    %v5300 = vpop.permute.xlu0 %5299
    %5301 = vrot.lane.b32.xlu0 %v4079, 32
    %v5302 = vpop.permute.xlu0 %5301
    %5303 = vrot.lane.b32.xlu0 %v4082, 32
    %v5304 = vpop.permute.xlu0 %5303
    %5305 = vrot.lane.b32.xlu0 %v4085, 32
    %v5306 = vpop.permute.xlu0 %5305
    %5307 = vrot.lane.b32.xlu0 %v4088, 32
    %v5308 = vpop.permute.xlu0 %5307
    %5309 = vrot.lane.b32.xlu0 %v4091, 32
    %v5310 = vpop.permute.xlu0 %5309
    %5311 = vrot.lane.b32.xlu0 %v4094, 32
    %v5312 = vpop.permute.xlu0 %5311
    %5313 = vrot.lane.b32.xlu0 %v4097, 32
    %v5314 = vpop.permute.xlu0 %5313
    %5315 = vrot.lane.b32.xlu0 %v4100, 32
    %v5316 = vpop.permute.xlu0 %5315
    %5317 = vrot.lane.b32.xlu0 %v4103, 32
    %v5318 = vpop.permute.xlu0 %5317
    %5319 = vrot.lane.b32.xlu0 %v4106, 32
    %v5320 = vpop.permute.xlu0 %5319
    %5321 = vrot.lane.b32.xlu0 %v4109, 32
    %v5322 = vpop.permute.xlu0 %5321
    %5323 = vrot.lane.b32.xlu0 %v4112, 32
    %v5324 = vpop.permute.xlu0 %5323
    %5325 = vrot.lane.b32.xlu0 %v4115, 32
    %v5326 = vpop.permute.xlu0 %5325
    %5327 = vrot.lane.b32.xlu0 %v4118, 32
    %v5328 = vpop.permute.xlu0 %5327
    %5329 = vrot.lane.b32.xlu0 %v4121, 32
    %v5330 = vpop.permute.xlu0 %5329
    %5331 = vrot.lane.b32.xlu0 %v4124, 32
    %v5332 = vpop.permute.xlu0 %5331
    %5333 = vrot.lane.b32.xlu0 %v4127, 32
    %v5334 = vpop.permute.xlu0 %5333
    %5335 = vrot.lane.b32.xlu0 %v4130, 32
    %v5336 = vpop.permute.xlu0 %5335
    %5337 = vrot.lane.b32.xlu0 %v4133, 32
    %v5338 = vpop.permute.xlu0 %5337
    %5339 = vrot.lane.b32.xlu0 %v4136, 32
    %v5340 = vpop.permute.xlu0 %5339
    %5341 = vrot.lane.b32.xlu0 %v4139, 32
    %v5342 = vpop.permute.xlu0 %5341
    %5343 = vrot.lane.b32.xlu0 %v4142, 32
    %v5344 = vpop.permute.xlu0 %5343
    %5345 = vrot.lane.b32.xlu0 %v4145, 32
    %v5346 = vpop.permute.xlu0 %5345
    %5347 = vrot.lane.b32.xlu0 %v4148, 32
    %v5348 = vpop.permute.xlu0 %5347
    %5349 = vrot.lane.b32.xlu0 %v4151, 32
    %v5350 = vpop.permute.xlu0 %5349
    %5351 = vrot.lane.b32.xlu0 %v4154, 32
    %v5352 = vpop.permute.xlu0 %5351
    %5353 = vrot.lane.b32.xlu0 %v4157, 32
    %v5354 = vpop.permute.xlu0 %5353
    %5355 = vrot.lane.b32.xlu0 %v4160, 32
    %v5356 = vpop.permute.xlu0 %5355
    %5357 = vrot.lane.b32.xlu0 %v4163, 32
    %v5358 = vpop.permute.xlu0 %5357
    %5359 = vrot.lane.b32.xlu0 %v4166, 32
    %v5360 = vpop.permute.xlu0 %5359
    %5361 = vrot.lane.b32.xlu0 %v4169, 32
    %v5362 = vpop.permute.xlu0 %5361
    %5363 = vrot.lane.b32.xlu0 %v4172, 32
    %v5364 = vpop.permute.xlu0 %5363
    %5365 = vrot.lane.b32.xlu0 %v4175, 32
    %v5366 = vpop.permute.xlu0 %5365
    %5367 = vrot.lane.b32.xlu0 %v4178, 32
    %v5368 = vpop.permute.xlu0 %5367
    %5369 = vrot.lane.b32.xlu0 %v4181, 32
    %v5370 = vpop.permute.xlu0 %5369
    %5371 = vrot.lane.b32.xlu0 %v4184, 32
    %v5372 = vpop.permute.xlu0 %5371
    %5373 = vrot.lane.b32.xlu0 %v4187, 32
    %v5374 = vpop.permute.xlu0 %5373
    %5375 = vrot.lane.b32.xlu0 %v4190, 32
    %v5376 = vpop.permute.xlu0 %5375
    %5377 = vrot.lane.b32.xlu0 %v4193, 32
    %v5378 = vpop.permute.xlu0 %5377
    %5379 = vrot.lane.b32.xlu0 %v4196, 32
    %v5380 = vpop.permute.xlu0 %5379
    %5381 = vrot.lane.b32.xlu0 %v4199, 32
    %v5382 = vpop.permute.xlu0 %5381
    %5383 = vrot.lane.b32.xlu0 %v4202, 32
    %v5384 = vpop.permute.xlu0 %5383
    %5385 = vrot.lane.b32.xlu0 %v4205, 32
    %v5386 = vpop.permute.xlu0 %5385
    %5387 = vrot.lane.b32.xlu0 %v4208, 32
    %v5388 = vpop.permute.xlu0 %5387
    %5389 = vrot.lane.b32.xlu0 %v4211, 32
    %v5390 = vpop.permute.xlu0 %5389
    %5391 = vrot.lane.b32.xlu0 %v4214, 32
    %v5392 = vpop.permute.xlu0 %5391
    %v5521 = vadd.f32 %v4626, %v5138
    %v5522 = vadd.f32 %v4629, %v5140
    %v5523 = vadd.f32 %v4632, %v5142
    %v5524 = vadd.f32 %v4635, %v5144
    %v5525 = vadd.f32 %v4638, %v5146
    %v5526 = vadd.f32 %v4641, %v5148
    %v5527 = vadd.f32 %v4644, %v5150
    %v5528 = vadd.f32 %v4647, %v5152
    %v5529 = vadd.f32 %v4650, %v5154
    %v5530 = vadd.f32 %v4653, %v5156
    %v5531 = vadd.f32 %v4656, %v5158
    %v5532 = vadd.f32 %v4659, %v5160
    %v5533 = vadd.f32 %v4662, %v5162
    %v5534 = vadd.f32 %v4665, %v5164
    %v5535 = vadd.f32 %v4668, %v5166
    %v5536 = vadd.f32 %v4671, %v5168
    %v5537 = vadd.f32 %v4674, %v5170
    %v5538 = vadd.f32 %v4677, %v5172
    %v5539 = vadd.f32 %v4680, %v5174
    %v5540 = vadd.f32 %v4683, %v5176
    %v5541 = vadd.f32 %v4686, %v5178
    %v5542 = vadd.f32 %v4689, %v5180
    %v5543 = vadd.f32 %v4692, %v5182
    %v5544 = vadd.f32 %v4695, %v5184
    %v5545 = vadd.f32 %v4698, %v5186
    %v5546 = vadd.f32 %v4701, %v5188
    %v5547 = vadd.f32 %v4704, %v5190
    %v5548 = vadd.f32 %v4707, %v5192
    %v5549 = vadd.f32 %v4710, %v5194
    %v5550 = vadd.f32 %v4713, %v5196
    %v5551 = vadd.f32 %v4716, %v5198
    %v5552 = vadd.f32 %v4719, %v5200
    %v5553 = vadd.f32 %v4722, %v5202
    %v5554 = vadd.f32 %v4725, %v5204
    %v5555 = vadd.f32 %v4728, %v5206
    %v5556 = vadd.f32 %v4731, %v5208
    %v5557 = vadd.f32 %v4734, %v5210
    %v5558 = vadd.f32 %v4737, %v5212
    %v5559 = vadd.f32 %v4740, %v5214
    %v5560 = vadd.f32 %v4743, %v5216
    %v5561 = vadd.f32 %v4746, %v5218
    %v5562 = vadd.f32 %v4749, %v5220
    %v5563 = vadd.f32 %v4752, %v5222
    %v5564 = vadd.f32 %v4755, %v5224
    %v5565 = vadd.f32 %v4758, %v5226
    %v5566 = vadd.f32 %v4761, %v5228
    %v5567 = vadd.f32 %v4764, %v5230
    %v5568 = vadd.f32 %v4767, %v5232
    %v5569 = vadd.f32 %v4770, %v5234
    %v5570 = vadd.f32 %v4773, %v5236
    %v5571 = vadd.f32 %v4776, %v5238
    %v5572 = vadd.f32 %v4779, %v5240
    %v5573 = vadd.f32 %v4782, %v5242
    %v5574 = vadd.f32 %v4785, %v5244
    %v5575 = vadd.f32 %v4788, %v5246
    %v5576 = vadd.f32 %v4791, %v5248
    %v5577 = vadd.f32 %v4794, %v5250
    %v5578 = vadd.f32 %v4797, %v5252
    %v5579 = vadd.f32 %v4800, %v5254
    %v5580 = vadd.f32 %v4803, %v5256
    %v5581 = vadd.f32 %v4806, %v5258
    %v5582 = vadd.f32 %v4809, %v5260
    %v5583 = vadd.f32 %v4812, %v5262
    %v5584 = vadd.f32 %v4815, %v5264
    %v5585 = vadd.f32 %v4818, %v5266
    %v5586 = vadd.f32 %v4821, %v5268
    %v5587 = vadd.f32 %v4824, %v5270
    %v5588 = vadd.f32 %v4827, %v5272
    %v5589 = vadd.f32 %v4830, %v5274
    %v5590 = vadd.f32 %v4833, %v5276
    %v5591 = vadd.f32 %v4836, %v5278
    %v5592 = vadd.f32 %v4839, %v5280
    %v5593 = vadd.f32 %v4842, %v5282
    %v5594 = vadd.f32 %v4845, %v5284
    %v5595 = vadd.f32 %v4848, %v5286
    %v5596 = vadd.f32 %v4851, %v5288
    %v5597 = vadd.f32 %v4854, %v5290
    %v5598 = vadd.f32 %v4857, %v5292
    %v5599 = vadd.f32 %v4860, %v5294
    %v5600 = vadd.f32 %v4863, %v5296
    %v5601 = vadd.f32 %v4866, %v5298
    %v5602 = vadd.f32 %v4869, %v5300
    %v5603 = vadd.f32 %v4872, %v5302
    %v5604 = vadd.f32 %v4875, %v5304
    %v5605 = vadd.f32 %v4878, %v5306
    %v5606 = vadd.f32 %v4881, %v5308
    %v5607 = vadd.f32 %v4884, %v5310
    %v5608 = vadd.f32 %v4887, %v5312
    %v5609 = vadd.f32 %v4890, %v5314
    %v5610 = vadd.f32 %v4893, %v5316
    %v5611 = vadd.f32 %v4896, %v5318
    %v5612 = vadd.f32 %v4899, %v5320
    %v5613 = vadd.f32 %v4902, %v5322
    %v5614 = vadd.f32 %v4905, %v5324
    %v5615 = vadd.f32 %v4908, %v5326
    %v5616 = vadd.f32 %v4911, %v5328
    %v5617 = vadd.f32 %v4914, %v5330
    %v5618 = vadd.f32 %v4917, %v5332
    %v5619 = vadd.f32 %v4920, %v5334
    %v5620 = vadd.f32 %v4923, %v5336
    %v5621 = vadd.f32 %v4926, %v5338
    %v5622 = vadd.f32 %v4929, %v5340
    %v5623 = vadd.f32 %v4932, %v5342
    %v5624 = vadd.f32 %v4935, %v5344
    %v5625 = vadd.f32 %v4938, %v5346
    %v5626 = vadd.f32 %v4941, %v5348
    %v5627 = vadd.f32 %v4944, %v5350
    %v5628 = vadd.f32 %v4947, %v5352
    %v5629 = vadd.f32 %v4950, %v5354
    %v5630 = vadd.f32 %v4953, %v5356
    %v5631 = vadd.f32 %v4956, %v5358
    %v5632 = vadd.f32 %v4959, %v5360
    %v5633 = vadd.f32 %v4962, %v5362
    %v5634 = vadd.f32 %v4965, %v5364
    %v5635 = vadd.f32 %v4968, %v5366
    %v5636 = vadd.f32 %v4971, %v5368
    %v5637 = vadd.f32 %v4974, %v5370
    %v5638 = vadd.f32 %v4977, %v5372
    %v5639 = vadd.f32 %v4980, %v5374
    %v5640 = vadd.f32 %v4983, %v5376
    %v5641 = vadd.f32 %v4986, %v5378
    %v5642 = vadd.f32 %v4989, %v5380
    %v5643 = vadd.f32 %v4992, %v5382
    %v5644 = vadd.f32 %v4995, %v5384
    %v5645 = vadd.f32 %v4998, %v5386
    %v5646 = vadd.f32 %v5001, %v5388
    %v5647 = vadd.f32 %v5004, %v5390
    %v5648 = vadd.f32 %v5007, %v5392
    %v5649 = vld [vmem:[%s8] sm:$0xff]
    %v5650 = vld [vmem:[%s8 + $0x8] sm:$0xff]
    %v5651 = vld [vmem:[%s8 + $0x10] sm:$0xff]
    %v5652 = vld [vmem:[%s8 + $0x18] sm:$0xff]
    %v5653 = vld [vmem:[%s9] sm:$0x1]
    %v5655 = vperm.slane %v5653, 0
    %v5658 = vsel %vm3430, %v54, 0
    %v5661 = vsel %vm3430, %v55, 0
    %v5664 = vsel %vm3430, %v56, 0
    %v5667 = vsel %vm3430, %v57, 0
    %v5670 = vsel %vm3430, %v58, 0
    %v5673 = vsel %vm3430, %v59, 0
    %v5676 = vsel %vm3430, %v60, 0
    %v5679 = vsel %vm3430, %v61, 0
    %v5682 = vsel %vm3430, %v62, 0
    %v5685 = vsel %vm3430, %v63, 0
    %v5688 = vsel %vm3430, %v64, 0
    %v5691 = vsel %vm3430, %v65, 0
    %v5694 = vsel %vm3430, %v66, 0
    %v5697 = vsel %vm3430, %v67, 0
    %v5700 = vsel %vm3430, %v68, 0
    %v5703 = vsel %vm3430, %v69, 0
    %5705 = vmatpush.msra.mxu0 0.0
    %5706 = vmatpush.msra.mxu0 0.0
    %5707 = vmatpush.msra.mxu0 0.0
    %5708 = vmatpush.msra.mxu0 0.0
    %5709 = vmatpush.msra.mxu0 0.0
    %5710 = vmatpush.msra.mxu0 0.0
    %5711 = vmatpush.msra.mxu0 0.0
    %5712 = vmatpush.msra.mxu0 0.0
    %5713 = vmatpush.msra.mxu0 0.0
    %5714 = vmatpush.msra.mxu0 0.0
    %5715 = vmatpush.msra.mxu0 0.0
    %5716 = vmatpush.msra.mxu0 0.0
    %5717 = vmatpush.msra.mxu0 %v5652
    %5718 = vmatpush.msra.mxu0 %v5651
    %5719 = vmatpush.msra.mxu0 %v5650
    %5720 = vmatpush.msra.mxu0 %v5649
    %5721 = vmatmul.f32.gmra.mxu0 %v5658
    %v5722 = vpop.f32.mrf.mxu0
    %v5723 = vadd.f32 %v5655, %v5722
    %5724 = vmatmul.f32.gmra.mxu0 %v5661
    %v5725 = vpop.f32.mrf.mxu0
    %v5726 = vadd.f32 %v5655, %v5725
    %5727 = vmatmul.f32.gmra.mxu0 %v5664
    %v5728 = vpop.f32.mrf.mxu0
    %v5729 = vadd.f32 %v5655, %v5728
    %5730 = vmatmul.f32.gmra.mxu0 %v5667
    %v5731 = vpop.f32.mrf.mxu0
    %v5732 = vadd.f32 %v5655, %v5731
    %5733 = vmatmul.f32.gmra.mxu0 %v5670
    %v5734 = vpop.f32.mrf.mxu0
    %v5735 = vadd.f32 %v5655, %v5734
    %5736 = vmatmul.f32.gmra.mxu0 %v5673
    %v5737 = vpop.f32.mrf.mxu0
    %v5738 = vadd.f32 %v5655, %v5737
    %5739 = vmatmul.f32.gmra.mxu0 %v5676
    %v5740 = vpop.f32.mrf.mxu0
    %v5741 = vadd.f32 %v5655, %v5740
    %5742 = vmatmul.f32.gmra.mxu0 %v5679
    %v5743 = vpop.f32.mrf.mxu0
    %v5744 = vadd.f32 %v5655, %v5743
    %5745 = vmatmul.f32.gmra.mxu0 %v5682
    %v5746 = vpop.f32.mrf.mxu0
    %v5747 = vadd.f32 %v5655, %v5746
    %5748 = vmatmul.f32.gmra.mxu0 %v5685
    %v5749 = vpop.f32.mrf.mxu0
    %v5750 = vadd.f32 %v5655, %v5749
    %5751 = vmatmul.f32.gmra.mxu0 %v5688
    %v5752 = vpop.f32.mrf.mxu0
    %v5753 = vadd.f32 %v5655, %v5752
    %5754 = vmatmul.f32.gmra.mxu0 %v5691
    %v5755 = vpop.f32.mrf.mxu0
    %v5756 = vadd.f32 %v5655, %v5755
    %5757 = vmatmul.f32.gmra.mxu0 %v5694
    %v5758 = vpop.f32.mrf.mxu0
    %v5759 = vadd.f32 %v5655, %v5758
    %5760 = vmatmul.f32.gmra.mxu0 %v5697
    %v5761 = vpop.f32.mrf.mxu0
    %v5762 = vadd.f32 %v5655, %v5761
    %5763 = vmatmul.f32.gmra.mxu0 %v5700
    %v5764 = vpop.f32.mrf.mxu0
    %v5765 = vadd.f32 %v5655, %v5764
    %5766 = vmatmul.f32.gmra.mxu0 %v5703
    %v5767 = vpop.f32.mrf.mxu0
    %v5768 = vadd.f32 %v5655, %v5767
    %5769 = vdwg.mxu0
    %v5786 = vrot.slane %v5723, 1
    %v5787 = vrot.slane %v5723, 2
    %v5788 = vrot.slane %v5723, 3
    %v5789 = vrot.slane %v5723, 4
    %v5790 = vrot.slane %v5723, 5
    %v5791 = vrot.slane %v5723, 6
    %v5792 = vrot.slane %v5723, 7
    %v5793 = vrot.slane %v5726, 1
    %v5794 = vrot.slane %v5726, 2
    %v5795 = vrot.slane %v5726, 3
    %v5796 = vrot.slane %v5726, 4
    %v5797 = vrot.slane %v5726, 5
    %v5798 = vrot.slane %v5726, 6
    %v5799 = vrot.slane %v5726, 7
    %v5800 = vrot.slane %v5729, 1
    %v5801 = vrot.slane %v5729, 2
    %v5802 = vrot.slane %v5729, 3
    %v5803 = vrot.slane %v5729, 4
    %v5804 = vrot.slane %v5729, 5
    %v5805 = vrot.slane %v5729, 6
    %v5806 = vrot.slane %v5729, 7
    %v5807 = vrot.slane %v5732, 1
    %v5808 = vrot.slane %v5732, 2
    %v5809 = vrot.slane %v5732, 3
    %v5810 = vrot.slane %v5732, 4
    %v5811 = vrot.slane %v5732, 5
    %v5812 = vrot.slane %v5732, 6
    %v5813 = vrot.slane %v5732, 7
    %v5814 = vrot.slane %v5735, 1
    %v5815 = vrot.slane %v5735, 2
    %v5816 = vrot.slane %v5735, 3
    %v5817 = vrot.slane %v5735, 4
    %v5818 = vrot.slane %v5735, 5
    %v5819 = vrot.slane %v5735, 6
    %v5820 = vrot.slane %v5735, 7
    %v5821 = vrot.slane %v5738, 1
    %v5822 = vrot.slane %v5738, 2
    %v5823 = vrot.slane %v5738, 3
    %v5824 = vrot.slane %v5738, 4
    %v5825 = vrot.slane %v5738, 5
    %v5826 = vrot.slane %v5738, 6
    %v5827 = vrot.slane %v5738, 7
    %v5828 = vrot.slane %v5741, 1
    %v5829 = vrot.slane %v5741, 2
    %v5830 = vrot.slane %v5741, 3
    %v5831 = vrot.slane %v5741, 4
    %v5832 = vrot.slane %v5741, 5
    %v5833 = vrot.slane %v5741, 6
    %v5834 = vrot.slane %v5741, 7
    %v5835 = vrot.slane %v5744, 1
    %v5836 = vrot.slane %v5744, 2
    %v5837 = vrot.slane %v5744, 3
    %v5838 = vrot.slane %v5744, 4
    %v5839 = vrot.slane %v5744, 5
    %v5840 = vrot.slane %v5744, 6
    %v5841 = vrot.slane %v5744, 7
    %v5842 = vrot.slane %v5747, 1
    %v5843 = vrot.slane %v5747, 2
    %v5844 = vrot.slane %v5747, 3
    %v5845 = vrot.slane %v5747, 4
    %v5846 = vrot.slane %v5747, 5
    %v5847 = vrot.slane %v5747, 6
    %v5848 = vrot.slane %v5747, 7
    %v5849 = vrot.slane %v5750, 1
    %v5850 = vrot.slane %v5750, 2
    %v5851 = vrot.slane %v5750, 3
    %v5852 = vrot.slane %v5750, 4
    %v5853 = vrot.slane %v5750, 5
    %v5854 = vrot.slane %v5750, 6
    %v5855 = vrot.slane %v5750, 7
    %v5856 = vrot.slane %v5753, 1
    %v5857 = vrot.slane %v5753, 2
    %v5858 = vrot.slane %v5753, 3
    %v5859 = vrot.slane %v5753, 4
    %v5860 = vrot.slane %v5753, 5
    %v5861 = vrot.slane %v5753, 6
    %v5862 = vrot.slane %v5753, 7
    %v5863 = vrot.slane %v5756, 1
    %v5864 = vrot.slane %v5756, 2
    %v5865 = vrot.slane %v5756, 3
    %v5866 = vrot.slane %v5756, 4
    %v5867 = vrot.slane %v5756, 5
    %v5868 = vrot.slane %v5756, 6
    %v5869 = vrot.slane %v5756, 7
    %v5870 = vrot.slane %v5759, 1
    %v5871 = vrot.slane %v5759, 2
    %v5872 = vrot.slane %v5759, 3
    %v5873 = vrot.slane %v5759, 4
    %v5874 = vrot.slane %v5759, 5
    %v5875 = vrot.slane %v5759, 6
    %v5876 = vrot.slane %v5759, 7
    %v5877 = vrot.slane %v5762, 1
    %v5878 = vrot.slane %v5762, 2
    %v5879 = vrot.slane %v5762, 3
    %v5880 = vrot.slane %v5762, 4
    %v5881 = vrot.slane %v5762, 5
    %v5882 = vrot.slane %v5762, 6
    %v5883 = vrot.slane %v5762, 7
    %v5884 = vrot.slane %v5765, 1
    %v5885 = vrot.slane %v5765, 2
    %v5886 = vrot.slane %v5765, 3
    %v5887 = vrot.slane %v5765, 4
    %v5888 = vrot.slane %v5765, 5
    %v5889 = vrot.slane %v5765, 6
    %v5890 = vrot.slane %v5765, 7
    %v5891 = vrot.slane %v5768, 1
    %v5892 = vrot.slane %v5768, 2
    %v5893 = vrot.slane %v5768, 3
    %v5894 = vrot.slane %v5768, 4
    %v5895 = vrot.slane %v5768, 5
    %v5896 = vrot.slane %v5768, 6
    %v5897 = vrot.slane %v5768, 7
    %v5898 = vperm.slane %v5723, 0
    %v5899 = vperm.slane %v5786, 0
    %v5900 = vperm.slane %v5787, 0
    %v5901 = vperm.slane %v5788, 0
    %v5902 = vperm.slane %v5789, 0
    %v5903 = vperm.slane %v5790, 0
    %v5904 = vperm.slane %v5791, 0
    %v5905 = vperm.slane %v5792, 0
    %v5906 = vperm.slane %v5726, 0
    %v5907 = vperm.slane %v5793, 0
    %v5908 = vperm.slane %v5794, 0
    %v5909 = vperm.slane %v5795, 0
    %v5910 = vperm.slane %v5796, 0
    %v5911 = vperm.slane %v5797, 0
    %v5912 = vperm.slane %v5798, 0
    %v5913 = vperm.slane %v5799, 0
    %v5914 = vperm.slane %v5729, 0
    %v5915 = vperm.slane %v5800, 0
    %v5916 = vperm.slane %v5801, 0
    %v5917 = vperm.slane %v5802, 0
    %v5918 = vperm.slane %v5803, 0
    %v5919 = vperm.slane %v5804, 0
    %v5920 = vperm.slane %v5805, 0
    %v5921 = vperm.slane %v5806, 0
    %v5922 = vperm.slane %v5732, 0
    %v5923 = vperm.slane %v5807, 0
    %v5924 = vperm.slane %v5808, 0
    %v5925 = vperm.slane %v5809, 0
    %v5926 = vperm.slane %v5810, 0
    %v5927 = vperm.slane %v5811, 0
    %v5928 = vperm.slane %v5812, 0
    %v5929 = vperm.slane %v5813, 0
    %v5930 = vperm.slane %v5735, 0
    %v5931 = vperm.slane %v5814, 0
    %v5932 = vperm.slane %v5815, 0
    %v5933 = vperm.slane %v5816, 0
    %v5934 = vperm.slane %v5817, 0
    %v5935 = vperm.slane %v5818, 0
    %v5936 = vperm.slane %v5819, 0
    %v5937 = vperm.slane %v5820, 0
    %v5938 = vperm.slane %v5738, 0
    %v5939 = vperm.slane %v5821, 0
    %v5940 = vperm.slane %v5822, 0
    %v5941 = vperm.slane %v5823, 0
    %v5942 = vperm.slane %v5824, 0
    %v5943 = vperm.slane %v5825, 0
    %v5944 = vperm.slane %v5826, 0
    %v5945 = vperm.slane %v5827, 0
    %v5946 = vperm.slane %v5741, 0
    %v5947 = vperm.slane %v5828, 0
    %v5948 = vperm.slane %v5829, 0
    %v5949 = vperm.slane %v5830, 0
    %v5950 = vperm.slane %v5831, 0
    %v5951 = vperm.slane %v5832, 0
    %v5952 = vperm.slane %v5833, 0
    %v5953 = vperm.slane %v5834, 0
    %v5954 = vperm.slane %v5744, 0
    %v5955 = vperm.slane %v5835, 0
    %v5956 = vperm.slane %v5836, 0
    %v5957 = vperm.slane %v5837, 0
    %v5958 = vperm.slane %v5838, 0
    %v5959 = vperm.slane %v5839, 0
    %v5960 = vperm.slane %v5840, 0
    %v5961 = vperm.slane %v5841, 0
    %v5962 = vperm.slane %v5747, 0
    %v5963 = vperm.slane %v5842, 0
    %v5964 = vperm.slane %v5843, 0
    %v5965 = vperm.slane %v5844, 0
    %v5966 = vperm.slane %v5845, 0
    %v5967 = vperm.slane %v5846, 0
    %v5968 = vperm.slane %v5847, 0
    %v5969 = vperm.slane %v5848, 0
    %v5970 = vperm.slane %v5750, 0
    %v5971 = vperm.slane %v5849, 0
    %v5972 = vperm.slane %v5850, 0
    %v5973 = vperm.slane %v5851, 0
    %v5974 = vperm.slane %v5852, 0
    %v5975 = vperm.slane %v5853, 0
    %v5976 = vperm.slane %v5854, 0
    %v5977 = vperm.slane %v5855, 0
    %v5978 = vperm.slane %v5753, 0
    %v5979 = vperm.slane %v5856, 0
    %v5980 = vperm.slane %v5857, 0
    %v5981 = vperm.slane %v5858, 0
    %v5982 = vperm.slane %v5859, 0
    %v5983 = vperm.slane %v5860, 0
    %v5984 = vperm.slane %v5861, 0
    %v5985 = vperm.slane %v5862, 0
    %v5986 = vperm.slane %v5756, 0
    %v5987 = vperm.slane %v5863, 0
    %v5988 = vperm.slane %v5864, 0
    %v5989 = vperm.slane %v5865, 0
    %v5990 = vperm.slane %v5866, 0
    %v5991 = vperm.slane %v5867, 0
    %v5992 = vperm.slane %v5868, 0
    %v5993 = vperm.slane %v5869, 0
    %v5994 = vperm.slane %v5759, 0
    %v5995 = vperm.slane %v5870, 0
    %v5996 = vperm.slane %v5871, 0
    %v5997 = vperm.slane %v5872, 0
    %v5998 = vperm.slane %v5873, 0
    %v5999 = vperm.slane %v5874, 0
    %v6000 = vperm.slane %v5875, 0
    %v6001 = vperm.slane %v5876, 0
    %v6002 = vperm.slane %v5762, 0
    %v6003 = vperm.slane %v5877, 0
    %v6004 = vperm.slane %v5878, 0
    %v6005 = vperm.slane %v5879, 0
    %v6006 = vperm.slane %v5880, 0
    %v6007 = vperm.slane %v5881, 0
    %v6008 = vperm.slane %v5882, 0
    %v6009 = vperm.slane %v5883, 0
    %v6010 = vperm.slane %v5765, 0
    %v6011 = vperm.slane %v5884, 0
    %v6012 = vperm.slane %v5885, 0
    %v6013 = vperm.slane %v5886, 0
    %v6014 = vperm.slane %v5887, 0
    %v6015 = vperm.slane %v5888, 0
    %v6016 = vperm.slane %v5889, 0
    %v6017 = vperm.slane %v5890, 0
    %v6018 = vperm.slane %v5768, 0
    %v6019 = vperm.slane %v5891, 0
    %v6020 = vperm.slane %v5892, 0
    %v6021 = vperm.slane %v5893, 0
    %v6022 = vperm.slane %v5894, 0
    %v6023 = vperm.slane %v5895, 0
    %v6024 = vperm.slane %v5896, 0
    %v6025 = vperm.slane %v5897, 0
    %v6154 = vsub.f32 %v5898, %v4626
    %v6155 = vsub.f32 %v5899, %v4629
    %v6156 = vsub.f32 %v5900, %v4632
    %v6157 = vsub.f32 %v5901, %v4635
    %v6158 = vsub.f32 %v5902, %v4638
    %v6159 = vsub.f32 %v5903, %v4641
    %v6160 = vsub.f32 %v5904, %v4644
    %v6161 = vsub.f32 %v5905, %v4647
    %v6162 = vsub.f32 %v5906, %v4650
    %v6163 = vsub.f32 %v5907, %v4653
    %v6164 = vsub.f32 %v5908, %v4656
    %v6165 = vsub.f32 %v5909, %v4659
    %v6166 = vsub.f32 %v5910, %v4662
    %v6167 = vsub.f32 %v5911, %v4665
    %v6168 = vsub.f32 %v5912, %v4668
    %v6169 = vsub.f32 %v5913, %v4671
    %v6170 = vsub.f32 %v5914, %v4674
    %v6171 = vsub.f32 %v5915, %v4677
    %v6172 = vsub.f32 %v5916, %v4680
    %v6173 = vsub.f32 %v5917, %v4683
    %v6174 = vsub.f32 %v5918, %v4686
    %v6175 = vsub.f32 %v5919, %v4689
    %v6176 = vsub.f32 %v5920, %v4692
    %v6177 = vsub.f32 %v5921, %v4695
    %v6178 = vsub.f32 %v5922, %v4698
    %v6179 = vsub.f32 %v5923, %v4701
    %v6180 = vsub.f32 %v5924, %v4704
    %v6181 = vsub.f32 %v5925, %v4707
    %v6182 = vsub.f32 %v5926, %v4710
    %v6183 = vsub.f32 %v5927, %v4713
    %v6184 = vsub.f32 %v5928, %v4716
    %v6185 = vsub.f32 %v5929, %v4719
    %v6186 = vsub.f32 %v5930, %v4722
    %v6187 = vsub.f32 %v5931, %v4725
    %v6188 = vsub.f32 %v5932, %v4728
    %v6189 = vsub.f32 %v5933, %v4731
    %v6190 = vsub.f32 %v5934, %v4734
    %v6191 = vsub.f32 %v5935, %v4737
    %v6192 = vsub.f32 %v5936, %v4740
    %v6193 = vsub.f32 %v5937, %v4743
    %v6194 = vsub.f32 %v5938, %v4746
    %v6195 = vsub.f32 %v5939, %v4749
    %v6196 = vsub.f32 %v5940, %v4752
    %v6197 = vsub.f32 %v5941, %v4755
    %v6198 = vsub.f32 %v5942, %v4758
    %v6199 = vsub.f32 %v5943, %v4761
    %v6200 = vsub.f32 %v5944, %v4764
    %v6201 = vsub.f32 %v5945, %v4767
    %v6202 = vsub.f32 %v5946, %v4770
    %v6203 = vsub.f32 %v5947, %v4773
    %v6204 = vsub.f32 %v5948, %v4776
    %v6205 = vsub.f32 %v5949, %v4779
    %v6206 = vsub.f32 %v5950, %v4782
    %v6207 = vsub.f32 %v5951, %v4785
    %v6208 = vsub.f32 %v5952, %v4788
    %v6209 = vsub.f32 %v5953, %v4791
    %v6210 = vsub.f32 %v5954, %v4794
    %v6211 = vsub.f32 %v5955, %v4797
    %v6212 = vsub.f32 %v5956, %v4800
    %v6213 = vsub.f32 %v5957, %v4803
    %v6214 = vsub.f32 %v5958, %v4806
    %v6215 = vsub.f32 %v5959, %v4809
    %v6216 = vsub.f32 %v5960, %v4812
    %v6217 = vsub.f32 %v5961, %v4815
    %v6218 = vsub.f32 %v5962, %v4818
    %v6219 = vsub.f32 %v5963, %v4821
    %v6220 = vsub.f32 %v5964, %v4824
    %v6221 = vsub.f32 %v5965, %v4827
    %v6222 = vsub.f32 %v5966, %v4830
    %v6223 = vsub.f32 %v5967, %v4833
    %v6224 = vsub.f32 %v5968, %v4836
    %v6225 = vsub.f32 %v5969, %v4839
    %v6226 = vsub.f32 %v5970, %v4842
    %v6227 = vsub.f32 %v5971, %v4845
    %v6228 = vsub.f32 %v5972, %v4848
    %v6229 = vsub.f32 %v5973, %v4851
    %v6230 = vsub.f32 %v5974, %v4854
    %v6231 = vsub.f32 %v5975, %v4857
    %v6232 = vsub.f32 %v5976, %v4860
    %v6233 = vsub.f32 %v5977, %v4863
    %v6234 = vsub.f32 %v5978, %v4866
    %v6235 = vsub.f32 %v5979, %v4869
    %v6236 = vsub.f32 %v5980, %v4872
    %v6237 = vsub.f32 %v5981, %v4875
    %v6238 = vsub.f32 %v5982, %v4878
    %v6239 = vsub.f32 %v5983, %v4881
    %v6240 = vsub.f32 %v5984, %v4884
    %v6241 = vsub.f32 %v5985, %v4887
    %v6242 = vsub.f32 %v5986, %v4890
    %v6243 = vsub.f32 %v5987, %v4893
    %v6244 = vsub.f32 %v5988, %v4896
    %v6245 = vsub.f32 %v5989, %v4899
    %v6246 = vsub.f32 %v5990, %v4902
    %v6247 = vsub.f32 %v5991, %v4905
    %v6248 = vsub.f32 %v5992, %v4908
    %v6249 = vsub.f32 %v5993, %v4911
    %v6250 = vsub.f32 %v5994, %v4914
    %v6251 = vsub.f32 %v5995, %v4917
    %v6252 = vsub.f32 %v5996, %v4920
    %v6253 = vsub.f32 %v5997, %v4923
    %v6254 = vsub.f32 %v5998, %v4926
    %v6255 = vsub.f32 %v5999, %v4929
    %v6256 = vsub.f32 %v6000, %v4932
    %v6257 = vsub.f32 %v6001, %v4935
    %v6258 = vsub.f32 %v6002, %v4938
    %v6259 = vsub.f32 %v6003, %v4941
    %v6260 = vsub.f32 %v6004, %v4944
    %v6261 = vsub.f32 %v6005, %v4947
    %v6262 = vsub.f32 %v6006, %v4950
    %v6263 = vsub.f32 %v6007, %v4953
    %v6264 = vsub.f32 %v6008, %v4956
    %v6265 = vsub.f32 %v6009, %v4959
    %v6266 = vsub.f32 %v6010, %v4962
    %v6267 = vsub.f32 %v6011, %v4965
    %v6268 = vsub.f32 %v6012, %v4968
    %v6269 = vsub.f32 %v6013, %v4971
    %v6270 = vsub.f32 %v6014, %v4974
    %v6271 = vsub.f32 %v6015, %v4977
    %v6272 = vsub.f32 %v6016, %v4980
    %v6273 = vsub.f32 %v6017, %v4983
    %v6274 = vsub.f32 %v6018, %v4986
    %v6275 = vsub.f32 %v6019, %v4989
    %v6276 = vsub.f32 %v6020, %v4992
    %v6277 = vsub.f32 %v6021, %v4995
    %v6278 = vsub.f32 %v6022, %v4998
    %v6279 = vsub.f32 %v6023, %v5001
    %v6280 = vsub.f32 %v6024, %v5004
    %v6281 = vsub.f32 %v6025, %v5007
    %v6282 = vadd.f32 %v6154, %v3833
    %v6283 = vadd.f32 %v6155, %v3836
    %v6284 = vadd.f32 %v6156, %v3839
    %v6285 = vadd.f32 %v6157, %v3842
    %v6286 = vadd.f32 %v6158, %v3845
    %v6287 = vadd.f32 %v6159, %v3848
    %v6288 = vadd.f32 %v6160, %v3851
    %v6289 = vadd.f32 %v6161, %v3854
    %v6290 = vadd.f32 %v6162, %v3857
    %v6291 = vadd.f32 %v6163, %v3860
    %v6292 = vadd.f32 %v6164, %v3863
    %v6293 = vadd.f32 %v6165, %v3866
    %v6294 = vadd.f32 %v6166, %v3869
    %v6295 = vadd.f32 %v6167, %v3872
    %v6296 = vadd.f32 %v6168, %v3875
    %v6297 = vadd.f32 %v6169, %v3878
    %v6298 = vadd.f32 %v6170, %v3881
    %v6299 = vadd.f32 %v6171, %v3884
    %v6300 = vadd.f32 %v6172, %v3887
    %v6301 = vadd.f32 %v6173, %v3890
    %v6302 = vadd.f32 %v6174, %v3893
    %v6303 = vadd.f32 %v6175, %v3896
    %v6304 = vadd.f32 %v6176, %v3899
    %v6305 = vadd.f32 %v6177, %v3902
    %v6306 = vadd.f32 %v6178, %v3905
    %v6307 = vadd.f32 %v6179, %v3908
    %v6308 = vadd.f32 %v6180, %v3911
    %v6309 = vadd.f32 %v6181, %v3914
    %v6310 = vadd.f32 %v6182, %v3917
    %v6311 = vadd.f32 %v6183, %v3920
    %v6312 = vadd.f32 %v6184, %v3923
    %v6313 = vadd.f32 %v6185, %v3926
    %v6314 = vadd.f32 %v6186, %v3929
    %v6315 = vadd.f32 %v6187, %v3932
    %v6316 = vadd.f32 %v6188, %v3935
    %v6317 = vadd.f32 %v6189, %v3938
    %v6318 = vadd.f32 %v6190, %v3941
    %v6319 = vadd.f32 %v6191, %v3944
    %v6320 = vadd.f32 %v6192, %v3947
    %v6321 = vadd.f32 %v6193, %v3950
    %v6322 = vadd.f32 %v6194, %v3953
    %v6323 = vadd.f32 %v6195, %v3956
    %v6324 = vadd.f32 %v6196, %v3959
    %v6325 = vadd.f32 %v6197, %v3962
    %v6326 = vadd.f32 %v6198, %v3965
    %v6327 = vadd.f32 %v6199, %v3968
    %v6328 = vadd.f32 %v6200, %v3971
    %v6329 = vadd.f32 %v6201, %v3974
    %v6330 = vadd.f32 %v6202, %v3977
    %v6331 = vadd.f32 %v6203, %v3980
    %v6332 = vadd.f32 %v6204, %v3983
    %v6333 = vadd.f32 %v6205, %v3986
    %v6334 = vadd.f32 %v6206, %v3989
    %v6335 = vadd.f32 %v6207, %v3992
    %v6336 = vadd.f32 %v6208, %v3995
    %v6337 = vadd.f32 %v6209, %v3998
    %v6338 = vadd.f32 %v6210, %v4001
    %v6339 = vadd.f32 %v6211, %v4004
    %v6340 = vadd.f32 %v6212, %v4007
    %v6341 = vadd.f32 %v6213, %v4010
    %v6342 = vadd.f32 %v6214, %v4013
    %v6343 = vadd.f32 %v6215, %v4016
    %v6344 = vadd.f32 %v6216, %v4019
    %v6345 = vadd.f32 %v6217, %v4022
    %v6346 = vadd.f32 %v6218, %v4025
    %v6347 = vadd.f32 %v6219, %v4028
    %v6348 = vadd.f32 %v6220, %v4031
    %v6349 = vadd.f32 %v6221, %v4034
    %v6350 = vadd.f32 %v6222, %v4037
    %v6351 = vadd.f32 %v6223, %v4040
    %v6352 = vadd.f32 %v6224, %v4043
    %v6353 = vadd.f32 %v6225, %v4046
    %v6354 = vadd.f32 %v6226, %v4049
    %v6355 = vadd.f32 %v6227, %v4052
    %v6356 = vadd.f32 %v6228, %v4055
    %v6357 = vadd.f32 %v6229, %v4058
    %v6358 = vadd.f32 %v6230, %v4061
    %v6359 = vadd.f32 %v6231, %v4064
    %v6360 = vadd.f32 %v6232, %v4067
    %v6361 = vadd.f32 %v6233, %v4070
    %v6362 = vadd.f32 %v6234, %v4073
    %v6363 = vadd.f32 %v6235, %v4076
    %v6364 = vadd.f32 %v6236, %v4079
    %v6365 = vadd.f32 %v6237, %v4082
    %v6366 = vadd.f32 %v6238, %v4085
    %v6367 = vadd.f32 %v6239, %v4088
    %v6368 = vadd.f32 %v6240, %v4091
    %v6369 = vadd.f32 %v6241, %v4094
    %v6370 = vadd.f32 %v6242, %v4097
    %v6371 = vadd.f32 %v6243, %v4100
    %v6372 = vadd.f32 %v6244, %v4103
    %v6373 = vadd.f32 %v6245, %v4106
    %v6374 = vadd.f32 %v6246, %v4109
    %v6375 = vadd.f32 %v6247, %v4112
    %v6376 = vadd.f32 %v6248, %v4115
    %v6377 = vadd.f32 %v6249, %v4118
    %v6378 = vadd.f32 %v6250, %v4121
    %v6379 = vadd.f32 %v6251, %v4124
    %v6380 = vadd.f32 %v6252, %v4127
    %v6381 = vadd.f32 %v6253, %v4130
    %v6382 = vadd.f32 %v6254, %v4133
    %v6383 = vadd.f32 %v6255, %v4136
    %v6384 = vadd.f32 %v6256, %v4139
    %v6385 = vadd.f32 %v6257, %v4142
    %v6386 = vadd.f32 %v6258, %v4145
    %v6387 = vadd.f32 %v6259, %v4148
    %v6388 = vadd.f32 %v6260, %v4151
    %v6389 = vadd.f32 %v6261, %v4154
    %v6390 = vadd.f32 %v6262, %v4157
    %v6391 = vadd.f32 %v6263, %v4160
    %v6392 = vadd.f32 %v6264, %v4163
    %v6393 = vadd.f32 %v6265, %v4166
    %v6394 = vadd.f32 %v6266, %v4169
    %v6395 = vadd.f32 %v6267, %v4172
    %v6396 = vadd.f32 %v6268, %v4175
    %v6397 = vadd.f32 %v6269, %v4178
    %v6398 = vadd.f32 %v6270, %v4181
    %v6399 = vadd.f32 %v6271, %v4184
    %v6400 = vadd.f32 %v6272, %v4187
    %v6401 = vadd.f32 %v6273, %v4190
    %v6402 = vadd.f32 %v6274, %v4193
    %v6403 = vadd.f32 %v6275, %v4196
    %v6404 = vadd.f32 %v6276, %v4199
    %v6405 = vadd.f32 %v6277, %v4202
    %v6406 = vadd.f32 %v6278, %v4205
    %v6407 = vadd.f32 %v6279, %v4208
    %v6408 = vadd.f32 %v6280, %v4211
    %v6409 = vadd.f32 %v6281, %v4214
    %v6410 = vld [vmem:[%s12] sm:$0xff]
    %v6411 = vld [vmem:[%s12 + $0x8] sm:$0xff]
    %v6412 = vld [vmem:[%s12 + $0x10] sm:$0xff]
    %v6413 = vld [vmem:[%s12 + $0x18] sm:$0xff]
    %v6414 = vld [vmem:[%s13] sm:$0x1]
    %v6416 = vperm.slane %v6414, 0
    %v6419 = vsel %vm3430, %v6282, 0
    %v6422 = vsel %vm3430, %v6283, 0
    %v6425 = vsel %vm3430, %v6284, 0
    %v6428 = vsel %vm3430, %v6285, 0
    %v6431 = vsel %vm3430, %v6286, 0
    %v6434 = vsel %vm3430, %v6287, 0
    %v6437 = vsel %vm3430, %v6288, 0
    %v6440 = vsel %vm3430, %v6289, 0
    %v6443 = vsel %vm3430, %v6290, 0
    %v6446 = vsel %vm3430, %v6291, 0
    %v6449 = vsel %vm3430, %v6292, 0
    %v6452 = vsel %vm3430, %v6293, 0
    %v6455 = vsel %vm3430, %v6294, 0
    %v6458 = vsel %vm3430, %v6295, 0
    %v6461 = vsel %vm3430, %v6296, 0
    %v6464 = vsel %vm3430, %v6297, 0
    %v6467 = vsel %vm3430, %v6298, 0
    %v6470 = vsel %vm3430, %v6299, 0
    %v6473 = vsel %vm3430, %v6300, 0
    %v6476 = vsel %vm3430, %v6301, 0
    %v6479 = vsel %vm3430, %v6302, 0
    %v6482 = vsel %vm3430, %v6303, 0
    %v6485 = vsel %vm3430, %v6304, 0
    %v6488 = vsel %vm3430, %v6305, 0
    %v6491 = vsel %vm3430, %v6306, 0
    %v6494 = vsel %vm3430, %v6307, 0
    %v6497 = vsel %vm3430, %v6308, 0
    %v6500 = vsel %vm3430, %v6309, 0
    %v6503 = vsel %vm3430, %v6310, 0
    %v6506 = vsel %vm3430, %v6311, 0
    %v6509 = vsel %vm3430, %v6312, 0
    %v6512 = vsel %vm3430, %v6313, 0
    %v6515 = vsel %vm3430, %v6314, 0
    %v6518 = vsel %vm3430, %v6315, 0
    %v6521 = vsel %vm3430, %v6316, 0
    %v6524 = vsel %vm3430, %v6317, 0
    %v6527 = vsel %vm3430, %v6318, 0
    %v6530 = vsel %vm3430, %v6319, 0
    %v6533 = vsel %vm3430, %v6320, 0
    %v6536 = vsel %vm3430, %v6321, 0
    %v6539 = vsel %vm3430, %v6322, 0
    %v6542 = vsel %vm3430, %v6323, 0
    %v6545 = vsel %vm3430, %v6324, 0
    %v6548 = vsel %vm3430, %v6325, 0
    %v6551 = vsel %vm3430, %v6326, 0
    %v6554 = vsel %vm3430, %v6327, 0
    %v6557 = vsel %vm3430, %v6328, 0
    %v6560 = vsel %vm3430, %v6329, 0
    %v6563 = vsel %vm3430, %v6330, 0
    %v6566 = vsel %vm3430, %v6331, 0
    %v6569 = vsel %vm3430, %v6332, 0
    %v6572 = vsel %vm3430, %v6333, 0
    %v6575 = vsel %vm3430, %v6334, 0
    %v6578 = vsel %vm3430, %v6335, 0
    %v6581 = vsel %vm3430, %v6336, 0
    %v6584 = vsel %vm3430, %v6337, 0
    %v6587 = vsel %vm3430, %v6338, 0
    %v6590 = vsel %vm3430, %v6339, 0
    %v6593 = vsel %vm3430, %v6340, 0
    %v6596 = vsel %vm3430, %v6341, 0
    %v6599 = vsel %vm3430, %v6342, 0
    %v6602 = vsel %vm3430, %v6343, 0
    %v6605 = vsel %vm3430, %v6344, 0
    %v6608 = vsel %vm3430, %v6345, 0
    %v6611 = vsel %vm3430, %v6346, 0
    %v6614 = vsel %vm3430, %v6347, 0
    %v6617 = vsel %vm3430, %v6348, 0
    %v6620 = vsel %vm3430, %v6349, 0
    %v6623 = vsel %vm3430, %v6350, 0
    %v6626 = vsel %vm3430, %v6351, 0
    %v6629 = vsel %vm3430, %v6352, 0
    %v6632 = vsel %vm3430, %v6353, 0
    %v6635 = vsel %vm3430, %v6354, 0
    %v6638 = vsel %vm3430, %v6355, 0
    %v6641 = vsel %vm3430, %v6356, 0
    %v6644 = vsel %vm3430, %v6357, 0
    %v6647 = vsel %vm3430, %v6358, 0
    %v6650 = vsel %vm3430, %v6359, 0
    %v6653 = vsel %vm3430, %v6360, 0
    %v6656 = vsel %vm3430, %v6361, 0
    %v6659 = vsel %vm3430, %v6362, 0
    %v6662 = vsel %vm3430, %v6363, 0
    %v6665 = vsel %vm3430, %v6364, 0
    %v6668 = vsel %vm3430, %v6365, 0
    %v6671 = vsel %vm3430, %v6366, 0
    %v6674 = vsel %vm3430, %v6367, 0
    %v6677 = vsel %vm3430, %v6368, 0
    %v6680 = vsel %vm3430, %v6369, 0
    %v6683 = vsel %vm3430, %v6370, 0
    %v6686 = vsel %vm3430, %v6371, 0
    %v6689 = vsel %vm3430, %v6372, 0
    %v6692 = vsel %vm3430, %v6373, 0
    %v6695 = vsel %vm3430, %v6374, 0
    %v6698 = vsel %vm3430, %v6375, 0
    %v6701 = vsel %vm3430, %v6376, 0
    %v6704 = vsel %vm3430, %v6377, 0
    %v6707 = vsel %vm3430, %v6378, 0
    %v6710 = vsel %vm3430, %v6379, 0
    %v6713 = vsel %vm3430, %v6380, 0
    %v6716 = vsel %vm3430, %v6381, 0
    %v6719 = vsel %vm3430, %v6382, 0
    %v6722 = vsel %vm3430, %v6383, 0
    %v6725 = vsel %vm3430, %v6384, 0
    %v6728 = vsel %vm3430, %v6385, 0
    %v6731 = vsel %vm3430, %v6386, 0
    %v6734 = vsel %vm3430, %v6387, 0
    %v6737 = vsel %vm3430, %v6388, 0
    %v6740 = vsel %vm3430, %v6389, 0
    %v6743 = vsel %vm3430, %v6390, 0
    %v6746 = vsel %vm3430, %v6391, 0
    %v6749 = vsel %vm3430, %v6392, 0
    %v6752 = vsel %vm3430, %v6393, 0
    %v6755 = vsel %vm3430, %v6394, 0
    %v6758 = vsel %vm3430, %v6395, 0
    %v6761 = vsel %vm3430, %v6396, 0
    %v6764 = vsel %vm3430, %v6397, 0
    %v6767 = vsel %vm3430, %v6398, 0
    %v6770 = vsel %vm3430, %v6399, 0
    %v6773 = vsel %vm3430, %v6400, 0
    %v6776 = vsel %vm3430, %v6401, 0
    %v6779 = vsel %vm3430, %v6402, 0
    %v6782 = vsel %vm3430, %v6403, 0
    %v6785 = vsel %vm3430, %v6404, 0
    %v6788 = vsel %vm3430, %v6405, 0
    %v6791 = vsel %vm3430, %v6406, 0
    %v6794 = vsel %vm3430, %v6407, 0
    %v6797 = vsel %vm3430, %v6408, 0
    %v6800 = vsel %vm3430, %v6409, 0
    %6802 = vmatpush.msra.mxu0 0.0
    %6803 = vmatpush.msra.mxu0 0.0
    %6804 = vmatpush.msra.mxu0 0.0
    %6805 = vmatpush.msra.mxu0 0.0
    %6806 = vmatpush.msra.mxu0 0.0
    %6807 = vmatpush.msra.mxu0 0.0
    %6808 = vmatpush.msra.mxu0 0.0
    %6809 = vmatpush.msra.mxu0 0.0
    %6810 = vmatpush.msra.mxu0 0.0
    %6811 = vmatpush.msra.mxu0 0.0
    %6812 = vmatpush.msra.mxu0 0.0
    %6813 = vmatpush.msra.mxu0 0.0
    %6814 = vmatpush.msra.mxu0 %v6413
    %6815 = vmatpush.msra.mxu0 %v6412
    %6816 = vmatpush.msra.mxu0 %v6411
    %6817 = vmatpush.msra.mxu0 %v6410
    %6818 = vmatmul.f32.gmra.mxu0 %v6419
    %v6819 = vpop.f32.mrf.mxu0
    %v6820 = vadd.f32 %v6416, %v6819
    %6821 = vmatmul.f32.gmra.mxu0 %v6422
    %v6822 = vpop.f32.mrf.mxu0
    %v6823 = vadd.f32 %v6416, %v6822
    %6824 = vmatmul.f32.gmra.mxu0 %v6425
    %v6825 = vpop.f32.mrf.mxu0
    %v6826 = vadd.f32 %v6416, %v6825
    %6827 = vmatmul.f32.gmra.mxu0 %v6428
    %v6828 = vpop.f32.mrf.mxu0
    %v6829 = vadd.f32 %v6416, %v6828
    %6830 = vmatmul.f32.gmra.mxu0 %v6431
    %v6831 = vpop.f32.mrf.mxu0
    %v6832 = vadd.f32 %v6416, %v6831
    %6833 = vmatmul.f32.gmra.mxu0 %v6434
    %v6834 = vpop.f32.mrf.mxu0
    %v6835 = vadd.f32 %v6416, %v6834
    %6836 = vmatmul.f32.gmra.mxu0 %v6437
    %v6837 = vpop.f32.mrf.mxu0
    %v6838 = vadd.f32 %v6416, %v6837
    %6839 = vmatmul.f32.gmra.mxu0 %v6440
    %v6840 = vpop.f32.mrf.mxu0
    %v6841 = vadd.f32 %v6416, %v6840
    %6842 = vmatmul.f32.gmra.mxu0 %v6443
    %v6843 = vpop.f32.mrf.mxu0
    %v6844 = vadd.f32 %v6416, %v6843
    %6845 = vmatmul.f32.gmra.mxu0 %v6446
    %v6846 = vpop.f32.mrf.mxu0
    %v6847 = vadd.f32 %v6416, %v6846
    %6848 = vmatmul.f32.gmra.mxu0 %v6449
    %v6849 = vpop.f32.mrf.mxu0
    %v6850 = vadd.f32 %v6416, %v6849
    %6851 = vmatmul.f32.gmra.mxu0 %v6452
    %v6852 = vpop.f32.mrf.mxu0
    %v6853 = vadd.f32 %v6416, %v6852
    %6854 = vmatmul.f32.gmra.mxu0 %v6455
    %v6855 = vpop.f32.mrf.mxu0
    %v6856 = vadd.f32 %v6416, %v6855
    %6857 = vmatmul.f32.gmra.mxu0 %v6458
    %v6858 = vpop.f32.mrf.mxu0
    %v6859 = vadd.f32 %v6416, %v6858
    %6860 = vmatmul.f32.gmra.mxu0 %v6461
    %v6861 = vpop.f32.mrf.mxu0
    %v6862 = vadd.f32 %v6416, %v6861
    %6863 = vmatmul.f32.gmra.mxu0 %v6464
    %v6864 = vpop.f32.mrf.mxu0
    %v6865 = vadd.f32 %v6416, %v6864
    %6866 = vmatmul.f32.gmra.mxu0 %v6467
    %v6867 = vpop.f32.mrf.mxu0
    %v6868 = vadd.f32 %v6416, %v6867
    %6869 = vmatmul.f32.gmra.mxu0 %v6470
    %v6870 = vpop.f32.mrf.mxu0
    %v6871 = vadd.f32 %v6416, %v6870
    %6872 = vmatmul.f32.gmra.mxu0 %v6473
    %v6873 = vpop.f32.mrf.mxu0
    %v6874 = vadd.f32 %v6416, %v6873
    %6875 = vmatmul.f32.gmra.mxu0 %v6476
    %v6876 = vpop.f32.mrf.mxu0
    %v6877 = vadd.f32 %v6416, %v6876
    %6878 = vmatmul.f32.gmra.mxu0 %v6479
    %v6879 = vpop.f32.mrf.mxu0
    %v6880 = vadd.f32 %v6416, %v6879
    %6881 = vmatmul.f32.gmra.mxu0 %v6482
    %v6882 = vpop.f32.mrf.mxu0
    %v6883 = vadd.f32 %v6416, %v6882
    %6884 = vmatmul.f32.gmra.mxu0 %v6485
    %v6885 = vpop.f32.mrf.mxu0
    %v6886 = vadd.f32 %v6416, %v6885
    %6887 = vmatmul.f32.gmra.mxu0 %v6488
    %v6888 = vpop.f32.mrf.mxu0
    %v6889 = vadd.f32 %v6416, %v6888
    %6890 = vmatmul.f32.gmra.mxu0 %v6491
    %v6891 = vpop.f32.mrf.mxu0
    %v6892 = vadd.f32 %v6416, %v6891
    %6893 = vmatmul.f32.gmra.mxu0 %v6494
    %v6894 = vpop.f32.mrf.mxu0
    %v6895 = vadd.f32 %v6416, %v6894
    %6896 = vmatmul.f32.gmra.mxu0 %v6497
    %v6897 = vpop.f32.mrf.mxu0
    %v6898 = vadd.f32 %v6416, %v6897
    %6899 = vmatmul.f32.gmra.mxu0 %v6500
    %v6900 = vpop.f32.mrf.mxu0
    %v6901 = vadd.f32 %v6416, %v6900
    %6902 = vmatmul.f32.gmra.mxu0 %v6503
    %v6903 = vpop.f32.mrf.mxu0
    %v6904 = vadd.f32 %v6416, %v6903
    %6905 = vmatmul.f32.gmra.mxu0 %v6506
    %v6906 = vpop.f32.mrf.mxu0
    %v6907 = vadd.f32 %v6416, %v6906
    %6908 = vmatmul.f32.gmra.mxu0 %v6509
    %v6909 = vpop.f32.mrf.mxu0
    %v6910 = vadd.f32 %v6416, %v6909
    %6911 = vmatmul.f32.gmra.mxu0 %v6512
    %v6912 = vpop.f32.mrf.mxu0
    %v6913 = vadd.f32 %v6416, %v6912
    %6914 = vmatmul.f32.gmra.mxu0 %v6515
    %v6915 = vpop.f32.mrf.mxu0
    %v6916 = vadd.f32 %v6416, %v6915
    %6917 = vmatmul.f32.gmra.mxu0 %v6518
    %v6918 = vpop.f32.mrf.mxu0
    %v6919 = vadd.f32 %v6416, %v6918
    %6920 = vmatmul.f32.gmra.mxu0 %v6521
    %v6921 = vpop.f32.mrf.mxu0
    %v6922 = vadd.f32 %v6416, %v6921
    %6923 = vmatmul.f32.gmra.mxu0 %v6524
    %v6924 = vpop.f32.mrf.mxu0
    %v6925 = vadd.f32 %v6416, %v6924
    %6926 = vmatmul.f32.gmra.mxu0 %v6527
    %v6927 = vpop.f32.mrf.mxu0
    %v6928 = vadd.f32 %v6416, %v6927
    %6929 = vmatmul.f32.gmra.mxu0 %v6530
    %v6930 = vpop.f32.mrf.mxu0
    %v6931 = vadd.f32 %v6416, %v6930
    %6932 = vmatmul.f32.gmra.mxu0 %v6533
    %v6933 = vpop.f32.mrf.mxu0
    %v6934 = vadd.f32 %v6416, %v6933
    %6935 = vmatmul.f32.gmra.mxu0 %v6536
    %v6936 = vpop.f32.mrf.mxu0
    %v6937 = vadd.f32 %v6416, %v6936
    %6938 = vmatmul.f32.gmra.mxu0 %v6539
    %v6939 = vpop.f32.mrf.mxu0
    %v6940 = vadd.f32 %v6416, %v6939
    %6941 = vmatmul.f32.gmra.mxu0 %v6542
    %v6942 = vpop.f32.mrf.mxu0
    %v6943 = vadd.f32 %v6416, %v6942
    %6944 = vmatmul.f32.gmra.mxu0 %v6545
    %v6945 = vpop.f32.mrf.mxu0
    %v6946 = vadd.f32 %v6416, %v6945
    %6947 = vmatmul.f32.gmra.mxu0 %v6548
    %v6948 = vpop.f32.mrf.mxu0
    %v6949 = vadd.f32 %v6416, %v6948
    %6950 = vmatmul.f32.gmra.mxu0 %v6551
    %v6951 = vpop.f32.mrf.mxu0
    %v6952 = vadd.f32 %v6416, %v6951
    %6953 = vmatmul.f32.gmra.mxu0 %v6554
    %v6954 = vpop.f32.mrf.mxu0
    %v6955 = vadd.f32 %v6416, %v6954
    %6956 = vmatmul.f32.gmra.mxu0 %v6557
    %v6957 = vpop.f32.mrf.mxu0
    %v6958 = vadd.f32 %v6416, %v6957
    %6959 = vmatmul.f32.gmra.mxu0 %v6560
    %v6960 = vpop.f32.mrf.mxu0
    %v6961 = vadd.f32 %v6416, %v6960
    %6962 = vmatmul.f32.gmra.mxu0 %v6563
    %v6963 = vpop.f32.mrf.mxu0
    %v6964 = vadd.f32 %v6416, %v6963
    %6965 = vmatmul.f32.gmra.mxu0 %v6566
    %v6966 = vpop.f32.mrf.mxu0
    %v6967 = vadd.f32 %v6416, %v6966
    %6968 = vmatmul.f32.gmra.mxu0 %v6569
    %v6969 = vpop.f32.mrf.mxu0
    %v6970 = vadd.f32 %v6416, %v6969
    %6971 = vmatmul.f32.gmra.mxu0 %v6572
    %v6972 = vpop.f32.mrf.mxu0
    %v6973 = vadd.f32 %v6416, %v6972
    %6974 = vmatmul.f32.gmra.mxu0 %v6575
    %v6975 = vpop.f32.mrf.mxu0
    %v6976 = vadd.f32 %v6416, %v6975
    %6977 = vmatmul.f32.gmra.mxu0 %v6578
    %v6978 = vpop.f32.mrf.mxu0
    %v6979 = vadd.f32 %v6416, %v6978
    %6980 = vmatmul.f32.gmra.mxu0 %v6581
    %v6981 = vpop.f32.mrf.mxu0
    %v6982 = vadd.f32 %v6416, %v6981
    %6983 = vmatmul.f32.gmra.mxu0 %v6584
    %v6984 = vpop.f32.mrf.mxu0
    %v6985 = vadd.f32 %v6416, %v6984
    %6986 = vmatmul.f32.gmra.mxu0 %v6587
    %v6987 = vpop.f32.mrf.mxu0
    %v6988 = vadd.f32 %v6416, %v6987
    %6989 = vmatmul.f32.gmra.mxu0 %v6590
    %v6990 = vpop.f32.mrf.mxu0
    %v6991 = vadd.f32 %v6416, %v6990
    %6992 = vmatmul.f32.gmra.mxu0 %v6593
    %v6993 = vpop.f32.mrf.mxu0
    %v6994 = vadd.f32 %v6416, %v6993
    %6995 = vmatmul.f32.gmra.mxu0 %v6596
    %v6996 = vpop.f32.mrf.mxu0
    %v6997 = vadd.f32 %v6416, %v6996
    %6998 = vmatmul.f32.gmra.mxu0 %v6599
    %v6999 = vpop.f32.mrf.mxu0
    %v7000 = vadd.f32 %v6416, %v6999
    %7001 = vmatmul.f32.gmra.mxu0 %v6602
    %v7002 = vpop.f32.mrf.mxu0
    %v7003 = vadd.f32 %v6416, %v7002
    %7004 = vmatmul.f32.gmra.mxu0 %v6605
    %v7005 = vpop.f32.mrf.mxu0
    %v7006 = vadd.f32 %v6416, %v7005
    %7007 = vmatmul.f32.gmra.mxu0 %v6608
    %v7008 = vpop.f32.mrf.mxu0
    %v7009 = vadd.f32 %v6416, %v7008
    %7010 = vmatmul.f32.gmra.mxu0 %v6611
    %v7011 = vpop.f32.mrf.mxu0
    %v7012 = vadd.f32 %v6416, %v7011
    %7013 = vmatmul.f32.gmra.mxu0 %v6614
    %v7014 = vpop.f32.mrf.mxu0
    %v7015 = vadd.f32 %v6416, %v7014
    %7016 = vmatmul.f32.gmra.mxu0 %v6617
    %v7017 = vpop.f32.mrf.mxu0
    %v7018 = vadd.f32 %v6416, %v7017
    %7019 = vmatmul.f32.gmra.mxu0 %v6620
    %v7020 = vpop.f32.mrf.mxu0
    %v7021 = vadd.f32 %v6416, %v7020
    %7022 = vmatmul.f32.gmra.mxu0 %v6623
    %v7023 = vpop.f32.mrf.mxu0
    %v7024 = vadd.f32 %v6416, %v7023
    %7025 = vmatmul.f32.gmra.mxu0 %v6626
    %v7026 = vpop.f32.mrf.mxu0
    %v7027 = vadd.f32 %v6416, %v7026
    %7028 = vmatmul.f32.gmra.mxu0 %v6629
    %v7029 = vpop.f32.mrf.mxu0
    %v7030 = vadd.f32 %v6416, %v7029
    %7031 = vmatmul.f32.gmra.mxu0 %v6632
    %v7032 = vpop.f32.mrf.mxu0
    %v7033 = vadd.f32 %v6416, %v7032
    %7034 = vmatmul.f32.gmra.mxu0 %v6635
    %v7035 = vpop.f32.mrf.mxu0
    %v7036 = vadd.f32 %v6416, %v7035
    %7037 = vmatmul.f32.gmra.mxu0 %v6638
    %v7038 = vpop.f32.mrf.mxu0
    %v7039 = vadd.f32 %v6416, %v7038
    %7040 = vmatmul.f32.gmra.mxu0 %v6641
    %v7041 = vpop.f32.mrf.mxu0
    %v7042 = vadd.f32 %v6416, %v7041
    %7043 = vmatmul.f32.gmra.mxu0 %v6644
    %v7044 = vpop.f32.mrf.mxu0
    %v7045 = vadd.f32 %v6416, %v7044
    %7046 = vmatmul.f32.gmra.mxu0 %v6647
    %v7047 = vpop.f32.mrf.mxu0
    %v7048 = vadd.f32 %v6416, %v7047
    %7049 = vmatmul.f32.gmra.mxu0 %v6650
    %v7050 = vpop.f32.mrf.mxu0
    %v7051 = vadd.f32 %v6416, %v7050
    %7052 = vmatmul.f32.gmra.mxu0 %v6653
    %v7053 = vpop.f32.mrf.mxu0
    %v7054 = vadd.f32 %v6416, %v7053
    %7055 = vmatmul.f32.gmra.mxu0 %v6656
    %v7056 = vpop.f32.mrf.mxu0
    %v7057 = vadd.f32 %v6416, %v7056
    %7058 = vmatmul.f32.gmra.mxu0 %v6659
    %v7059 = vpop.f32.mrf.mxu0
    %v7060 = vadd.f32 %v6416, %v7059
    %7061 = vmatmul.f32.gmra.mxu0 %v6662
    %v7062 = vpop.f32.mrf.mxu0
    %v7063 = vadd.f32 %v6416, %v7062
    %7064 = vmatmul.f32.gmra.mxu0 %v6665
    %v7065 = vpop.f32.mrf.mxu0
    %v7066 = vadd.f32 %v6416, %v7065
    %7067 = vmatmul.f32.gmra.mxu0 %v6668
    %v7068 = vpop.f32.mrf.mxu0
    %v7069 = vadd.f32 %v6416, %v7068
    %7070 = vmatmul.f32.gmra.mxu0 %v6671
    %v7071 = vpop.f32.mrf.mxu0
    %v7072 = vadd.f32 %v6416, %v7071
    %7073 = vmatmul.f32.gmra.mxu0 %v6674
    %v7074 = vpop.f32.mrf.mxu0
    %v7075 = vadd.f32 %v6416, %v7074
    %7076 = vmatmul.f32.gmra.mxu0 %v6677
    %v7077 = vpop.f32.mrf.mxu0
    %v7078 = vadd.f32 %v6416, %v7077
    %7079 = vmatmul.f32.gmra.mxu0 %v6680
    %v7080 = vpop.f32.mrf.mxu0
    %v7081 = vadd.f32 %v6416, %v7080
    %7082 = vmatmul.f32.gmra.mxu0 %v6683
    %v7083 = vpop.f32.mrf.mxu0
    %v7084 = vadd.f32 %v6416, %v7083
    %7085 = vmatmul.f32.gmra.mxu0 %v6686
    %v7086 = vpop.f32.mrf.mxu0
    %v7087 = vadd.f32 %v6416, %v7086
    %7088 = vmatmul.f32.gmra.mxu0 %v6689
    %v7089 = vpop.f32.mrf.mxu0
    %v7090 = vadd.f32 %v6416, %v7089
    %7091 = vmatmul.f32.gmra.mxu0 %v6692
    %v7092 = vpop.f32.mrf.mxu0
    %v7093 = vadd.f32 %v6416, %v7092
    %7094 = vmatmul.f32.gmra.mxu0 %v6695
    %v7095 = vpop.f32.mrf.mxu0
    %v7096 = vadd.f32 %v6416, %v7095
    %7097 = vmatmul.f32.gmra.mxu0 %v6698
    %v7098 = vpop.f32.mrf.mxu0
    %v7099 = vadd.f32 %v6416, %v7098
    %7100 = vmatmul.f32.gmra.mxu0 %v6701
    %v7101 = vpop.f32.mrf.mxu0
    %v7102 = vadd.f32 %v6416, %v7101
    %7103 = vmatmul.f32.gmra.mxu0 %v6704
    %v7104 = vpop.f32.mrf.mxu0
    %v7105 = vadd.f32 %v6416, %v7104
    %7106 = vmatmul.f32.gmra.mxu0 %v6707
    %v7107 = vpop.f32.mrf.mxu0
    %v7108 = vadd.f32 %v6416, %v7107
    %7109 = vmatmul.f32.gmra.mxu0 %v6710
    %v7110 = vpop.f32.mrf.mxu0
    %v7111 = vadd.f32 %v6416, %v7110
    %7112 = vmatmul.f32.gmra.mxu0 %v6713
    %v7113 = vpop.f32.mrf.mxu0
    %v7114 = vadd.f32 %v6416, %v7113
    %7115 = vmatmul.f32.gmra.mxu0 %v6716
    %v7116 = vpop.f32.mrf.mxu0
    %v7117 = vadd.f32 %v6416, %v7116
    %7118 = vmatmul.f32.gmra.mxu0 %v6719
    %v7119 = vpop.f32.mrf.mxu0
    %v7120 = vadd.f32 %v6416, %v7119
    %7121 = vmatmul.f32.gmra.mxu0 %v6722
    %v7122 = vpop.f32.mrf.mxu0
    %v7123 = vadd.f32 %v6416, %v7122
    %7124 = vmatmul.f32.gmra.mxu0 %v6725
    %v7125 = vpop.f32.mrf.mxu0
    %v7126 = vadd.f32 %v6416, %v7125
    %7127 = vmatmul.f32.gmra.mxu0 %v6728
    %v7128 = vpop.f32.mrf.mxu0
    %v7129 = vadd.f32 %v6416, %v7128
    %7130 = vmatmul.f32.gmra.mxu0 %v6731
    %v7131 = vpop.f32.mrf.mxu0
    %v7132 = vadd.f32 %v6416, %v7131
    %7133 = vmatmul.f32.gmra.mxu0 %v6734
    %v7134 = vpop.f32.mrf.mxu0
    %v7135 = vadd.f32 %v6416, %v7134
    %7136 = vmatmul.f32.gmra.mxu0 %v6737
    %v7137 = vpop.f32.mrf.mxu0
    %v7138 = vadd.f32 %v6416, %v7137
    %7139 = vmatmul.f32.gmra.mxu0 %v6740
    %v7140 = vpop.f32.mrf.mxu0
    %v7141 = vadd.f32 %v6416, %v7140
    %7142 = vmatmul.f32.gmra.mxu0 %v6743
    %v7143 = vpop.f32.mrf.mxu0
    %v7144 = vadd.f32 %v6416, %v7143
    %7145 = vmatmul.f32.gmra.mxu0 %v6746
    %v7146 = vpop.f32.mrf.mxu0
    %v7147 = vadd.f32 %v6416, %v7146
    %7148 = vmatmul.f32.gmra.mxu0 %v6749
    %v7149 = vpop.f32.mrf.mxu0
    %v7150 = vadd.f32 %v6416, %v7149
    %7151 = vmatmul.f32.gmra.mxu0 %v6752
    %v7152 = vpop.f32.mrf.mxu0
    %v7153 = vadd.f32 %v6416, %v7152
    %7154 = vmatmul.f32.gmra.mxu0 %v6755
    %v7155 = vpop.f32.mrf.mxu0
    %v7156 = vadd.f32 %v6416, %v7155
    %7157 = vmatmul.f32.gmra.mxu0 %v6758
    %v7158 = vpop.f32.mrf.mxu0
    %v7159 = vadd.f32 %v6416, %v7158
    %7160 = vmatmul.f32.gmra.mxu0 %v6761
    %v7161 = vpop.f32.mrf.mxu0
    %v7162 = vadd.f32 %v6416, %v7161
    %7163 = vmatmul.f32.gmra.mxu0 %v6764
    %v7164 = vpop.f32.mrf.mxu0
    %v7165 = vadd.f32 %v6416, %v7164
    %7166 = vmatmul.f32.gmra.mxu0 %v6767
    %v7167 = vpop.f32.mrf.mxu0
    %v7168 = vadd.f32 %v6416, %v7167
    %7169 = vmatmul.f32.gmra.mxu0 %v6770
    %v7170 = vpop.f32.mrf.mxu0
    %v7171 = vadd.f32 %v6416, %v7170
    %7172 = vmatmul.f32.gmra.mxu0 %v6773
    %v7173 = vpop.f32.mrf.mxu0
    %v7174 = vadd.f32 %v6416, %v7173
    %7175 = vmatmul.f32.gmra.mxu0 %v6776
    %v7176 = vpop.f32.mrf.mxu0
    %v7177 = vadd.f32 %v6416, %v7176
    %7178 = vmatmul.f32.gmra.mxu0 %v6779
    %v7179 = vpop.f32.mrf.mxu0
    %v7180 = vadd.f32 %v6416, %v7179
    %7181 = vmatmul.f32.gmra.mxu0 %v6782
    %v7182 = vpop.f32.mrf.mxu0
    %v7183 = vadd.f32 %v6416, %v7182
    %7184 = vmatmul.f32.gmra.mxu0 %v6785
    %v7185 = vpop.f32.mrf.mxu0
    %v7186 = vadd.f32 %v6416, %v7185
    %7187 = vmatmul.f32.gmra.mxu0 %v6788
    %v7188 = vpop.f32.mrf.mxu0
    %v7189 = vadd.f32 %v6416, %v7188
    %7190 = vmatmul.f32.gmra.mxu0 %v6791
    %v7191 = vpop.f32.mrf.mxu0
    %v7192 = vadd.f32 %v6416, %v7191
    %7193 = vmatmul.f32.gmra.mxu0 %v6794
    %v7194 = vpop.f32.mrf.mxu0
    %v7195 = vadd.f32 %v6416, %v7194
    %7196 = vmatmul.f32.gmra.mxu0 %v6797
    %v7197 = vpop.f32.mrf.mxu0
    %v7198 = vadd.f32 %v6416, %v7197
    %7199 = vmatmul.f32.gmra.mxu0 %v6800
    %v7200 = vpop.f32.mrf.mxu0
    %v7201 = vadd.f32 %v6416, %v7200
    %7202 = vdwg.mxu0
    %v7203 = vmax.f32 %v6820, 0.0
    %v7204 = vmax.f32 %v6823, 0.0
    %v7205 = vmax.f32 %v6826, 0.0
    %v7206 = vmax.f32 %v6829, 0.0
    %v7207 = vmax.f32 %v6832, 0.0
    %v7208 = vmax.f32 %v6835, 0.0
    %v7209 = vmax.f32 %v6838, 0.0
    %v7210 = vmax.f32 %v6841, 0.0
    %v7211 = vmax.f32 %v6844, 0.0
    %v7212 = vmax.f32 %v6847, 0.0
    %v7213 = vmax.f32 %v6850, 0.0
    %v7214 = vmax.f32 %v6853, 0.0
    %v7215 = vmax.f32 %v6856, 0.0
    %v7216 = vmax.f32 %v6859, 0.0
    %v7217 = vmax.f32 %v6862, 0.0
    %v7218 = vmax.f32 %v6865, 0.0
    %v7219 = vmax.f32 %v6868, 0.0
    %v7220 = vmax.f32 %v6871, 0.0
    %v7221 = vmax.f32 %v6874, 0.0
    %v7222 = vmax.f32 %v6877, 0.0
    %v7223 = vmax.f32 %v6880, 0.0
    %v7224 = vmax.f32 %v6883, 0.0
    %v7225 = vmax.f32 %v6886, 0.0
    %v7226 = vmax.f32 %v6889, 0.0
    %v7227 = vmax.f32 %v6892, 0.0
    %v7228 = vmax.f32 %v6895, 0.0
    %v7229 = vmax.f32 %v6898, 0.0
    %v7230 = vmax.f32 %v6901, 0.0
    %v7231 = vmax.f32 %v6904, 0.0
    %v7232 = vmax.f32 %v6907, 0.0
    %v7233 = vmax.f32 %v6910, 0.0
    %v7234 = vmax.f32 %v6913, 0.0
    %v7235 = vmax.f32 %v6916, 0.0
    %v7236 = vmax.f32 %v6919, 0.0
    %v7237 = vmax.f32 %v6922, 0.0
    %v7238 = vmax.f32 %v6925, 0.0
    %v7239 = vmax.f32 %v6928, 0.0
    %v7240 = vmax.f32 %v6931, 0.0
    %v7241 = vmax.f32 %v6934, 0.0
    %v7242 = vmax.f32 %v6937, 0.0
    %v7243 = vmax.f32 %v6940, 0.0
    %v7244 = vmax.f32 %v6943, 0.0
    %v7245 = vmax.f32 %v6946, 0.0
    %v7246 = vmax.f32 %v6949, 0.0
    %v7247 = vmax.f32 %v6952, 0.0
    %v7248 = vmax.f32 %v6955, 0.0
    %v7249 = vmax.f32 %v6958, 0.0
    %v7250 = vmax.f32 %v6961, 0.0
    %v7251 = vmax.f32 %v6964, 0.0
    %v7252 = vmax.f32 %v6967, 0.0
    %v7253 = vmax.f32 %v6970, 0.0
    %v7254 = vmax.f32 %v6973, 0.0
    %v7255 = vmax.f32 %v6976, 0.0
    %v7256 = vmax.f32 %v6979, 0.0
    %v7257 = vmax.f32 %v6982, 0.0
    %v7258 = vmax.f32 %v6985, 0.0
    %v7259 = vmax.f32 %v6988, 0.0
    %v7260 = vmax.f32 %v6991, 0.0
    %v7261 = vmax.f32 %v6994, 0.0
    %v7262 = vmax.f32 %v6997, 0.0
    %v7263 = vmax.f32 %v7000, 0.0
    %v7264 = vmax.f32 %v7003, 0.0
    %v7265 = vmax.f32 %v7006, 0.0
    %v7266 = vmax.f32 %v7009, 0.0
    %v7267 = vmax.f32 %v7012, 0.0
    %v7268 = vmax.f32 %v7015, 0.0
    %v7269 = vmax.f32 %v7018, 0.0
    %v7270 = vmax.f32 %v7021, 0.0
    %v7271 = vmax.f32 %v7024, 0.0
    %v7272 = vmax.f32 %v7027, 0.0
    %v7273 = vmax.f32 %v7030, 0.0
    %v7274 = vmax.f32 %v7033, 0.0
    %v7275 = vmax.f32 %v7036, 0.0
    %v7276 = vmax.f32 %v7039, 0.0
    %v7277 = vmax.f32 %v7042, 0.0
    %v7278 = vmax.f32 %v7045, 0.0
    %v7279 = vmax.f32 %v7048, 0.0
    %v7280 = vmax.f32 %v7051, 0.0
    %v7281 = vmax.f32 %v7054, 0.0
    %v7282 = vmax.f32 %v7057, 0.0
    %v7283 = vmax.f32 %v7060, 0.0
    %v7284 = vmax.f32 %v7063, 0.0
    %v7285 = vmax.f32 %v7066, 0.0
    %v7286 = vmax.f32 %v7069, 0.0
    %v7287 = vmax.f32 %v7072, 0.0
    %v7288 = vmax.f32 %v7075, 0.0
    %v7289 = vmax.f32 %v7078, 0.0
    %v7290 = vmax.f32 %v7081, 0.0
    %v7291 = vmax.f32 %v7084, 0.0
    %v7292 = vmax.f32 %v7087, 0.0
    %v7293 = vmax.f32 %v7090, 0.0
    %v7294 = vmax.f32 %v7093, 0.0
    %v7295 = vmax.f32 %v7096, 0.0
    %v7296 = vmax.f32 %v7099, 0.0
    %v7297 = vmax.f32 %v7102, 0.0
    %v7298 = vmax.f32 %v7105, 0.0
    %v7299 = vmax.f32 %v7108, 0.0
    %v7300 = vmax.f32 %v7111, 0.0
    %v7301 = vmax.f32 %v7114, 0.0
    %v7302 = vmax.f32 %v7117, 0.0
    %v7303 = vmax.f32 %v7120, 0.0
    %v7304 = vmax.f32 %v7123, 0.0
    %v7305 = vmax.f32 %v7126, 0.0
    %v7306 = vmax.f32 %v7129, 0.0
    %v7307 = vmax.f32 %v7132, 0.0
    %v7308 = vmax.f32 %v7135, 0.0
    %v7309 = vmax.f32 %v7138, 0.0
    %v7310 = vmax.f32 %v7141, 0.0
    %v7311 = vmax.f32 %v7144, 0.0
    %v7312 = vmax.f32 %v7147, 0.0
    %v7313 = vmax.f32 %v7150, 0.0
    %v7314 = vmax.f32 %v7153, 0.0
    %v7315 = vmax.f32 %v7156, 0.0
    %v7316 = vmax.f32 %v7159, 0.0
    %v7317 = vmax.f32 %v7162, 0.0
    %v7318 = vmax.f32 %v7165, 0.0
    %v7319 = vmax.f32 %v7168, 0.0
    %v7320 = vmax.f32 %v7171, 0.0
    %v7321 = vmax.f32 %v7174, 0.0
    %v7322 = vmax.f32 %v7177, 0.0
    %v7323 = vmax.f32 %v7180, 0.0
    %v7324 = vmax.f32 %v7183, 0.0
    %v7325 = vmax.f32 %v7186, 0.0
    %v7326 = vmax.f32 %v7189, 0.0
    %v7327 = vmax.f32 %v7192, 0.0
    %v7328 = vmax.f32 %v7195, 0.0
    %v7329 = vmax.f32 %v7198, 0.0
    %v7330 = vmax.f32 %v7201, 0.0
    %v7331 = vld [vmem:[%s14] sm:$0xff]
    %v7332 = vld [vmem:[%s14 + $0x8] sm:$0xff]
    %v7333 = vld [vmem:[%s14 + $0x10] sm:$0xff]
    %v7334 = vld [vmem:[%s14 + $0x18] sm:$0xff]
    %v7335 = vld [vmem:[%s15] sm:$0x1]
    %v7337 = vperm.slane %v7335, 0
    %v7340 = vsel %vm3430, %v7203, 0
    %v7343 = vsel %vm3430, %v7204, 0
    %v7346 = vsel %vm3430, %v7205, 0
    %v7349 = vsel %vm3430, %v7206, 0
    %v7352 = vsel %vm3430, %v7207, 0
    %v7355 = vsel %vm3430, %v7208, 0
    %v7358 = vsel %vm3430, %v7209, 0
    %v7361 = vsel %vm3430, %v7210, 0
    %v7364 = vsel %vm3430, %v7211, 0
    %v7367 = vsel %vm3430, %v7212, 0
    %v7370 = vsel %vm3430, %v7213, 0
    %v7373 = vsel %vm3430, %v7214, 0
    %v7376 = vsel %vm3430, %v7215, 0
    %v7379 = vsel %vm3430, %v7216, 0
    %v7382 = vsel %vm3430, %v7217, 0
    %v7385 = vsel %vm3430, %v7218, 0
    %v7388 = vsel %vm3430, %v7219, 0
    %v7391 = vsel %vm3430, %v7220, 0
    %v7394 = vsel %vm3430, %v7221, 0
    %v7397 = vsel %vm3430, %v7222, 0
    %v7400 = vsel %vm3430, %v7223, 0
    %v7403 = vsel %vm3430, %v7224, 0
    %v7406 = vsel %vm3430, %v7225, 0
    %v7409 = vsel %vm3430, %v7226, 0
    %v7412 = vsel %vm3430, %v7227, 0
    %v7415 = vsel %vm3430, %v7228, 0
    %v7418 = vsel %vm3430, %v7229, 0
    %v7421 = vsel %vm3430, %v7230, 0
    %v7424 = vsel %vm3430, %v7231, 0
    %v7427 = vsel %vm3430, %v7232, 0
    %v7430 = vsel %vm3430, %v7233, 0
    %v7433 = vsel %vm3430, %v7234, 0
    %v7436 = vsel %vm3430, %v7235, 0
    %v7439 = vsel %vm3430, %v7236, 0
    %v7442 = vsel %vm3430, %v7237, 0
    %v7445 = vsel %vm3430, %v7238, 0
    %v7448 = vsel %vm3430, %v7239, 0
    %v7451 = vsel %vm3430, %v7240, 0
    %v7454 = vsel %vm3430, %v7241, 0
    %v7457 = vsel %vm3430, %v7242, 0
    %v7460 = vsel %vm3430, %v7243, 0
    %v7463 = vsel %vm3430, %v7244, 0
    %v7466 = vsel %vm3430, %v7245, 0
    %v7469 = vsel %vm3430, %v7246, 0
    %v7472 = vsel %vm3430, %v7247, 0
    %v7475 = vsel %vm3430, %v7248, 0
    %v7478 = vsel %vm3430, %v7249, 0
    %v7481 = vsel %vm3430, %v7250, 0
    %v7484 = vsel %vm3430, %v7251, 0
    %v7487 = vsel %vm3430, %v7252, 0
    %v7490 = vsel %vm3430, %v7253, 0
    %v7493 = vsel %vm3430, %v7254, 0
    %v7496 = vsel %vm3430, %v7255, 0
    %v7499 = vsel %vm3430, %v7256, 0
    %v7502 = vsel %vm3430, %v7257, 0
    %v7505 = vsel %vm3430, %v7258, 0
    %v7508 = vsel %vm3430, %v7259, 0
    %v7511 = vsel %vm3430, %v7260, 0
    %v7514 = vsel %vm3430, %v7261, 0
    %v7517 = vsel %vm3430, %v7262, 0
    %v7520 = vsel %vm3430, %v7263, 0
    %v7523 = vsel %vm3430, %v7264, 0
    %v7526 = vsel %vm3430, %v7265, 0
    %v7529 = vsel %vm3430, %v7266, 0
    %v7532 = vsel %vm3430, %v7267, 0
    %v7535 = vsel %vm3430, %v7268, 0
    %v7538 = vsel %vm3430, %v7269, 0
    %v7541 = vsel %vm3430, %v7270, 0
    %v7544 = vsel %vm3430, %v7271, 0
    %v7547 = vsel %vm3430, %v7272, 0
    %v7550 = vsel %vm3430, %v7273, 0
    %v7553 = vsel %vm3430, %v7274, 0
    %v7556 = vsel %vm3430, %v7275, 0
    %v7559 = vsel %vm3430, %v7276, 0
    %v7562 = vsel %vm3430, %v7277, 0
    %v7565 = vsel %vm3430, %v7278, 0
    %v7568 = vsel %vm3430, %v7279, 0
    %v7571 = vsel %vm3430, %v7280, 0
    %v7574 = vsel %vm3430, %v7281, 0
    %v7577 = vsel %vm3430, %v7282, 0
    %v7580 = vsel %vm3430, %v7283, 0
    %v7583 = vsel %vm3430, %v7284, 0
    %v7586 = vsel %vm3430, %v7285, 0
    %v7589 = vsel %vm3430, %v7286, 0
    %v7592 = vsel %vm3430, %v7287, 0
    %v7595 = vsel %vm3430, %v7288, 0
    %v7598 = vsel %vm3430, %v7289, 0
    %v7601 = vsel %vm3430, %v7290, 0
    %v7604 = vsel %vm3430, %v7291, 0
    %v7607 = vsel %vm3430, %v7292, 0
    %v7610 = vsel %vm3430, %v7293, 0
    %v7613 = vsel %vm3430, %v7294, 0
    %v7616 = vsel %vm3430, %v7295, 0
    %v7619 = vsel %vm3430, %v7296, 0
    %v7622 = vsel %vm3430, %v7297, 0
    %v7625 = vsel %vm3430, %v7298, 0
    %v7628 = vsel %vm3430, %v7299, 0
    %v7631 = vsel %vm3430, %v7300, 0
    %v7634 = vsel %vm3430, %v7301, 0
    %v7637 = vsel %vm3430, %v7302, 0
    %v7640 = vsel %vm3430, %v7303, 0
    %v7643 = vsel %vm3430, %v7304, 0
    %v7646 = vsel %vm3430, %v7305, 0
    %v7649 = vsel %vm3430, %v7306, 0
    %v7652 = vsel %vm3430, %v7307, 0
    %v7655 = vsel %vm3430, %v7308, 0
    %v7658 = vsel %vm3430, %v7309, 0
    %v7661 = vsel %vm3430, %v7310, 0
    %v7664 = vsel %vm3430, %v7311, 0
    %v7667 = vsel %vm3430, %v7312, 0
    %v7670 = vsel %vm3430, %v7313, 0
    %v7673 = vsel %vm3430, %v7314, 0
    %v7676 = vsel %vm3430, %v7315, 0
    %v7679 = vsel %vm3430, %v7316, 0
    %v7682 = vsel %vm3430, %v7317, 0
    %v7685 = vsel %vm3430, %v7318, 0
    %v7688 = vsel %vm3430, %v7319, 0
    %v7691 = vsel %vm3430, %v7320, 0
    %v7694 = vsel %vm3430, %v7321, 0
    %v7697 = vsel %vm3430, %v7322, 0
    %v7700 = vsel %vm3430, %v7323, 0
    %v7703 = vsel %vm3430, %v7324, 0
    %v7706 = vsel %vm3430, %v7325, 0
    %v7709 = vsel %vm3430, %v7326, 0
    %v7712 = vsel %vm3430, %v7327, 0
    %v7715 = vsel %vm3430, %v7328, 0
    %v7718 = vsel %vm3430, %v7329, 0
    %v7721 = vsel %vm3430, %v7330, 0
    %7723 = vmatpush.msra.mxu0 0.0
    %7724 = vmatpush.msra.mxu0 0.0
    %7725 = vmatpush.msra.mxu0 0.0
    %7726 = vmatpush.msra.mxu0 0.0
    %7727 = vmatpush.msra.mxu0 0.0
    %7728 = vmatpush.msra.mxu0 0.0
    %7729 = vmatpush.msra.mxu0 0.0
    %7730 = vmatpush.msra.mxu0 0.0
    %7731 = vmatpush.msra.mxu0 0.0
    %7732 = vmatpush.msra.mxu0 0.0
    %7733 = vmatpush.msra.mxu0 0.0
    %7734 = vmatpush.msra.mxu0 0.0
    %7735 = vmatpush.msra.mxu0 %v7334
    %7736 = vmatpush.msra.mxu0 %v7333
    %7737 = vmatpush.msra.mxu0 %v7332
    %7738 = vmatpush.msra.mxu0 %v7331
    %7739 = vmatmul.f32.gmra.mxu0 %v7340
    %v7740 = vpop.f32.mrf.mxu0
    %v7741 = vadd.f32 %v7337, %v7740
    %7742 = vmatmul.f32.gmra.mxu0 %v7343
    %v7743 = vpop.f32.mrf.mxu0
    %v7744 = vadd.f32 %v7337, %v7743
    %7745 = vmatmul.f32.gmra.mxu0 %v7346
    %v7746 = vpop.f32.mrf.mxu0
    %v7747 = vadd.f32 %v7337, %v7746
    %7748 = vmatmul.f32.gmra.mxu0 %v7349
    %v7749 = vpop.f32.mrf.mxu0
    %v7750 = vadd.f32 %v7337, %v7749
    %7751 = vmatmul.f32.gmra.mxu0 %v7352
    %v7752 = vpop.f32.mrf.mxu0
    %v7753 = vadd.f32 %v7337, %v7752
    %7754 = vmatmul.f32.gmra.mxu0 %v7355
    %v7755 = vpop.f32.mrf.mxu0
    %v7756 = vadd.f32 %v7337, %v7755
    %7757 = vmatmul.f32.gmra.mxu0 %v7358
    %v7758 = vpop.f32.mrf.mxu0
    %v7759 = vadd.f32 %v7337, %v7758
    %7760 = vmatmul.f32.gmra.mxu0 %v7361
    %v7761 = vpop.f32.mrf.mxu0
    %v7762 = vadd.f32 %v7337, %v7761
    %7763 = vmatmul.f32.gmra.mxu0 %v7364
    %v7764 = vpop.f32.mrf.mxu0
    %v7765 = vadd.f32 %v7337, %v7764
    %7766 = vmatmul.f32.gmra.mxu0 %v7367
    %v7767 = vpop.f32.mrf.mxu0
    %v7768 = vadd.f32 %v7337, %v7767
    %7769 = vmatmul.f32.gmra.mxu0 %v7370
    %v7770 = vpop.f32.mrf.mxu0
    %v7771 = vadd.f32 %v7337, %v7770
    %7772 = vmatmul.f32.gmra.mxu0 %v7373
    %v7773 = vpop.f32.mrf.mxu0
    %v7774 = vadd.f32 %v7337, %v7773
    %7775 = vmatmul.f32.gmra.mxu0 %v7376
    %v7776 = vpop.f32.mrf.mxu0
    %v7777 = vadd.f32 %v7337, %v7776
    %7778 = vmatmul.f32.gmra.mxu0 %v7379
    %v7779 = vpop.f32.mrf.mxu0
    %v7780 = vadd.f32 %v7337, %v7779
    %7781 = vmatmul.f32.gmra.mxu0 %v7382
    %v7782 = vpop.f32.mrf.mxu0
    %v7783 = vadd.f32 %v7337, %v7782
    %7784 = vmatmul.f32.gmra.mxu0 %v7385
    %v7785 = vpop.f32.mrf.mxu0
    %v7786 = vadd.f32 %v7337, %v7785
    %7787 = vmatmul.f32.gmra.mxu0 %v7388
    %v7788 = vpop.f32.mrf.mxu0
    %v7789 = vadd.f32 %v7337, %v7788
    %7790 = vmatmul.f32.gmra.mxu0 %v7391
    %v7791 = vpop.f32.mrf.mxu0
    %v7792 = vadd.f32 %v7337, %v7791
    %7793 = vmatmul.f32.gmra.mxu0 %v7394
    %v7794 = vpop.f32.mrf.mxu0
    %v7795 = vadd.f32 %v7337, %v7794
    %7796 = vmatmul.f32.gmra.mxu0 %v7397
    %v7797 = vpop.f32.mrf.mxu0
    %v7798 = vadd.f32 %v7337, %v7797
    %7799 = vmatmul.f32.gmra.mxu0 %v7400
    %v7800 = vpop.f32.mrf.mxu0
    %v7801 = vadd.f32 %v7337, %v7800
    %7802 = vmatmul.f32.gmra.mxu0 %v7403
    %v7803 = vpop.f32.mrf.mxu0
    %v7804 = vadd.f32 %v7337, %v7803
    %7805 = vmatmul.f32.gmra.mxu0 %v7406
    %v7806 = vpop.f32.mrf.mxu0
    %v7807 = vadd.f32 %v7337, %v7806
    %7808 = vmatmul.f32.gmra.mxu0 %v7409
    %v7809 = vpop.f32.mrf.mxu0
    %v7810 = vadd.f32 %v7337, %v7809
    %7811 = vmatmul.f32.gmra.mxu0 %v7412
    %v7812 = vpop.f32.mrf.mxu0
    %v7813 = vadd.f32 %v7337, %v7812
    %7814 = vmatmul.f32.gmra.mxu0 %v7415
    %v7815 = vpop.f32.mrf.mxu0
    %v7816 = vadd.f32 %v7337, %v7815
    %7817 = vmatmul.f32.gmra.mxu0 %v7418
    %v7818 = vpop.f32.mrf.mxu0
    %v7819 = vadd.f32 %v7337, %v7818
    %7820 = vmatmul.f32.gmra.mxu0 %v7421
    %v7821 = vpop.f32.mrf.mxu0
    %v7822 = vadd.f32 %v7337, %v7821
    %7823 = vmatmul.f32.gmra.mxu0 %v7424
    %v7824 = vpop.f32.mrf.mxu0
    %v7825 = vadd.f32 %v7337, %v7824
    %7826 = vmatmul.f32.gmra.mxu0 %v7427
    %v7827 = vpop.f32.mrf.mxu0
    %v7828 = vadd.f32 %v7337, %v7827
    %7829 = vmatmul.f32.gmra.mxu0 %v7430
    %v7830 = vpop.f32.mrf.mxu0
    %v7831 = vadd.f32 %v7337, %v7830
    %7832 = vmatmul.f32.gmra.mxu0 %v7433
    %v7833 = vpop.f32.mrf.mxu0
    %v7834 = vadd.f32 %v7337, %v7833
    %7835 = vmatmul.f32.gmra.mxu0 %v7436
    %v7836 = vpop.f32.mrf.mxu0
    %v7837 = vadd.f32 %v7337, %v7836
    %7838 = vmatmul.f32.gmra.mxu0 %v7439
    %v7839 = vpop.f32.mrf.mxu0
    %v7840 = vadd.f32 %v7337, %v7839
    %7841 = vmatmul.f32.gmra.mxu0 %v7442
    %v7842 = vpop.f32.mrf.mxu0
    %v7843 = vadd.f32 %v7337, %v7842
    %7844 = vmatmul.f32.gmra.mxu0 %v7445
    %v7845 = vpop.f32.mrf.mxu0
    %v7846 = vadd.f32 %v7337, %v7845
    %7847 = vmatmul.f32.gmra.mxu0 %v7448
    %v7848 = vpop.f32.mrf.mxu0
    %v7849 = vadd.f32 %v7337, %v7848
    %7850 = vmatmul.f32.gmra.mxu0 %v7451
    %v7851 = vpop.f32.mrf.mxu0
    %v7852 = vadd.f32 %v7337, %v7851
    %7853 = vmatmul.f32.gmra.mxu0 %v7454
    %v7854 = vpop.f32.mrf.mxu0
    %v7855 = vadd.f32 %v7337, %v7854
    %7856 = vmatmul.f32.gmra.mxu0 %v7457
    %v7857 = vpop.f32.mrf.mxu0
    %v7858 = vadd.f32 %v7337, %v7857
    %7859 = vmatmul.f32.gmra.mxu0 %v7460
    %v7860 = vpop.f32.mrf.mxu0
    %v7861 = vadd.f32 %v7337, %v7860
    %7862 = vmatmul.f32.gmra.mxu0 %v7463
    %v7863 = vpop.f32.mrf.mxu0
    %v7864 = vadd.f32 %v7337, %v7863
    %7865 = vmatmul.f32.gmra.mxu0 %v7466
    %v7866 = vpop.f32.mrf.mxu0
    %v7867 = vadd.f32 %v7337, %v7866
    %7868 = vmatmul.f32.gmra.mxu0 %v7469
    %v7869 = vpop.f32.mrf.mxu0
    %v7870 = vadd.f32 %v7337, %v7869
    %7871 = vmatmul.f32.gmra.mxu0 %v7472
    %v7872 = vpop.f32.mrf.mxu0
    %v7873 = vadd.f32 %v7337, %v7872
    %7874 = vmatmul.f32.gmra.mxu0 %v7475
    %v7875 = vpop.f32.mrf.mxu0
    %v7876 = vadd.f32 %v7337, %v7875
    %7877 = vmatmul.f32.gmra.mxu0 %v7478
    %v7878 = vpop.f32.mrf.mxu0
    %v7879 = vadd.f32 %v7337, %v7878
    %7880 = vmatmul.f32.gmra.mxu0 %v7481
    %v7881 = vpop.f32.mrf.mxu0
    %v7882 = vadd.f32 %v7337, %v7881
    %7883 = vmatmul.f32.gmra.mxu0 %v7484
    %v7884 = vpop.f32.mrf.mxu0
    %v7885 = vadd.f32 %v7337, %v7884
    %7886 = vmatmul.f32.gmra.mxu0 %v7487
    %v7887 = vpop.f32.mrf.mxu0
    %v7888 = vadd.f32 %v7337, %v7887
    %7889 = vmatmul.f32.gmra.mxu0 %v7490
    %v7890 = vpop.f32.mrf.mxu0
    %v7891 = vadd.f32 %v7337, %v7890
    %7892 = vmatmul.f32.gmra.mxu0 %v7493
    %v7893 = vpop.f32.mrf.mxu0
    %v7894 = vadd.f32 %v7337, %v7893
    %7895 = vmatmul.f32.gmra.mxu0 %v7496
    %v7896 = vpop.f32.mrf.mxu0
    %v7897 = vadd.f32 %v7337, %v7896
    %7898 = vmatmul.f32.gmra.mxu0 %v7499
    %v7899 = vpop.f32.mrf.mxu0
    %v7900 = vadd.f32 %v7337, %v7899
    %7901 = vmatmul.f32.gmra.mxu0 %v7502
    %v7902 = vpop.f32.mrf.mxu0
    %v7903 = vadd.f32 %v7337, %v7902
    %7904 = vmatmul.f32.gmra.mxu0 %v7505
    %v7905 = vpop.f32.mrf.mxu0
    %v7906 = vadd.f32 %v7337, %v7905
    %7907 = vmatmul.f32.gmra.mxu0 %v7508
    %v7908 = vpop.f32.mrf.mxu0
    %v7909 = vadd.f32 %v7337, %v7908
    %7910 = vmatmul.f32.gmra.mxu0 %v7511
    %v7911 = vpop.f32.mrf.mxu0
    %v7912 = vadd.f32 %v7337, %v7911
    %7913 = vmatmul.f32.gmra.mxu0 %v7514
    %v7914 = vpop.f32.mrf.mxu0
    %v7915 = vadd.f32 %v7337, %v7914
    %7916 = vmatmul.f32.gmra.mxu0 %v7517
    %v7917 = vpop.f32.mrf.mxu0
    %v7918 = vadd.f32 %v7337, %v7917
    %7919 = vmatmul.f32.gmra.mxu0 %v7520
    %v7920 = vpop.f32.mrf.mxu0
    %v7921 = vadd.f32 %v7337, %v7920
    %7922 = vmatmul.f32.gmra.mxu0 %v7523
    %v7923 = vpop.f32.mrf.mxu0
    %v7924 = vadd.f32 %v7337, %v7923
    %7925 = vmatmul.f32.gmra.mxu0 %v7526
    %v7926 = vpop.f32.mrf.mxu0
    %v7927 = vadd.f32 %v7337, %v7926
    %7928 = vmatmul.f32.gmra.mxu0 %v7529
    %v7929 = vpop.f32.mrf.mxu0
    %v7930 = vadd.f32 %v7337, %v7929
    %7931 = vmatmul.f32.gmra.mxu0 %v7532
    %v7932 = vpop.f32.mrf.mxu0
    %v7933 = vadd.f32 %v7337, %v7932
    %7934 = vmatmul.f32.gmra.mxu0 %v7535
    %v7935 = vpop.f32.mrf.mxu0
    %v7936 = vadd.f32 %v7337, %v7935
    %7937 = vmatmul.f32.gmra.mxu0 %v7538
    %v7938 = vpop.f32.mrf.mxu0
    %v7939 = vadd.f32 %v7337, %v7938
    %7940 = vmatmul.f32.gmra.mxu0 %v7541
    %v7941 = vpop.f32.mrf.mxu0
    %v7942 = vadd.f32 %v7337, %v7941
    %7943 = vmatmul.f32.gmra.mxu0 %v7544
    %v7944 = vpop.f32.mrf.mxu0
    %v7945 = vadd.f32 %v7337, %v7944
    %7946 = vmatmul.f32.gmra.mxu0 %v7547
    %v7947 = vpop.f32.mrf.mxu0
    %v7948 = vadd.f32 %v7337, %v7947
    %7949 = vmatmul.f32.gmra.mxu0 %v7550
    %v7950 = vpop.f32.mrf.mxu0
    %v7951 = vadd.f32 %v7337, %v7950
    %7952 = vmatmul.f32.gmra.mxu0 %v7553
    %v7953 = vpop.f32.mrf.mxu0
    %v7954 = vadd.f32 %v7337, %v7953
    %7955 = vmatmul.f32.gmra.mxu0 %v7556
    %v7956 = vpop.f32.mrf.mxu0
    %v7957 = vadd.f32 %v7337, %v7956
    %7958 = vmatmul.f32.gmra.mxu0 %v7559
    %v7959 = vpop.f32.mrf.mxu0
    %v7960 = vadd.f32 %v7337, %v7959
    %7961 = vmatmul.f32.gmra.mxu0 %v7562
    %v7962 = vpop.f32.mrf.mxu0
    %v7963 = vadd.f32 %v7337, %v7962
    %7964 = vmatmul.f32.gmra.mxu0 %v7565
    %v7965 = vpop.f32.mrf.mxu0
    %v7966 = vadd.f32 %v7337, %v7965
    %7967 = vmatmul.f32.gmra.mxu0 %v7568
    %v7968 = vpop.f32.mrf.mxu0
    %v7969 = vadd.f32 %v7337, %v7968
    %7970 = vmatmul.f32.gmra.mxu0 %v7571
    %v7971 = vpop.f32.mrf.mxu0
    %v7972 = vadd.f32 %v7337, %v7971
    %7973 = vmatmul.f32.gmra.mxu0 %v7574
    %v7974 = vpop.f32.mrf.mxu0
    %v7975 = vadd.f32 %v7337, %v7974
    %7976 = vmatmul.f32.gmra.mxu0 %v7577
    %v7977 = vpop.f32.mrf.mxu0
    %v7978 = vadd.f32 %v7337, %v7977
    %7979 = vmatmul.f32.gmra.mxu0 %v7580
    %v7980 = vpop.f32.mrf.mxu0
    %v7981 = vadd.f32 %v7337, %v7980
    %7982 = vmatmul.f32.gmra.mxu0 %v7583
    %v7983 = vpop.f32.mrf.mxu0
    %v7984 = vadd.f32 %v7337, %v7983
    %7985 = vmatmul.f32.gmra.mxu0 %v7586
    %v7986 = vpop.f32.mrf.mxu0
    %v7987 = vadd.f32 %v7337, %v7986
    %7988 = vmatmul.f32.gmra.mxu0 %v7589
    %v7989 = vpop.f32.mrf.mxu0
    %v7990 = vadd.f32 %v7337, %v7989
    %7991 = vmatmul.f32.gmra.mxu0 %v7592
    %v7992 = vpop.f32.mrf.mxu0
    %v7993 = vadd.f32 %v7337, %v7992
    %7994 = vmatmul.f32.gmra.mxu0 %v7595
    %v7995 = vpop.f32.mrf.mxu0
    %v7996 = vadd.f32 %v7337, %v7995
    %7997 = vmatmul.f32.gmra.mxu0 %v7598
    %v7998 = vpop.f32.mrf.mxu0
    %v7999 = vadd.f32 %v7337, %v7998
    %8000 = vmatmul.f32.gmra.mxu0 %v7601
    %v8001 = vpop.f32.mrf.mxu0
    %v8002 = vadd.f32 %v7337, %v8001
    %8003 = vmatmul.f32.gmra.mxu0 %v7604
    %v8004 = vpop.f32.mrf.mxu0
    %v8005 = vadd.f32 %v7337, %v8004
    %8006 = vmatmul.f32.gmra.mxu0 %v7607
    %v8007 = vpop.f32.mrf.mxu0
    %v8008 = vadd.f32 %v7337, %v8007
    %8009 = vmatmul.f32.gmra.mxu0 %v7610
    %v8010 = vpop.f32.mrf.mxu0
    %v8011 = vadd.f32 %v7337, %v8010
    %8012 = vmatmul.f32.gmra.mxu0 %v7613
    %v8013 = vpop.f32.mrf.mxu0
    %v8014 = vadd.f32 %v7337, %v8013
    %8015 = vmatmul.f32.gmra.mxu0 %v7616
    %v8016 = vpop.f32.mrf.mxu0
    %v8017 = vadd.f32 %v7337, %v8016
    %8018 = vmatmul.f32.gmra.mxu0 %v7619
    %v8019 = vpop.f32.mrf.mxu0
    %v8020 = vadd.f32 %v7337, %v8019
    %8021 = vmatmul.f32.gmra.mxu0 %v7622
    %v8022 = vpop.f32.mrf.mxu0
    %v8023 = vadd.f32 %v7337, %v8022
    %8024 = vmatmul.f32.gmra.mxu0 %v7625
    %v8025 = vpop.f32.mrf.mxu0
    %v8026 = vadd.f32 %v7337, %v8025
    %8027 = vmatmul.f32.gmra.mxu0 %v7628
    %v8028 = vpop.f32.mrf.mxu0
    %v8029 = vadd.f32 %v7337, %v8028
    %8030 = vmatmul.f32.gmra.mxu0 %v7631
    %v8031 = vpop.f32.mrf.mxu0
    %v8032 = vadd.f32 %v7337, %v8031
    %8033 = vmatmul.f32.gmra.mxu0 %v7634
    %v8034 = vpop.f32.mrf.mxu0
    %v8035 = vadd.f32 %v7337, %v8034
    %8036 = vmatmul.f32.gmra.mxu0 %v7637
    %v8037 = vpop.f32.mrf.mxu0
    %v8038 = vadd.f32 %v7337, %v8037
    %8039 = vmatmul.f32.gmra.mxu0 %v7640
    %v8040 = vpop.f32.mrf.mxu0
    %v8041 = vadd.f32 %v7337, %v8040
    %8042 = vmatmul.f32.gmra.mxu0 %v7643
    %v8043 = vpop.f32.mrf.mxu0
    %v8044 = vadd.f32 %v7337, %v8043
    %8045 = vmatmul.f32.gmra.mxu0 %v7646
    %v8046 = vpop.f32.mrf.mxu0
    %v8047 = vadd.f32 %v7337, %v8046
    %8048 = vmatmul.f32.gmra.mxu0 %v7649
    %v8049 = vpop.f32.mrf.mxu0
    %v8050 = vadd.f32 %v7337, %v8049
    %8051 = vmatmul.f32.gmra.mxu0 %v7652
    %v8052 = vpop.f32.mrf.mxu0
    %v8053 = vadd.f32 %v7337, %v8052
    %8054 = vmatmul.f32.gmra.mxu0 %v7655
    %v8055 = vpop.f32.mrf.mxu0
    %v8056 = vadd.f32 %v7337, %v8055
    %8057 = vmatmul.f32.gmra.mxu0 %v7658
    %v8058 = vpop.f32.mrf.mxu0
    %v8059 = vadd.f32 %v7337, %v8058
    %8060 = vmatmul.f32.gmra.mxu0 %v7661
    %v8061 = vpop.f32.mrf.mxu0
    %v8062 = vadd.f32 %v7337, %v8061
    %8063 = vmatmul.f32.gmra.mxu0 %v7664
    %v8064 = vpop.f32.mrf.mxu0
    %v8065 = vadd.f32 %v7337, %v8064
    %8066 = vmatmul.f32.gmra.mxu0 %v7667
    %v8067 = vpop.f32.mrf.mxu0
    %v8068 = vadd.f32 %v7337, %v8067
    %8069 = vmatmul.f32.gmra.mxu0 %v7670
    %v8070 = vpop.f32.mrf.mxu0
    %v8071 = vadd.f32 %v7337, %v8070
    %8072 = vmatmul.f32.gmra.mxu0 %v7673
    %v8073 = vpop.f32.mrf.mxu0
    %v8074 = vadd.f32 %v7337, %v8073
    %8075 = vmatmul.f32.gmra.mxu0 %v7676
    %v8076 = vpop.f32.mrf.mxu0
    %v8077 = vadd.f32 %v7337, %v8076
    %8078 = vmatmul.f32.gmra.mxu0 %v7679
    %v8079 = vpop.f32.mrf.mxu0
    %v8080 = vadd.f32 %v7337, %v8079
    %8081 = vmatmul.f32.gmra.mxu0 %v7682
    %v8082 = vpop.f32.mrf.mxu0
    %v8083 = vadd.f32 %v7337, %v8082
    %8084 = vmatmul.f32.gmra.mxu0 %v7685
    %v8085 = vpop.f32.mrf.mxu0
    %v8086 = vadd.f32 %v7337, %v8085
    %8087 = vmatmul.f32.gmra.mxu0 %v7688
    %v8088 = vpop.f32.mrf.mxu0
    %v8089 = vadd.f32 %v7337, %v8088
    %8090 = vmatmul.f32.gmra.mxu0 %v7691
    %v8091 = vpop.f32.mrf.mxu0
    %v8092 = vadd.f32 %v7337, %v8091
    %8093 = vmatmul.f32.gmra.mxu0 %v7694
    %v8094 = vpop.f32.mrf.mxu0
    %v8095 = vadd.f32 %v7337, %v8094
    %8096 = vmatmul.f32.gmra.mxu0 %v7697
    %v8097 = vpop.f32.mrf.mxu0
    %v8098 = vadd.f32 %v7337, %v8097
    %8099 = vmatmul.f32.gmra.mxu0 %v7700
    %v8100 = vpop.f32.mrf.mxu0
    %v8101 = vadd.f32 %v7337, %v8100
    %8102 = vmatmul.f32.gmra.mxu0 %v7703
    %v8103 = vpop.f32.mrf.mxu0
    %v8104 = vadd.f32 %v7337, %v8103
    %8105 = vmatmul.f32.gmra.mxu0 %v7706
    %v8106 = vpop.f32.mrf.mxu0
    %v8107 = vadd.f32 %v7337, %v8106
    %8108 = vmatmul.f32.gmra.mxu0 %v7709
    %v8109 = vpop.f32.mrf.mxu0
    %v8110 = vadd.f32 %v7337, %v8109
    %8111 = vmatmul.f32.gmra.mxu0 %v7712
    %v8112 = vpop.f32.mrf.mxu0
    %v8113 = vadd.f32 %v7337, %v8112
    %8114 = vmatmul.f32.gmra.mxu0 %v7715
    %v8115 = vpop.f32.mrf.mxu0
    %v8116 = vadd.f32 %v7337, %v8115
    %8117 = vmatmul.f32.gmra.mxu0 %v7718
    %v8118 = vpop.f32.mrf.mxu0
    %v8119 = vadd.f32 %v7337, %v8118
    %8120 = vmatmul.f32.gmra.mxu0 %v7721
    %v8121 = vpop.f32.mrf.mxu0
    %v8122 = vadd.f32 %v7337, %v8121
    %8123 = vdwg.mxu0
    %v8124 = vsel %vm3430, %v7741, -inf
    %v8125 = vrot.slane %v8124, 4
    %v8126 = vmax.f32 %v8124, %v8125
    %v8127 = vrot.slane %v8126, 2
    %v8128 = vmax.f32 %v8126, %v8127
    %v8129 = vrot.slane %v8128, 1
    %v8130 = vmax.f32 %v8128, %v8129
    %v8131 = vsel %vm3430, %v7744, -inf
    %v8132 = vrot.slane %v8131, 4
    %v8133 = vmax.f32 %v8131, %v8132
    %v8134 = vrot.slane %v8133, 2
    %v8135 = vmax.f32 %v8133, %v8134
    %v8136 = vrot.slane %v8135, 1
    %v8137 = vmax.f32 %v8135, %v8136
    %v8138 = vsel %vm3430, %v7747, -inf
    %v8139 = vrot.slane %v8138, 4
    %v8140 = vmax.f32 %v8138, %v8139
    %v8141 = vrot.slane %v8140, 2
    %v8142 = vmax.f32 %v8140, %v8141
    %v8143 = vrot.slane %v8142, 1
    %v8144 = vmax.f32 %v8142, %v8143
    %v8145 = vsel %vm3430, %v7750, -inf
    %v8146 = vrot.slane %v8145, 4
    %v8147 = vmax.f32 %v8145, %v8146
    %v8148 = vrot.slane %v8147, 2
    %v8149 = vmax.f32 %v8147, %v8148
    %v8150 = vrot.slane %v8149, 1
    %v8151 = vmax.f32 %v8149, %v8150
    %v8152 = vsel %vm3430, %v7753, -inf
    %v8153 = vrot.slane %v8152, 4
    %v8154 = vmax.f32 %v8152, %v8153
    %v8155 = vrot.slane %v8154, 2
    %v8156 = vmax.f32 %v8154, %v8155
    %v8157 = vrot.slane %v8156, 1
    %v8158 = vmax.f32 %v8156, %v8157
    %v8159 = vsel %vm3430, %v7756, -inf
    %v8160 = vrot.slane %v8159, 4
    %v8161 = vmax.f32 %v8159, %v8160
    %v8162 = vrot.slane %v8161, 2
    %v8163 = vmax.f32 %v8161, %v8162
    %v8164 = vrot.slane %v8163, 1
    %v8165 = vmax.f32 %v8163, %v8164
    %v8166 = vsel %vm3430, %v7759, -inf
    %v8167 = vrot.slane %v8166, 4
    %v8168 = vmax.f32 %v8166, %v8167
    %v8169 = vrot.slane %v8168, 2
    %v8170 = vmax.f32 %v8168, %v8169
    %v8171 = vrot.slane %v8170, 1
    %v8172 = vmax.f32 %v8170, %v8171
    %v8173 = vsel %vm3430, %v7762, -inf
    %v8174 = vrot.slane %v8173, 4
    %v8175 = vmax.f32 %v8173, %v8174
    %v8176 = vrot.slane %v8175, 2
    %v8177 = vmax.f32 %v8175, %v8176
    %v8178 = vrot.slane %v8177, 1
    %v8179 = vmax.f32 %v8177, %v8178
    %v8180 = vsel %vm3430, %v7765, -inf
    %v8181 = vrot.slane %v8180, 4
    %v8182 = vmax.f32 %v8180, %v8181
    %v8183 = vrot.slane %v8182, 2
    %v8184 = vmax.f32 %v8182, %v8183
    %v8185 = vrot.slane %v8184, 1
    %v8186 = vmax.f32 %v8184, %v8185
    %v8187 = vsel %vm3430, %v7768, -inf
    %v8188 = vrot.slane %v8187, 4
    %v8189 = vmax.f32 %v8187, %v8188
    %v8190 = vrot.slane %v8189, 2
    %v8191 = vmax.f32 %v8189, %v8190
    %v8192 = vrot.slane %v8191, 1
    %v8193 = vmax.f32 %v8191, %v8192
    %v8194 = vsel %vm3430, %v7771, -inf
    %v8195 = vrot.slane %v8194, 4
    %v8196 = vmax.f32 %v8194, %v8195
    %v8197 = vrot.slane %v8196, 2
    %v8198 = vmax.f32 %v8196, %v8197
    %v8199 = vrot.slane %v8198, 1
    %v8200 = vmax.f32 %v8198, %v8199
    %v8201 = vsel %vm3430, %v7774, -inf
    %v8202 = vrot.slane %v8201, 4
    %v8203 = vmax.f32 %v8201, %v8202
    %v8204 = vrot.slane %v8203, 2
    %v8205 = vmax.f32 %v8203, %v8204
    %v8206 = vrot.slane %v8205, 1
    %v8207 = vmax.f32 %v8205, %v8206
    %v8208 = vsel %vm3430, %v7777, -inf
    %v8209 = vrot.slane %v8208, 4
    %v8210 = vmax.f32 %v8208, %v8209
    %v8211 = vrot.slane %v8210, 2
    %v8212 = vmax.f32 %v8210, %v8211
    %v8213 = vrot.slane %v8212, 1
    %v8214 = vmax.f32 %v8212, %v8213
    %v8215 = vsel %vm3430, %v7780, -inf
    %v8216 = vrot.slane %v8215, 4
    %v8217 = vmax.f32 %v8215, %v8216
    %v8218 = vrot.slane %v8217, 2
    %v8219 = vmax.f32 %v8217, %v8218
    %v8220 = vrot.slane %v8219, 1
    %v8221 = vmax.f32 %v8219, %v8220
    %v8222 = vsel %vm3430, %v7783, -inf
    %v8223 = vrot.slane %v8222, 4
    %v8224 = vmax.f32 %v8222, %v8223
    %v8225 = vrot.slane %v8224, 2
    %v8226 = vmax.f32 %v8224, %v8225
    %v8227 = vrot.slane %v8226, 1
    %v8228 = vmax.f32 %v8226, %v8227
    %v8229 = vsel %vm3430, %v7786, -inf
    %v8230 = vrot.slane %v8229, 4
    %v8231 = vmax.f32 %v8229, %v8230
    %v8232 = vrot.slane %v8231, 2
    %v8233 = vmax.f32 %v8231, %v8232
    %v8234 = vrot.slane %v8233, 1
    %v8235 = vmax.f32 %v8233, %v8234
    %v8236 = vsel %vm3430, %v7789, -inf
    %v8237 = vrot.slane %v8236, 4
    %v8238 = vmax.f32 %v8236, %v8237
    %v8239 = vrot.slane %v8238, 2
    %v8240 = vmax.f32 %v8238, %v8239
    %v8241 = vrot.slane %v8240, 1
    %v8242 = vmax.f32 %v8240, %v8241
    %v8243 = vsel %vm3430, %v7792, -inf
    %v8244 = vrot.slane %v8243, 4
    %v8245 = vmax.f32 %v8243, %v8244
    %v8246 = vrot.slane %v8245, 2
    %v8247 = vmax.f32 %v8245, %v8246
    %v8248 = vrot.slane %v8247, 1
    %v8249 = vmax.f32 %v8247, %v8248
    %v8250 = vsel %vm3430, %v7795, -inf
    %v8251 = vrot.slane %v8250, 4
    %v8252 = vmax.f32 %v8250, %v8251
    %v8253 = vrot.slane %v8252, 2
    %v8254 = vmax.f32 %v8252, %v8253
    %v8255 = vrot.slane %v8254, 1
    %v8256 = vmax.f32 %v8254, %v8255
    %v8257 = vsel %vm3430, %v7798, -inf
    %v8258 = vrot.slane %v8257, 4
    %v8259 = vmax.f32 %v8257, %v8258
    %v8260 = vrot.slane %v8259, 2
    %v8261 = vmax.f32 %v8259, %v8260
    %v8262 = vrot.slane %v8261, 1
    %v8263 = vmax.f32 %v8261, %v8262
    %v8264 = vsel %vm3430, %v7801, -inf
    %v8265 = vrot.slane %v8264, 4
    %v8266 = vmax.f32 %v8264, %v8265
    %v8267 = vrot.slane %v8266, 2
    %v8268 = vmax.f32 %v8266, %v8267
    %v8269 = vrot.slane %v8268, 1
    %v8270 = vmax.f32 %v8268, %v8269
    %v8271 = vsel %vm3430, %v7804, -inf
    %v8272 = vrot.slane %v8271, 4
    %v8273 = vmax.f32 %v8271, %v8272
    %v8274 = vrot.slane %v8273, 2
    %v8275 = vmax.f32 %v8273, %v8274
    %v8276 = vrot.slane %v8275, 1
    %v8277 = vmax.f32 %v8275, %v8276
    %v8278 = vsel %vm3430, %v7807, -inf
    %v8279 = vrot.slane %v8278, 4
    %v8280 = vmax.f32 %v8278, %v8279
    %v8281 = vrot.slane %v8280, 2
    %v8282 = vmax.f32 %v8280, %v8281
    %v8283 = vrot.slane %v8282, 1
    %v8284 = vmax.f32 %v8282, %v8283
    %v8285 = vsel %vm3430, %v7810, -inf
    %v8286 = vrot.slane %v8285, 4
    %v8287 = vmax.f32 %v8285, %v8286
    %v8288 = vrot.slane %v8287, 2
    %v8289 = vmax.f32 %v8287, %v8288
    %v8290 = vrot.slane %v8289, 1
    %v8291 = vmax.f32 %v8289, %v8290
    %v8292 = vsel %vm3430, %v7813, -inf
    %v8293 = vrot.slane %v8292, 4
    %v8294 = vmax.f32 %v8292, %v8293
    %v8295 = vrot.slane %v8294, 2
    %v8296 = vmax.f32 %v8294, %v8295
    %v8297 = vrot.slane %v8296, 1
    %v8298 = vmax.f32 %v8296, %v8297
    %v8299 = vsel %vm3430, %v7816, -inf
    %v8300 = vrot.slane %v8299, 4
    %v8301 = vmax.f32 %v8299, %v8300
    %v8302 = vrot.slane %v8301, 2
    %v8303 = vmax.f32 %v8301, %v8302
    %v8304 = vrot.slane %v8303, 1
    %v8305 = vmax.f32 %v8303, %v8304
    %v8306 = vsel %vm3430, %v7819, -inf
    %v8307 = vrot.slane %v8306, 4
    %v8308 = vmax.f32 %v8306, %v8307
    %v8309 = vrot.slane %v8308, 2
    %v8310 = vmax.f32 %v8308, %v8309
    %v8311 = vrot.slane %v8310, 1
    %v8312 = vmax.f32 %v8310, %v8311
    %v8313 = vsel %vm3430, %v7822, -inf
    %v8314 = vrot.slane %v8313, 4
    %v8315 = vmax.f32 %v8313, %v8314
    %v8316 = vrot.slane %v8315, 2
    %v8317 = vmax.f32 %v8315, %v8316
    %v8318 = vrot.slane %v8317, 1
    %v8319 = vmax.f32 %v8317, %v8318
    %v8320 = vsel %vm3430, %v7825, -inf
    %v8321 = vrot.slane %v8320, 4
    %v8322 = vmax.f32 %v8320, %v8321
    %v8323 = vrot.slane %v8322, 2
    %v8324 = vmax.f32 %v8322, %v8323
    %v8325 = vrot.slane %v8324, 1
    %v8326 = vmax.f32 %v8324, %v8325
    %v8327 = vsel %vm3430, %v7828, -inf
    %v8328 = vrot.slane %v8327, 4
    %v8329 = vmax.f32 %v8327, %v8328
    %v8330 = vrot.slane %v8329, 2
    %v8331 = vmax.f32 %v8329, %v8330
    %v8332 = vrot.slane %v8331, 1
    %v8333 = vmax.f32 %v8331, %v8332
    %v8334 = vsel %vm3430, %v7831, -inf
    %v8335 = vrot.slane %v8334, 4
    %v8336 = vmax.f32 %v8334, %v8335
    %v8337 = vrot.slane %v8336, 2
    %v8338 = vmax.f32 %v8336, %v8337
    %v8339 = vrot.slane %v8338, 1
    %v8340 = vmax.f32 %v8338, %v8339
    %v8341 = vsel %vm3430, %v7834, -inf
    %v8342 = vrot.slane %v8341, 4
    %v8343 = vmax.f32 %v8341, %v8342
    %v8344 = vrot.slane %v8343, 2
    %v8345 = vmax.f32 %v8343, %v8344
    %v8346 = vrot.slane %v8345, 1
    %v8347 = vmax.f32 %v8345, %v8346
    %v8348 = vsel %vm3430, %v7837, -inf
    %v8349 = vrot.slane %v8348, 4
    %v8350 = vmax.f32 %v8348, %v8349
    %v8351 = vrot.slane %v8350, 2
    %v8352 = vmax.f32 %v8350, %v8351
    %v8353 = vrot.slane %v8352, 1
    %v8354 = vmax.f32 %v8352, %v8353
    %v8355 = vsel %vm3430, %v7840, -inf
    %v8356 = vrot.slane %v8355, 4
    %v8357 = vmax.f32 %v8355, %v8356
    %v8358 = vrot.slane %v8357, 2
    %v8359 = vmax.f32 %v8357, %v8358
    %v8360 = vrot.slane %v8359, 1
    %v8361 = vmax.f32 %v8359, %v8360
    %v8362 = vsel %vm3430, %v7843, -inf
    %v8363 = vrot.slane %v8362, 4
    %v8364 = vmax.f32 %v8362, %v8363
    %v8365 = vrot.slane %v8364, 2
    %v8366 = vmax.f32 %v8364, %v8365
    %v8367 = vrot.slane %v8366, 1
    %v8368 = vmax.f32 %v8366, %v8367
    %v8369 = vsel %vm3430, %v7846, -inf
    %v8370 = vrot.slane %v8369, 4
    %v8371 = vmax.f32 %v8369, %v8370
    %v8372 = vrot.slane %v8371, 2
    %v8373 = vmax.f32 %v8371, %v8372
    %v8374 = vrot.slane %v8373, 1
    %v8375 = vmax.f32 %v8373, %v8374
    %v8376 = vsel %vm3430, %v7849, -inf
    %v8377 = vrot.slane %v8376, 4
    %v8378 = vmax.f32 %v8376, %v8377
    %v8379 = vrot.slane %v8378, 2
    %v8380 = vmax.f32 %v8378, %v8379
    %v8381 = vrot.slane %v8380, 1
    %v8382 = vmax.f32 %v8380, %v8381
    %v8383 = vsel %vm3430, %v7852, -inf
    %v8384 = vrot.slane %v8383, 4
    %v8385 = vmax.f32 %v8383, %v8384
    %v8386 = vrot.slane %v8385, 2
    %v8387 = vmax.f32 %v8385, %v8386
    %v8388 = vrot.slane %v8387, 1
    %v8389 = vmax.f32 %v8387, %v8388
    %v8390 = vsel %vm3430, %v7855, -inf
    %v8391 = vrot.slane %v8390, 4
    %v8392 = vmax.f32 %v8390, %v8391
    %v8393 = vrot.slane %v8392, 2
    %v8394 = vmax.f32 %v8392, %v8393
    %v8395 = vrot.slane %v8394, 1
    %v8396 = vmax.f32 %v8394, %v8395
    %v8397 = vsel %vm3430, %v7858, -inf
    %v8398 = vrot.slane %v8397, 4
    %v8399 = vmax.f32 %v8397, %v8398
    %v8400 = vrot.slane %v8399, 2
    %v8401 = vmax.f32 %v8399, %v8400
    %v8402 = vrot.slane %v8401, 1
    %v8403 = vmax.f32 %v8401, %v8402
    %v8404 = vsel %vm3430, %v7861, -inf
    %v8405 = vrot.slane %v8404, 4
    %v8406 = vmax.f32 %v8404, %v8405
    %v8407 = vrot.slane %v8406, 2
    %v8408 = vmax.f32 %v8406, %v8407
    %v8409 = vrot.slane %v8408, 1
    %v8410 = vmax.f32 %v8408, %v8409
    %v8411 = vsel %vm3430, %v7864, -inf
    %v8412 = vrot.slane %v8411, 4
    %v8413 = vmax.f32 %v8411, %v8412
    %v8414 = vrot.slane %v8413, 2
    %v8415 = vmax.f32 %v8413, %v8414
    %v8416 = vrot.slane %v8415, 1
    %v8417 = vmax.f32 %v8415, %v8416
    %v8418 = vsel %vm3430, %v7867, -inf
    %v8419 = vrot.slane %v8418, 4
    %v8420 = vmax.f32 %v8418, %v8419
    %v8421 = vrot.slane %v8420, 2
    %v8422 = vmax.f32 %v8420, %v8421
    %v8423 = vrot.slane %v8422, 1
    %v8424 = vmax.f32 %v8422, %v8423
    %v8425 = vsel %vm3430, %v7870, -inf
    %v8426 = vrot.slane %v8425, 4
    %v8427 = vmax.f32 %v8425, %v8426
    %v8428 = vrot.slane %v8427, 2
    %v8429 = vmax.f32 %v8427, %v8428
    %v8430 = vrot.slane %v8429, 1
    %v8431 = vmax.f32 %v8429, %v8430
    %v8432 = vsel %vm3430, %v7873, -inf
    %v8433 = vrot.slane %v8432, 4
    %v8434 = vmax.f32 %v8432, %v8433
    %v8435 = vrot.slane %v8434, 2
    %v8436 = vmax.f32 %v8434, %v8435
    %v8437 = vrot.slane %v8436, 1
    %v8438 = vmax.f32 %v8436, %v8437
    %v8439 = vsel %vm3430, %v7876, -inf
    %v8440 = vrot.slane %v8439, 4
    %v8441 = vmax.f32 %v8439, %v8440
    %v8442 = vrot.slane %v8441, 2
    %v8443 = vmax.f32 %v8441, %v8442
    %v8444 = vrot.slane %v8443, 1
    %v8445 = vmax.f32 %v8443, %v8444
    %v8446 = vsel %vm3430, %v7879, -inf
    %v8447 = vrot.slane %v8446, 4
    %v8448 = vmax.f32 %v8446, %v8447
    %v8449 = vrot.slane %v8448, 2
    %v8450 = vmax.f32 %v8448, %v8449
    %v8451 = vrot.slane %v8450, 1
    %v8452 = vmax.f32 %v8450, %v8451
    %v8453 = vsel %vm3430, %v7882, -inf
    %v8454 = vrot.slane %v8453, 4
    %v8455 = vmax.f32 %v8453, %v8454
    %v8456 = vrot.slane %v8455, 2
    %v8457 = vmax.f32 %v8455, %v8456
    %v8458 = vrot.slane %v8457, 1
    %v8459 = vmax.f32 %v8457, %v8458
    %v8460 = vsel %vm3430, %v7885, -inf
    %v8461 = vrot.slane %v8460, 4
    %v8462 = vmax.f32 %v8460, %v8461
    %v8463 = vrot.slane %v8462, 2
    %v8464 = vmax.f32 %v8462, %v8463
    %v8465 = vrot.slane %v8464, 1
    %v8466 = vmax.f32 %v8464, %v8465
    %v8467 = vsel %vm3430, %v7888, -inf
    %v8468 = vrot.slane %v8467, 4
    %v8469 = vmax.f32 %v8467, %v8468
    %v8470 = vrot.slane %v8469, 2
    %v8471 = vmax.f32 %v8469, %v8470
    %v8472 = vrot.slane %v8471, 1
    %v8473 = vmax.f32 %v8471, %v8472
    %v8474 = vsel %vm3430, %v7891, -inf
    %v8475 = vrot.slane %v8474, 4
    %v8476 = vmax.f32 %v8474, %v8475
    %v8477 = vrot.slane %v8476, 2
    %v8478 = vmax.f32 %v8476, %v8477
    %v8479 = vrot.slane %v8478, 1
    %v8480 = vmax.f32 %v8478, %v8479
    %v8481 = vsel %vm3430, %v7894, -inf
    %v8482 = vrot.slane %v8481, 4
    %v8483 = vmax.f32 %v8481, %v8482
    %v8484 = vrot.slane %v8483, 2
    %v8485 = vmax.f32 %v8483, %v8484
    %v8486 = vrot.slane %v8485, 1
    %v8487 = vmax.f32 %v8485, %v8486
    %v8488 = vsel %vm3430, %v7897, -inf
    %v8489 = vrot.slane %v8488, 4
    %v8490 = vmax.f32 %v8488, %v8489
    %v8491 = vrot.slane %v8490, 2
    %v8492 = vmax.f32 %v8490, %v8491
    %v8493 = vrot.slane %v8492, 1
    %v8494 = vmax.f32 %v8492, %v8493
    %v8495 = vsel %vm3430, %v7900, -inf
    %v8496 = vrot.slane %v8495, 4
    %v8497 = vmax.f32 %v8495, %v8496
    %v8498 = vrot.slane %v8497, 2
    %v8499 = vmax.f32 %v8497, %v8498
    %v8500 = vrot.slane %v8499, 1
    %v8501 = vmax.f32 %v8499, %v8500
    %v8502 = vsel %vm3430, %v7903, -inf
    %v8503 = vrot.slane %v8502, 4
    %v8504 = vmax.f32 %v8502, %v8503
    %v8505 = vrot.slane %v8504, 2
    %v8506 = vmax.f32 %v8504, %v8505
    %v8507 = vrot.slane %v8506, 1
    %v8508 = vmax.f32 %v8506, %v8507
    %v8509 = vsel %vm3430, %v7906, -inf
    %v8510 = vrot.slane %v8509, 4
    %v8511 = vmax.f32 %v8509, %v8510
    %v8512 = vrot.slane %v8511, 2
    %v8513 = vmax.f32 %v8511, %v8512
    %v8514 = vrot.slane %v8513, 1
    %v8515 = vmax.f32 %v8513, %v8514
    %v8516 = vsel %vm3430, %v7909, -inf
    %v8517 = vrot.slane %v8516, 4
    %v8518 = vmax.f32 %v8516, %v8517
    %v8519 = vrot.slane %v8518, 2
    %v8520 = vmax.f32 %v8518, %v8519
    %v8521 = vrot.slane %v8520, 1
    %v8522 = vmax.f32 %v8520, %v8521
    %v8523 = vsel %vm3430, %v7912, -inf
    %v8524 = vrot.slane %v8523, 4
    %v8525 = vmax.f32 %v8523, %v8524
    %v8526 = vrot.slane %v8525, 2
    %v8527 = vmax.f32 %v8525, %v8526
    %v8528 = vrot.slane %v8527, 1
    %v8529 = vmax.f32 %v8527, %v8528
    %v8530 = vsel %vm3430, %v7915, -inf
    %v8531 = vrot.slane %v8530, 4
    %v8532 = vmax.f32 %v8530, %v8531
    %v8533 = vrot.slane %v8532, 2
    %v8534 = vmax.f32 %v8532, %v8533
    %v8535 = vrot.slane %v8534, 1
    %v8536 = vmax.f32 %v8534, %v8535
    %v8537 = vsel %vm3430, %v7918, -inf
    %v8538 = vrot.slane %v8537, 4
    %v8539 = vmax.f32 %v8537, %v8538
    %v8540 = vrot.slane %v8539, 2
    %v8541 = vmax.f32 %v8539, %v8540
    %v8542 = vrot.slane %v8541, 1
    %v8543 = vmax.f32 %v8541, %v8542
    %v8544 = vsel %vm3430, %v7921, -inf
    %v8545 = vrot.slane %v8544, 4
    %v8546 = vmax.f32 %v8544, %v8545
    %v8547 = vrot.slane %v8546, 2
    %v8548 = vmax.f32 %v8546, %v8547
    %v8549 = vrot.slane %v8548, 1
    %v8550 = vmax.f32 %v8548, %v8549
    %v8551 = vsel %vm3430, %v7924, -inf
    %v8552 = vrot.slane %v8551, 4
    %v8553 = vmax.f32 %v8551, %v8552
    %v8554 = vrot.slane %v8553, 2
    %v8555 = vmax.f32 %v8553, %v8554
    %v8556 = vrot.slane %v8555, 1
    %v8557 = vmax.f32 %v8555, %v8556
    %v8558 = vsel %vm3430, %v7927, -inf
    %v8559 = vrot.slane %v8558, 4
    %v8560 = vmax.f32 %v8558, %v8559
    %v8561 = vrot.slane %v8560, 2
    %v8562 = vmax.f32 %v8560, %v8561
    %v8563 = vrot.slane %v8562, 1
    %v8564 = vmax.f32 %v8562, %v8563
    %v8565 = vsel %vm3430, %v7930, -inf
    %v8566 = vrot.slane %v8565, 4
    %v8567 = vmax.f32 %v8565, %v8566
    %v8568 = vrot.slane %v8567, 2
    %v8569 = vmax.f32 %v8567, %v8568
    %v8570 = vrot.slane %v8569, 1
    %v8571 = vmax.f32 %v8569, %v8570
    %v8572 = vsel %vm3430, %v7933, -inf
    %v8573 = vrot.slane %v8572, 4
    %v8574 = vmax.f32 %v8572, %v8573
    %v8575 = vrot.slane %v8574, 2
    %v8576 = vmax.f32 %v8574, %v8575
    %v8577 = vrot.slane %v8576, 1
    %v8578 = vmax.f32 %v8576, %v8577
    %v8579 = vsel %vm3430, %v7936, -inf
    %v8580 = vrot.slane %v8579, 4
    %v8581 = vmax.f32 %v8579, %v8580
    %v8582 = vrot.slane %v8581, 2
    %v8583 = vmax.f32 %v8581, %v8582
    %v8584 = vrot.slane %v8583, 1
    %v8585 = vmax.f32 %v8583, %v8584
    %v8586 = vsel %vm3430, %v7939, -inf
    %v8587 = vrot.slane %v8586, 4
    %v8588 = vmax.f32 %v8586, %v8587
    %v8589 = vrot.slane %v8588, 2
    %v8590 = vmax.f32 %v8588, %v8589
    %v8591 = vrot.slane %v8590, 1
    %v8592 = vmax.f32 %v8590, %v8591
    %v8593 = vsel %vm3430, %v7942, -inf
    %v8594 = vrot.slane %v8593, 4
    %v8595 = vmax.f32 %v8593, %v8594
    %v8596 = vrot.slane %v8595, 2
    %v8597 = vmax.f32 %v8595, %v8596
    %v8598 = vrot.slane %v8597, 1
    %v8599 = vmax.f32 %v8597, %v8598
    %v8600 = vsel %vm3430, %v7945, -inf
    %v8601 = vrot.slane %v8600, 4
    %v8602 = vmax.f32 %v8600, %v8601
    %v8603 = vrot.slane %v8602, 2
    %v8604 = vmax.f32 %v8602, %v8603
    %v8605 = vrot.slane %v8604, 1
    %v8606 = vmax.f32 %v8604, %v8605
    %v8607 = vsel %vm3430, %v7948, -inf
    %v8608 = vrot.slane %v8607, 4
    %v8609 = vmax.f32 %v8607, %v8608
    %v8610 = vrot.slane %v8609, 2
    %v8611 = vmax.f32 %v8609, %v8610
    %v8612 = vrot.slane %v8611, 1
    %v8613 = vmax.f32 %v8611, %v8612
    %v8614 = vsel %vm3430, %v7951, -inf
    %v8615 = vrot.slane %v8614, 4
    %v8616 = vmax.f32 %v8614, %v8615
    %v8617 = vrot.slane %v8616, 2
    %v8618 = vmax.f32 %v8616, %v8617
    %v8619 = vrot.slane %v8618, 1
    %v8620 = vmax.f32 %v8618, %v8619
    %v8621 = vsel %vm3430, %v7954, -inf
    %v8622 = vrot.slane %v8621, 4
    %v8623 = vmax.f32 %v8621, %v8622
    %v8624 = vrot.slane %v8623, 2
    %v8625 = vmax.f32 %v8623, %v8624
    %v8626 = vrot.slane %v8625, 1
    %v8627 = vmax.f32 %v8625, %v8626
    %v8628 = vsel %vm3430, %v7957, -inf
    %v8629 = vrot.slane %v8628, 4
    %v8630 = vmax.f32 %v8628, %v8629
    %v8631 = vrot.slane %v8630, 2
    %v8632 = vmax.f32 %v8630, %v8631
    %v8633 = vrot.slane %v8632, 1
    %v8634 = vmax.f32 %v8632, %v8633
    %v8635 = vsel %vm3430, %v7960, -inf
    %v8636 = vrot.slane %v8635, 4
    %v8637 = vmax.f32 %v8635, %v8636
    %v8638 = vrot.slane %v8637, 2
    %v8639 = vmax.f32 %v8637, %v8638
    %v8640 = vrot.slane %v8639, 1
    %v8641 = vmax.f32 %v8639, %v8640
    %v8642 = vsel %vm3430, %v7963, -inf
    %v8643 = vrot.slane %v8642, 4
    %v8644 = vmax.f32 %v8642, %v8643
    %v8645 = vrot.slane %v8644, 2
    %v8646 = vmax.f32 %v8644, %v8645
    %v8647 = vrot.slane %v8646, 1
    %v8648 = vmax.f32 %v8646, %v8647
    %v8649 = vsel %vm3430, %v7966, -inf
    %v8650 = vrot.slane %v8649, 4
    %v8651 = vmax.f32 %v8649, %v8650
    %v8652 = vrot.slane %v8651, 2
    %v8653 = vmax.f32 %v8651, %v8652
    %v8654 = vrot.slane %v8653, 1
    %v8655 = vmax.f32 %v8653, %v8654
    %v8656 = vsel %vm3430, %v7969, -inf
    %v8657 = vrot.slane %v8656, 4
    %v8658 = vmax.f32 %v8656, %v8657
    %v8659 = vrot.slane %v8658, 2
    %v8660 = vmax.f32 %v8658, %v8659
    %v8661 = vrot.slane %v8660, 1
    %v8662 = vmax.f32 %v8660, %v8661
    %v8663 = vsel %vm3430, %v7972, -inf
    %v8664 = vrot.slane %v8663, 4
    %v8665 = vmax.f32 %v8663, %v8664
    %v8666 = vrot.slane %v8665, 2
    %v8667 = vmax.f32 %v8665, %v8666
    %v8668 = vrot.slane %v8667, 1
    %v8669 = vmax.f32 %v8667, %v8668
    %v8670 = vsel %vm3430, %v7975, -inf
    %v8671 = vrot.slane %v8670, 4
    %v8672 = vmax.f32 %v8670, %v8671
    %v8673 = vrot.slane %v8672, 2
    %v8674 = vmax.f32 %v8672, %v8673
    %v8675 = vrot.slane %v8674, 1
    %v8676 = vmax.f32 %v8674, %v8675
    %v8677 = vsel %vm3430, %v7978, -inf
    %v8678 = vrot.slane %v8677, 4
    %v8679 = vmax.f32 %v8677, %v8678
    %v8680 = vrot.slane %v8679, 2
    %v8681 = vmax.f32 %v8679, %v8680
    %v8682 = vrot.slane %v8681, 1
    %v8683 = vmax.f32 %v8681, %v8682
    %v8684 = vsel %vm3430, %v7981, -inf
    %v8685 = vrot.slane %v8684, 4
    %v8686 = vmax.f32 %v8684, %v8685
    %v8687 = vrot.slane %v8686, 2
    %v8688 = vmax.f32 %v8686, %v8687
    %v8689 = vrot.slane %v8688, 1
    %v8690 = vmax.f32 %v8688, %v8689
    %v8691 = vsel %vm3430, %v7984, -inf
    %v8692 = vrot.slane %v8691, 4
    %v8693 = vmax.f32 %v8691, %v8692
    %v8694 = vrot.slane %v8693, 2
    %v8695 = vmax.f32 %v8693, %v8694
    %v8696 = vrot.slane %v8695, 1
    %v8697 = vmax.f32 %v8695, %v8696
    %v8698 = vsel %vm3430, %v7987, -inf
    %v8699 = vrot.slane %v8698, 4
    %v8700 = vmax.f32 %v8698, %v8699
    %v8701 = vrot.slane %v8700, 2
    %v8702 = vmax.f32 %v8700, %v8701
    %v8703 = vrot.slane %v8702, 1
    %v8704 = vmax.f32 %v8702, %v8703
    %v8705 = vsel %vm3430, %v7990, -inf
    %v8706 = vrot.slane %v8705, 4
    %v8707 = vmax.f32 %v8705, %v8706
    %v8708 = vrot.slane %v8707, 2
    %v8709 = vmax.f32 %v8707, %v8708
    %v8710 = vrot.slane %v8709, 1
    %v8711 = vmax.f32 %v8709, %v8710
    %v8712 = vsel %vm3430, %v7993, -inf
    %v8713 = vrot.slane %v8712, 4
    %v8714 = vmax.f32 %v8712, %v8713
    %v8715 = vrot.slane %v8714, 2
    %v8716 = vmax.f32 %v8714, %v8715
    %v8717 = vrot.slane %v8716, 1
    %v8718 = vmax.f32 %v8716, %v8717
    %v8719 = vsel %vm3430, %v7996, -inf
    %v8720 = vrot.slane %v8719, 4
    %v8721 = vmax.f32 %v8719, %v8720
    %v8722 = vrot.slane %v8721, 2
    %v8723 = vmax.f32 %v8721, %v8722
    %v8724 = vrot.slane %v8723, 1
    %v8725 = vmax.f32 %v8723, %v8724
    %v8726 = vsel %vm3430, %v7999, -inf
    %v8727 = vrot.slane %v8726, 4
    %v8728 = vmax.f32 %v8726, %v8727
    %v8729 = vrot.slane %v8728, 2
    %v8730 = vmax.f32 %v8728, %v8729
    %v8731 = vrot.slane %v8730, 1
    %v8732 = vmax.f32 %v8730, %v8731
    %v8733 = vsel %vm3430, %v8002, -inf
    %v8734 = vrot.slane %v8733, 4
    %v8735 = vmax.f32 %v8733, %v8734
    %v8736 = vrot.slane %v8735, 2
    %v8737 = vmax.f32 %v8735, %v8736
    %v8738 = vrot.slane %v8737, 1
    %v8739 = vmax.f32 %v8737, %v8738
    %v8740 = vsel %vm3430, %v8005, -inf
    %v8741 = vrot.slane %v8740, 4
    %v8742 = vmax.f32 %v8740, %v8741
    %v8743 = vrot.slane %v8742, 2
    %v8744 = vmax.f32 %v8742, %v8743
    %v8745 = vrot.slane %v8744, 1
    %v8746 = vmax.f32 %v8744, %v8745
    %v8747 = vsel %vm3430, %v8008, -inf
    %v8748 = vrot.slane %v8747, 4
    %v8749 = vmax.f32 %v8747, %v8748
    %v8750 = vrot.slane %v8749, 2
    %v8751 = vmax.f32 %v8749, %v8750
    %v8752 = vrot.slane %v8751, 1
    %v8753 = vmax.f32 %v8751, %v8752
    %v8754 = vsel %vm3430, %v8011, -inf
    %v8755 = vrot.slane %v8754, 4
    %v8756 = vmax.f32 %v8754, %v8755
    %v8757 = vrot.slane %v8756, 2
    %v8758 = vmax.f32 %v8756, %v8757
    %v8759 = vrot.slane %v8758, 1
    %v8760 = vmax.f32 %v8758, %v8759
    %v8761 = vsel %vm3430, %v8014, -inf
    %v8762 = vrot.slane %v8761, 4
    %v8763 = vmax.f32 %v8761, %v8762
    %v8764 = vrot.slane %v8763, 2
    %v8765 = vmax.f32 %v8763, %v8764
    %v8766 = vrot.slane %v8765, 1
    %v8767 = vmax.f32 %v8765, %v8766
    %v8768 = vsel %vm3430, %v8017, -inf
    %v8769 = vrot.slane %v8768, 4
    %v8770 = vmax.f32 %v8768, %v8769
    %v8771 = vrot.slane %v8770, 2
    %v8772 = vmax.f32 %v8770, %v8771
    %v8773 = vrot.slane %v8772, 1
    %v8774 = vmax.f32 %v8772, %v8773
    %v8775 = vsel %vm3430, %v8020, -inf
    %v8776 = vrot.slane %v8775, 4
    %v8777 = vmax.f32 %v8775, %v8776
    %v8778 = vrot.slane %v8777, 2
    %v8779 = vmax.f32 %v8777, %v8778
    %v8780 = vrot.slane %v8779, 1
    %v8781 = vmax.f32 %v8779, %v8780
    %v8782 = vsel %vm3430, %v8023, -inf
    %v8783 = vrot.slane %v8782, 4
    %v8784 = vmax.f32 %v8782, %v8783
    %v8785 = vrot.slane %v8784, 2
    %v8786 = vmax.f32 %v8784, %v8785
    %v8787 = vrot.slane %v8786, 1
    %v8788 = vmax.f32 %v8786, %v8787
    %v8789 = vsel %vm3430, %v8026, -inf
    %v8790 = vrot.slane %v8789, 4
    %v8791 = vmax.f32 %v8789, %v8790
    %v8792 = vrot.slane %v8791, 2
    %v8793 = vmax.f32 %v8791, %v8792
    %v8794 = vrot.slane %v8793, 1
    %v8795 = vmax.f32 %v8793, %v8794
    %v8796 = vsel %vm3430, %v8029, -inf
    %v8797 = vrot.slane %v8796, 4
    %v8798 = vmax.f32 %v8796, %v8797
    %v8799 = vrot.slane %v8798, 2
    %v8800 = vmax.f32 %v8798, %v8799
    %v8801 = vrot.slane %v8800, 1
    %v8802 = vmax.f32 %v8800, %v8801
    %v8803 = vsel %vm3430, %v8032, -inf
    %v8804 = vrot.slane %v8803, 4
    %v8805 = vmax.f32 %v8803, %v8804
    %v8806 = vrot.slane %v8805, 2
    %v8807 = vmax.f32 %v8805, %v8806
    %v8808 = vrot.slane %v8807, 1
    %v8809 = vmax.f32 %v8807, %v8808
    %v8810 = vsel %vm3430, %v8035, -inf
    %v8811 = vrot.slane %v8810, 4
    %v8812 = vmax.f32 %v8810, %v8811
    %v8813 = vrot.slane %v8812, 2
    %v8814 = vmax.f32 %v8812, %v8813
    %v8815 = vrot.slane %v8814, 1
    %v8816 = vmax.f32 %v8814, %v8815
    %v8817 = vsel %vm3430, %v8038, -inf
    %v8818 = vrot.slane %v8817, 4
    %v8819 = vmax.f32 %v8817, %v8818
    %v8820 = vrot.slane %v8819, 2
    %v8821 = vmax.f32 %v8819, %v8820
    %v8822 = vrot.slane %v8821, 1
    %v8823 = vmax.f32 %v8821, %v8822
    %v8824 = vsel %vm3430, %v8041, -inf
    %v8825 = vrot.slane %v8824, 4
    %v8826 = vmax.f32 %v8824, %v8825
    %v8827 = vrot.slane %v8826, 2
    %v8828 = vmax.f32 %v8826, %v8827
    %v8829 = vrot.slane %v8828, 1
    %v8830 = vmax.f32 %v8828, %v8829
    %v8831 = vsel %vm3430, %v8044, -inf
    %v8832 = vrot.slane %v8831, 4
    %v8833 = vmax.f32 %v8831, %v8832
    %v8834 = vrot.slane %v8833, 2
    %v8835 = vmax.f32 %v8833, %v8834
    %v8836 = vrot.slane %v8835, 1
    %v8837 = vmax.f32 %v8835, %v8836
    %v8838 = vsel %vm3430, %v8047, -inf
    %v8839 = vrot.slane %v8838, 4
    %v8840 = vmax.f32 %v8838, %v8839
    %v8841 = vrot.slane %v8840, 2
    %v8842 = vmax.f32 %v8840, %v8841
    %v8843 = vrot.slane %v8842, 1
    %v8844 = vmax.f32 %v8842, %v8843
    %v8845 = vsel %vm3430, %v8050, -inf
    %v8846 = vrot.slane %v8845, 4
    %v8847 = vmax.f32 %v8845, %v8846
    %v8848 = vrot.slane %v8847, 2
    %v8849 = vmax.f32 %v8847, %v8848
    %v8850 = vrot.slane %v8849, 1
    %v8851 = vmax.f32 %v8849, %v8850
    %v8852 = vsel %vm3430, %v8053, -inf
    %v8853 = vrot.slane %v8852, 4
    %v8854 = vmax.f32 %v8852, %v8853
    %v8855 = vrot.slane %v8854, 2
    %v8856 = vmax.f32 %v8854, %v8855
    %v8857 = vrot.slane %v8856, 1
    %v8858 = vmax.f32 %v8856, %v8857
    %v8859 = vsel %vm3430, %v8056, -inf
    %v8860 = vrot.slane %v8859, 4
    %v8861 = vmax.f32 %v8859, %v8860
    %v8862 = vrot.slane %v8861, 2
    %v8863 = vmax.f32 %v8861, %v8862
    %v8864 = vrot.slane %v8863, 1
    %v8865 = vmax.f32 %v8863, %v8864
    %v8866 = vsel %vm3430, %v8059, -inf
    %v8867 = vrot.slane %v8866, 4
    %v8868 = vmax.f32 %v8866, %v8867
    %v8869 = vrot.slane %v8868, 2
    %v8870 = vmax.f32 %v8868, %v8869
    %v8871 = vrot.slane %v8870, 1
    %v8872 = vmax.f32 %v8870, %v8871
    %v8873 = vsel %vm3430, %v8062, -inf
    %v8874 = vrot.slane %v8873, 4
    %v8875 = vmax.f32 %v8873, %v8874
    %v8876 = vrot.slane %v8875, 2
    %v8877 = vmax.f32 %v8875, %v8876
    %v8878 = vrot.slane %v8877, 1
    %v8879 = vmax.f32 %v8877, %v8878
    %v8880 = vsel %vm3430, %v8065, -inf
    %v8881 = vrot.slane %v8880, 4
    %v8882 = vmax.f32 %v8880, %v8881
    %v8883 = vrot.slane %v8882, 2
    %v8884 = vmax.f32 %v8882, %v8883
    %v8885 = vrot.slane %v8884, 1
    %v8886 = vmax.f32 %v8884, %v8885
    %v8887 = vsel %vm3430, %v8068, -inf
    %v8888 = vrot.slane %v8887, 4
    %v8889 = vmax.f32 %v8887, %v8888
    %v8890 = vrot.slane %v8889, 2
    %v8891 = vmax.f32 %v8889, %v8890
    %v8892 = vrot.slane %v8891, 1
    %v8893 = vmax.f32 %v8891, %v8892
    %v8894 = vsel %vm3430, %v8071, -inf
    %v8895 = vrot.slane %v8894, 4
    %v8896 = vmax.f32 %v8894, %v8895
    %v8897 = vrot.slane %v8896, 2
    %v8898 = vmax.f32 %v8896, %v8897
    %v8899 = vrot.slane %v8898, 1
    %v8900 = vmax.f32 %v8898, %v8899
    %v8901 = vsel %vm3430, %v8074, -inf
    %v8902 = vrot.slane %v8901, 4
    %v8903 = vmax.f32 %v8901, %v8902
    %v8904 = vrot.slane %v8903, 2
    %v8905 = vmax.f32 %v8903, %v8904
    %v8906 = vrot.slane %v8905, 1
    %v8907 = vmax.f32 %v8905, %v8906
    %v8908 = vsel %vm3430, %v8077, -inf
    %v8909 = vrot.slane %v8908, 4
    %v8910 = vmax.f32 %v8908, %v8909
    %v8911 = vrot.slane %v8910, 2
    %v8912 = vmax.f32 %v8910, %v8911
    %v8913 = vrot.slane %v8912, 1
    %v8914 = vmax.f32 %v8912, %v8913
    %v8915 = vsel %vm3430, %v8080, -inf
    %v8916 = vrot.slane %v8915, 4
    %v8917 = vmax.f32 %v8915, %v8916
    %v8918 = vrot.slane %v8917, 2
    %v8919 = vmax.f32 %v8917, %v8918
    %v8920 = vrot.slane %v8919, 1
    %v8921 = vmax.f32 %v8919, %v8920
    %v8922 = vsel %vm3430, %v8083, -inf
    %v8923 = vrot.slane %v8922, 4
    %v8924 = vmax.f32 %v8922, %v8923
    %v8925 = vrot.slane %v8924, 2
    %v8926 = vmax.f32 %v8924, %v8925
    %v8927 = vrot.slane %v8926, 1
    %v8928 = vmax.f32 %v8926, %v8927
    %v8929 = vsel %vm3430, %v8086, -inf
    %v8930 = vrot.slane %v8929, 4
    %v8931 = vmax.f32 %v8929, %v8930
    %v8932 = vrot.slane %v8931, 2
    %v8933 = vmax.f32 %v8931, %v8932
    %v8934 = vrot.slane %v8933, 1
    %v8935 = vmax.f32 %v8933, %v8934
    %v8936 = vsel %vm3430, %v8089, -inf
    %v8937 = vrot.slane %v8936, 4
    %v8938 = vmax.f32 %v8936, %v8937
    %v8939 = vrot.slane %v8938, 2
    %v8940 = vmax.f32 %v8938, %v8939
    %v8941 = vrot.slane %v8940, 1
    %v8942 = vmax.f32 %v8940, %v8941
    %v8943 = vsel %vm3430, %v8092, -inf
    %v8944 = vrot.slane %v8943, 4
    %v8945 = vmax.f32 %v8943, %v8944
    %v8946 = vrot.slane %v8945, 2
    %v8947 = vmax.f32 %v8945, %v8946
    %v8948 = vrot.slane %v8947, 1
    %v8949 = vmax.f32 %v8947, %v8948
    %v8950 = vsel %vm3430, %v8095, -inf
    %v8951 = vrot.slane %v8950, 4
    %v8952 = vmax.f32 %v8950, %v8951
    %v8953 = vrot.slane %v8952, 2
    %v8954 = vmax.f32 %v8952, %v8953
    %v8955 = vrot.slane %v8954, 1
    %v8956 = vmax.f32 %v8954, %v8955
    %v8957 = vsel %vm3430, %v8098, -inf
    %v8958 = vrot.slane %v8957, 4
    %v8959 = vmax.f32 %v8957, %v8958
    %v8960 = vrot.slane %v8959, 2
    %v8961 = vmax.f32 %v8959, %v8960
    %v8962 = vrot.slane %v8961, 1
    %v8963 = vmax.f32 %v8961, %v8962
    %v8964 = vsel %vm3430, %v8101, -inf
    %v8965 = vrot.slane %v8964, 4
    %v8966 = vmax.f32 %v8964, %v8965
    %v8967 = vrot.slane %v8966, 2
    %v8968 = vmax.f32 %v8966, %v8967
    %v8969 = vrot.slane %v8968, 1
    %v8970 = vmax.f32 %v8968, %v8969
    %v8971 = vsel %vm3430, %v8104, -inf
    %v8972 = vrot.slane %v8971, 4
    %v8973 = vmax.f32 %v8971, %v8972
    %v8974 = vrot.slane %v8973, 2
    %v8975 = vmax.f32 %v8973, %v8974
    %v8976 = vrot.slane %v8975, 1
    %v8977 = vmax.f32 %v8975, %v8976
    %v8978 = vsel %vm3430, %v8107, -inf
    %v8979 = vrot.slane %v8978, 4
    %v8980 = vmax.f32 %v8978, %v8979
    %v8981 = vrot.slane %v8980, 2
    %v8982 = vmax.f32 %v8980, %v8981
    %v8983 = vrot.slane %v8982, 1
    %v8984 = vmax.f32 %v8982, %v8983
    %v8985 = vsel %vm3430, %v8110, -inf
    %v8986 = vrot.slane %v8985, 4
    %v8987 = vmax.f32 %v8985, %v8986
    %v8988 = vrot.slane %v8987, 2
    %v8989 = vmax.f32 %v8987, %v8988
    %v8990 = vrot.slane %v8989, 1
    %v8991 = vmax.f32 %v8989, %v8990
    %v8992 = vsel %vm3430, %v8113, -inf
    %v8993 = vrot.slane %v8992, 4
    %v8994 = vmax.f32 %v8992, %v8993
    %v8995 = vrot.slane %v8994, 2
    %v8996 = vmax.f32 %v8994, %v8995
    %v8997 = vrot.slane %v8996, 1
    %v8998 = vmax.f32 %v8996, %v8997
    %v8999 = vsel %vm3430, %v8116, -inf
    %v9000 = vrot.slane %v8999, 4
    %v9001 = vmax.f32 %v8999, %v9000
    %v9002 = vrot.slane %v9001, 2
    %v9003 = vmax.f32 %v9001, %v9002
    %v9004 = vrot.slane %v9003, 1
    %v9005 = vmax.f32 %v9003, %v9004
    %v9006 = vsel %vm3430, %v8119, -inf
    %v9007 = vrot.slane %v9006, 4
    %v9008 = vmax.f32 %v9006, %v9007
    %v9009 = vrot.slane %v9008, 2
    %v9010 = vmax.f32 %v9008, %v9009
    %v9011 = vrot.slane %v9010, 1
    %v9012 = vmax.f32 %v9010, %v9011
    %v9013 = vsel %vm3430, %v8122, -inf
    %v9014 = vrot.slane %v9013, 4
    %v9015 = vmax.f32 %v9013, %v9014
    %v9016 = vrot.slane %v9015, 2
    %v9017 = vmax.f32 %v9015, %v9016
    %v9018 = vrot.slane %v9017, 1
    %v9019 = vmax.f32 %v9017, %v9018
    %v9020 = vsub.f32 %v7741, %v8130
    %v9021 = vsub.f32 %v7744, %v8137
    %v9022 = vsub.f32 %v7747, %v8144
    %v9023 = vsub.f32 %v7750, %v8151
    %v9024 = vsub.f32 %v7753, %v8158
    %v9025 = vsub.f32 %v7756, %v8165
    %v9026 = vsub.f32 %v7759, %v8172
    %v9027 = vsub.f32 %v7762, %v8179
    %v9028 = vsub.f32 %v7765, %v8186
    %v9029 = vsub.f32 %v7768, %v8193
    %v9030 = vsub.f32 %v7771, %v8200
    %v9031 = vsub.f32 %v7774, %v8207
    %v9032 = vsub.f32 %v7777, %v8214
    %v9033 = vsub.f32 %v7780, %v8221
    %v9034 = vsub.f32 %v7783, %v8228
    %v9035 = vsub.f32 %v7786, %v8235
    %v9036 = vsub.f32 %v7789, %v8242
    %v9037 = vsub.f32 %v7792, %v8249
    %v9038 = vsub.f32 %v7795, %v8256
    %v9039 = vsub.f32 %v7798, %v8263
    %v9040 = vsub.f32 %v7801, %v8270
    %v9041 = vsub.f32 %v7804, %v8277
    %v9042 = vsub.f32 %v7807, %v8284
    %v9043 = vsub.f32 %v7810, %v8291
    %v9044 = vsub.f32 %v7813, %v8298
    %v9045 = vsub.f32 %v7816, %v8305
    %v9046 = vsub.f32 %v7819, %v8312
    %v9047 = vsub.f32 %v7822, %v8319
    %v9048 = vsub.f32 %v7825, %v8326
    %v9049 = vsub.f32 %v7828, %v8333
    %v9050 = vsub.f32 %v7831, %v8340
    %v9051 = vsub.f32 %v7834, %v8347
    %v9052 = vsub.f32 %v7837, %v8354
    %v9053 = vsub.f32 %v7840, %v8361
    %v9054 = vsub.f32 %v7843, %v8368
    %v9055 = vsub.f32 %v7846, %v8375
    %v9056 = vsub.f32 %v7849, %v8382
    %v9057 = vsub.f32 %v7852, %v8389
    %v9058 = vsub.f32 %v7855, %v8396
    %v9059 = vsub.f32 %v7858, %v8403
    %v9060 = vsub.f32 %v7861, %v8410
    %v9061 = vsub.f32 %v7864, %v8417
    %v9062 = vsub.f32 %v7867, %v8424
    %v9063 = vsub.f32 %v7870, %v8431
    %v9064 = vsub.f32 %v7873, %v8438
    %v9065 = vsub.f32 %v7876, %v8445
    %v9066 = vsub.f32 %v7879, %v8452
    %v9067 = vsub.f32 %v7882, %v8459
    %v9068 = vsub.f32 %v7885, %v8466
    %v9069 = vsub.f32 %v7888, %v8473
    %v9070 = vsub.f32 %v7891, %v8480
    %v9071 = vsub.f32 %v7894, %v8487
    %v9072 = vsub.f32 %v7897, %v8494
    %v9073 = vsub.f32 %v7900, %v8501
    %v9074 = vsub.f32 %v7903, %v8508
    %v9075 = vsub.f32 %v7906, %v8515
    %v9076 = vsub.f32 %v7909, %v8522
    %v9077 = vsub.f32 %v7912, %v8529
    %v9078 = vsub.f32 %v7915, %v8536
    %v9079 = vsub.f32 %v7918, %v8543
    %v9080 = vsub.f32 %v7921, %v8550
    %v9081 = vsub.f32 %v7924, %v8557
    %v9082 = vsub.f32 %v7927, %v8564
    %v9083 = vsub.f32 %v7930, %v8571
    %v9084 = vsub.f32 %v7933, %v8578
    %v9085 = vsub.f32 %v7936, %v8585
    %v9086 = vsub.f32 %v7939, %v8592
    %v9087 = vsub.f32 %v7942, %v8599
    %v9088 = vsub.f32 %v7945, %v8606
    %v9089 = vsub.f32 %v7948, %v8613
    %v9090 = vsub.f32 %v7951, %v8620
    %v9091 = vsub.f32 %v7954, %v8627
    %v9092 = vsub.f32 %v7957, %v8634
    %v9093 = vsub.f32 %v7960, %v8641
    %v9094 = vsub.f32 %v7963, %v8648
    %v9095 = vsub.f32 %v7966, %v8655
    %v9096 = vsub.f32 %v7969, %v8662
    %v9097 = vsub.f32 %v7972, %v8669
    %v9098 = vsub.f32 %v7975, %v8676
    %v9099 = vsub.f32 %v7978, %v8683
    %v9100 = vsub.f32 %v7981, %v8690
    %v9101 = vsub.f32 %v7984, %v8697
    %v9102 = vsub.f32 %v7987, %v8704
    %v9103 = vsub.f32 %v7990, %v8711
    %v9104 = vsub.f32 %v7993, %v8718
    %v9105 = vsub.f32 %v7996, %v8725
    %v9106 = vsub.f32 %v7999, %v8732
    %v9107 = vsub.f32 %v8002, %v8739
    %v9108 = vsub.f32 %v8005, %v8746
    %v9109 = vsub.f32 %v8008, %v8753
    %v9110 = vsub.f32 %v8011, %v8760
    %v9111 = vsub.f32 %v8014, %v8767
    %v9112 = vsub.f32 %v8017, %v8774
    %v9113 = vsub.f32 %v8020, %v8781
    %v9114 = vsub.f32 %v8023, %v8788
    %v9115 = vsub.f32 %v8026, %v8795
    %v9116 = vsub.f32 %v8029, %v8802
    %v9117 = vsub.f32 %v8032, %v8809
    %v9118 = vsub.f32 %v8035, %v8816
    %v9119 = vsub.f32 %v8038, %v8823
    %v9120 = vsub.f32 %v8041, %v8830
    %v9121 = vsub.f32 %v8044, %v8837
    %v9122 = vsub.f32 %v8047, %v8844
    %v9123 = vsub.f32 %v8050, %v8851
    %v9124 = vsub.f32 %v8053, %v8858
    %v9125 = vsub.f32 %v8056, %v8865
    %v9126 = vsub.f32 %v8059, %v8872
    %v9127 = vsub.f32 %v8062, %v8879
    %v9128 = vsub.f32 %v8065, %v8886
    %v9129 = vsub.f32 %v8068, %v8893
    %v9130 = vsub.f32 %v8071, %v8900
    %v9131 = vsub.f32 %v8074, %v8907
    %v9132 = vsub.f32 %v8077, %v8914
    %v9133 = vsub.f32 %v8080, %v8921
    %v9134 = vsub.f32 %v8083, %v8928
    %v9135 = vsub.f32 %v8086, %v8935
    %v9136 = vsub.f32 %v8089, %v8942
    %v9137 = vsub.f32 %v8092, %v8949
    %v9138 = vsub.f32 %v8095, %v8956
    %v9139 = vsub.f32 %v8098, %v8963
    %v9140 = vsub.f32 %v8101, %v8970
    %v9141 = vsub.f32 %v8104, %v8977
    %v9142 = vsub.f32 %v8107, %v8984
    %v9143 = vsub.f32 %v8110, %v8991
    %v9144 = vsub.f32 %v8113, %v8998
    %v9145 = vsub.f32 %v8116, %v9005
    %v9146 = vsub.f32 %v8119, %v9012
    %v9147 = vsub.f32 %v8122, %v9019
    %v9148 = vmul.f32 %v9020, 1.442695
    %v9149 = vpow.pop %v9148
    %v9150 = vmul.f32 %v9021, 1.442695
    %v9151 = vpow.pop %v9150
    %v9152 = vmul.f32 %v9022, 1.442695
    %v9153 = vpow.pop %v9152
    %v9154 = vmul.f32 %v9023, 1.442695
    %v9155 = vpow.pop %v9154
    %v9156 = vmul.f32 %v9024, 1.442695
    %v9157 = vpow.pop %v9156
    %v9158 = vmul.f32 %v9025, 1.442695
    %v9159 = vpow.pop %v9158
    %v9160 = vmul.f32 %v9026, 1.442695
    %v9161 = vpow.pop %v9160
    %v9162 = vmul.f32 %v9027, 1.442695
    %v9163 = vpow.pop %v9162
    %v9164 = vmul.f32 %v9028, 1.442695
    %v9165 = vpow.pop %v9164
    %v9166 = vmul.f32 %v9029, 1.442695
    %v9167 = vpow.pop %v9166
    %v9168 = vmul.f32 %v9030, 1.442695
    %v9169 = vpow.pop %v9168
    %v9170 = vmul.f32 %v9031, 1.442695
    %v9171 = vpow.pop %v9170
    %v9172 = vmul.f32 %v9032, 1.442695
    %v9173 = vpow.pop %v9172
    %v9174 = vmul.f32 %v9033, 1.442695
    %v9175 = vpow.pop %v9174
    %v9176 = vmul.f32 %v9034, 1.442695
    %v9177 = vpow.pop %v9176
    %v9178 = vmul.f32 %v9035, 1.442695
    %v9179 = vpow.pop %v9178
    %v9180 = vmul.f32 %v9036, 1.442695
    %v9181 = vpow.pop %v9180
    %v9182 = vmul.f32 %v9037, 1.442695
    %v9183 = vpow.pop %v9182
    %v9184 = vmul.f32 %v9038, 1.442695
    %v9185 = vpow.pop %v9184
    %v9186 = vmul.f32 %v9039, 1.442695
    %v9187 = vpow.pop %v9186
    %v9188 = vmul.f32 %v9040, 1.442695
    %v9189 = vpow.pop %v9188
    %v9190 = vmul.f32 %v9041, 1.442695
    %v9191 = vpow.pop %v9190
    %v9192 = vmul.f32 %v9042, 1.442695
    %v9193 = vpow.pop %v9192
    %v9194 = vmul.f32 %v9043, 1.442695
    %v9195 = vpow.pop %v9194
    %v9196 = vmul.f32 %v9044, 1.442695
    %v9197 = vpow.pop %v9196
    %v9198 = vmul.f32 %v9045, 1.442695
    %v9199 = vpow.pop %v9198
    %v9200 = vmul.f32 %v9046, 1.442695
    %v9201 = vpow.pop %v9200
    %v9202 = vmul.f32 %v9047, 1.442695
    %v9203 = vpow.pop %v9202
    %v9204 = vmul.f32 %v9048, 1.442695
    %v9205 = vpow.pop %v9204
    %v9206 = vmul.f32 %v9049, 1.442695
    %v9207 = vpow.pop %v9206
    %v9208 = vmul.f32 %v9050, 1.442695
    %v9209 = vpow.pop %v9208
    %v9210 = vmul.f32 %v9051, 1.442695
    %v9211 = vpow.pop %v9210
    %v9212 = vmul.f32 %v9052, 1.442695
    %v9213 = vpow.pop %v9212
    %v9214 = vmul.f32 %v9053, 1.442695
    %v9215 = vpow.pop %v9214
    %v9216 = vmul.f32 %v9054, 1.442695
    %v9217 = vpow.pop %v9216
    %v9218 = vmul.f32 %v9055, 1.442695
    %v9219 = vpow.pop %v9218
    %v9220 = vmul.f32 %v9056, 1.442695
    %v9221 = vpow.pop %v9220
    %v9222 = vmul.f32 %v9057, 1.442695
    %v9223 = vpow.pop %v9222
    %v9224 = vmul.f32 %v9058, 1.442695
    %v9225 = vpow.pop %v9224
    %v9226 = vmul.f32 %v9059, 1.442695
    %v9227 = vpow.pop %v9226
    %v9228 = vmul.f32 %v9060, 1.442695
    %v9229 = vpow.pop %v9228
    %v9230 = vmul.f32 %v9061, 1.442695
    %v9231 = vpow.pop %v9230
    %v9232 = vmul.f32 %v9062, 1.442695
    %v9233 = vpow.pop %v9232
    %v9234 = vmul.f32 %v9063, 1.442695
    %v9235 = vpow.pop %v9234
    %v9236 = vmul.f32 %v9064, 1.442695
    %v9237 = vpow.pop %v9236
    %v9238 = vmul.f32 %v9065, 1.442695
    %v9239 = vpow.pop %v9238
    %v9240 = vmul.f32 %v9066, 1.442695
    %v9241 = vpow.pop %v9240
    %v9242 = vmul.f32 %v9067, 1.442695
    %v9243 = vpow.pop %v9242
    %v9244 = vmul.f32 %v9068, 1.442695
    %v9245 = vpow.pop %v9244
    %v9246 = vmul.f32 %v9069, 1.442695
    %v9247 = vpow.pop %v9246
    %v9248 = vmul.f32 %v9070, 1.442695
    %v9249 = vpow.pop %v9248
    %v9250 = vmul.f32 %v9071, 1.442695
    %v9251 = vpow.pop %v9250
    %v9252 = vmul.f32 %v9072, 1.442695
    %v9253 = vpow.pop %v9252
    %v9254 = vmul.f32 %v9073, 1.442695
    %v9255 = vpow.pop %v9254
    %v9256 = vmul.f32 %v9074, 1.442695
    %v9257 = vpow.pop %v9256
    %v9258 = vmul.f32 %v9075, 1.442695
    %v9259 = vpow.pop %v9258
    %v9260 = vmul.f32 %v9076, 1.442695
    %v9261 = vpow.pop %v9260
    %v9262 = vmul.f32 %v9077, 1.442695
    %v9263 = vpow.pop %v9262
    %v9264 = vmul.f32 %v9078, 1.442695
    %v9265 = vpow.pop %v9264
    %v9266 = vmul.f32 %v9079, 1.442695
    %v9267 = vpow.pop %v9266
    %v9268 = vmul.f32 %v9080, 1.442695
    %v9269 = vpow.pop %v9268
    %v9270 = vmul.f32 %v9081, 1.442695
    %v9271 = vpow.pop %v9270
    %v9272 = vmul.f32 %v9082, 1.442695
    %v9273 = vpow.pop %v9272
    %v9274 = vmul.f32 %v9083, 1.442695
    %v9275 = vpow.pop %v9274
    %v9276 = vmul.f32 %v9084, 1.442695
    %v9277 = vpow.pop %v9276
    %v9278 = vmul.f32 %v9085, 1.442695
    %v9279 = vpow.pop %v9278
    %v9280 = vmul.f32 %v9086, 1.442695
    %v9281 = vpow.pop %v9280
    %v9282 = vmul.f32 %v9087, 1.442695
    %v9283 = vpow.pop %v9282
    %v9284 = vmul.f32 %v9088, 1.442695
    %v9285 = vpow.pop %v9284
    %v9286 = vmul.f32 %v9089, 1.442695
    %v9287 = vpow.pop %v9286
    %v9288 = vmul.f32 %v9090, 1.442695
    %v9289 = vpow.pop %v9288
    %v9290 = vmul.f32 %v9091, 1.442695
    %v9291 = vpow.pop %v9290
    %v9292 = vmul.f32 %v9092, 1.442695
    %v9293 = vpow.pop %v9292
    %v9294 = vmul.f32 %v9093, 1.442695
    %v9295 = vpow.pop %v9294
    %v9296 = vmul.f32 %v9094, 1.442695
    %v9297 = vpow.pop %v9296
    %v9298 = vmul.f32 %v9095, 1.442695
    %v9299 = vpow.pop %v9298
    %v9300 = vmul.f32 %v9096, 1.442695
    %v9301 = vpow.pop %v9300
    %v9302 = vmul.f32 %v9097, 1.442695
    %v9303 = vpow.pop %v9302
    %v9304 = vmul.f32 %v9098, 1.442695
    %v9305 = vpow.pop %v9304
    %v9306 = vmul.f32 %v9099, 1.442695
    %v9307 = vpow.pop %v9306
    %v9308 = vmul.f32 %v9100, 1.442695
    %v9309 = vpow.pop %v9308
    %v9310 = vmul.f32 %v9101, 1.442695
    %v9311 = vpow.pop %v9310
    %v9312 = vmul.f32 %v9102, 1.442695
    %v9313 = vpow.pop %v9312
    %v9314 = vmul.f32 %v9103, 1.442695
    %v9315 = vpow.pop %v9314
    %v9316 = vmul.f32 %v9104, 1.442695
    %v9317 = vpow.pop %v9316
    %v9318 = vmul.f32 %v9105, 1.442695
    %v9319 = vpow.pop %v9318
    %v9320 = vmul.f32 %v9106, 1.442695
    %v9321 = vpow.pop %v9320
    %v9322 = vmul.f32 %v9107, 1.442695
    %v9323 = vpow.pop %v9322
    %v9324 = vmul.f32 %v9108, 1.442695
    %v9325 = vpow.pop %v9324
    %v9326 = vmul.f32 %v9109, 1.442695
    %v9327 = vpow.pop %v9326
    %v9328 = vmul.f32 %v9110, 1.442695
    %v9329 = vpow.pop %v9328
    %v9330 = vmul.f32 %v9111, 1.442695
    %v9331 = vpow.pop %v9330
    %v9332 = vmul.f32 %v9112, 1.442695
    %v9333 = vpow.pop %v9332
    %v9334 = vmul.f32 %v9113, 1.442695
    %v9335 = vpow.pop %v9334
    %v9336 = vmul.f32 %v9114, 1.442695
    %v9337 = vpow.pop %v9336
    %v9338 = vmul.f32 %v9115, 1.442695
    %v9339 = vpow.pop %v9338
    %v9340 = vmul.f32 %v9116, 1.442695
    %v9341 = vpow.pop %v9340
    %v9342 = vmul.f32 %v9117, 1.442695
    %v9343 = vpow.pop %v9342
    %v9344 = vmul.f32 %v9118, 1.442695
    %v9345 = vpow.pop %v9344
    %v9346 = vmul.f32 %v9119, 1.442695
    %v9347 = vpow.pop %v9346
    %v9348 = vmul.f32 %v9120, 1.442695
    %v9349 = vpow.pop %v9348
    %v9350 = vmul.f32 %v9121, 1.442695
    %v9351 = vpow.pop %v9350
    %v9352 = vmul.f32 %v9122, 1.442695
    %v9353 = vpow.pop %v9352
    %v9354 = vmul.f32 %v9123, 1.442695
    %v9355 = vpow.pop %v9354
    %v9356 = vmul.f32 %v9124, 1.442695
    %v9357 = vpow.pop %v9356
    %v9358 = vmul.f32 %v9125, 1.442695
    %v9359 = vpow.pop %v9358
    %v9360 = vmul.f32 %v9126, 1.442695
    %v9361 = vpow.pop %v9360
    %v9362 = vmul.f32 %v9127, 1.442695
    %v9363 = vpow.pop %v9362
    %v9364 = vmul.f32 %v9128, 1.442695
    %v9365 = vpow.pop %v9364
    %v9366 = vmul.f32 %v9129, 1.442695
    %v9367 = vpow.pop %v9366
    %v9368 = vmul.f32 %v9130, 1.442695
    %v9369 = vpow.pop %v9368
    %v9370 = vmul.f32 %v9131, 1.442695
    %v9371 = vpow.pop %v9370
    %v9372 = vmul.f32 %v9132, 1.442695
    %v9373 = vpow.pop %v9372
    %v9374 = vmul.f32 %v9133, 1.442695
    %v9375 = vpow.pop %v9374
    %v9376 = vmul.f32 %v9134, 1.442695
    %v9377 = vpow.pop %v9376
    %v9378 = vmul.f32 %v9135, 1.442695
    %v9379 = vpow.pop %v9378
    %v9380 = vmul.f32 %v9136, 1.442695
    %v9381 = vpow.pop %v9380
    %v9382 = vmul.f32 %v9137, 1.442695
    %v9383 = vpow.pop %v9382
    %v9384 = vmul.f32 %v9138, 1.442695
    %v9385 = vpow.pop %v9384
    %v9386 = vmul.f32 %v9139, 1.442695
    %v9387 = vpow.pop %v9386
    %v9388 = vmul.f32 %v9140, 1.442695
    %v9389 = vpow.pop %v9388
    %v9390 = vmul.f32 %v9141, 1.442695
    %v9391 = vpow.pop %v9390
    %v9392 = vmul.f32 %v9142, 1.442695
    %v9393 = vpow.pop %v9392
    %v9394 = vmul.f32 %v9143, 1.442695
    %v9395 = vpow.pop %v9394
    %v9396 = vmul.f32 %v9144, 1.442695
    %v9397 = vpow.pop %v9396
    %v9398 = vmul.f32 %v9145, 1.442695
    %v9399 = vpow.pop %v9398
    %v9400 = vmul.f32 %v9146, 1.442695
    %v9401 = vpow.pop %v9400
    %v9402 = vmul.f32 %v9147, 1.442695
    %v9403 = vpow.pop %v9402
    %v9404 = vsel %vm3430, %v9149, 0.0
    %v9405 = vrot.slane %v9404, 4
    %v9406 = vadd.f32 %v9404, %v9405
    %v9407 = vrot.slane %v9406, 2
    %v9408 = vadd.f32 %v9406, %v9407
    %v9409 = vrot.slane %v9408, 1
    %v9410 = vadd.f32 %v9408, %v9409
    %v9411 = vsel %vm3430, %v9151, 0.0
    %v9412 = vrot.slane %v9411, 4
    %v9413 = vadd.f32 %v9411, %v9412
    %v9414 = vrot.slane %v9413, 2
    %v9415 = vadd.f32 %v9413, %v9414
    %v9416 = vrot.slane %v9415, 1
    %v9417 = vadd.f32 %v9415, %v9416
    %v9418 = vsel %vm3430, %v9153, 0.0
    %v9419 = vrot.slane %v9418, 4
    %v9420 = vadd.f32 %v9418, %v9419
    %v9421 = vrot.slane %v9420, 2
    %v9422 = vadd.f32 %v9420, %v9421
    %v9423 = vrot.slane %v9422, 1
    %v9424 = vadd.f32 %v9422, %v9423
    %v9425 = vsel %vm3430, %v9155, 0.0
    %v9426 = vrot.slane %v9425, 4
    %v9427 = vadd.f32 %v9425, %v9426
    %v9428 = vrot.slane %v9427, 2
    %v9429 = vadd.f32 %v9427, %v9428
    %v9430 = vrot.slane %v9429, 1
    %v9431 = vadd.f32 %v9429, %v9430
    %v9432 = vsel %vm3430, %v9157, 0.0
    %v9433 = vrot.slane %v9432, 4
    %v9434 = vadd.f32 %v9432, %v9433
    %v9435 = vrot.slane %v9434, 2
    %v9436 = vadd.f32 %v9434, %v9435
    %v9437 = vrot.slane %v9436, 1
    %v9438 = vadd.f32 %v9436, %v9437
    %v9439 = vsel %vm3430, %v9159, 0.0
    %v9440 = vrot.slane %v9439, 4
    %v9441 = vadd.f32 %v9439, %v9440
    %v9442 = vrot.slane %v9441, 2
    %v9443 = vadd.f32 %v9441, %v9442
    %v9444 = vrot.slane %v9443, 1
    %v9445 = vadd.f32 %v9443, %v9444
    %v9446 = vsel %vm3430, %v9161, 0.0
    %v9447 = vrot.slane %v9446, 4
    %v9448 = vadd.f32 %v9446, %v9447
    %v9449 = vrot.slane %v9448, 2
    %v9450 = vadd.f32 %v9448, %v9449
    %v9451 = vrot.slane %v9450, 1
    %v9452 = vadd.f32 %v9450, %v9451
    %v9453 = vsel %vm3430, %v9163, 0.0
    %v9454 = vrot.slane %v9453, 4
    %v9455 = vadd.f32 %v9453, %v9454
    %v9456 = vrot.slane %v9455, 2
    %v9457 = vadd.f32 %v9455, %v9456
    %v9458 = vrot.slane %v9457, 1
    %v9459 = vadd.f32 %v9457, %v9458
    %v9460 = vsel %vm3430, %v9165, 0.0
    %v9461 = vrot.slane %v9460, 4
    %v9462 = vadd.f32 %v9460, %v9461
    %v9463 = vrot.slane %v9462, 2
    %v9464 = vadd.f32 %v9462, %v9463
    %v9465 = vrot.slane %v9464, 1
    %v9466 = vadd.f32 %v9464, %v9465
    %v9467 = vsel %vm3430, %v9167, 0.0
    %v9468 = vrot.slane %v9467, 4
    %v9469 = vadd.f32 %v9467, %v9468
    %v9470 = vrot.slane %v9469, 2
    %v9471 = vadd.f32 %v9469, %v9470
    %v9472 = vrot.slane %v9471, 1
    %v9473 = vadd.f32 %v9471, %v9472
    %v9474 = vsel %vm3430, %v9169, 0.0
    %v9475 = vrot.slane %v9474, 4
    %v9476 = vadd.f32 %v9474, %v9475
    %v9477 = vrot.slane %v9476, 2
    %v9478 = vadd.f32 %v9476, %v9477
    %v9479 = vrot.slane %v9478, 1
    %v9480 = vadd.f32 %v9478, %v9479
    %v9481 = vsel %vm3430, %v9171, 0.0
    %v9482 = vrot.slane %v9481, 4
    %v9483 = vadd.f32 %v9481, %v9482
    %v9484 = vrot.slane %v9483, 2
    %v9485 = vadd.f32 %v9483, %v9484
    %v9486 = vrot.slane %v9485, 1
    %v9487 = vadd.f32 %v9485, %v9486
    %v9488 = vsel %vm3430, %v9173, 0.0
    %v9489 = vrot.slane %v9488, 4
    %v9490 = vadd.f32 %v9488, %v9489
    %v9491 = vrot.slane %v9490, 2
    %v9492 = vadd.f32 %v9490, %v9491
    %v9493 = vrot.slane %v9492, 1
    %v9494 = vadd.f32 %v9492, %v9493
    %v9495 = vsel %vm3430, %v9175, 0.0
    %v9496 = vrot.slane %v9495, 4
    %v9497 = vadd.f32 %v9495, %v9496
    %v9498 = vrot.slane %v9497, 2
    %v9499 = vadd.f32 %v9497, %v9498
    %v9500 = vrot.slane %v9499, 1
    %v9501 = vadd.f32 %v9499, %v9500
    %v9502 = vsel %vm3430, %v9177, 0.0
    %v9503 = vrot.slane %v9502, 4
    %v9504 = vadd.f32 %v9502, %v9503
    %v9505 = vrot.slane %v9504, 2
    %v9506 = vadd.f32 %v9504, %v9505
    %v9507 = vrot.slane %v9506, 1
    %v9508 = vadd.f32 %v9506, %v9507
    %v9509 = vsel %vm3430, %v9179, 0.0
    %v9510 = vrot.slane %v9509, 4
    %v9511 = vadd.f32 %v9509, %v9510
    %v9512 = vrot.slane %v9511, 2
    %v9513 = vadd.f32 %v9511, %v9512
    %v9514 = vrot.slane %v9513, 1
    %v9515 = vadd.f32 %v9513, %v9514
    %v9516 = vsel %vm3430, %v9181, 0.0
    %v9517 = vrot.slane %v9516, 4
    %v9518 = vadd.f32 %v9516, %v9517
    %v9519 = vrot.slane %v9518, 2
    %v9520 = vadd.f32 %v9518, %v9519
    %v9521 = vrot.slane %v9520, 1
    %v9522 = vadd.f32 %v9520, %v9521
    %v9523 = vsel %vm3430, %v9183, 0.0
    %v9524 = vrot.slane %v9523, 4
    %v9525 = vadd.f32 %v9523, %v9524
    %v9526 = vrot.slane %v9525, 2
    %v9527 = vadd.f32 %v9525, %v9526
    %v9528 = vrot.slane %v9527, 1
    %v9529 = vadd.f32 %v9527, %v9528
    %v9530 = vsel %vm3430, %v9185, 0.0
    %v9531 = vrot.slane %v9530, 4
    %v9532 = vadd.f32 %v9530, %v9531
    %v9533 = vrot.slane %v9532, 2
    %v9534 = vadd.f32 %v9532, %v9533
    %v9535 = vrot.slane %v9534, 1
    %v9536 = vadd.f32 %v9534, %v9535
    %v9537 = vsel %vm3430, %v9187, 0.0
    %v9538 = vrot.slane %v9537, 4
    %v9539 = vadd.f32 %v9537, %v9538
    %v9540 = vrot.slane %v9539, 2
    %v9541 = vadd.f32 %v9539, %v9540
    %v9542 = vrot.slane %v9541, 1
    %v9543 = vadd.f32 %v9541, %v9542
    %v9544 = vsel %vm3430, %v9189, 0.0
    %v9545 = vrot.slane %v9544, 4
    %v9546 = vadd.f32 %v9544, %v9545
    %v9547 = vrot.slane %v9546, 2
    %v9548 = vadd.f32 %v9546, %v9547
    %v9549 = vrot.slane %v9548, 1
    %v9550 = vadd.f32 %v9548, %v9549
    %v9551 = vsel %vm3430, %v9191, 0.0
    %v9552 = vrot.slane %v9551, 4
    %v9553 = vadd.f32 %v9551, %v9552
    %v9554 = vrot.slane %v9553, 2
    %v9555 = vadd.f32 %v9553, %v9554
    %v9556 = vrot.slane %v9555, 1
    %v9557 = vadd.f32 %v9555, %v9556
    %v9558 = vsel %vm3430, %v9193, 0.0
    %v9559 = vrot.slane %v9558, 4
    %v9560 = vadd.f32 %v9558, %v9559
    %v9561 = vrot.slane %v9560, 2
    %v9562 = vadd.f32 %v9560, %v9561
    %v9563 = vrot.slane %v9562, 1
    %v9564 = vadd.f32 %v9562, %v9563
    %v9565 = vsel %vm3430, %v9195, 0.0
    %v9566 = vrot.slane %v9565, 4
    %v9567 = vadd.f32 %v9565, %v9566
    %v9568 = vrot.slane %v9567, 2
    %v9569 = vadd.f32 %v9567, %v9568
    %v9570 = vrot.slane %v9569, 1
    %v9571 = vadd.f32 %v9569, %v9570
    %v9572 = vsel %vm3430, %v9197, 0.0
    %v9573 = vrot.slane %v9572, 4
    %v9574 = vadd.f32 %v9572, %v9573
    %v9575 = vrot.slane %v9574, 2
    %v9576 = vadd.f32 %v9574, %v9575
    %v9577 = vrot.slane %v9576, 1
    %v9578 = vadd.f32 %v9576, %v9577
    %v9579 = vsel %vm3430, %v9199, 0.0
    %v9580 = vrot.slane %v9579, 4
    %v9581 = vadd.f32 %v9579, %v9580
    %v9582 = vrot.slane %v9581, 2
    %v9583 = vadd.f32 %v9581, %v9582
    %v9584 = vrot.slane %v9583, 1
    %v9585 = vadd.f32 %v9583, %v9584
    %v9586 = vsel %vm3430, %v9201, 0.0
    %v9587 = vrot.slane %v9586, 4
    %v9588 = vadd.f32 %v9586, %v9587
    %v9589 = vrot.slane %v9588, 2
    %v9590 = vadd.f32 %v9588, %v9589
    %v9591 = vrot.slane %v9590, 1
    %v9592 = vadd.f32 %v9590, %v9591
    %v9593 = vsel %vm3430, %v9203, 0.0
    %v9594 = vrot.slane %v9593, 4
    %v9595 = vadd.f32 %v9593, %v9594
    %v9596 = vrot.slane %v9595, 2
    %v9597 = vadd.f32 %v9595, %v9596
    %v9598 = vrot.slane %v9597, 1
    %v9599 = vadd.f32 %v9597, %v9598
    %v9600 = vsel %vm3430, %v9205, 0.0
    %v9601 = vrot.slane %v9600, 4
    %v9602 = vadd.f32 %v9600, %v9601
    %v9603 = vrot.slane %v9602, 2
    %v9604 = vadd.f32 %v9602, %v9603
    %v9605 = vrot.slane %v9604, 1
    %v9606 = vadd.f32 %v9604, %v9605
    %v9607 = vsel %vm3430, %v9207, 0.0
    %v9608 = vrot.slane %v9607, 4
    %v9609 = vadd.f32 %v9607, %v9608
    %v9610 = vrot.slane %v9609, 2
    %v9611 = vadd.f32 %v9609, %v9610
    %v9612 = vrot.slane %v9611, 1
    %v9613 = vadd.f32 %v9611, %v9612
    %v9614 = vsel %vm3430, %v9209, 0.0
    %v9615 = vrot.slane %v9614, 4
    %v9616 = vadd.f32 %v9614, %v9615
    %v9617 = vrot.slane %v9616, 2
    %v9618 = vadd.f32 %v9616, %v9617
    %v9619 = vrot.slane %v9618, 1
    %v9620 = vadd.f32 %v9618, %v9619
    %v9621 = vsel %vm3430, %v9211, 0.0
    %v9622 = vrot.slane %v9621, 4
    %v9623 = vadd.f32 %v9621, %v9622
    %v9624 = vrot.slane %v9623, 2
    %v9625 = vadd.f32 %v9623, %v9624
    %v9626 = vrot.slane %v9625, 1
    %v9627 = vadd.f32 %v9625, %v9626
    %v9628 = vsel %vm3430, %v9213, 0.0
    %v9629 = vrot.slane %v9628, 4
    %v9630 = vadd.f32 %v9628, %v9629
    %v9631 = vrot.slane %v9630, 2
    %v9632 = vadd.f32 %v9630, %v9631
    %v9633 = vrot.slane %v9632, 1
    %v9634 = vadd.f32 %v9632, %v9633
    %v9635 = vsel %vm3430, %v9215, 0.0
    %v9636 = vrot.slane %v9635, 4
    %v9637 = vadd.f32 %v9635, %v9636
    %v9638 = vrot.slane %v9637, 2
    %v9639 = vadd.f32 %v9637, %v9638
    %v9640 = vrot.slane %v9639, 1
    %v9641 = vadd.f32 %v9639, %v9640
    %v9642 = vsel %vm3430, %v9217, 0.0
    %v9643 = vrot.slane %v9642, 4
    %v9644 = vadd.f32 %v9642, %v9643
    %v9645 = vrot.slane %v9644, 2
    %v9646 = vadd.f32 %v9644, %v9645
    %v9647 = vrot.slane %v9646, 1
    %v9648 = vadd.f32 %v9646, %v9647
    %v9649 = vsel %vm3430, %v9219, 0.0
    %v9650 = vrot.slane %v9649, 4
    %v9651 = vadd.f32 %v9649, %v9650
    %v9652 = vrot.slane %v9651, 2
    %v9653 = vadd.f32 %v9651, %v9652
    %v9654 = vrot.slane %v9653, 1
    %v9655 = vadd.f32 %v9653, %v9654
    %v9656 = vsel %vm3430, %v9221, 0.0
    %v9657 = vrot.slane %v9656, 4
    %v9658 = vadd.f32 %v9656, %v9657
    %v9659 = vrot.slane %v9658, 2
    %v9660 = vadd.f32 %v9658, %v9659
    %v9661 = vrot.slane %v9660, 1
    %v9662 = vadd.f32 %v9660, %v9661
    %v9663 = vsel %vm3430, %v9223, 0.0
    %v9664 = vrot.slane %v9663, 4
    %v9665 = vadd.f32 %v9663, %v9664
    %v9666 = vrot.slane %v9665, 2
    %v9667 = vadd.f32 %v9665, %v9666
    %v9668 = vrot.slane %v9667, 1
    %v9669 = vadd.f32 %v9667, %v9668
    %v9670 = vsel %vm3430, %v9225, 0.0
    %v9671 = vrot.slane %v9670, 4
    %v9672 = vadd.f32 %v9670, %v9671
    %v9673 = vrot.slane %v9672, 2
    %v9674 = vadd.f32 %v9672, %v9673
    %v9675 = vrot.slane %v9674, 1
    %v9676 = vadd.f32 %v9674, %v9675
    %v9677 = vsel %vm3430, %v9227, 0.0
    %v9678 = vrot.slane %v9677, 4
    %v9679 = vadd.f32 %v9677, %v9678
    %v9680 = vrot.slane %v9679, 2
    %v9681 = vadd.f32 %v9679, %v9680
    %v9682 = vrot.slane %v9681, 1
    %v9683 = vadd.f32 %v9681, %v9682
    %v9684 = vsel %vm3430, %v9229, 0.0
    %v9685 = vrot.slane %v9684, 4
    %v9686 = vadd.f32 %v9684, %v9685
    %v9687 = vrot.slane %v9686, 2
    %v9688 = vadd.f32 %v9686, %v9687
    %v9689 = vrot.slane %v9688, 1
    %v9690 = vadd.f32 %v9688, %v9689
    %v9691 = vsel %vm3430, %v9231, 0.0
    %v9692 = vrot.slane %v9691, 4
    %v9693 = vadd.f32 %v9691, %v9692
    %v9694 = vrot.slane %v9693, 2
    %v9695 = vadd.f32 %v9693, %v9694
    %v9696 = vrot.slane %v9695, 1
    %v9697 = vadd.f32 %v9695, %v9696
    %v9698 = vsel %vm3430, %v9233, 0.0
    %v9699 = vrot.slane %v9698, 4
    %v9700 = vadd.f32 %v9698, %v9699
    %v9701 = vrot.slane %v9700, 2
    %v9702 = vadd.f32 %v9700, %v9701
    %v9703 = vrot.slane %v9702, 1
    %v9704 = vadd.f32 %v9702, %v9703
    %v9705 = vsel %vm3430, %v9235, 0.0
    %v9706 = vrot.slane %v9705, 4
    %v9707 = vadd.f32 %v9705, %v9706
    %v9708 = vrot.slane %v9707, 2
    %v9709 = vadd.f32 %v9707, %v9708
    %v9710 = vrot.slane %v9709, 1
    %v9711 = vadd.f32 %v9709, %v9710
    %v9712 = vsel %vm3430, %v9237, 0.0
    %v9713 = vrot.slane %v9712, 4
    %v9714 = vadd.f32 %v9712, %v9713
    %v9715 = vrot.slane %v9714, 2
    %v9716 = vadd.f32 %v9714, %v9715
    %v9717 = vrot.slane %v9716, 1
    %v9718 = vadd.f32 %v9716, %v9717
    %v9719 = vsel %vm3430, %v9239, 0.0
    %v9720 = vrot.slane %v9719, 4
    %v9721 = vadd.f32 %v9719, %v9720
    %v9722 = vrot.slane %v9721, 2
    %v9723 = vadd.f32 %v9721, %v9722
    %v9724 = vrot.slane %v9723, 1
    %v9725 = vadd.f32 %v9723, %v9724
    %v9726 = vsel %vm3430, %v9241, 0.0
    %v9727 = vrot.slane %v9726, 4
    %v9728 = vadd.f32 %v9726, %v9727
    %v9729 = vrot.slane %v9728, 2
    %v9730 = vadd.f32 %v9728, %v9729
    %v9731 = vrot.slane %v9730, 1
    %v9732 = vadd.f32 %v9730, %v9731
    %v9733 = vsel %vm3430, %v9243, 0.0
    %v9734 = vrot.slane %v9733, 4
    %v9735 = vadd.f32 %v9733, %v9734
    %v9736 = vrot.slane %v9735, 2
    %v9737 = vadd.f32 %v9735, %v9736
    %v9738 = vrot.slane %v9737, 1
    %v9739 = vadd.f32 %v9737, %v9738
    %v9740 = vsel %vm3430, %v9245, 0.0
    %v9741 = vrot.slane %v9740, 4
    %v9742 = vadd.f32 %v9740, %v9741
    %v9743 = vrot.slane %v9742, 2
    %v9744 = vadd.f32 %v9742, %v9743
    %v9745 = vrot.slane %v9744, 1
    %v9746 = vadd.f32 %v9744, %v9745
    %v9747 = vsel %vm3430, %v9247, 0.0
    %v9748 = vrot.slane %v9747, 4
    %v9749 = vadd.f32 %v9747, %v9748
    %v9750 = vrot.slane %v9749, 2
    %v9751 = vadd.f32 %v9749, %v9750
    %v9752 = vrot.slane %v9751, 1
    %v9753 = vadd.f32 %v9751, %v9752
    %v9754 = vsel %vm3430, %v9249, 0.0
    %v9755 = vrot.slane %v9754, 4
    %v9756 = vadd.f32 %v9754, %v9755
    %v9757 = vrot.slane %v9756, 2
    %v9758 = vadd.f32 %v9756, %v9757
    %v9759 = vrot.slane %v9758, 1
    %v9760 = vadd.f32 %v9758, %v9759
    %v9761 = vsel %vm3430, %v9251, 0.0
    %v9762 = vrot.slane %v9761, 4
    %v9763 = vadd.f32 %v9761, %v9762
    %v9764 = vrot.slane %v9763, 2
    %v9765 = vadd.f32 %v9763, %v9764
    %v9766 = vrot.slane %v9765, 1
    %v9767 = vadd.f32 %v9765, %v9766
    %v9768 = vsel %vm3430, %v9253, 0.0
    %v9769 = vrot.slane %v9768, 4
    %v9770 = vadd.f32 %v9768, %v9769
    %v9771 = vrot.slane %v9770, 2
    %v9772 = vadd.f32 %v9770, %v9771
    %v9773 = vrot.slane %v9772, 1
    %v9774 = vadd.f32 %v9772, %v9773
    %v9775 = vsel %vm3430, %v9255, 0.0
    %v9776 = vrot.slane %v9775, 4
    %v9777 = vadd.f32 %v9775, %v9776
    %v9778 = vrot.slane %v9777, 2
    %v9779 = vadd.f32 %v9777, %v9778
    %v9780 = vrot.slane %v9779, 1
    %v9781 = vadd.f32 %v9779, %v9780
    %v9782 = vsel %vm3430, %v9257, 0.0
    %v9783 = vrot.slane %v9782, 4
    %v9784 = vadd.f32 %v9782, %v9783
    %v9785 = vrot.slane %v9784, 2
    %v9786 = vadd.f32 %v9784, %v9785
    %v9787 = vrot.slane %v9786, 1
    %v9788 = vadd.f32 %v9786, %v9787
    %v9789 = vsel %vm3430, %v9259, 0.0
    %v9790 = vrot.slane %v9789, 4
    %v9791 = vadd.f32 %v9789, %v9790
    %v9792 = vrot.slane %v9791, 2
    %v9793 = vadd.f32 %v9791, %v9792
    %v9794 = vrot.slane %v9793, 1
    %v9795 = vadd.f32 %v9793, %v9794
    %v9796 = vsel %vm3430, %v9261, 0.0
    %v9797 = vrot.slane %v9796, 4
    %v9798 = vadd.f32 %v9796, %v9797
    %v9799 = vrot.slane %v9798, 2
    %v9800 = vadd.f32 %v9798, %v9799
    %v9801 = vrot.slane %v9800, 1
    %v9802 = vadd.f32 %v9800, %v9801
    %v9803 = vsel %vm3430, %v9263, 0.0
    %v9804 = vrot.slane %v9803, 4
    %v9805 = vadd.f32 %v9803, %v9804
    %v9806 = vrot.slane %v9805, 2
    %v9807 = vadd.f32 %v9805, %v9806
    %v9808 = vrot.slane %v9807, 1
    %v9809 = vadd.f32 %v9807, %v9808
    %v9810 = vsel %vm3430, %v9265, 0.0
    %v9811 = vrot.slane %v9810, 4
    %v9812 = vadd.f32 %v9810, %v9811
    %v9813 = vrot.slane %v9812, 2
    %v9814 = vadd.f32 %v9812, %v9813
    %v9815 = vrot.slane %v9814, 1
    %v9816 = vadd.f32 %v9814, %v9815
    %v9817 = vsel %vm3430, %v9267, 0.0
    %v9818 = vrot.slane %v9817, 4
    %v9819 = vadd.f32 %v9817, %v9818
    %v9820 = vrot.slane %v9819, 2
    %v9821 = vadd.f32 %v9819, %v9820
    %v9822 = vrot.slane %v9821, 1
    %v9823 = vadd.f32 %v9821, %v9822
    %v9824 = vsel %vm3430, %v9269, 0.0
    %v9825 = vrot.slane %v9824, 4
    %v9826 = vadd.f32 %v9824, %v9825
    %v9827 = vrot.slane %v9826, 2
    %v9828 = vadd.f32 %v9826, %v9827
    %v9829 = vrot.slane %v9828, 1
    %v9830 = vadd.f32 %v9828, %v9829
    %v9831 = vsel %vm3430, %v9271, 0.0
    %v9832 = vrot.slane %v9831, 4
    %v9833 = vadd.f32 %v9831, %v9832
    %v9834 = vrot.slane %v9833, 2
    %v9835 = vadd.f32 %v9833, %v9834
    %v9836 = vrot.slane %v9835, 1
    %v9837 = vadd.f32 %v9835, %v9836
    %v9838 = vsel %vm3430, %v9273, 0.0
    %v9839 = vrot.slane %v9838, 4
    %v9840 = vadd.f32 %v9838, %v9839
    %v9841 = vrot.slane %v9840, 2
    %v9842 = vadd.f32 %v9840, %v9841
    %v9843 = vrot.slane %v9842, 1
    %v9844 = vadd.f32 %v9842, %v9843
    %v9845 = vsel %vm3430, %v9275, 0.0
    %v9846 = vrot.slane %v9845, 4
    %v9847 = vadd.f32 %v9845, %v9846
    %v9848 = vrot.slane %v9847, 2
    %v9849 = vadd.f32 %v9847, %v9848
    %v9850 = vrot.slane %v9849, 1
    %v9851 = vadd.f32 %v9849, %v9850
    %v9852 = vsel %vm3430, %v9277, 0.0
    %v9853 = vrot.slane %v9852, 4
    %v9854 = vadd.f32 %v9852, %v9853
    %v9855 = vrot.slane %v9854, 2
    %v9856 = vadd.f32 %v9854, %v9855
    %v9857 = vrot.slane %v9856, 1
    %v9858 = vadd.f32 %v9856, %v9857
    %v9859 = vsel %vm3430, %v9279, 0.0
    %v9860 = vrot.slane %v9859, 4
    %v9861 = vadd.f32 %v9859, %v9860
    %v9862 = vrot.slane %v9861, 2
    %v9863 = vadd.f32 %v9861, %v9862
    %v9864 = vrot.slane %v9863, 1
    %v9865 = vadd.f32 %v9863, %v9864
    %v9866 = vsel %vm3430, %v9281, 0.0
    %v9867 = vrot.slane %v9866, 4
    %v9868 = vadd.f32 %v9866, %v9867
    %v9869 = vrot.slane %v9868, 2
    %v9870 = vadd.f32 %v9868, %v9869
    %v9871 = vrot.slane %v9870, 1
    %v9872 = vadd.f32 %v9870, %v9871
    %v9873 = vsel %vm3430, %v9283, 0.0
    %v9874 = vrot.slane %v9873, 4
    %v9875 = vadd.f32 %v9873, %v9874
    %v9876 = vrot.slane %v9875, 2
    %v9877 = vadd.f32 %v9875, %v9876
    %v9878 = vrot.slane %v9877, 1
    %v9879 = vadd.f32 %v9877, %v9878
    %v9880 = vsel %vm3430, %v9285, 0.0
    %v9881 = vrot.slane %v9880, 4
    %v9882 = vadd.f32 %v9880, %v9881
    %v9883 = vrot.slane %v9882, 2
    %v9884 = vadd.f32 %v9882, %v9883
    %v9885 = vrot.slane %v9884, 1
    %v9886 = vadd.f32 %v9884, %v9885
    %v9887 = vsel %vm3430, %v9287, 0.0
    %v9888 = vrot.slane %v9887, 4
    %v9889 = vadd.f32 %v9887, %v9888
    %v9890 = vrot.slane %v9889, 2
    %v9891 = vadd.f32 %v9889, %v9890
    %v9892 = vrot.slane %v9891, 1
    %v9893 = vadd.f32 %v9891, %v9892
    %v9894 = vsel %vm3430, %v9289, 0.0
    %v9895 = vrot.slane %v9894, 4
    %v9896 = vadd.f32 %v9894, %v9895
    %v9897 = vrot.slane %v9896, 2
    %v9898 = vadd.f32 %v9896, %v9897
    %v9899 = vrot.slane %v9898, 1
    %v9900 = vadd.f32 %v9898, %v9899
    %v9901 = vsel %vm3430, %v9291, 0.0
    %v9902 = vrot.slane %v9901, 4
    %v9903 = vadd.f32 %v9901, %v9902
    %v9904 = vrot.slane %v9903, 2
    %v9905 = vadd.f32 %v9903, %v9904
    %v9906 = vrot.slane %v9905, 1
    %v9907 = vadd.f32 %v9905, %v9906
    %v9908 = vsel %vm3430, %v9293, 0.0
    %v9909 = vrot.slane %v9908, 4
    %v9910 = vadd.f32 %v9908, %v9909
    %v9911 = vrot.slane %v9910, 2
    %v9912 = vadd.f32 %v9910, %v9911
    %v9913 = vrot.slane %v9912, 1
    %v9914 = vadd.f32 %v9912, %v9913
    %v9915 = vsel %vm3430, %v9295, 0.0
    %v9916 = vrot.slane %v9915, 4
    %v9917 = vadd.f32 %v9915, %v9916
    %v9918 = vrot.slane %v9917, 2
    %v9919 = vadd.f32 %v9917, %v9918
    %v9920 = vrot.slane %v9919, 1
    %v9921 = vadd.f32 %v9919, %v9920
    %v9922 = vsel %vm3430, %v9297, 0.0
    %v9923 = vrot.slane %v9922, 4
    %v9924 = vadd.f32 %v9922, %v9923
    %v9925 = vrot.slane %v9924, 2
    %v9926 = vadd.f32 %v9924, %v9925
    %v9927 = vrot.slane %v9926, 1
    %v9928 = vadd.f32 %v9926, %v9927
    %v9929 = vsel %vm3430, %v9299, 0.0
    %v9930 = vrot.slane %v9929, 4
    %v9931 = vadd.f32 %v9929, %v9930
    %v9932 = vrot.slane %v9931, 2
    %v9933 = vadd.f32 %v9931, %v9932
    %v9934 = vrot.slane %v9933, 1
    %v9935 = vadd.f32 %v9933, %v9934
    %v9936 = vsel %vm3430, %v9301, 0.0
    %v9937 = vrot.slane %v9936, 4
    %v9938 = vadd.f32 %v9936, %v9937
    %v9939 = vrot.slane %v9938, 2
    %v9940 = vadd.f32 %v9938, %v9939
    %v9941 = vrot.slane %v9940, 1
    %v9942 = vadd.f32 %v9940, %v9941
    %v9943 = vsel %vm3430, %v9303, 0.0
    %v9944 = vrot.slane %v9943, 4
    %v9945 = vadd.f32 %v9943, %v9944
    %v9946 = vrot.slane %v9945, 2
    %v9947 = vadd.f32 %v9945, %v9946
    %v9948 = vrot.slane %v9947, 1
    %v9949 = vadd.f32 %v9947, %v9948
    %v9950 = vsel %vm3430, %v9305, 0.0
    %v9951 = vrot.slane %v9950, 4
    %v9952 = vadd.f32 %v9950, %v9951
    %v9953 = vrot.slane %v9952, 2
    %v9954 = vadd.f32 %v9952, %v9953
    %v9955 = vrot.slane %v9954, 1
    %v9956 = vadd.f32 %v9954, %v9955
    %v9957 = vsel %vm3430, %v9307, 0.0
    %v9958 = vrot.slane %v9957, 4
    %v9959 = vadd.f32 %v9957, %v9958
    %v9960 = vrot.slane %v9959, 2
    %v9961 = vadd.f32 %v9959, %v9960
    %v9962 = vrot.slane %v9961, 1
    %v9963 = vadd.f32 %v9961, %v9962
    %v9964 = vsel %vm3430, %v9309, 0.0
    %v9965 = vrot.slane %v9964, 4
    %v9966 = vadd.f32 %v9964, %v9965
    %v9967 = vrot.slane %v9966, 2
    %v9968 = vadd.f32 %v9966, %v9967
    %v9969 = vrot.slane %v9968, 1
    %v9970 = vadd.f32 %v9968, %v9969
    %v9971 = vsel %vm3430, %v9311, 0.0
    %v9972 = vrot.slane %v9971, 4
    %v9973 = vadd.f32 %v9971, %v9972
    %v9974 = vrot.slane %v9973, 2
    %v9975 = vadd.f32 %v9973, %v9974
    %v9976 = vrot.slane %v9975, 1
    %v9977 = vadd.f32 %v9975, %v9976
    %v9978 = vsel %vm3430, %v9313, 0.0
    %v9979 = vrot.slane %v9978, 4
    %v9980 = vadd.f32 %v9978, %v9979
    %v9981 = vrot.slane %v9980, 2
    %v9982 = vadd.f32 %v9980, %v9981
    %v9983 = vrot.slane %v9982, 1
    %v9984 = vadd.f32 %v9982, %v9983
    %v9985 = vsel %vm3430, %v9315, 0.0
    %v9986 = vrot.slane %v9985, 4
    %v9987 = vadd.f32 %v9985, %v9986
    %v9988 = vrot.slane %v9987, 2
    %v9989 = vadd.f32 %v9987, %v9988
    %v9990 = vrot.slane %v9989, 1
    %v9991 = vadd.f32 %v9989, %v9990
    %v9992 = vsel %vm3430, %v9317, 0.0
    %v9993 = vrot.slane %v9992, 4
    %v9994 = vadd.f32 %v9992, %v9993
    %v9995 = vrot.slane %v9994, 2
    %v9996 = vadd.f32 %v9994, %v9995
    %v9997 = vrot.slane %v9996, 1
    %v9998 = vadd.f32 %v9996, %v9997
    %v9999 = vsel %vm3430, %v9319, 0.0
    %v10000 = vrot.slane %v9999, 4
    %v10001 = vadd.f32 %v9999, %v10000
    %v10002 = vrot.slane %v10001, 2
    %v10003 = vadd.f32 %v10001, %v10002
    %v10004 = vrot.slane %v10003, 1
    %v10005 = vadd.f32 %v10003, %v10004
    %v10006 = vsel %vm3430, %v9321, 0.0
    %v10007 = vrot.slane %v10006, 4
    %v10008 = vadd.f32 %v10006, %v10007
    %v10009 = vrot.slane %v10008, 2
    %v10010 = vadd.f32 %v10008, %v10009
    %v10011 = vrot.slane %v10010, 1
    %v10012 = vadd.f32 %v10010, %v10011
    %v10013 = vsel %vm3430, %v9323, 0.0
    %v10014 = vrot.slane %v10013, 4
    %v10015 = vadd.f32 %v10013, %v10014
    %v10016 = vrot.slane %v10015, 2
    %v10017 = vadd.f32 %v10015, %v10016
    %v10018 = vrot.slane %v10017, 1
    %v10019 = vadd.f32 %v10017, %v10018
    %v10020 = vsel %vm3430, %v9325, 0.0
    %v10021 = vrot.slane %v10020, 4
    %v10022 = vadd.f32 %v10020, %v10021
    %v10023 = vrot.slane %v10022, 2
    %v10024 = vadd.f32 %v10022, %v10023
    %v10025 = vrot.slane %v10024, 1
    %v10026 = vadd.f32 %v10024, %v10025
    %v10027 = vsel %vm3430, %v9327, 0.0
    %v10028 = vrot.slane %v10027, 4
    %v10029 = vadd.f32 %v10027, %v10028
    %v10030 = vrot.slane %v10029, 2
    %v10031 = vadd.f32 %v10029, %v10030
    %v10032 = vrot.slane %v10031, 1
    %v10033 = vadd.f32 %v10031, %v10032
    %v10034 = vsel %vm3430, %v9329, 0.0
    %v10035 = vrot.slane %v10034, 4
    %v10036 = vadd.f32 %v10034, %v10035
    %v10037 = vrot.slane %v10036, 2
    %v10038 = vadd.f32 %v10036, %v10037
    %v10039 = vrot.slane %v10038, 1
    %v10040 = vadd.f32 %v10038, %v10039
    %v10041 = vsel %vm3430, %v9331, 0.0
    %v10042 = vrot.slane %v10041, 4
    %v10043 = vadd.f32 %v10041, %v10042
    %v10044 = vrot.slane %v10043, 2
    %v10045 = vadd.f32 %v10043, %v10044
    %v10046 = vrot.slane %v10045, 1
    %v10047 = vadd.f32 %v10045, %v10046
    %v10048 = vsel %vm3430, %v9333, 0.0
    %v10049 = vrot.slane %v10048, 4
    %v10050 = vadd.f32 %v10048, %v10049
    %v10051 = vrot.slane %v10050, 2
    %v10052 = vadd.f32 %v10050, %v10051
    %v10053 = vrot.slane %v10052, 1
    %v10054 = vadd.f32 %v10052, %v10053
    %v10055 = vsel %vm3430, %v9335, 0.0
    %v10056 = vrot.slane %v10055, 4
    %v10057 = vadd.f32 %v10055, %v10056
    %v10058 = vrot.slane %v10057, 2
    %v10059 = vadd.f32 %v10057, %v10058
    %v10060 = vrot.slane %v10059, 1
    %v10061 = vadd.f32 %v10059, %v10060
    %v10062 = vsel %vm3430, %v9337, 0.0
    %v10063 = vrot.slane %v10062, 4
    %v10064 = vadd.f32 %v10062, %v10063
    %v10065 = vrot.slane %v10064, 2
    %v10066 = vadd.f32 %v10064, %v10065
    %v10067 = vrot.slane %v10066, 1
    %v10068 = vadd.f32 %v10066, %v10067
    %v10069 = vsel %vm3430, %v9339, 0.0
    %v10070 = vrot.slane %v10069, 4
    %v10071 = vadd.f32 %v10069, %v10070
    %v10072 = vrot.slane %v10071, 2
    %v10073 = vadd.f32 %v10071, %v10072
    %v10074 = vrot.slane %v10073, 1
    %v10075 = vadd.f32 %v10073, %v10074
    %v10076 = vsel %vm3430, %v9341, 0.0
    %v10077 = vrot.slane %v10076, 4
    %v10078 = vadd.f32 %v10076, %v10077
    %v10079 = vrot.slane %v10078, 2
    %v10080 = vadd.f32 %v10078, %v10079
    %v10081 = vrot.slane %v10080, 1
    %v10082 = vadd.f32 %v10080, %v10081
    %v10083 = vsel %vm3430, %v9343, 0.0
    %v10084 = vrot.slane %v10083, 4
    %v10085 = vadd.f32 %v10083, %v10084
    %v10086 = vrot.slane %v10085, 2
    %v10087 = vadd.f32 %v10085, %v10086
    %v10088 = vrot.slane %v10087, 1
    %v10089 = vadd.f32 %v10087, %v10088
    %v10090 = vsel %vm3430, %v9345, 0.0
    %v10091 = vrot.slane %v10090, 4
    %v10092 = vadd.f32 %v10090, %v10091
    %v10093 = vrot.slane %v10092, 2
    %v10094 = vadd.f32 %v10092, %v10093
    %v10095 = vrot.slane %v10094, 1
    %v10096 = vadd.f32 %v10094, %v10095
    %v10097 = vsel %vm3430, %v9347, 0.0
    %v10098 = vrot.slane %v10097, 4
    %v10099 = vadd.f32 %v10097, %v10098
    %v10100 = vrot.slane %v10099, 2
    %v10101 = vadd.f32 %v10099, %v10100
    %v10102 = vrot.slane %v10101, 1
    %v10103 = vadd.f32 %v10101, %v10102
    %v10104 = vsel %vm3430, %v9349, 0.0
    %v10105 = vrot.slane %v10104, 4
    %v10106 = vadd.f32 %v10104, %v10105
    %v10107 = vrot.slane %v10106, 2
    %v10108 = vadd.f32 %v10106, %v10107
    %v10109 = vrot.slane %v10108, 1
    %v10110 = vadd.f32 %v10108, %v10109
    %v10111 = vsel %vm3430, %v9351, 0.0
    %v10112 = vrot.slane %v10111, 4
    %v10113 = vadd.f32 %v10111, %v10112
    %v10114 = vrot.slane %v10113, 2
    %v10115 = vadd.f32 %v10113, %v10114
    %v10116 = vrot.slane %v10115, 1
    %v10117 = vadd.f32 %v10115, %v10116
    %v10118 = vsel %vm3430, %v9353, 0.0
    %v10119 = vrot.slane %v10118, 4
    %v10120 = vadd.f32 %v10118, %v10119
    %v10121 = vrot.slane %v10120, 2
    %v10122 = vadd.f32 %v10120, %v10121
    %v10123 = vrot.slane %v10122, 1
    %v10124 = vadd.f32 %v10122, %v10123
    %v10125 = vsel %vm3430, %v9355, 0.0
    %v10126 = vrot.slane %v10125, 4
    %v10127 = vadd.f32 %v10125, %v10126
    %v10128 = vrot.slane %v10127, 2
    %v10129 = vadd.f32 %v10127, %v10128
    %v10130 = vrot.slane %v10129, 1
    %v10131 = vadd.f32 %v10129, %v10130
    %v10132 = vsel %vm3430, %v9357, 0.0
    %v10133 = vrot.slane %v10132, 4
    %v10134 = vadd.f32 %v10132, %v10133
    %v10135 = vrot.slane %v10134, 2
    %v10136 = vadd.f32 %v10134, %v10135
    %v10137 = vrot.slane %v10136, 1
    %v10138 = vadd.f32 %v10136, %v10137
    %v10139 = vsel %vm3430, %v9359, 0.0
    %v10140 = vrot.slane %v10139, 4
    %v10141 = vadd.f32 %v10139, %v10140
    %v10142 = vrot.slane %v10141, 2
    %v10143 = vadd.f32 %v10141, %v10142
    %v10144 = vrot.slane %v10143, 1
    %v10145 = vadd.f32 %v10143, %v10144
    %v10146 = vsel %vm3430, %v9361, 0.0
    %v10147 = vrot.slane %v10146, 4
    %v10148 = vadd.f32 %v10146, %v10147
    %v10149 = vrot.slane %v10148, 2
    %v10150 = vadd.f32 %v10148, %v10149
    %v10151 = vrot.slane %v10150, 1
    %v10152 = vadd.f32 %v10150, %v10151
    %v10153 = vsel %vm3430, %v9363, 0.0
    %v10154 = vrot.slane %v10153, 4
    %v10155 = vadd.f32 %v10153, %v10154
    %v10156 = vrot.slane %v10155, 2
    %v10157 = vadd.f32 %v10155, %v10156
    %v10158 = vrot.slane %v10157, 1
    %v10159 = vadd.f32 %v10157, %v10158
    %v10160 = vsel %vm3430, %v9365, 0.0
    %v10161 = vrot.slane %v10160, 4
    %v10162 = vadd.f32 %v10160, %v10161
    %v10163 = vrot.slane %v10162, 2
    %v10164 = vadd.f32 %v10162, %v10163
    %v10165 = vrot.slane %v10164, 1
    %v10166 = vadd.f32 %v10164, %v10165
    %v10167 = vsel %vm3430, %v9367, 0.0
    %v10168 = vrot.slane %v10167, 4
    %v10169 = vadd.f32 %v10167, %v10168
    %v10170 = vrot.slane %v10169, 2
    %v10171 = vadd.f32 %v10169, %v10170
    %v10172 = vrot.slane %v10171, 1
    %v10173 = vadd.f32 %v10171, %v10172
    %v10174 = vsel %vm3430, %v9369, 0.0
    %v10175 = vrot.slane %v10174, 4
    %v10176 = vadd.f32 %v10174, %v10175
    %v10177 = vrot.slane %v10176, 2
    %v10178 = vadd.f32 %v10176, %v10177
    %v10179 = vrot.slane %v10178, 1
    %v10180 = vadd.f32 %v10178, %v10179
    %v10181 = vsel %vm3430, %v9371, 0.0
    %v10182 = vrot.slane %v10181, 4
    %v10183 = vadd.f32 %v10181, %v10182
    %v10184 = vrot.slane %v10183, 2
    %v10185 = vadd.f32 %v10183, %v10184
    %v10186 = vrot.slane %v10185, 1
    %v10187 = vadd.f32 %v10185, %v10186
    %v10188 = vsel %vm3430, %v9373, 0.0
    %v10189 = vrot.slane %v10188, 4
    %v10190 = vadd.f32 %v10188, %v10189
    %v10191 = vrot.slane %v10190, 2
    %v10192 = vadd.f32 %v10190, %v10191
    %v10193 = vrot.slane %v10192, 1
    %v10194 = vadd.f32 %v10192, %v10193
    %v10195 = vsel %vm3430, %v9375, 0.0
    %v10196 = vrot.slane %v10195, 4
    %v10197 = vadd.f32 %v10195, %v10196
    %v10198 = vrot.slane %v10197, 2
    %v10199 = vadd.f32 %v10197, %v10198
    %v10200 = vrot.slane %v10199, 1
    %v10201 = vadd.f32 %v10199, %v10200
    %v10202 = vsel %vm3430, %v9377, 0.0
    %v10203 = vrot.slane %v10202, 4
    %v10204 = vadd.f32 %v10202, %v10203
    %v10205 = vrot.slane %v10204, 2
    %v10206 = vadd.f32 %v10204, %v10205
    %v10207 = vrot.slane %v10206, 1
    %v10208 = vadd.f32 %v10206, %v10207
    %v10209 = vsel %vm3430, %v9379, 0.0
    %v10210 = vrot.slane %v10209, 4
    %v10211 = vadd.f32 %v10209, %v10210
    %v10212 = vrot.slane %v10211, 2
    %v10213 = vadd.f32 %v10211, %v10212
    %v10214 = vrot.slane %v10213, 1
    %v10215 = vadd.f32 %v10213, %v10214
    %v10216 = vsel %vm3430, %v9381, 0.0
    %v10217 = vrot.slane %v10216, 4
    %v10218 = vadd.f32 %v10216, %v10217
    %v10219 = vrot.slane %v10218, 2
    %v10220 = vadd.f32 %v10218, %v10219
    %v10221 = vrot.slane %v10220, 1
    %v10222 = vadd.f32 %v10220, %v10221
    %v10223 = vsel %vm3430, %v9383, 0.0
    %v10224 = vrot.slane %v10223, 4
    %v10225 = vadd.f32 %v10223, %v10224
    %v10226 = vrot.slane %v10225, 2
    %v10227 = vadd.f32 %v10225, %v10226
    %v10228 = vrot.slane %v10227, 1
    %v10229 = vadd.f32 %v10227, %v10228
    %v10230 = vsel %vm3430, %v9385, 0.0
    %v10231 = vrot.slane %v10230, 4
    %v10232 = vadd.f32 %v10230, %v10231
    %v10233 = vrot.slane %v10232, 2
    %v10234 = vadd.f32 %v10232, %v10233
    %v10235 = vrot.slane %v10234, 1
    %v10236 = vadd.f32 %v10234, %v10235
    %v10237 = vsel %vm3430, %v9387, 0.0
    %v10238 = vrot.slane %v10237, 4
    %v10239 = vadd.f32 %v10237, %v10238
    %v10240 = vrot.slane %v10239, 2
    %v10241 = vadd.f32 %v10239, %v10240
    %v10242 = vrot.slane %v10241, 1
    %v10243 = vadd.f32 %v10241, %v10242
    %v10244 = vsel %vm3430, %v9389, 0.0
    %v10245 = vrot.slane %v10244, 4
    %v10246 = vadd.f32 %v10244, %v10245
    %v10247 = vrot.slane %v10246, 2
    %v10248 = vadd.f32 %v10246, %v10247
    %v10249 = vrot.slane %v10248, 1
    %v10250 = vadd.f32 %v10248, %v10249
    %v10251 = vsel %vm3430, %v9391, 0.0
    %v10252 = vrot.slane %v10251, 4
    %v10253 = vadd.f32 %v10251, %v10252
    %v10254 = vrot.slane %v10253, 2
    %v10255 = vadd.f32 %v10253, %v10254
    %v10256 = vrot.slane %v10255, 1
    %v10257 = vadd.f32 %v10255, %v10256
    %v10258 = vsel %vm3430, %v9393, 0.0
    %v10259 = vrot.slane %v10258, 4
    %v10260 = vadd.f32 %v10258, %v10259
    %v10261 = vrot.slane %v10260, 2
    %v10262 = vadd.f32 %v10260, %v10261
    %v10263 = vrot.slane %v10262, 1
    %v10264 = vadd.f32 %v10262, %v10263
    %v10265 = vsel %vm3430, %v9395, 0.0
    %v10266 = vrot.slane %v10265, 4
    %v10267 = vadd.f32 %v10265, %v10266
    %v10268 = vrot.slane %v10267, 2
    %v10269 = vadd.f32 %v10267, %v10268
    %v10270 = vrot.slane %v10269, 1
    %v10271 = vadd.f32 %v10269, %v10270
    %v10272 = vsel %vm3430, %v9397, 0.0
    %v10273 = vrot.slane %v10272, 4
    %v10274 = vadd.f32 %v10272, %v10273
    %v10275 = vrot.slane %v10274, 2
    %v10276 = vadd.f32 %v10274, %v10275
    %v10277 = vrot.slane %v10276, 1
    %v10278 = vadd.f32 %v10276, %v10277
    %v10279 = vsel %vm3430, %v9399, 0.0
    %v10280 = vrot.slane %v10279, 4
    %v10281 = vadd.f32 %v10279, %v10280
    %v10282 = vrot.slane %v10281, 2
    %v10283 = vadd.f32 %v10281, %v10282
    %v10284 = vrot.slane %v10283, 1
    %v10285 = vadd.f32 %v10283, %v10284
    %v10286 = vsel %vm3430, %v9401, 0.0
    %v10287 = vrot.slane %v10286, 4
    %v10288 = vadd.f32 %v10286, %v10287
    %v10289 = vrot.slane %v10288, 2
    %v10290 = vadd.f32 %v10288, %v10289
    %v10291 = vrot.slane %v10290, 1
    %v10292 = vadd.f32 %v10290, %v10291
    %v10293 = vsel %vm3430, %v9403, 0.0
    %v10294 = vrot.slane %v10293, 4
    %v10295 = vadd.f32 %v10293, %v10294
    %v10296 = vrot.slane %v10295, 2
    %v10297 = vadd.f32 %v10295, %v10296
    %v10298 = vrot.slane %v10297, 1
    %v10299 = vadd.f32 %v10297, %v10298
    %10428 = vrot.lane.b32.xlu0 %v5521, 96
    %v10429 = vpop.permute.xlu0 %10428
    %10430 = vrot.lane.b32.xlu0 %v5522, 96
    %v10431 = vpop.permute.xlu0 %10430
    %10432 = vrot.lane.b32.xlu0 %v5523, 96
    %v10433 = vpop.permute.xlu0 %10432
    %10434 = vrot.lane.b32.xlu0 %v5524, 96
    %v10435 = vpop.permute.xlu0 %10434
    %10436 = vrot.lane.b32.xlu0 %v5525, 96
    %v10437 = vpop.permute.xlu0 %10436
    %10438 = vrot.lane.b32.xlu0 %v5526, 96
    %v10439 = vpop.permute.xlu0 %10438
    %10440 = vrot.lane.b32.xlu0 %v5527, 96
    %v10441 = vpop.permute.xlu0 %10440
    %10442 = vrot.lane.b32.xlu0 %v5528, 96
    %v10443 = vpop.permute.xlu0 %10442
    %10444 = vrot.lane.b32.xlu0 %v5529, 96
    %v10445 = vpop.permute.xlu0 %10444
    %10446 = vrot.lane.b32.xlu0 %v5530, 96
    %v10447 = vpop.permute.xlu0 %10446
    %10448 = vrot.lane.b32.xlu0 %v5531, 96
    %v10449 = vpop.permute.xlu0 %10448
    %10450 = vrot.lane.b32.xlu0 %v5532, 96
    %v10451 = vpop.permute.xlu0 %10450
    %10452 = vrot.lane.b32.xlu0 %v5533, 96
    %v10453 = vpop.permute.xlu0 %10452
    %10454 = vrot.lane.b32.xlu0 %v5534, 96
    %v10455 = vpop.permute.xlu0 %10454
    %10456 = vrot.lane.b32.xlu0 %v5535, 96
    %v10457 = vpop.permute.xlu0 %10456
    %10458 = vrot.lane.b32.xlu0 %v5536, 96
    %v10459 = vpop.permute.xlu0 %10458
    %10460 = vrot.lane.b32.xlu0 %v5537, 96
    %v10461 = vpop.permute.xlu0 %10460
    %10462 = vrot.lane.b32.xlu0 %v5538, 96
    %v10463 = vpop.permute.xlu0 %10462
    %10464 = vrot.lane.b32.xlu0 %v5539, 96
    %v10465 = vpop.permute.xlu0 %10464
    %10466 = vrot.lane.b32.xlu0 %v5540, 96
    %v10467 = vpop.permute.xlu0 %10466
    %10468 = vrot.lane.b32.xlu0 %v5541, 96
    %v10469 = vpop.permute.xlu0 %10468
    %10470 = vrot.lane.b32.xlu0 %v5542, 96
    %v10471 = vpop.permute.xlu0 %10470
    %10472 = vrot.lane.b32.xlu0 %v5543, 96
    %v10473 = vpop.permute.xlu0 %10472
    %10474 = vrot.lane.b32.xlu0 %v5544, 96
    %v10475 = vpop.permute.xlu0 %10474
    %10476 = vrot.lane.b32.xlu0 %v5545, 96
    %v10477 = vpop.permute.xlu0 %10476
    %10478 = vrot.lane.b32.xlu0 %v5546, 96
    %v10479 = vpop.permute.xlu0 %10478
    %10480 = vrot.lane.b32.xlu0 %v5547, 96
    %v10481 = vpop.permute.xlu0 %10480
    %10482 = vrot.lane.b32.xlu0 %v5548, 96
    %v10483 = vpop.permute.xlu0 %10482
    %10484 = vrot.lane.b32.xlu0 %v5549, 96
    %v10485 = vpop.permute.xlu0 %10484
    %10486 = vrot.lane.b32.xlu0 %v5550, 96
    %v10487 = vpop.permute.xlu0 %10486
    %10488 = vrot.lane.b32.xlu0 %v5551, 96
    %v10489 = vpop.permute.xlu0 %10488
    %10490 = vrot.lane.b32.xlu0 %v5552, 96
    %v10491 = vpop.permute.xlu0 %10490
    %10492 = vrot.lane.b32.xlu0 %v5553, 96
    %v10493 = vpop.permute.xlu0 %10492
    %10494 = vrot.lane.b32.xlu0 %v5554, 96
    %v10495 = vpop.permute.xlu0 %10494
    %10496 = vrot.lane.b32.xlu0 %v5555, 96
    %v10497 = vpop.permute.xlu0 %10496
    %10498 = vrot.lane.b32.xlu0 %v5556, 96
    %v10499 = vpop.permute.xlu0 %10498
    %10500 = vrot.lane.b32.xlu0 %v5557, 96
    %v10501 = vpop.permute.xlu0 %10500
    %10502 = vrot.lane.b32.xlu0 %v5558, 96
    %v10503 = vpop.permute.xlu0 %10502
    %10504 = vrot.lane.b32.xlu0 %v5559, 96
    %v10505 = vpop.permute.xlu0 %10504
    %10506 = vrot.lane.b32.xlu0 %v5560, 96
    %v10507 = vpop.permute.xlu0 %10506
    %10508 = vrot.lane.b32.xlu0 %v5561, 96
    %v10509 = vpop.permute.xlu0 %10508
    %10510 = vrot.lane.b32.xlu0 %v5562, 96
    %v10511 = vpop.permute.xlu0 %10510
    %10512 = vrot.lane.b32.xlu0 %v5563, 96
    %v10513 = vpop.permute.xlu0 %10512
    %10514 = vrot.lane.b32.xlu0 %v5564, 96
    %v10515 = vpop.permute.xlu0 %10514
    %10516 = vrot.lane.b32.xlu0 %v5565, 96
    %v10517 = vpop.permute.xlu0 %10516
    %10518 = vrot.lane.b32.xlu0 %v5566, 96
    %v10519 = vpop.permute.xlu0 %10518
    %10520 = vrot.lane.b32.xlu0 %v5567, 96
    %v10521 = vpop.permute.xlu0 %10520
    %10522 = vrot.lane.b32.xlu0 %v5568, 96
    %v10523 = vpop.permute.xlu0 %10522
    %10524 = vrot.lane.b32.xlu0 %v5569, 96
    %v10525 = vpop.permute.xlu0 %10524
    %10526 = vrot.lane.b32.xlu0 %v5570, 96
    %v10527 = vpop.permute.xlu0 %10526
    %10528 = vrot.lane.b32.xlu0 %v5571, 96
    %v10529 = vpop.permute.xlu0 %10528
    %10530 = vrot.lane.b32.xlu0 %v5572, 96
    %v10531 = vpop.permute.xlu0 %10530
    %10532 = vrot.lane.b32.xlu0 %v5573, 96
    %v10533 = vpop.permute.xlu0 %10532
    %10534 = vrot.lane.b32.xlu0 %v5574, 96
    %v10535 = vpop.permute.xlu0 %10534
    %10536 = vrot.lane.b32.xlu0 %v5575, 96
    %v10537 = vpop.permute.xlu0 %10536
    %10538 = vrot.lane.b32.xlu0 %v5576, 96
    %v10539 = vpop.permute.xlu0 %10538
    %10540 = vrot.lane.b32.xlu0 %v5577, 96
    %v10541 = vpop.permute.xlu0 %10540
    %10542 = vrot.lane.b32.xlu0 %v5578, 96
    %v10543 = vpop.permute.xlu0 %10542
    %10544 = vrot.lane.b32.xlu0 %v5579, 96
    %v10545 = vpop.permute.xlu0 %10544
    %10546 = vrot.lane.b32.xlu0 %v5580, 96
    %v10547 = vpop.permute.xlu0 %10546
    %10548 = vrot.lane.b32.xlu0 %v5581, 96
    %v10549 = vpop.permute.xlu0 %10548
    %10550 = vrot.lane.b32.xlu0 %v5582, 96
    %v10551 = vpop.permute.xlu0 %10550
    %10552 = vrot.lane.b32.xlu0 %v5583, 96
    %v10553 = vpop.permute.xlu0 %10552
    %10554 = vrot.lane.b32.xlu0 %v5584, 96
    %v10555 = vpop.permute.xlu0 %10554
    %10556 = vrot.lane.b32.xlu0 %v5585, 96
    %v10557 = vpop.permute.xlu0 %10556
    %10558 = vrot.lane.b32.xlu0 %v5586, 96
    %v10559 = vpop.permute.xlu0 %10558
    %10560 = vrot.lane.b32.xlu0 %v5587, 96
    %v10561 = vpop.permute.xlu0 %10560
    %10562 = vrot.lane.b32.xlu0 %v5588, 96
    %v10563 = vpop.permute.xlu0 %10562
    %10564 = vrot.lane.b32.xlu0 %v5589, 96
    %v10565 = vpop.permute.xlu0 %10564
    %10566 = vrot.lane.b32.xlu0 %v5590, 96
    %v10567 = vpop.permute.xlu0 %10566
    %10568 = vrot.lane.b32.xlu0 %v5591, 96
    %v10569 = vpop.permute.xlu0 %10568
    %10570 = vrot.lane.b32.xlu0 %v5592, 96
    %v10571 = vpop.permute.xlu0 %10570
    %10572 = vrot.lane.b32.xlu0 %v5593, 96
    %v10573 = vpop.permute.xlu0 %10572
    %10574 = vrot.lane.b32.xlu0 %v5594, 96
    %v10575 = vpop.permute.xlu0 %10574
    %10576 = vrot.lane.b32.xlu0 %v5595, 96
    %v10577 = vpop.permute.xlu0 %10576
    %10578 = vrot.lane.b32.xlu0 %v5596, 96
    %v10579 = vpop.permute.xlu0 %10578
    %10580 = vrot.lane.b32.xlu0 %v5597, 96
    %v10581 = vpop.permute.xlu0 %10580
    %10582 = vrot.lane.b32.xlu0 %v5598, 96
    %v10583 = vpop.permute.xlu0 %10582
    %10584 = vrot.lane.b32.xlu0 %v5599, 96
    %v10585 = vpop.permute.xlu0 %10584
    %10586 = vrot.lane.b32.xlu0 %v5600, 96
    %v10587 = vpop.permute.xlu0 %10586
    %10588 = vrot.lane.b32.xlu0 %v5601, 96
    %v10589 = vpop.permute.xlu0 %10588
    %10590 = vrot.lane.b32.xlu0 %v5602, 96
    %v10591 = vpop.permute.xlu0 %10590
    %10592 = vrot.lane.b32.xlu0 %v5603, 96
    %v10593 = vpop.permute.xlu0 %10592
    %10594 = vrot.lane.b32.xlu0 %v5604, 96
    %v10595 = vpop.permute.xlu0 %10594
    %10596 = vrot.lane.b32.xlu0 %v5605, 96
    %v10597 = vpop.permute.xlu0 %10596
    %10598 = vrot.lane.b32.xlu0 %v5606, 96
    %v10599 = vpop.permute.xlu0 %10598
    %10600 = vrot.lane.b32.xlu0 %v5607, 96
    %v10601 = vpop.permute.xlu0 %10600
    %10602 = vrot.lane.b32.xlu0 %v5608, 96
    %v10603 = vpop.permute.xlu0 %10602
    %10604 = vrot.lane.b32.xlu0 %v5609, 96
    %v10605 = vpop.permute.xlu0 %10604
    %10606 = vrot.lane.b32.xlu0 %v5610, 96
    %v10607 = vpop.permute.xlu0 %10606
    %10608 = vrot.lane.b32.xlu0 %v5611, 96
    %v10609 = vpop.permute.xlu0 %10608
    %10610 = vrot.lane.b32.xlu0 %v5612, 96
    %v10611 = vpop.permute.xlu0 %10610
    %10612 = vrot.lane.b32.xlu0 %v5613, 96
    %v10613 = vpop.permute.xlu0 %10612
    %10614 = vrot.lane.b32.xlu0 %v5614, 96
    %v10615 = vpop.permute.xlu0 %10614
    %10616 = vrot.lane.b32.xlu0 %v5615, 96
    %v10617 = vpop.permute.xlu0 %10616
    %10618 = vrot.lane.b32.xlu0 %v5616, 96
    %v10619 = vpop.permute.xlu0 %10618
    %10620 = vrot.lane.b32.xlu0 %v5617, 96
    %v10621 = vpop.permute.xlu0 %10620
    %10622 = vrot.lane.b32.xlu0 %v5618, 96
    %v10623 = vpop.permute.xlu0 %10622
    %10624 = vrot.lane.b32.xlu0 %v5619, 96
    %v10625 = vpop.permute.xlu0 %10624
    %10626 = vrot.lane.b32.xlu0 %v5620, 96
    %v10627 = vpop.permute.xlu0 %10626
    %10628 = vrot.lane.b32.xlu0 %v5621, 96
    %v10629 = vpop.permute.xlu0 %10628
    %10630 = vrot.lane.b32.xlu0 %v5622, 96
    %v10631 = vpop.permute.xlu0 %10630
    %10632 = vrot.lane.b32.xlu0 %v5623, 96
    %v10633 = vpop.permute.xlu0 %10632
    %10634 = vrot.lane.b32.xlu0 %v5624, 96
    %v10635 = vpop.permute.xlu0 %10634
    %10636 = vrot.lane.b32.xlu0 %v5625, 96
    %v10637 = vpop.permute.xlu0 %10636
    %10638 = vrot.lane.b32.xlu0 %v5626, 96
    %v10639 = vpop.permute.xlu0 %10638
    %10640 = vrot.lane.b32.xlu0 %v5627, 96
    %v10641 = vpop.permute.xlu0 %10640
    %10642 = vrot.lane.b32.xlu0 %v5628, 96
    %v10643 = vpop.permute.xlu0 %10642
    %10644 = vrot.lane.b32.xlu0 %v5629, 96
    %v10645 = vpop.permute.xlu0 %10644
    %10646 = vrot.lane.b32.xlu0 %v5630, 96
    %v10647 = vpop.permute.xlu0 %10646
    %10648 = vrot.lane.b32.xlu0 %v5631, 96
    %v10649 = vpop.permute.xlu0 %10648
    %10650 = vrot.lane.b32.xlu0 %v5632, 96
    %v10651 = vpop.permute.xlu0 %10650
    %10652 = vrot.lane.b32.xlu0 %v5633, 96
    %v10653 = vpop.permute.xlu0 %10652
    %10654 = vrot.lane.b32.xlu0 %v5634, 96
    %v10655 = vpop.permute.xlu0 %10654
    %10656 = vrot.lane.b32.xlu0 %v5635, 96
    %v10657 = vpop.permute.xlu0 %10656
    %10658 = vrot.lane.b32.xlu0 %v5636, 96
    %v10659 = vpop.permute.xlu0 %10658
    %10660 = vrot.lane.b32.xlu0 %v5637, 96
    %v10661 = vpop.permute.xlu0 %10660
    %10662 = vrot.lane.b32.xlu0 %v5638, 96
    %v10663 = vpop.permute.xlu0 %10662
    %10664 = vrot.lane.b32.xlu0 %v5639, 96
    %v10665 = vpop.permute.xlu0 %10664
    %10666 = vrot.lane.b32.xlu0 %v5640, 96
    %v10667 = vpop.permute.xlu0 %10666
    %10668 = vrot.lane.b32.xlu0 %v5641, 96
    %v10669 = vpop.permute.xlu0 %10668
    %10670 = vrot.lane.b32.xlu0 %v5642, 96
    %v10671 = vpop.permute.xlu0 %10670
    %10672 = vrot.lane.b32.xlu0 %v5643, 96
    %v10673 = vpop.permute.xlu0 %10672
    %10674 = vrot.lane.b32.xlu0 %v5644, 96
    %v10675 = vpop.permute.xlu0 %10674
    %10676 = vrot.lane.b32.xlu0 %v5645, 96
    %v10677 = vpop.permute.xlu0 %10676
    %10678 = vrot.lane.b32.xlu0 %v5646, 96
    %v10679 = vpop.permute.xlu0 %10678
    %10680 = vrot.lane.b32.xlu0 %v5647, 96
    %v10681 = vpop.permute.xlu0 %10680
    %10682 = vrot.lane.b32.xlu0 %v5648, 96
    %v10683 = vpop.permute.xlu0 %10682
    %v10812 = vmul.f32 %v9149, %v10429
    %v10813 = vmul.f32 %v9151, %v10431
    %v10814 = vmul.f32 %v9153, %v10433
    %v10815 = vmul.f32 %v9155, %v10435
    %v10816 = vmul.f32 %v9157, %v10437
    %v10817 = vmul.f32 %v9159, %v10439
    %v10818 = vmul.f32 %v9161, %v10441
    %v10819 = vmul.f32 %v9163, %v10443
    %v10820 = vmul.f32 %v9165, %v10445
    %v10821 = vmul.f32 %v9167, %v10447
    %v10822 = vmul.f32 %v9169, %v10449
    %v10823 = vmul.f32 %v9171, %v10451
    %v10824 = vmul.f32 %v9173, %v10453
    %v10825 = vmul.f32 %v9175, %v10455
    %v10826 = vmul.f32 %v9177, %v10457
    %v10827 = vmul.f32 %v9179, %v10459
    %v10828 = vmul.f32 %v9181, %v10461
    %v10829 = vmul.f32 %v9183, %v10463
    %v10830 = vmul.f32 %v9185, %v10465
    %v10831 = vmul.f32 %v9187, %v10467
    %v10832 = vmul.f32 %v9189, %v10469
    %v10833 = vmul.f32 %v9191, %v10471
    %v10834 = vmul.f32 %v9193, %v10473
    %v10835 = vmul.f32 %v9195, %v10475
    %v10836 = vmul.f32 %v9197, %v10477
    %v10837 = vmul.f32 %v9199, %v10479
    %v10838 = vmul.f32 %v9201, %v10481
    %v10839 = vmul.f32 %v9203, %v10483
    %v10840 = vmul.f32 %v9205, %v10485
    %v10841 = vmul.f32 %v9207, %v10487
    %v10842 = vmul.f32 %v9209, %v10489
    %v10843 = vmul.f32 %v9211, %v10491
    %v10844 = vmul.f32 %v9213, %v10493
    %v10845 = vmul.f32 %v9215, %v10495
    %v10846 = vmul.f32 %v9217, %v10497
    %v10847 = vmul.f32 %v9219, %v10499
    %v10848 = vmul.f32 %v9221, %v10501
    %v10849 = vmul.f32 %v9223, %v10503
    %v10850 = vmul.f32 %v9225, %v10505
    %v10851 = vmul.f32 %v9227, %v10507
    %v10852 = vmul.f32 %v9229, %v10509
    %v10853 = vmul.f32 %v9231, %v10511
    %v10854 = vmul.f32 %v9233, %v10513
    %v10855 = vmul.f32 %v9235, %v10515
    %v10856 = vmul.f32 %v9237, %v10517
    %v10857 = vmul.f32 %v9239, %v10519
    %v10858 = vmul.f32 %v9241, %v10521
    %v10859 = vmul.f32 %v9243, %v10523
    %v10860 = vmul.f32 %v9245, %v10525
    %v10861 = vmul.f32 %v9247, %v10527
    %v10862 = vmul.f32 %v9249, %v10529
    %v10863 = vmul.f32 %v9251, %v10531
    %v10864 = vmul.f32 %v9253, %v10533
    %v10865 = vmul.f32 %v9255, %v10535
    %v10866 = vmul.f32 %v9257, %v10537
    %v10867 = vmul.f32 %v9259, %v10539
    %v10868 = vmul.f32 %v9261, %v10541
    %v10869 = vmul.f32 %v9263, %v10543
    %v10870 = vmul.f32 %v9265, %v10545
    %v10871 = vmul.f32 %v9267, %v10547
    %v10872 = vmul.f32 %v9269, %v10549
    %v10873 = vmul.f32 %v9271, %v10551
    %v10874 = vmul.f32 %v9273, %v10553
    %v10875 = vmul.f32 %v9275, %v10555
    %v10876 = vmul.f32 %v9277, %v10557
    %v10877 = vmul.f32 %v9279, %v10559
    %v10878 = vmul.f32 %v9281, %v10561
    %v10879 = vmul.f32 %v9283, %v10563
    %v10880 = vmul.f32 %v9285, %v10565
    %v10881 = vmul.f32 %v9287, %v10567
    %v10882 = vmul.f32 %v9289, %v10569
    %v10883 = vmul.f32 %v9291, %v10571
    %v10884 = vmul.f32 %v9293, %v10573
    %v10885 = vmul.f32 %v9295, %v10575
    %v10886 = vmul.f32 %v9297, %v10577
    %v10887 = vmul.f32 %v9299, %v10579
    %v10888 = vmul.f32 %v9301, %v10581
    %v10889 = vmul.f32 %v9303, %v10583
    %v10890 = vmul.f32 %v9305, %v10585
    %v10891 = vmul.f32 %v9307, %v10587
    %v10892 = vmul.f32 %v9309, %v10589
    %v10893 = vmul.f32 %v9311, %v10591
    %v10894 = vmul.f32 %v9313, %v10593
    %v10895 = vmul.f32 %v9315, %v10595
    %v10896 = vmul.f32 %v9317, %v10597
    %v10897 = vmul.f32 %v9319, %v10599
    %v10898 = vmul.f32 %v9321, %v10601
    %v10899 = vmul.f32 %v9323, %v10603
    %v10900 = vmul.f32 %v9325, %v10605
    %v10901 = vmul.f32 %v9327, %v10607
    %v10902 = vmul.f32 %v9329, %v10609
    %v10903 = vmul.f32 %v9331, %v10611
    %v10904 = vmul.f32 %v9333, %v10613
    %v10905 = vmul.f32 %v9335, %v10615
    %v10906 = vmul.f32 %v9337, %v10617
    %v10907 = vmul.f32 %v9339, %v10619
    %v10908 = vmul.f32 %v9341, %v10621
    %v10909 = vmul.f32 %v9343, %v10623
    %v10910 = vmul.f32 %v9345, %v10625
    %v10911 = vmul.f32 %v9347, %v10627
    %v10912 = vmul.f32 %v9349, %v10629
    %v10913 = vmul.f32 %v9351, %v10631
    %v10914 = vmul.f32 %v9353, %v10633
    %v10915 = vmul.f32 %v9355, %v10635
    %v10916 = vmul.f32 %v9357, %v10637
    %v10917 = vmul.f32 %v9359, %v10639
    %v10918 = vmul.f32 %v9361, %v10641
    %v10919 = vmul.f32 %v9363, %v10643
    %v10920 = vmul.f32 %v9365, %v10645
    %v10921 = vmul.f32 %v9367, %v10647
    %v10922 = vmul.f32 %v9369, %v10649
    %v10923 = vmul.f32 %v9371, %v10651
    %v10924 = vmul.f32 %v9373, %v10653
    %v10925 = vmul.f32 %v9375, %v10655
    %v10926 = vmul.f32 %v9377, %v10657
    %v10927 = vmul.f32 %v9379, %v10659
    %v10928 = vmul.f32 %v9381, %v10661
    %v10929 = vmul.f32 %v9383, %v10663
    %v10930 = vmul.f32 %v9385, %v10665
    %v10931 = vmul.f32 %v9387, %v10667
    %v10932 = vmul.f32 %v9389, %v10669
    %v10933 = vmul.f32 %v9391, %v10671
    %v10934 = vmul.f32 %v9393, %v10673
    %v10935 = vmul.f32 %v9395, %v10675
    %v10936 = vmul.f32 %v9397, %v10677
    %v10937 = vmul.f32 %v9399, %v10679
    %v10938 = vmul.f32 %v9401, %v10681
    %v10939 = vmul.f32 %v9403, %v10683
    %v10940 = vsel %vm3430, %v10812, 0.0
    %v10941 = vrot.slane %v10940, 4
    %v10942 = vadd.f32 %v10940, %v10941
    %v10943 = vrot.slane %v10942, 2
    %v10944 = vadd.f32 %v10942, %v10943
    %v10945 = vrot.slane %v10944, 1
    %v10946 = vadd.f32 %v10944, %v10945
    %v10947 = vsel %vm3430, %v10813, 0.0
    %v10948 = vrot.slane %v10947, 4
    %v10949 = vadd.f32 %v10947, %v10948
    %v10950 = vrot.slane %v10949, 2
    %v10951 = vadd.f32 %v10949, %v10950
    %v10952 = vrot.slane %v10951, 1
    %v10953 = vadd.f32 %v10951, %v10952
    %v10954 = vsel %vm3430, %v10814, 0.0
    %v10955 = vrot.slane %v10954, 4
    %v10956 = vadd.f32 %v10954, %v10955
    %v10957 = vrot.slane %v10956, 2
    %v10958 = vadd.f32 %v10956, %v10957
    %v10959 = vrot.slane %v10958, 1
    %v10960 = vadd.f32 %v10958, %v10959
    %v10961 = vsel %vm3430, %v10815, 0.0
    %v10962 = vrot.slane %v10961, 4
    %v10963 = vadd.f32 %v10961, %v10962
    %v10964 = vrot.slane %v10963, 2
    %v10965 = vadd.f32 %v10963, %v10964
    %v10966 = vrot.slane %v10965, 1
    %v10967 = vadd.f32 %v10965, %v10966
    %v10968 = vsel %vm3430, %v10816, 0.0
    %v10969 = vrot.slane %v10968, 4
    %v10970 = vadd.f32 %v10968, %v10969
    %v10971 = vrot.slane %v10970, 2
    %v10972 = vadd.f32 %v10970, %v10971
    %v10973 = vrot.slane %v10972, 1
    %v10974 = vadd.f32 %v10972, %v10973
    %v10975 = vsel %vm3430, %v10817, 0.0
    %v10976 = vrot.slane %v10975, 4
    %v10977 = vadd.f32 %v10975, %v10976
    %v10978 = vrot.slane %v10977, 2
    %v10979 = vadd.f32 %v10977, %v10978
    %v10980 = vrot.slane %v10979, 1
    %v10981 = vadd.f32 %v10979, %v10980
    %v10982 = vsel %vm3430, %v10818, 0.0
    %v10983 = vrot.slane %v10982, 4
    %v10984 = vadd.f32 %v10982, %v10983
    %v10985 = vrot.slane %v10984, 2
    %v10986 = vadd.f32 %v10984, %v10985
    %v10987 = vrot.slane %v10986, 1
    %v10988 = vadd.f32 %v10986, %v10987
    %v10989 = vsel %vm3430, %v10819, 0.0
    %v10990 = vrot.slane %v10989, 4
    %v10991 = vadd.f32 %v10989, %v10990
    %v10992 = vrot.slane %v10991, 2
    %v10993 = vadd.f32 %v10991, %v10992
    %v10994 = vrot.slane %v10993, 1
    %v10995 = vadd.f32 %v10993, %v10994
    %v10996 = vsel %vm3430, %v10820, 0.0
    %v10997 = vrot.slane %v10996, 4
    %v10998 = vadd.f32 %v10996, %v10997
    %v10999 = vrot.slane %v10998, 2
    %v11000 = vadd.f32 %v10998, %v10999
    %v11001 = vrot.slane %v11000, 1
    %v11002 = vadd.f32 %v11000, %v11001
    %v11003 = vsel %vm3430, %v10821, 0.0
    %v11004 = vrot.slane %v11003, 4
    %v11005 = vadd.f32 %v11003, %v11004
    %v11006 = vrot.slane %v11005, 2
    %v11007 = vadd.f32 %v11005, %v11006
    %v11008 = vrot.slane %v11007, 1
    %v11009 = vadd.f32 %v11007, %v11008
    %v11010 = vsel %vm3430, %v10822, 0.0
    %v11011 = vrot.slane %v11010, 4
    %v11012 = vadd.f32 %v11010, %v11011
    %v11013 = vrot.slane %v11012, 2
    %v11014 = vadd.f32 %v11012, %v11013
    %v11015 = vrot.slane %v11014, 1
    %v11016 = vadd.f32 %v11014, %v11015
    %v11017 = vsel %vm3430, %v10823, 0.0
    %v11018 = vrot.slane %v11017, 4
    %v11019 = vadd.f32 %v11017, %v11018
    %v11020 = vrot.slane %v11019, 2
    %v11021 = vadd.f32 %v11019, %v11020
    %v11022 = vrot.slane %v11021, 1
    %v11023 = vadd.f32 %v11021, %v11022
    %v11024 = vsel %vm3430, %v10824, 0.0
    %v11025 = vrot.slane %v11024, 4
    %v11026 = vadd.f32 %v11024, %v11025
    %v11027 = vrot.slane %v11026, 2
    %v11028 = vadd.f32 %v11026, %v11027
    %v11029 = vrot.slane %v11028, 1
    %v11030 = vadd.f32 %v11028, %v11029
    %v11031 = vsel %vm3430, %v10825, 0.0
    %v11032 = vrot.slane %v11031, 4
    %v11033 = vadd.f32 %v11031, %v11032
    %v11034 = vrot.slane %v11033, 2
    %v11035 = vadd.f32 %v11033, %v11034
    %v11036 = vrot.slane %v11035, 1
    %v11037 = vadd.f32 %v11035, %v11036
    %v11038 = vsel %vm3430, %v10826, 0.0
    %v11039 = vrot.slane %v11038, 4
    %v11040 = vadd.f32 %v11038, %v11039
    %v11041 = vrot.slane %v11040, 2
    %v11042 = vadd.f32 %v11040, %v11041
    %v11043 = vrot.slane %v11042, 1
    %v11044 = vadd.f32 %v11042, %v11043
    %v11045 = vsel %vm3430, %v10827, 0.0
    %v11046 = vrot.slane %v11045, 4
    %v11047 = vadd.f32 %v11045, %v11046
    %v11048 = vrot.slane %v11047, 2
    %v11049 = vadd.f32 %v11047, %v11048
    %v11050 = vrot.slane %v11049, 1
    %v11051 = vadd.f32 %v11049, %v11050
    %v11052 = vsel %vm3430, %v10828, 0.0
    %v11053 = vrot.slane %v11052, 4
    %v11054 = vadd.f32 %v11052, %v11053
    %v11055 = vrot.slane %v11054, 2
    %v11056 = vadd.f32 %v11054, %v11055
    %v11057 = vrot.slane %v11056, 1
    %v11058 = vadd.f32 %v11056, %v11057
    %v11059 = vsel %vm3430, %v10829, 0.0
    %v11060 = vrot.slane %v11059, 4
    %v11061 = vadd.f32 %v11059, %v11060
    %v11062 = vrot.slane %v11061, 2
    %v11063 = vadd.f32 %v11061, %v11062
    %v11064 = vrot.slane %v11063, 1
    %v11065 = vadd.f32 %v11063, %v11064
    %v11066 = vsel %vm3430, %v10830, 0.0
    %v11067 = vrot.slane %v11066, 4
    %v11068 = vadd.f32 %v11066, %v11067
    %v11069 = vrot.slane %v11068, 2
    %v11070 = vadd.f32 %v11068, %v11069
    %v11071 = vrot.slane %v11070, 1
    %v11072 = vadd.f32 %v11070, %v11071
    %v11073 = vsel %vm3430, %v10831, 0.0
    %v11074 = vrot.slane %v11073, 4
    %v11075 = vadd.f32 %v11073, %v11074
    %v11076 = vrot.slane %v11075, 2
    %v11077 = vadd.f32 %v11075, %v11076
    %v11078 = vrot.slane %v11077, 1
    %v11079 = vadd.f32 %v11077, %v11078
    %v11080 = vsel %vm3430, %v10832, 0.0
    %v11081 = vrot.slane %v11080, 4
    %v11082 = vadd.f32 %v11080, %v11081
    %v11083 = vrot.slane %v11082, 2
    %v11084 = vadd.f32 %v11082, %v11083
    %v11085 = vrot.slane %v11084, 1
    %v11086 = vadd.f32 %v11084, %v11085
    %v11087 = vsel %vm3430, %v10833, 0.0
    %v11088 = vrot.slane %v11087, 4
    %v11089 = vadd.f32 %v11087, %v11088
    %v11090 = vrot.slane %v11089, 2
    %v11091 = vadd.f32 %v11089, %v11090
    %v11092 = vrot.slane %v11091, 1
    %v11093 = vadd.f32 %v11091, %v11092
    %v11094 = vsel %vm3430, %v10834, 0.0
    %v11095 = vrot.slane %v11094, 4
    %v11096 = vadd.f32 %v11094, %v11095
    %v11097 = vrot.slane %v11096, 2
    %v11098 = vadd.f32 %v11096, %v11097
    %v11099 = vrot.slane %v11098, 1
    %v11100 = vadd.f32 %v11098, %v11099
    %v11101 = vsel %vm3430, %v10835, 0.0
    %v11102 = vrot.slane %v11101, 4
    %v11103 = vadd.f32 %v11101, %v11102
    %v11104 = vrot.slane %v11103, 2
    %v11105 = vadd.f32 %v11103, %v11104
    %v11106 = vrot.slane %v11105, 1
    %v11107 = vadd.f32 %v11105, %v11106
    %v11108 = vsel %vm3430, %v10836, 0.0
    %v11109 = vrot.slane %v11108, 4
    %v11110 = vadd.f32 %v11108, %v11109
    %v11111 = vrot.slane %v11110, 2
    %v11112 = vadd.f32 %v11110, %v11111
    %v11113 = vrot.slane %v11112, 1
    %v11114 = vadd.f32 %v11112, %v11113
    %v11115 = vsel %vm3430, %v10837, 0.0
    %v11116 = vrot.slane %v11115, 4
    %v11117 = vadd.f32 %v11115, %v11116
    %v11118 = vrot.slane %v11117, 2
    %v11119 = vadd.f32 %v11117, %v11118
    %v11120 = vrot.slane %v11119, 1
    %v11121 = vadd.f32 %v11119, %v11120
    %v11122 = vsel %vm3430, %v10838, 0.0
    %v11123 = vrot.slane %v11122, 4
    %v11124 = vadd.f32 %v11122, %v11123
    %v11125 = vrot.slane %v11124, 2
    %v11126 = vadd.f32 %v11124, %v11125
    %v11127 = vrot.slane %v11126, 1
    %v11128 = vadd.f32 %v11126, %v11127
    %v11129 = vsel %vm3430, %v10839, 0.0
    %v11130 = vrot.slane %v11129, 4
    %v11131 = vadd.f32 %v11129, %v11130
    %v11132 = vrot.slane %v11131, 2
    %v11133 = vadd.f32 %v11131, %v11132
    %v11134 = vrot.slane %v11133, 1
    %v11135 = vadd.f32 %v11133, %v11134
    %v11136 = vsel %vm3430, %v10840, 0.0
    %v11137 = vrot.slane %v11136, 4
    %v11138 = vadd.f32 %v11136, %v11137
    %v11139 = vrot.slane %v11138, 2
    %v11140 = vadd.f32 %v11138, %v11139
    %v11141 = vrot.slane %v11140, 1
    %v11142 = vadd.f32 %v11140, %v11141
    %v11143 = vsel %vm3430, %v10841, 0.0
    %v11144 = vrot.slane %v11143, 4
    %v11145 = vadd.f32 %v11143, %v11144
    %v11146 = vrot.slane %v11145, 2
    %v11147 = vadd.f32 %v11145, %v11146
    %v11148 = vrot.slane %v11147, 1
    %v11149 = vadd.f32 %v11147, %v11148
    %v11150 = vsel %vm3430, %v10842, 0.0
    %v11151 = vrot.slane %v11150, 4
    %v11152 = vadd.f32 %v11150, %v11151
    %v11153 = vrot.slane %v11152, 2
    %v11154 = vadd.f32 %v11152, %v11153
    %v11155 = vrot.slane %v11154, 1
    %v11156 = vadd.f32 %v11154, %v11155
    %v11157 = vsel %vm3430, %v10843, 0.0
    %v11158 = vrot.slane %v11157, 4
    %v11159 = vadd.f32 %v11157, %v11158
    %v11160 = vrot.slane %v11159, 2
    %v11161 = vadd.f32 %v11159, %v11160
    %v11162 = vrot.slane %v11161, 1
    %v11163 = vadd.f32 %v11161, %v11162
    %v11164 = vsel %vm3430, %v10844, 0.0
    %v11165 = vrot.slane %v11164, 4
    %v11166 = vadd.f32 %v11164, %v11165
    %v11167 = vrot.slane %v11166, 2
    %v11168 = vadd.f32 %v11166, %v11167
    %v11169 = vrot.slane %v11168, 1
    %v11170 = vadd.f32 %v11168, %v11169
    %v11171 = vsel %vm3430, %v10845, 0.0
    %v11172 = vrot.slane %v11171, 4
    %v11173 = vadd.f32 %v11171, %v11172
    %v11174 = vrot.slane %v11173, 2
    %v11175 = vadd.f32 %v11173, %v11174
    %v11176 = vrot.slane %v11175, 1
    %v11177 = vadd.f32 %v11175, %v11176
    %v11178 = vsel %vm3430, %v10846, 0.0
    %v11179 = vrot.slane %v11178, 4
    %v11180 = vadd.f32 %v11178, %v11179
    %v11181 = vrot.slane %v11180, 2
    %v11182 = vadd.f32 %v11180, %v11181
    %v11183 = vrot.slane %v11182, 1
    %v11184 = vadd.f32 %v11182, %v11183
    %v11185 = vsel %vm3430, %v10847, 0.0
    %v11186 = vrot.slane %v11185, 4
    %v11187 = vadd.f32 %v11185, %v11186
    %v11188 = vrot.slane %v11187, 2
    %v11189 = vadd.f32 %v11187, %v11188
    %v11190 = vrot.slane %v11189, 1
    %v11191 = vadd.f32 %v11189, %v11190
    %v11192 = vsel %vm3430, %v10848, 0.0
    %v11193 = vrot.slane %v11192, 4
    %v11194 = vadd.f32 %v11192, %v11193
    %v11195 = vrot.slane %v11194, 2
    %v11196 = vadd.f32 %v11194, %v11195
    %v11197 = vrot.slane %v11196, 1
    %v11198 = vadd.f32 %v11196, %v11197
    %v11199 = vsel %vm3430, %v10849, 0.0
    %v11200 = vrot.slane %v11199, 4
    %v11201 = vadd.f32 %v11199, %v11200
    %v11202 = vrot.slane %v11201, 2
    %v11203 = vadd.f32 %v11201, %v11202
    %v11204 = vrot.slane %v11203, 1
    %v11205 = vadd.f32 %v11203, %v11204
    %v11206 = vsel %vm3430, %v10850, 0.0
    %v11207 = vrot.slane %v11206, 4
    %v11208 = vadd.f32 %v11206, %v11207
    %v11209 = vrot.slane %v11208, 2
    %v11210 = vadd.f32 %v11208, %v11209
    %v11211 = vrot.slane %v11210, 1
    %v11212 = vadd.f32 %v11210, %v11211
    %v11213 = vsel %vm3430, %v10851, 0.0
    %v11214 = vrot.slane %v11213, 4
    %v11215 = vadd.f32 %v11213, %v11214
    %v11216 = vrot.slane %v11215, 2
    %v11217 = vadd.f32 %v11215, %v11216
    %v11218 = vrot.slane %v11217, 1
    %v11219 = vadd.f32 %v11217, %v11218
    %v11220 = vsel %vm3430, %v10852, 0.0
    %v11221 = vrot.slane %v11220, 4
    %v11222 = vadd.f32 %v11220, %v11221
    %v11223 = vrot.slane %v11222, 2
    %v11224 = vadd.f32 %v11222, %v11223
    %v11225 = vrot.slane %v11224, 1
    %v11226 = vadd.f32 %v11224, %v11225
    %v11227 = vsel %vm3430, %v10853, 0.0
    %v11228 = vrot.slane %v11227, 4
    %v11229 = vadd.f32 %v11227, %v11228
    %v11230 = vrot.slane %v11229, 2
    %v11231 = vadd.f32 %v11229, %v11230
    %v11232 = vrot.slane %v11231, 1
    %v11233 = vadd.f32 %v11231, %v11232
    %v11234 = vsel %vm3430, %v10854, 0.0
    %v11235 = vrot.slane %v11234, 4
    %v11236 = vadd.f32 %v11234, %v11235
    %v11237 = vrot.slane %v11236, 2
    %v11238 = vadd.f32 %v11236, %v11237
    %v11239 = vrot.slane %v11238, 1
    %v11240 = vadd.f32 %v11238, %v11239
    %v11241 = vsel %vm3430, %v10855, 0.0
    %v11242 = vrot.slane %v11241, 4
    %v11243 = vadd.f32 %v11241, %v11242
    %v11244 = vrot.slane %v11243, 2
    %v11245 = vadd.f32 %v11243, %v11244
    %v11246 = vrot.slane %v11245, 1
    %v11247 = vadd.f32 %v11245, %v11246
    %v11248 = vsel %vm3430, %v10856, 0.0
    %v11249 = vrot.slane %v11248, 4
    %v11250 = vadd.f32 %v11248, %v11249
    %v11251 = vrot.slane %v11250, 2
    %v11252 = vadd.f32 %v11250, %v11251
    %v11253 = vrot.slane %v11252, 1
    %v11254 = vadd.f32 %v11252, %v11253
    %v11255 = vsel %vm3430, %v10857, 0.0
    %v11256 = vrot.slane %v11255, 4
    %v11257 = vadd.f32 %v11255, %v11256
    %v11258 = vrot.slane %v11257, 2
    %v11259 = vadd.f32 %v11257, %v11258
    %v11260 = vrot.slane %v11259, 1
    %v11261 = vadd.f32 %v11259, %v11260
    %v11262 = vsel %vm3430, %v10858, 0.0
    %v11263 = vrot.slane %v11262, 4
    %v11264 = vadd.f32 %v11262, %v11263
    %v11265 = vrot.slane %v11264, 2
    %v11266 = vadd.f32 %v11264, %v11265
    %v11267 = vrot.slane %v11266, 1
    %v11268 = vadd.f32 %v11266, %v11267
    %v11269 = vsel %vm3430, %v10859, 0.0
    %v11270 = vrot.slane %v11269, 4
    %v11271 = vadd.f32 %v11269, %v11270
    %v11272 = vrot.slane %v11271, 2
    %v11273 = vadd.f32 %v11271, %v11272
    %v11274 = vrot.slane %v11273, 1
    %v11275 = vadd.f32 %v11273, %v11274
    %v11276 = vsel %vm3430, %v10860, 0.0
    %v11277 = vrot.slane %v11276, 4
    %v11278 = vadd.f32 %v11276, %v11277
    %v11279 = vrot.slane %v11278, 2
    %v11280 = vadd.f32 %v11278, %v11279
    %v11281 = vrot.slane %v11280, 1
    %v11282 = vadd.f32 %v11280, %v11281
    %v11283 = vsel %vm3430, %v10861, 0.0
    %v11284 = vrot.slane %v11283, 4
    %v11285 = vadd.f32 %v11283, %v11284
    %v11286 = vrot.slane %v11285, 2
    %v11287 = vadd.f32 %v11285, %v11286
    %v11288 = vrot.slane %v11287, 1
    %v11289 = vadd.f32 %v11287, %v11288
    %v11290 = vsel %vm3430, %v10862, 0.0
    %v11291 = vrot.slane %v11290, 4
    %v11292 = vadd.f32 %v11290, %v11291
    %v11293 = vrot.slane %v11292, 2
    %v11294 = vadd.f32 %v11292, %v11293
    %v11295 = vrot.slane %v11294, 1
    %v11296 = vadd.f32 %v11294, %v11295
    %v11297 = vsel %vm3430, %v10863, 0.0
    %v11298 = vrot.slane %v11297, 4
    %v11299 = vadd.f32 %v11297, %v11298
    %v11300 = vrot.slane %v11299, 2
    %v11301 = vadd.f32 %v11299, %v11300
    %v11302 = vrot.slane %v11301, 1
    %v11303 = vadd.f32 %v11301, %v11302
    %v11304 = vsel %vm3430, %v10864, 0.0
    %v11305 = vrot.slane %v11304, 4
    %v11306 = vadd.f32 %v11304, %v11305
    %v11307 = vrot.slane %v11306, 2
    %v11308 = vadd.f32 %v11306, %v11307
    %v11309 = vrot.slane %v11308, 1
    %v11310 = vadd.f32 %v11308, %v11309
    %v11311 = vsel %vm3430, %v10865, 0.0
    %v11312 = vrot.slane %v11311, 4
    %v11313 = vadd.f32 %v11311, %v11312
    %v11314 = vrot.slane %v11313, 2
    %v11315 = vadd.f32 %v11313, %v11314
    %v11316 = vrot.slane %v11315, 1
    %v11317 = vadd.f32 %v11315, %v11316
    %v11318 = vsel %vm3430, %v10866, 0.0
    %v11319 = vrot.slane %v11318, 4
    %v11320 = vadd.f32 %v11318, %v11319
    %v11321 = vrot.slane %v11320, 2
    %v11322 = vadd.f32 %v11320, %v11321
    %v11323 = vrot.slane %v11322, 1
    %v11324 = vadd.f32 %v11322, %v11323
    %v11325 = vsel %vm3430, %v10867, 0.0
    %v11326 = vrot.slane %v11325, 4
    %v11327 = vadd.f32 %v11325, %v11326
    %v11328 = vrot.slane %v11327, 2
    %v11329 = vadd.f32 %v11327, %v11328
    %v11330 = vrot.slane %v11329, 1
    %v11331 = vadd.f32 %v11329, %v11330
    %v11332 = vsel %vm3430, %v10868, 0.0
    %v11333 = vrot.slane %v11332, 4
    %v11334 = vadd.f32 %v11332, %v11333
    %v11335 = vrot.slane %v11334, 2
    %v11336 = vadd.f32 %v11334, %v11335
    %v11337 = vrot.slane %v11336, 1
    %v11338 = vadd.f32 %v11336, %v11337
    %v11339 = vsel %vm3430, %v10869, 0.0
    %v11340 = vrot.slane %v11339, 4
    %v11341 = vadd.f32 %v11339, %v11340
    %v11342 = vrot.slane %v11341, 2
    %v11343 = vadd.f32 %v11341, %v11342
    %v11344 = vrot.slane %v11343, 1
    %v11345 = vadd.f32 %v11343, %v11344
    %v11346 = vsel %vm3430, %v10870, 0.0
    %v11347 = vrot.slane %v11346, 4
    %v11348 = vadd.f32 %v11346, %v11347
    %v11349 = vrot.slane %v11348, 2
    %v11350 = vadd.f32 %v11348, %v11349
    %v11351 = vrot.slane %v11350, 1
    %v11352 = vadd.f32 %v11350, %v11351
    %v11353 = vsel %vm3430, %v10871, 0.0
    %v11354 = vrot.slane %v11353, 4
    %v11355 = vadd.f32 %v11353, %v11354
    %v11356 = vrot.slane %v11355, 2
    %v11357 = vadd.f32 %v11355, %v11356
    %v11358 = vrot.slane %v11357, 1
    %v11359 = vadd.f32 %v11357, %v11358
    %v11360 = vsel %vm3430, %v10872, 0.0
    %v11361 = vrot.slane %v11360, 4
    %v11362 = vadd.f32 %v11360, %v11361
    %v11363 = vrot.slane %v11362, 2
    %v11364 = vadd.f32 %v11362, %v11363
    %v11365 = vrot.slane %v11364, 1
    %v11366 = vadd.f32 %v11364, %v11365
    %v11367 = vsel %vm3430, %v10873, 0.0
    %v11368 = vrot.slane %v11367, 4
    %v11369 = vadd.f32 %v11367, %v11368
    %v11370 = vrot.slane %v11369, 2
    %v11371 = vadd.f32 %v11369, %v11370
    %v11372 = vrot.slane %v11371, 1
    %v11373 = vadd.f32 %v11371, %v11372
    %v11374 = vsel %vm3430, %v10874, 0.0
    %v11375 = vrot.slane %v11374, 4
    %v11376 = vadd.f32 %v11374, %v11375
    %v11377 = vrot.slane %v11376, 2
    %v11378 = vadd.f32 %v11376, %v11377
    %v11379 = vrot.slane %v11378, 1
    %v11380 = vadd.f32 %v11378, %v11379
    %v11381 = vsel %vm3430, %v10875, 0.0
    %v11382 = vrot.slane %v11381, 4
    %v11383 = vadd.f32 %v11381, %v11382
    %v11384 = vrot.slane %v11383, 2
    %v11385 = vadd.f32 %v11383, %v11384
    %v11386 = vrot.slane %v11385, 1
    %v11387 = vadd.f32 %v11385, %v11386
    %v11388 = vsel %vm3430, %v10876, 0.0
    %v11389 = vrot.slane %v11388, 4
    %v11390 = vadd.f32 %v11388, %v11389
    %v11391 = vrot.slane %v11390, 2
    %v11392 = vadd.f32 %v11390, %v11391
    %v11393 = vrot.slane %v11392, 1
    %v11394 = vadd.f32 %v11392, %v11393
    %v11395 = vsel %vm3430, %v10877, 0.0
    %v11396 = vrot.slane %v11395, 4
    %v11397 = vadd.f32 %v11395, %v11396
    %v11398 = vrot.slane %v11397, 2
    %v11399 = vadd.f32 %v11397, %v11398
    %v11400 = vrot.slane %v11399, 1
    %v11401 = vadd.f32 %v11399, %v11400
    %v11402 = vsel %vm3430, %v10878, 0.0
    %v11403 = vrot.slane %v11402, 4
    %v11404 = vadd.f32 %v11402, %v11403
    %v11405 = vrot.slane %v11404, 2
    %v11406 = vadd.f32 %v11404, %v11405
    %v11407 = vrot.slane %v11406, 1
    %v11408 = vadd.f32 %v11406, %v11407
    %v11409 = vsel %vm3430, %v10879, 0.0
    %v11410 = vrot.slane %v11409, 4
    %v11411 = vadd.f32 %v11409, %v11410
    %v11412 = vrot.slane %v11411, 2
    %v11413 = vadd.f32 %v11411, %v11412
    %v11414 = vrot.slane %v11413, 1
    %v11415 = vadd.f32 %v11413, %v11414
    %v11416 = vsel %vm3430, %v10880, 0.0
    %v11417 = vrot.slane %v11416, 4
    %v11418 = vadd.f32 %v11416, %v11417
    %v11419 = vrot.slane %v11418, 2
    %v11420 = vadd.f32 %v11418, %v11419
    %v11421 = vrot.slane %v11420, 1
    %v11422 = vadd.f32 %v11420, %v11421
    %v11423 = vsel %vm3430, %v10881, 0.0
    %v11424 = vrot.slane %v11423, 4
    %v11425 = vadd.f32 %v11423, %v11424
    %v11426 = vrot.slane %v11425, 2
    %v11427 = vadd.f32 %v11425, %v11426
    %v11428 = vrot.slane %v11427, 1
    %v11429 = vadd.f32 %v11427, %v11428
    %v11430 = vsel %vm3430, %v10882, 0.0
    %v11431 = vrot.slane %v11430, 4
    %v11432 = vadd.f32 %v11430, %v11431
    %v11433 = vrot.slane %v11432, 2
    %v11434 = vadd.f32 %v11432, %v11433
    %v11435 = vrot.slane %v11434, 1
    %v11436 = vadd.f32 %v11434, %v11435
    %v11437 = vsel %vm3430, %v10883, 0.0
    %v11438 = vrot.slane %v11437, 4
    %v11439 = vadd.f32 %v11437, %v11438
    %v11440 = vrot.slane %v11439, 2
    %v11441 = vadd.f32 %v11439, %v11440
    %v11442 = vrot.slane %v11441, 1
    %v11443 = vadd.f32 %v11441, %v11442
    %v11444 = vsel %vm3430, %v10884, 0.0
    %v11445 = vrot.slane %v11444, 4
    %v11446 = vadd.f32 %v11444, %v11445
    %v11447 = vrot.slane %v11446, 2
    %v11448 = vadd.f32 %v11446, %v11447
    %v11449 = vrot.slane %v11448, 1
    %v11450 = vadd.f32 %v11448, %v11449
    %v11451 = vsel %vm3430, %v10885, 0.0
    %v11452 = vrot.slane %v11451, 4
    %v11453 = vadd.f32 %v11451, %v11452
    %v11454 = vrot.slane %v11453, 2
    %v11455 = vadd.f32 %v11453, %v11454
    %v11456 = vrot.slane %v11455, 1
    %v11457 = vadd.f32 %v11455, %v11456
    %v11458 = vsel %vm3430, %v10886, 0.0
    %v11459 = vrot.slane %v11458, 4
    %v11460 = vadd.f32 %v11458, %v11459
    %v11461 = vrot.slane %v11460, 2
    %v11462 = vadd.f32 %v11460, %v11461
    %v11463 = vrot.slane %v11462, 1
    %v11464 = vadd.f32 %v11462, %v11463
    %v11465 = vsel %vm3430, %v10887, 0.0
    %v11466 = vrot.slane %v11465, 4
    %v11467 = vadd.f32 %v11465, %v11466
    %v11468 = vrot.slane %v11467, 2
    %v11469 = vadd.f32 %v11467, %v11468
    %v11470 = vrot.slane %v11469, 1
    %v11471 = vadd.f32 %v11469, %v11470
    %v11472 = vsel %vm3430, %v10888, 0.0
    %v11473 = vrot.slane %v11472, 4
    %v11474 = vadd.f32 %v11472, %v11473
    %v11475 = vrot.slane %v11474, 2
    %v11476 = vadd.f32 %v11474, %v11475
    %v11477 = vrot.slane %v11476, 1
    %v11478 = vadd.f32 %v11476, %v11477
    %v11479 = vsel %vm3430, %v10889, 0.0
    %v11480 = vrot.slane %v11479, 4
    %v11481 = vadd.f32 %v11479, %v11480
    %v11482 = vrot.slane %v11481, 2
    %v11483 = vadd.f32 %v11481, %v11482
    %v11484 = vrot.slane %v11483, 1
    %v11485 = vadd.f32 %v11483, %v11484
    %v11486 = vsel %vm3430, %v10890, 0.0
    %v11487 = vrot.slane %v11486, 4
    %v11488 = vadd.f32 %v11486, %v11487
    %v11489 = vrot.slane %v11488, 2
    %v11490 = vadd.f32 %v11488, %v11489
    %v11491 = vrot.slane %v11490, 1
    %v11492 = vadd.f32 %v11490, %v11491
    %v11493 = vsel %vm3430, %v10891, 0.0
    %v11494 = vrot.slane %v11493, 4
    %v11495 = vadd.f32 %v11493, %v11494
    %v11496 = vrot.slane %v11495, 2
    %v11497 = vadd.f32 %v11495, %v11496
    %v11498 = vrot.slane %v11497, 1
    %v11499 = vadd.f32 %v11497, %v11498
    %v11500 = vsel %vm3430, %v10892, 0.0
    %v11501 = vrot.slane %v11500, 4
    %v11502 = vadd.f32 %v11500, %v11501
    %v11503 = vrot.slane %v11502, 2
    %v11504 = vadd.f32 %v11502, %v11503
    %v11505 = vrot.slane %v11504, 1
    %v11506 = vadd.f32 %v11504, %v11505
    %v11507 = vsel %vm3430, %v10893, 0.0
    %v11508 = vrot.slane %v11507, 4
    %v11509 = vadd.f32 %v11507, %v11508
    %v11510 = vrot.slane %v11509, 2
    %v11511 = vadd.f32 %v11509, %v11510
    %v11512 = vrot.slane %v11511, 1
    %v11513 = vadd.f32 %v11511, %v11512
    %v11514 = vsel %vm3430, %v10894, 0.0
    %v11515 = vrot.slane %v11514, 4
    %v11516 = vadd.f32 %v11514, %v11515
    %v11517 = vrot.slane %v11516, 2
    %v11518 = vadd.f32 %v11516, %v11517
    %v11519 = vrot.slane %v11518, 1
    %v11520 = vadd.f32 %v11518, %v11519
    %v11521 = vsel %vm3430, %v10895, 0.0
    %v11522 = vrot.slane %v11521, 4
    %v11523 = vadd.f32 %v11521, %v11522
    %v11524 = vrot.slane %v11523, 2
    %v11525 = vadd.f32 %v11523, %v11524
    %v11526 = vrot.slane %v11525, 1
    %v11527 = vadd.f32 %v11525, %v11526
    %v11528 = vsel %vm3430, %v10896, 0.0
    %v11529 = vrot.slane %v11528, 4
    %v11530 = vadd.f32 %v11528, %v11529
    %v11531 = vrot.slane %v11530, 2
    %v11532 = vadd.f32 %v11530, %v11531
    %v11533 = vrot.slane %v11532, 1
    %v11534 = vadd.f32 %v11532, %v11533
    %v11535 = vsel %vm3430, %v10897, 0.0
    %v11536 = vrot.slane %v11535, 4
    %v11537 = vadd.f32 %v11535, %v11536
    %v11538 = vrot.slane %v11537, 2
    %v11539 = vadd.f32 %v11537, %v11538
    %v11540 = vrot.slane %v11539, 1
    %v11541 = vadd.f32 %v11539, %v11540
    %v11542 = vsel %vm3430, %v10898, 0.0
    %v11543 = vrot.slane %v11542, 4
    %v11544 = vadd.f32 %v11542, %v11543
    %v11545 = vrot.slane %v11544, 2
    %v11546 = vadd.f32 %v11544, %v11545
    %v11547 = vrot.slane %v11546, 1
    %v11548 = vadd.f32 %v11546, %v11547
    %v11549 = vsel %vm3430, %v10899, 0.0
    %v11550 = vrot.slane %v11549, 4
    %v11551 = vadd.f32 %v11549, %v11550
    %v11552 = vrot.slane %v11551, 2
    %v11553 = vadd.f32 %v11551, %v11552
    %v11554 = vrot.slane %v11553, 1
    %v11555 = vadd.f32 %v11553, %v11554
    %v11556 = vsel %vm3430, %v10900, 0.0
    %v11557 = vrot.slane %v11556, 4
    %v11558 = vadd.f32 %v11556, %v11557
    %v11559 = vrot.slane %v11558, 2
    %v11560 = vadd.f32 %v11558, %v11559
    %v11561 = vrot.slane %v11560, 1
    %v11562 = vadd.f32 %v11560, %v11561
    %v11563 = vsel %vm3430, %v10901, 0.0
    %v11564 = vrot.slane %v11563, 4
    %v11565 = vadd.f32 %v11563, %v11564
    %v11566 = vrot.slane %v11565, 2
    %v11567 = vadd.f32 %v11565, %v11566
    %v11568 = vrot.slane %v11567, 1
    %v11569 = vadd.f32 %v11567, %v11568
    %v11570 = vsel %vm3430, %v10902, 0.0
    %v11571 = vrot.slane %v11570, 4
    %v11572 = vadd.f32 %v11570, %v11571
    %v11573 = vrot.slane %v11572, 2
    %v11574 = vadd.f32 %v11572, %v11573
    %v11575 = vrot.slane %v11574, 1
    %v11576 = vadd.f32 %v11574, %v11575
    %v11577 = vsel %vm3430, %v10903, 0.0
    %v11578 = vrot.slane %v11577, 4
    %v11579 = vadd.f32 %v11577, %v11578
    %v11580 = vrot.slane %v11579, 2
    %v11581 = vadd.f32 %v11579, %v11580
    %v11582 = vrot.slane %v11581, 1
    %v11583 = vadd.f32 %v11581, %v11582
    %v11584 = vsel %vm3430, %v10904, 0.0
    %v11585 = vrot.slane %v11584, 4
    %v11586 = vadd.f32 %v11584, %v11585
    %v11587 = vrot.slane %v11586, 2
    %v11588 = vadd.f32 %v11586, %v11587
    %v11589 = vrot.slane %v11588, 1
    %v11590 = vadd.f32 %v11588, %v11589
    %v11591 = vsel %vm3430, %v10905, 0.0
    %v11592 = vrot.slane %v11591, 4
    %v11593 = vadd.f32 %v11591, %v11592
    %v11594 = vrot.slane %v11593, 2
    %v11595 = vadd.f32 %v11593, %v11594
    %v11596 = vrot.slane %v11595, 1
    %v11597 = vadd.f32 %v11595, %v11596
    %v11598 = vsel %vm3430, %v10906, 0.0
    %v11599 = vrot.slane %v11598, 4
    %v11600 = vadd.f32 %v11598, %v11599
    %v11601 = vrot.slane %v11600, 2
    %v11602 = vadd.f32 %v11600, %v11601
    %v11603 = vrot.slane %v11602, 1
    %v11604 = vadd.f32 %v11602, %v11603
    %v11605 = vsel %vm3430, %v10907, 0.0
    %v11606 = vrot.slane %v11605, 4
    %v11607 = vadd.f32 %v11605, %v11606
    %v11608 = vrot.slane %v11607, 2
    %v11609 = vadd.f32 %v11607, %v11608
    %v11610 = vrot.slane %v11609, 1
    %v11611 = vadd.f32 %v11609, %v11610
    %v11612 = vsel %vm3430, %v10908, 0.0
    %v11613 = vrot.slane %v11612, 4
    %v11614 = vadd.f32 %v11612, %v11613
    %v11615 = vrot.slane %v11614, 2
    %v11616 = vadd.f32 %v11614, %v11615
    %v11617 = vrot.slane %v11616, 1
    %v11618 = vadd.f32 %v11616, %v11617
    %v11619 = vsel %vm3430, %v10909, 0.0
    %v11620 = vrot.slane %v11619, 4
    %v11621 = vadd.f32 %v11619, %v11620
    %v11622 = vrot.slane %v11621, 2
    %v11623 = vadd.f32 %v11621, %v11622
    %v11624 = vrot.slane %v11623, 1
    %v11625 = vadd.f32 %v11623, %v11624
    %v11626 = vsel %vm3430, %v10910, 0.0
    %v11627 = vrot.slane %v11626, 4
    %v11628 = vadd.f32 %v11626, %v11627
    %v11629 = vrot.slane %v11628, 2
    %v11630 = vadd.f32 %v11628, %v11629
    %v11631 = vrot.slane %v11630, 1
    %v11632 = vadd.f32 %v11630, %v11631
    %v11633 = vsel %vm3430, %v10911, 0.0
    %v11634 = vrot.slane %v11633, 4
    %v11635 = vadd.f32 %v11633, %v11634
    %v11636 = vrot.slane %v11635, 2
    %v11637 = vadd.f32 %v11635, %v11636
    %v11638 = vrot.slane %v11637, 1
    %v11639 = vadd.f32 %v11637, %v11638
    %v11640 = vsel %vm3430, %v10912, 0.0
    %v11641 = vrot.slane %v11640, 4
    %v11642 = vadd.f32 %v11640, %v11641
    %v11643 = vrot.slane %v11642, 2
    %v11644 = vadd.f32 %v11642, %v11643
    %v11645 = vrot.slane %v11644, 1
    %v11646 = vadd.f32 %v11644, %v11645
    %v11647 = vsel %vm3430, %v10913, 0.0
    %v11648 = vrot.slane %v11647, 4
    %v11649 = vadd.f32 %v11647, %v11648
    %v11650 = vrot.slane %v11649, 2
    %v11651 = vadd.f32 %v11649, %v11650
    %v11652 = vrot.slane %v11651, 1
    %v11653 = vadd.f32 %v11651, %v11652
    %v11654 = vsel %vm3430, %v10914, 0.0
    %v11655 = vrot.slane %v11654, 4
    %v11656 = vadd.f32 %v11654, %v11655
    %v11657 = vrot.slane %v11656, 2
    %v11658 = vadd.f32 %v11656, %v11657
    %v11659 = vrot.slane %v11658, 1
    %v11660 = vadd.f32 %v11658, %v11659
    %v11661 = vsel %vm3430, %v10915, 0.0
    %v11662 = vrot.slane %v11661, 4
    %v11663 = vadd.f32 %v11661, %v11662
    %v11664 = vrot.slane %v11663, 2
    %v11665 = vadd.f32 %v11663, %v11664
    %v11666 = vrot.slane %v11665, 1
    %v11667 = vadd.f32 %v11665, %v11666
    %v11668 = vsel %vm3430, %v10916, 0.0
    %v11669 = vrot.slane %v11668, 4
    %v11670 = vadd.f32 %v11668, %v11669
    %v11671 = vrot.slane %v11670, 2
    %v11672 = vadd.f32 %v11670, %v11671
    %v11673 = vrot.slane %v11672, 1
    %v11674 = vadd.f32 %v11672, %v11673
    %v11675 = vsel %vm3430, %v10917, 0.0
    %v11676 = vrot.slane %v11675, 4
    %v11677 = vadd.f32 %v11675, %v11676
    %v11678 = vrot.slane %v11677, 2
    %v11679 = vadd.f32 %v11677, %v11678
    %v11680 = vrot.slane %v11679, 1
    %v11681 = vadd.f32 %v11679, %v11680
    %v11682 = vsel %vm3430, %v10918, 0.0
    %v11683 = vrot.slane %v11682, 4
    %v11684 = vadd.f32 %v11682, %v11683
    %v11685 = vrot.slane %v11684, 2
    %v11686 = vadd.f32 %v11684, %v11685
    %v11687 = vrot.slane %v11686, 1
    %v11688 = vadd.f32 %v11686, %v11687
    %v11689 = vsel %vm3430, %v10919, 0.0
    %v11690 = vrot.slane %v11689, 4
    %v11691 = vadd.f32 %v11689, %v11690
    %v11692 = vrot.slane %v11691, 2
    %v11693 = vadd.f32 %v11691, %v11692
    %v11694 = vrot.slane %v11693, 1
    %v11695 = vadd.f32 %v11693, %v11694
    %v11696 = vsel %vm3430, %v10920, 0.0
    %v11697 = vrot.slane %v11696, 4
    %v11698 = vadd.f32 %v11696, %v11697
    %v11699 = vrot.slane %v11698, 2
    %v11700 = vadd.f32 %v11698, %v11699
    %v11701 = vrot.slane %v11700, 1
    %v11702 = vadd.f32 %v11700, %v11701
    %v11703 = vsel %vm3430, %v10921, 0.0
    %v11704 = vrot.slane %v11703, 4
    %v11705 = vadd.f32 %v11703, %v11704
    %v11706 = vrot.slane %v11705, 2
    %v11707 = vadd.f32 %v11705, %v11706
    %v11708 = vrot.slane %v11707, 1
    %v11709 = vadd.f32 %v11707, %v11708
    %v11710 = vsel %vm3430, %v10922, 0.0
    %v11711 = vrot.slane %v11710, 4
    %v11712 = vadd.f32 %v11710, %v11711
    %v11713 = vrot.slane %v11712, 2
    %v11714 = vadd.f32 %v11712, %v11713
    %v11715 = vrot.slane %v11714, 1
    %v11716 = vadd.f32 %v11714, %v11715
    %v11717 = vsel %vm3430, %v10923, 0.0
    %v11718 = vrot.slane %v11717, 4
    %v11719 = vadd.f32 %v11717, %v11718
    %v11720 = vrot.slane %v11719, 2
    %v11721 = vadd.f32 %v11719, %v11720
    %v11722 = vrot.slane %v11721, 1
    %v11723 = vadd.f32 %v11721, %v11722
    %v11724 = vsel %vm3430, %v10924, 0.0
    %v11725 = vrot.slane %v11724, 4
    %v11726 = vadd.f32 %v11724, %v11725
    %v11727 = vrot.slane %v11726, 2
    %v11728 = vadd.f32 %v11726, %v11727
    %v11729 = vrot.slane %v11728, 1
    %v11730 = vadd.f32 %v11728, %v11729
    %v11731 = vsel %vm3430, %v10925, 0.0
    %v11732 = vrot.slane %v11731, 4
    %v11733 = vadd.f32 %v11731, %v11732
    %v11734 = vrot.slane %v11733, 2
    %v11735 = vadd.f32 %v11733, %v11734
    %v11736 = vrot.slane %v11735, 1
    %v11737 = vadd.f32 %v11735, %v11736
    %v11738 = vsel %vm3430, %v10926, 0.0
    %v11739 = vrot.slane %v11738, 4
    %v11740 = vadd.f32 %v11738, %v11739
    %v11741 = vrot.slane %v11740, 2
    %v11742 = vadd.f32 %v11740, %v11741
    %v11743 = vrot.slane %v11742, 1
    %v11744 = vadd.f32 %v11742, %v11743
    %v11745 = vsel %vm3430, %v10927, 0.0
    %v11746 = vrot.slane %v11745, 4
    %v11747 = vadd.f32 %v11745, %v11746
    %v11748 = vrot.slane %v11747, 2
    %v11749 = vadd.f32 %v11747, %v11748
    %v11750 = vrot.slane %v11749, 1
    %v11751 = vadd.f32 %v11749, %v11750
    %v11752 = vsel %vm3430, %v10928, 0.0
    %v11753 = vrot.slane %v11752, 4
    %v11754 = vadd.f32 %v11752, %v11753
    %v11755 = vrot.slane %v11754, 2
    %v11756 = vadd.f32 %v11754, %v11755
    %v11757 = vrot.slane %v11756, 1
    %v11758 = vadd.f32 %v11756, %v11757
    %v11759 = vsel %vm3430, %v10929, 0.0
    %v11760 = vrot.slane %v11759, 4
    %v11761 = vadd.f32 %v11759, %v11760
    %v11762 = vrot.slane %v11761, 2
    %v11763 = vadd.f32 %v11761, %v11762
    %v11764 = vrot.slane %v11763, 1
    %v11765 = vadd.f32 %v11763, %v11764
    %v11766 = vsel %vm3430, %v10930, 0.0
    %v11767 = vrot.slane %v11766, 4
    %v11768 = vadd.f32 %v11766, %v11767
    %v11769 = vrot.slane %v11768, 2
    %v11770 = vadd.f32 %v11768, %v11769
    %v11771 = vrot.slane %v11770, 1
    %v11772 = vadd.f32 %v11770, %v11771
    %v11773 = vsel %vm3430, %v10931, 0.0
    %v11774 = vrot.slane %v11773, 4
    %v11775 = vadd.f32 %v11773, %v11774
    %v11776 = vrot.slane %v11775, 2
    %v11777 = vadd.f32 %v11775, %v11776
    %v11778 = vrot.slane %v11777, 1
    %v11779 = vadd.f32 %v11777, %v11778
    %v11780 = vsel %vm3430, %v10932, 0.0
    %v11781 = vrot.slane %v11780, 4
    %v11782 = vadd.f32 %v11780, %v11781
    %v11783 = vrot.slane %v11782, 2
    %v11784 = vadd.f32 %v11782, %v11783
    %v11785 = vrot.slane %v11784, 1
    %v11786 = vadd.f32 %v11784, %v11785
    %v11787 = vsel %vm3430, %v10933, 0.0
    %v11788 = vrot.slane %v11787, 4
    %v11789 = vadd.f32 %v11787, %v11788
    %v11790 = vrot.slane %v11789, 2
    %v11791 = vadd.f32 %v11789, %v11790
    %v11792 = vrot.slane %v11791, 1
    %v11793 = vadd.f32 %v11791, %v11792
    %v11794 = vsel %vm3430, %v10934, 0.0
    %v11795 = vrot.slane %v11794, 4
    %v11796 = vadd.f32 %v11794, %v11795
    %v11797 = vrot.slane %v11796, 2
    %v11798 = vadd.f32 %v11796, %v11797
    %v11799 = vrot.slane %v11798, 1
    %v11800 = vadd.f32 %v11798, %v11799
    %v11801 = vsel %vm3430, %v10935, 0.0
    %v11802 = vrot.slane %v11801, 4
    %v11803 = vadd.f32 %v11801, %v11802
    %v11804 = vrot.slane %v11803, 2
    %v11805 = vadd.f32 %v11803, %v11804
    %v11806 = vrot.slane %v11805, 1
    %v11807 = vadd.f32 %v11805, %v11806
    %v11808 = vsel %vm3430, %v10936, 0.0
    %v11809 = vrot.slane %v11808, 4
    %v11810 = vadd.f32 %v11808, %v11809
    %v11811 = vrot.slane %v11810, 2
    %v11812 = vadd.f32 %v11810, %v11811
    %v11813 = vrot.slane %v11812, 1
    %v11814 = vadd.f32 %v11812, %v11813
    %v11815 = vsel %vm3430, %v10937, 0.0
    %v11816 = vrot.slane %v11815, 4
    %v11817 = vadd.f32 %v11815, %v11816
    %v11818 = vrot.slane %v11817, 2
    %v11819 = vadd.f32 %v11817, %v11818
    %v11820 = vrot.slane %v11819, 1
    %v11821 = vadd.f32 %v11819, %v11820
    %v11822 = vsel %vm3430, %v10938, 0.0
    %v11823 = vrot.slane %v11822, 4
    %v11824 = vadd.f32 %v11822, %v11823
    %v11825 = vrot.slane %v11824, 2
    %v11826 = vadd.f32 %v11824, %v11825
    %v11827 = vrot.slane %v11826, 1
    %v11828 = vadd.f32 %v11826, %v11827
    %v11829 = vsel %vm3430, %v10939, 0.0
    %v11830 = vrot.slane %v11829, 4
    %v11831 = vadd.f32 %v11829, %v11830
    %v11832 = vrot.slane %v11831, 2
    %v11833 = vadd.f32 %v11831, %v11832
    %v11834 = vrot.slane %v11833, 1
    %v11835 = vadd.f32 %v11833, %v11834
    %v11836 = vrcp.pop %v9410
    %v11837 = vmul.f32 %v9410, %v11836
    %v11838 = vsub.f32 1.0, %v11837
    %v11839 = vmul.f32 %v11836, %v11838
    %v11840 = vadd.f32 %v11836, %v11839
    %vm11841 = vweird.f32 %v9410
    %vm11842 = vweird.f32 %v11836
    %vm11843 = vmor %vm11841, %vm11842
    %v11844 = vsel %vm11843, %v11836, %v11840
    %v11845 = vand.u32 2147483647, %v9410
    %vm11846 = vcmp.eq.f32.partialorder %v11845, 8.507059e+37
    %v11847 = vand.u32 %v9410, 2147483648
    %v11848 = vor.u32 1.1754944e-38, %v11847
    %v11849 = vsel %vm11846, %v11848, %v11844
    %v11850 = vmul.f32 %v10946, %v11849
    %v11851 = vrcp.pop %v9417
    %v11852 = vmul.f32 %v9417, %v11851
    %v11853 = vsub.f32 1.0, %v11852
    %v11854 = vmul.f32 %v11851, %v11853
    %v11855 = vadd.f32 %v11851, %v11854
    %vm11856 = vweird.f32 %v9417
    %vm11857 = vweird.f32 %v11851
    %vm11858 = vmor %vm11856, %vm11857
    %v11859 = vsel %vm11858, %v11851, %v11855
    %v11860 = vand.u32 2147483647, %v9417
    %vm11861 = vcmp.eq.f32.partialorder %v11860, 8.507059e+37
    %v11862 = vand.u32 %v9417, 2147483648
    %v11863 = vor.u32 1.1754944e-38, %v11862
    %v11864 = vsel %vm11861, %v11863, %v11859
    %v11865 = vmul.f32 %v10953, %v11864
    %v11866 = vrcp.pop %v9424
    %v11867 = vmul.f32 %v9424, %v11866
    %v11868 = vsub.f32 1.0, %v11867
    %v11869 = vmul.f32 %v11866, %v11868
    %v11870 = vadd.f32 %v11866, %v11869
    %vm11871 = vweird.f32 %v9424
    %vm11872 = vweird.f32 %v11866
    %vm11873 = vmor %vm11871, %vm11872
    %v11874 = vsel %vm11873, %v11866, %v11870
    %v11875 = vand.u32 2147483647, %v9424
    %vm11876 = vcmp.eq.f32.partialorder %v11875, 8.507059e+37
    %v11877 = vand.u32 %v9424, 2147483648
    %v11878 = vor.u32 1.1754944e-38, %v11877
    %v11879 = vsel %vm11876, %v11878, %v11874
    %v11880 = vmul.f32 %v10960, %v11879
    %v11881 = vrcp.pop %v9431
    %v11882 = vmul.f32 %v9431, %v11881
    %v11883 = vsub.f32 1.0, %v11882
    %v11884 = vmul.f32 %v11881, %v11883
    %v11885 = vadd.f32 %v11881, %v11884
    %vm11886 = vweird.f32 %v9431
    %vm11887 = vweird.f32 %v11881
    %vm11888 = vmor %vm11886, %vm11887
    %v11889 = vsel %vm11888, %v11881, %v11885
    %v11890 = vand.u32 2147483647, %v9431
    %vm11891 = vcmp.eq.f32.partialorder %v11890, 8.507059e+37
    %v11892 = vand.u32 %v9431, 2147483648
    %v11893 = vor.u32 1.1754944e-38, %v11892
    %v11894 = vsel %vm11891, %v11893, %v11889
    %v11895 = vmul.f32 %v10967, %v11894
    %v11896 = vrcp.pop %v9438
    %v11897 = vmul.f32 %v9438, %v11896
    %v11898 = vsub.f32 1.0, %v11897
    %v11899 = vmul.f32 %v11896, %v11898
    %v11900 = vadd.f32 %v11896, %v11899
    %vm11901 = vweird.f32 %v9438
    %vm11902 = vweird.f32 %v11896
    %vm11903 = vmor %vm11901, %vm11902
    %v11904 = vsel %vm11903, %v11896, %v11900
    %v11905 = vand.u32 2147483647, %v9438
    %vm11906 = vcmp.eq.f32.partialorder %v11905, 8.507059e+37
    %v11907 = vand.u32 %v9438, 2147483648
    %v11908 = vor.u32 1.1754944e-38, %v11907
    %v11909 = vsel %vm11906, %v11908, %v11904
    %v11910 = vmul.f32 %v10974, %v11909
    %v11911 = vrcp.pop %v9445
    %v11912 = vmul.f32 %v9445, %v11911
    %v11913 = vsub.f32 1.0, %v11912
    %v11914 = vmul.f32 %v11911, %v11913
    %v11915 = vadd.f32 %v11911, %v11914
    %vm11916 = vweird.f32 %v9445
    %vm11917 = vweird.f32 %v11911
    %vm11918 = vmor %vm11916, %vm11917
    %v11919 = vsel %vm11918, %v11911, %v11915
    %v11920 = vand.u32 2147483647, %v9445
    %vm11921 = vcmp.eq.f32.partialorder %v11920, 8.507059e+37
    %v11922 = vand.u32 %v9445, 2147483648
    %v11923 = vor.u32 1.1754944e-38, %v11922
    %v11924 = vsel %vm11921, %v11923, %v11919
    %v11925 = vmul.f32 %v10981, %v11924
    %v11926 = vrcp.pop %v9452
    %v11927 = vmul.f32 %v9452, %v11926
    %v11928 = vsub.f32 1.0, %v11927
    %v11929 = vmul.f32 %v11926, %v11928
    %v11930 = vadd.f32 %v11926, %v11929
    %vm11931 = vweird.f32 %v9452
    %vm11932 = vweird.f32 %v11926
    %vm11933 = vmor %vm11931, %vm11932
    %v11934 = vsel %vm11933, %v11926, %v11930
    %v11935 = vand.u32 2147483647, %v9452
    %vm11936 = vcmp.eq.f32.partialorder %v11935, 8.507059e+37
    %v11937 = vand.u32 %v9452, 2147483648
    %v11938 = vor.u32 1.1754944e-38, %v11937
    %v11939 = vsel %vm11936, %v11938, %v11934
    %v11940 = vmul.f32 %v10988, %v11939
    %v11941 = vrcp.pop %v9459
    %v11942 = vmul.f32 %v9459, %v11941
    %v11943 = vsub.f32 1.0, %v11942
    %v11944 = vmul.f32 %v11941, %v11943
    %v11945 = vadd.f32 %v11941, %v11944
    %vm11946 = vweird.f32 %v9459
    %vm11947 = vweird.f32 %v11941
    %vm11948 = vmor %vm11946, %vm11947
    %v11949 = vsel %vm11948, %v11941, %v11945
    %v11950 = vand.u32 2147483647, %v9459
    %vm11951 = vcmp.eq.f32.partialorder %v11950, 8.507059e+37
    %v11952 = vand.u32 %v9459, 2147483648
    %v11953 = vor.u32 1.1754944e-38, %v11952
    %v11954 = vsel %vm11951, %v11953, %v11949
    %v11955 = vmul.f32 %v10995, %v11954
    %v11956 = vrcp.pop %v9466
    %v11957 = vmul.f32 %v9466, %v11956
    %v11958 = vsub.f32 1.0, %v11957
    %v11959 = vmul.f32 %v11956, %v11958
    %v11960 = vadd.f32 %v11956, %v11959
    %vm11961 = vweird.f32 %v9466
    %vm11962 = vweird.f32 %v11956
    %vm11963 = vmor %vm11961, %vm11962
    %v11964 = vsel %vm11963, %v11956, %v11960
    %v11965 = vand.u32 2147483647, %v9466
    %vm11966 = vcmp.eq.f32.partialorder %v11965, 8.507059e+37
    %v11967 = vand.u32 %v9466, 2147483648
    %v11968 = vor.u32 1.1754944e-38, %v11967
    %v11969 = vsel %vm11966, %v11968, %v11964
    %v11970 = vmul.f32 %v11002, %v11969
    %v11971 = vrcp.pop %v9473
    %v11972 = vmul.f32 %v9473, %v11971
    %v11973 = vsub.f32 1.0, %v11972
    %v11974 = vmul.f32 %v11971, %v11973
    %v11975 = vadd.f32 %v11971, %v11974
    %vm11976 = vweird.f32 %v9473
    %vm11977 = vweird.f32 %v11971
    %vm11978 = vmor %vm11976, %vm11977
    %v11979 = vsel %vm11978, %v11971, %v11975
    %v11980 = vand.u32 2147483647, %v9473
    %vm11981 = vcmp.eq.f32.partialorder %v11980, 8.507059e+37
    %v11982 = vand.u32 %v9473, 2147483648
    %v11983 = vor.u32 1.1754944e-38, %v11982
    %v11984 = vsel %vm11981, %v11983, %v11979
    %v11985 = vmul.f32 %v11009, %v11984
    %v11986 = vrcp.pop %v9480
    %v11987 = vmul.f32 %v9480, %v11986
    %v11988 = vsub.f32 1.0, %v11987
    %v11989 = vmul.f32 %v11986, %v11988
    %v11990 = vadd.f32 %v11986, %v11989
    %vm11991 = vweird.f32 %v9480
    %vm11992 = vweird.f32 %v11986
    %vm11993 = vmor %vm11991, %vm11992
    %v11994 = vsel %vm11993, %v11986, %v11990
    %v11995 = vand.u32 2147483647, %v9480
    %vm11996 = vcmp.eq.f32.partialorder %v11995, 8.507059e+37
    %v11997 = vand.u32 %v9480, 2147483648
    %v11998 = vor.u32 1.1754944e-38, %v11997
    %v11999 = vsel %vm11996, %v11998, %v11994
    %v12000 = vmul.f32 %v11016, %v11999
    %v12001 = vrcp.pop %v9487
    %v12002 = vmul.f32 %v9487, %v12001
    %v12003 = vsub.f32 1.0, %v12002
    %v12004 = vmul.f32 %v12001, %v12003
    %v12005 = vadd.f32 %v12001, %v12004
    %vm12006 = vweird.f32 %v9487
    %vm12007 = vweird.f32 %v12001
    %vm12008 = vmor %vm12006, %vm12007
    %v12009 = vsel %vm12008, %v12001, %v12005
    %v12010 = vand.u32 2147483647, %v9487
    %vm12011 = vcmp.eq.f32.partialorder %v12010, 8.507059e+37
    %v12012 = vand.u32 %v9487, 2147483648
    %v12013 = vor.u32 1.1754944e-38, %v12012
    %v12014 = vsel %vm12011, %v12013, %v12009
    %v12015 = vmul.f32 %v11023, %v12014
    %v12016 = vrcp.pop %v9494
    %v12017 = vmul.f32 %v9494, %v12016
    %v12018 = vsub.f32 1.0, %v12017
    %v12019 = vmul.f32 %v12016, %v12018
    %v12020 = vadd.f32 %v12016, %v12019
    %vm12021 = vweird.f32 %v9494
    %vm12022 = vweird.f32 %v12016
    %vm12023 = vmor %vm12021, %vm12022
    %v12024 = vsel %vm12023, %v12016, %v12020
    %v12025 = vand.u32 2147483647, %v9494
    %vm12026 = vcmp.eq.f32.partialorder %v12025, 8.507059e+37
    %v12027 = vand.u32 %v9494, 2147483648
    %v12028 = vor.u32 1.1754944e-38, %v12027
    %v12029 = vsel %vm12026, %v12028, %v12024
    %v12030 = vmul.f32 %v11030, %v12029
    %v12031 = vrcp.pop %v9501
    %v12032 = vmul.f32 %v9501, %v12031
    %v12033 = vsub.f32 1.0, %v12032
    %v12034 = vmul.f32 %v12031, %v12033
    %v12035 = vadd.f32 %v12031, %v12034
    %vm12036 = vweird.f32 %v9501
    %vm12037 = vweird.f32 %v12031
    %vm12038 = vmor %vm12036, %vm12037
    %v12039 = vsel %vm12038, %v12031, %v12035
    %v12040 = vand.u32 2147483647, %v9501
    %vm12041 = vcmp.eq.f32.partialorder %v12040, 8.507059e+37
    %v12042 = vand.u32 %v9501, 2147483648
    %v12043 = vor.u32 1.1754944e-38, %v12042
    %v12044 = vsel %vm12041, %v12043, %v12039
    %v12045 = vmul.f32 %v11037, %v12044
    %v12046 = vrcp.pop %v9508
    %v12047 = vmul.f32 %v9508, %v12046
    %v12048 = vsub.f32 1.0, %v12047
    %v12049 = vmul.f32 %v12046, %v12048
    %v12050 = vadd.f32 %v12046, %v12049
    %vm12051 = vweird.f32 %v9508
    %vm12052 = vweird.f32 %v12046
    %vm12053 = vmor %vm12051, %vm12052
    %v12054 = vsel %vm12053, %v12046, %v12050
    %v12055 = vand.u32 2147483647, %v9508
    %vm12056 = vcmp.eq.f32.partialorder %v12055, 8.507059e+37
    %v12057 = vand.u32 %v9508, 2147483648
    %v12058 = vor.u32 1.1754944e-38, %v12057
    %v12059 = vsel %vm12056, %v12058, %v12054
    %v12060 = vmul.f32 %v11044, %v12059
    %v12061 = vrcp.pop %v9515
    %v12062 = vmul.f32 %v9515, %v12061
    %v12063 = vsub.f32 1.0, %v12062
    %v12064 = vmul.f32 %v12061, %v12063
    %v12065 = vadd.f32 %v12061, %v12064
    %vm12066 = vweird.f32 %v9515
    %vm12067 = vweird.f32 %v12061
    %vm12068 = vmor %vm12066, %vm12067
    %v12069 = vsel %vm12068, %v12061, %v12065
    %v12070 = vand.u32 2147483647, %v9515
    %vm12071 = vcmp.eq.f32.partialorder %v12070, 8.507059e+37
    %v12072 = vand.u32 %v9515, 2147483648
    %v12073 = vor.u32 1.1754944e-38, %v12072
    %v12074 = vsel %vm12071, %v12073, %v12069
    %v12075 = vmul.f32 %v11051, %v12074
    %v12076 = vrcp.pop %v9522
    %v12077 = vmul.f32 %v9522, %v12076
    %v12078 = vsub.f32 1.0, %v12077
    %v12079 = vmul.f32 %v12076, %v12078
    %v12080 = vadd.f32 %v12076, %v12079
    %vm12081 = vweird.f32 %v9522
    %vm12082 = vweird.f32 %v12076
    %vm12083 = vmor %vm12081, %vm12082
    %v12084 = vsel %vm12083, %v12076, %v12080
    %v12085 = vand.u32 2147483647, %v9522
    %vm12086 = vcmp.eq.f32.partialorder %v12085, 8.507059e+37
    %v12087 = vand.u32 %v9522, 2147483648
    %v12088 = vor.u32 1.1754944e-38, %v12087
    %v12089 = vsel %vm12086, %v12088, %v12084
    %v12090 = vmul.f32 %v11058, %v12089
    %v12091 = vrcp.pop %v9529
    %v12092 = vmul.f32 %v9529, %v12091
    %v12093 = vsub.f32 1.0, %v12092
    %v12094 = vmul.f32 %v12091, %v12093
    %v12095 = vadd.f32 %v12091, %v12094
    %vm12096 = vweird.f32 %v9529
    %vm12097 = vweird.f32 %v12091
    %vm12098 = vmor %vm12096, %vm12097
    %v12099 = vsel %vm12098, %v12091, %v12095
    %v12100 = vand.u32 2147483647, %v9529
    %vm12101 = vcmp.eq.f32.partialorder %v12100, 8.507059e+37
    %v12102 = vand.u32 %v9529, 2147483648
    %v12103 = vor.u32 1.1754944e-38, %v12102
    %v12104 = vsel %vm12101, %v12103, %v12099
    %v12105 = vmul.f32 %v11065, %v12104
    %v12106 = vrcp.pop %v9536
    %v12107 = vmul.f32 %v9536, %v12106
    %v12108 = vsub.f32 1.0, %v12107
    %v12109 = vmul.f32 %v12106, %v12108
    %v12110 = vadd.f32 %v12106, %v12109
    %vm12111 = vweird.f32 %v9536
    %vm12112 = vweird.f32 %v12106
    %vm12113 = vmor %vm12111, %vm12112
    %v12114 = vsel %vm12113, %v12106, %v12110
    %v12115 = vand.u32 2147483647, %v9536
    %vm12116 = vcmp.eq.f32.partialorder %v12115, 8.507059e+37
    %v12117 = vand.u32 %v9536, 2147483648
    %v12118 = vor.u32 1.1754944e-38, %v12117
    %v12119 = vsel %vm12116, %v12118, %v12114
    %v12120 = vmul.f32 %v11072, %v12119
    %v12121 = vrcp.pop %v9543
    %v12122 = vmul.f32 %v9543, %v12121
    %v12123 = vsub.f32 1.0, %v12122
    %v12124 = vmul.f32 %v12121, %v12123
    %v12125 = vadd.f32 %v12121, %v12124
    %vm12126 = vweird.f32 %v9543
    %vm12127 = vweird.f32 %v12121
    %vm12128 = vmor %vm12126, %vm12127
    %v12129 = vsel %vm12128, %v12121, %v12125
    %v12130 = vand.u32 2147483647, %v9543
    %vm12131 = vcmp.eq.f32.partialorder %v12130, 8.507059e+37
    %v12132 = vand.u32 %v9543, 2147483648
    %v12133 = vor.u32 1.1754944e-38, %v12132
    %v12134 = vsel %vm12131, %v12133, %v12129
    %v12135 = vmul.f32 %v11079, %v12134
    %v12136 = vrcp.pop %v9550
    %v12137 = vmul.f32 %v9550, %v12136
    %v12138 = vsub.f32 1.0, %v12137
    %v12139 = vmul.f32 %v12136, %v12138
    %v12140 = vadd.f32 %v12136, %v12139
    %vm12141 = vweird.f32 %v9550
    %vm12142 = vweird.f32 %v12136
    %vm12143 = vmor %vm12141, %vm12142
    %v12144 = vsel %vm12143, %v12136, %v12140
    %v12145 = vand.u32 2147483647, %v9550
    %vm12146 = vcmp.eq.f32.partialorder %v12145, 8.507059e+37
    %v12147 = vand.u32 %v9550, 2147483648
    %v12148 = vor.u32 1.1754944e-38, %v12147
    %v12149 = vsel %vm12146, %v12148, %v12144
    %v12150 = vmul.f32 %v11086, %v12149
    %v12151 = vrcp.pop %v9557
    %v12152 = vmul.f32 %v9557, %v12151
    %v12153 = vsub.f32 1.0, %v12152
    %v12154 = vmul.f32 %v12151, %v12153
    %v12155 = vadd.f32 %v12151, %v12154
    %vm12156 = vweird.f32 %v9557
    %vm12157 = vweird.f32 %v12151
    %vm12158 = vmor %vm12156, %vm12157
    %v12159 = vsel %vm12158, %v12151, %v12155
    %v12160 = vand.u32 2147483647, %v9557
    %vm12161 = vcmp.eq.f32.partialorder %v12160, 8.507059e+37
    %v12162 = vand.u32 %v9557, 2147483648
    %v12163 = vor.u32 1.1754944e-38, %v12162
    %v12164 = vsel %vm12161, %v12163, %v12159
    %v12165 = vmul.f32 %v11093, %v12164
    %v12166 = vrcp.pop %v9564
    %v12167 = vmul.f32 %v9564, %v12166
    %v12168 = vsub.f32 1.0, %v12167
    %v12169 = vmul.f32 %v12166, %v12168
    %v12170 = vadd.f32 %v12166, %v12169
    %vm12171 = vweird.f32 %v9564
    %vm12172 = vweird.f32 %v12166
    %vm12173 = vmor %vm12171, %vm12172
    %v12174 = vsel %vm12173, %v12166, %v12170
    %v12175 = vand.u32 2147483647, %v9564
    %vm12176 = vcmp.eq.f32.partialorder %v12175, 8.507059e+37
    %v12177 = vand.u32 %v9564, 2147483648
    %v12178 = vor.u32 1.1754944e-38, %v12177
    %v12179 = vsel %vm12176, %v12178, %v12174
    %v12180 = vmul.f32 %v11100, %v12179
    %v12181 = vrcp.pop %v9571
    %v12182 = vmul.f32 %v9571, %v12181
    %v12183 = vsub.f32 1.0, %v12182
    %v12184 = vmul.f32 %v12181, %v12183
    %v12185 = vadd.f32 %v12181, %v12184
    %vm12186 = vweird.f32 %v9571
    %vm12187 = vweird.f32 %v12181
    %vm12188 = vmor %vm12186, %vm12187
    %v12189 = vsel %vm12188, %v12181, %v12185
    %v12190 = vand.u32 2147483647, %v9571
    %vm12191 = vcmp.eq.f32.partialorder %v12190, 8.507059e+37
    %v12192 = vand.u32 %v9571, 2147483648
    %v12193 = vor.u32 1.1754944e-38, %v12192
    %v12194 = vsel %vm12191, %v12193, %v12189
    %v12195 = vmul.f32 %v11107, %v12194
    %v12196 = vrcp.pop %v9578
    %v12197 = vmul.f32 %v9578, %v12196
    %v12198 = vsub.f32 1.0, %v12197
    %v12199 = vmul.f32 %v12196, %v12198
    %v12200 = vadd.f32 %v12196, %v12199
    %vm12201 = vweird.f32 %v9578
    %vm12202 = vweird.f32 %v12196
    %vm12203 = vmor %vm12201, %vm12202
    %v12204 = vsel %vm12203, %v12196, %v12200
    %v12205 = vand.u32 2147483647, %v9578
    %vm12206 = vcmp.eq.f32.partialorder %v12205, 8.507059e+37
    %v12207 = vand.u32 %v9578, 2147483648
    %v12208 = vor.u32 1.1754944e-38, %v12207
    %v12209 = vsel %vm12206, %v12208, %v12204
    %v12210 = vmul.f32 %v11114, %v12209
    %v12211 = vrcp.pop %v9585
    %v12212 = vmul.f32 %v9585, %v12211
    %v12213 = vsub.f32 1.0, %v12212
    %v12214 = vmul.f32 %v12211, %v12213
    %v12215 = vadd.f32 %v12211, %v12214
    %vm12216 = vweird.f32 %v9585
    %vm12217 = vweird.f32 %v12211
    %vm12218 = vmor %vm12216, %vm12217
    %v12219 = vsel %vm12218, %v12211, %v12215
    %v12220 = vand.u32 2147483647, %v9585
    %vm12221 = vcmp.eq.f32.partialorder %v12220, 8.507059e+37
    %v12222 = vand.u32 %v9585, 2147483648
    %v12223 = vor.u32 1.1754944e-38, %v12222
    %v12224 = vsel %vm12221, %v12223, %v12219
    %v12225 = vmul.f32 %v11121, %v12224
    %v12226 = vrcp.pop %v9592
    %v12227 = vmul.f32 %v9592, %v12226
    %v12228 = vsub.f32 1.0, %v12227
    %v12229 = vmul.f32 %v12226, %v12228
    %v12230 = vadd.f32 %v12226, %v12229
    %vm12231 = vweird.f32 %v9592
    %vm12232 = vweird.f32 %v12226
    %vm12233 = vmor %vm12231, %vm12232
    %v12234 = vsel %vm12233, %v12226, %v12230
    %v12235 = vand.u32 2147483647, %v9592
    %vm12236 = vcmp.eq.f32.partialorder %v12235, 8.507059e+37
    %v12237 = vand.u32 %v9592, 2147483648
    %v12238 = vor.u32 1.1754944e-38, %v12237
    %v12239 = vsel %vm12236, %v12238, %v12234
    %v12240 = vmul.f32 %v11128, %v12239
    %v12241 = vrcp.pop %v9599
    %v12242 = vmul.f32 %v9599, %v12241
    %v12243 = vsub.f32 1.0, %v12242
    %v12244 = vmul.f32 %v12241, %v12243
    %v12245 = vadd.f32 %v12241, %v12244
    %vm12246 = vweird.f32 %v9599
    %vm12247 = vweird.f32 %v12241
    %vm12248 = vmor %vm12246, %vm12247
    %v12249 = vsel %vm12248, %v12241, %v12245
    %v12250 = vand.u32 2147483647, %v9599
    %vm12251 = vcmp.eq.f32.partialorder %v12250, 8.507059e+37
    %v12252 = vand.u32 %v9599, 2147483648
    %v12253 = vor.u32 1.1754944e-38, %v12252
    %v12254 = vsel %vm12251, %v12253, %v12249
    %v12255 = vmul.f32 %v11135, %v12254
    %v12256 = vrcp.pop %v9606
    %v12257 = vmul.f32 %v9606, %v12256
    %v12258 = vsub.f32 1.0, %v12257
    %v12259 = vmul.f32 %v12256, %v12258
    %v12260 = vadd.f32 %v12256, %v12259
    %vm12261 = vweird.f32 %v9606
    %vm12262 = vweird.f32 %v12256
    %vm12263 = vmor %vm12261, %vm12262
    %v12264 = vsel %vm12263, %v12256, %v12260
    %v12265 = vand.u32 2147483647, %v9606
    %vm12266 = vcmp.eq.f32.partialorder %v12265, 8.507059e+37
    %v12267 = vand.u32 %v9606, 2147483648
    %v12268 = vor.u32 1.1754944e-38, %v12267
    %v12269 = vsel %vm12266, %v12268, %v12264
    %v12270 = vmul.f32 %v11142, %v12269
    %v12271 = vrcp.pop %v9613
    %v12272 = vmul.f32 %v9613, %v12271
    %v12273 = vsub.f32 1.0, %v12272
    %v12274 = vmul.f32 %v12271, %v12273
    %v12275 = vadd.f32 %v12271, %v12274
    %vm12276 = vweird.f32 %v9613
    %vm12277 = vweird.f32 %v12271
    %vm12278 = vmor %vm12276, %vm12277
    %v12279 = vsel %vm12278, %v12271, %v12275
    %v12280 = vand.u32 2147483647, %v9613
    %vm12281 = vcmp.eq.f32.partialorder %v12280, 8.507059e+37
    %v12282 = vand.u32 %v9613, 2147483648
    %v12283 = vor.u32 1.1754944e-38, %v12282
    %v12284 = vsel %vm12281, %v12283, %v12279
    %v12285 = vmul.f32 %v11149, %v12284
    %v12286 = vrcp.pop %v9620
    %v12287 = vmul.f32 %v9620, %v12286
    %v12288 = vsub.f32 1.0, %v12287
    %v12289 = vmul.f32 %v12286, %v12288
    %v12290 = vadd.f32 %v12286, %v12289
    %vm12291 = vweird.f32 %v9620
    %vm12292 = vweird.f32 %v12286
    %vm12293 = vmor %vm12291, %vm12292
    %v12294 = vsel %vm12293, %v12286, %v12290
    %v12295 = vand.u32 2147483647, %v9620
    %vm12296 = vcmp.eq.f32.partialorder %v12295, 8.507059e+37
    %v12297 = vand.u32 %v9620, 2147483648
    %v12298 = vor.u32 1.1754944e-38, %v12297
    %v12299 = vsel %vm12296, %v12298, %v12294
    %v12300 = vmul.f32 %v11156, %v12299
    %v12301 = vrcp.pop %v9627
    %v12302 = vmul.f32 %v9627, %v12301
    %v12303 = vsub.f32 1.0, %v12302
    %v12304 = vmul.f32 %v12301, %v12303
    %v12305 = vadd.f32 %v12301, %v12304
    %vm12306 = vweird.f32 %v9627
    %vm12307 = vweird.f32 %v12301
    %vm12308 = vmor %vm12306, %vm12307
    %v12309 = vsel %vm12308, %v12301, %v12305
    %v12310 = vand.u32 2147483647, %v9627
    %vm12311 = vcmp.eq.f32.partialorder %v12310, 8.507059e+37
    %v12312 = vand.u32 %v9627, 2147483648
    %v12313 = vor.u32 1.1754944e-38, %v12312
    %v12314 = vsel %vm12311, %v12313, %v12309
    %v12315 = vmul.f32 %v11163, %v12314
    %v12316 = vrcp.pop %v9634
    %v12317 = vmul.f32 %v9634, %v12316
    %v12318 = vsub.f32 1.0, %v12317
    %v12319 = vmul.f32 %v12316, %v12318
    %v12320 = vadd.f32 %v12316, %v12319
    %vm12321 = vweird.f32 %v9634
    %vm12322 = vweird.f32 %v12316
    %vm12323 = vmor %vm12321, %vm12322
    %v12324 = vsel %vm12323, %v12316, %v12320
    %v12325 = vand.u32 2147483647, %v9634
    %vm12326 = vcmp.eq.f32.partialorder %v12325, 8.507059e+37
    %v12327 = vand.u32 %v9634, 2147483648
    %v12328 = vor.u32 1.1754944e-38, %v12327
    %v12329 = vsel %vm12326, %v12328, %v12324
    %v12330 = vmul.f32 %v11170, %v12329
    %v12331 = vrcp.pop %v9641
    %v12332 = vmul.f32 %v9641, %v12331
    %v12333 = vsub.f32 1.0, %v12332
    %v12334 = vmul.f32 %v12331, %v12333
    %v12335 = vadd.f32 %v12331, %v12334
    %vm12336 = vweird.f32 %v9641
    %vm12337 = vweird.f32 %v12331
    %vm12338 = vmor %vm12336, %vm12337
    %v12339 = vsel %vm12338, %v12331, %v12335
    %v12340 = vand.u32 2147483647, %v9641
    %vm12341 = vcmp.eq.f32.partialorder %v12340, 8.507059e+37
    %v12342 = vand.u32 %v9641, 2147483648
    %v12343 = vor.u32 1.1754944e-38, %v12342
    %v12344 = vsel %vm12341, %v12343, %v12339
    %v12345 = vmul.f32 %v11177, %v12344
    %v12346 = vrcp.pop %v9648
    %v12347 = vmul.f32 %v9648, %v12346
    %v12348 = vsub.f32 1.0, %v12347
    %v12349 = vmul.f32 %v12346, %v12348
    %v12350 = vadd.f32 %v12346, %v12349
    %vm12351 = vweird.f32 %v9648
    %vm12352 = vweird.f32 %v12346
    %vm12353 = vmor %vm12351, %vm12352
    %v12354 = vsel %vm12353, %v12346, %v12350
    %v12355 = vand.u32 2147483647, %v9648
    %vm12356 = vcmp.eq.f32.partialorder %v12355, 8.507059e+37
    %v12357 = vand.u32 %v9648, 2147483648
    %v12358 = vor.u32 1.1754944e-38, %v12357
    %v12359 = vsel %vm12356, %v12358, %v12354
    %v12360 = vmul.f32 %v11184, %v12359
    %v12361 = vrcp.pop %v9655
    %v12362 = vmul.f32 %v9655, %v12361
    %v12363 = vsub.f32 1.0, %v12362
    %v12364 = vmul.f32 %v12361, %v12363
    %v12365 = vadd.f32 %v12361, %v12364
    %vm12366 = vweird.f32 %v9655
    %vm12367 = vweird.f32 %v12361
    %vm12368 = vmor %vm12366, %vm12367
    %v12369 = vsel %vm12368, %v12361, %v12365
    %v12370 = vand.u32 2147483647, %v9655
    %vm12371 = vcmp.eq.f32.partialorder %v12370, 8.507059e+37
    %v12372 = vand.u32 %v9655, 2147483648
    %v12373 = vor.u32 1.1754944e-38, %v12372
    %v12374 = vsel %vm12371, %v12373, %v12369
    %v12375 = vmul.f32 %v11191, %v12374
    %v12376 = vrcp.pop %v9662
    %v12377 = vmul.f32 %v9662, %v12376
    %v12378 = vsub.f32 1.0, %v12377
    %v12379 = vmul.f32 %v12376, %v12378
    %v12380 = vadd.f32 %v12376, %v12379
    %vm12381 = vweird.f32 %v9662
    %vm12382 = vweird.f32 %v12376
    %vm12383 = vmor %vm12381, %vm12382
    %v12384 = vsel %vm12383, %v12376, %v12380
    %v12385 = vand.u32 2147483647, %v9662
    %vm12386 = vcmp.eq.f32.partialorder %v12385, 8.507059e+37
    %v12387 = vand.u32 %v9662, 2147483648
    %v12388 = vor.u32 1.1754944e-38, %v12387
    %v12389 = vsel %vm12386, %v12388, %v12384
    %v12390 = vmul.f32 %v11198, %v12389
    %v12391 = vrcp.pop %v9669
    %v12392 = vmul.f32 %v9669, %v12391
    %v12393 = vsub.f32 1.0, %v12392
    %v12394 = vmul.f32 %v12391, %v12393
    %v12395 = vadd.f32 %v12391, %v12394
    %vm12396 = vweird.f32 %v9669
    %vm12397 = vweird.f32 %v12391
    %vm12398 = vmor %vm12396, %vm12397
    %v12399 = vsel %vm12398, %v12391, %v12395
    %v12400 = vand.u32 2147483647, %v9669
    %vm12401 = vcmp.eq.f32.partialorder %v12400, 8.507059e+37
    %v12402 = vand.u32 %v9669, 2147483648
    %v12403 = vor.u32 1.1754944e-38, %v12402
    %v12404 = vsel %vm12401, %v12403, %v12399
    %v12405 = vmul.f32 %v11205, %v12404
    %v12406 = vrcp.pop %v9676
    %v12407 = vmul.f32 %v9676, %v12406
    %v12408 = vsub.f32 1.0, %v12407
    %v12409 = vmul.f32 %v12406, %v12408
    %v12410 = vadd.f32 %v12406, %v12409
    %vm12411 = vweird.f32 %v9676
    %vm12412 = vweird.f32 %v12406
    %vm12413 = vmor %vm12411, %vm12412
    %v12414 = vsel %vm12413, %v12406, %v12410
    %v12415 = vand.u32 2147483647, %v9676
    %vm12416 = vcmp.eq.f32.partialorder %v12415, 8.507059e+37
    %v12417 = vand.u32 %v9676, 2147483648
    %v12418 = vor.u32 1.1754944e-38, %v12417
    %v12419 = vsel %vm12416, %v12418, %v12414
    %v12420 = vmul.f32 %v11212, %v12419
    %v12421 = vrcp.pop %v9683
    %v12422 = vmul.f32 %v9683, %v12421
    %v12423 = vsub.f32 1.0, %v12422
    %v12424 = vmul.f32 %v12421, %v12423
    %v12425 = vadd.f32 %v12421, %v12424
    %vm12426 = vweird.f32 %v9683
    %vm12427 = vweird.f32 %v12421
    %vm12428 = vmor %vm12426, %vm12427
    %v12429 = vsel %vm12428, %v12421, %v12425
    %v12430 = vand.u32 2147483647, %v9683
    %vm12431 = vcmp.eq.f32.partialorder %v12430, 8.507059e+37
    %v12432 = vand.u32 %v9683, 2147483648
    %v12433 = vor.u32 1.1754944e-38, %v12432
    %v12434 = vsel %vm12431, %v12433, %v12429
    %v12435 = vmul.f32 %v11219, %v12434
    %v12436 = vrcp.pop %v9690
    %v12437 = vmul.f32 %v9690, %v12436
    %v12438 = vsub.f32 1.0, %v12437
    %v12439 = vmul.f32 %v12436, %v12438
    %v12440 = vadd.f32 %v12436, %v12439
    %vm12441 = vweird.f32 %v9690
    %vm12442 = vweird.f32 %v12436
    %vm12443 = vmor %vm12441, %vm12442
    %v12444 = vsel %vm12443, %v12436, %v12440
    %v12445 = vand.u32 2147483647, %v9690
    %vm12446 = vcmp.eq.f32.partialorder %v12445, 8.507059e+37
    %v12447 = vand.u32 %v9690, 2147483648
    %v12448 = vor.u32 1.1754944e-38, %v12447
    %v12449 = vsel %vm12446, %v12448, %v12444
    %v12450 = vmul.f32 %v11226, %v12449
    %v12451 = vrcp.pop %v9697
    %v12452 = vmul.f32 %v9697, %v12451
    %v12453 = vsub.f32 1.0, %v12452
    %v12454 = vmul.f32 %v12451, %v12453
    %v12455 = vadd.f32 %v12451, %v12454
    %vm12456 = vweird.f32 %v9697
    %vm12457 = vweird.f32 %v12451
    %vm12458 = vmor %vm12456, %vm12457
    %v12459 = vsel %vm12458, %v12451, %v12455
    %v12460 = vand.u32 2147483647, %v9697
    %vm12461 = vcmp.eq.f32.partialorder %v12460, 8.507059e+37
    %v12462 = vand.u32 %v9697, 2147483648
    %v12463 = vor.u32 1.1754944e-38, %v12462
    %v12464 = vsel %vm12461, %v12463, %v12459
    %v12465 = vmul.f32 %v11233, %v12464
    %v12466 = vrcp.pop %v9704
    %v12467 = vmul.f32 %v9704, %v12466
    %v12468 = vsub.f32 1.0, %v12467
    %v12469 = vmul.f32 %v12466, %v12468
    %v12470 = vadd.f32 %v12466, %v12469
    %vm12471 = vweird.f32 %v9704
    %vm12472 = vweird.f32 %v12466
    %vm12473 = vmor %vm12471, %vm12472
    %v12474 = vsel %vm12473, %v12466, %v12470
    %v12475 = vand.u32 2147483647, %v9704
    %vm12476 = vcmp.eq.f32.partialorder %v12475, 8.507059e+37
    %v12477 = vand.u32 %v9704, 2147483648
    %v12478 = vor.u32 1.1754944e-38, %v12477
    %v12479 = vsel %vm12476, %v12478, %v12474
    %v12480 = vmul.f32 %v11240, %v12479
    %v12481 = vrcp.pop %v9711
    %v12482 = vmul.f32 %v9711, %v12481
    %v12483 = vsub.f32 1.0, %v12482
    %v12484 = vmul.f32 %v12481, %v12483
    %v12485 = vadd.f32 %v12481, %v12484
    %vm12486 = vweird.f32 %v9711
    %vm12487 = vweird.f32 %v12481
    %vm12488 = vmor %vm12486, %vm12487
    %v12489 = vsel %vm12488, %v12481, %v12485
    %v12490 = vand.u32 2147483647, %v9711
    %vm12491 = vcmp.eq.f32.partialorder %v12490, 8.507059e+37
    %v12492 = vand.u32 %v9711, 2147483648
    %v12493 = vor.u32 1.1754944e-38, %v12492
    %v12494 = vsel %vm12491, %v12493, %v12489
    %v12495 = vmul.f32 %v11247, %v12494
    %v12496 = vrcp.pop %v9718
    %v12497 = vmul.f32 %v9718, %v12496
    %v12498 = vsub.f32 1.0, %v12497
    %v12499 = vmul.f32 %v12496, %v12498
    %v12500 = vadd.f32 %v12496, %v12499
    %vm12501 = vweird.f32 %v9718
    %vm12502 = vweird.f32 %v12496
    %vm12503 = vmor %vm12501, %vm12502
    %v12504 = vsel %vm12503, %v12496, %v12500
    %v12505 = vand.u32 2147483647, %v9718
    %vm12506 = vcmp.eq.f32.partialorder %v12505, 8.507059e+37
    %v12507 = vand.u32 %v9718, 2147483648
    %v12508 = vor.u32 1.1754944e-38, %v12507
    %v12509 = vsel %vm12506, %v12508, %v12504
    %v12510 = vmul.f32 %v11254, %v12509
    %v12511 = vrcp.pop %v9725
    %v12512 = vmul.f32 %v9725, %v12511
    %v12513 = vsub.f32 1.0, %v12512
    %v12514 = vmul.f32 %v12511, %v12513
    %v12515 = vadd.f32 %v12511, %v12514
    %vm12516 = vweird.f32 %v9725
    %vm12517 = vweird.f32 %v12511
    %vm12518 = vmor %vm12516, %vm12517
    %v12519 = vsel %vm12518, %v12511, %v12515
    %v12520 = vand.u32 2147483647, %v9725
    %vm12521 = vcmp.eq.f32.partialorder %v12520, 8.507059e+37
    %v12522 = vand.u32 %v9725, 2147483648
    %v12523 = vor.u32 1.1754944e-38, %v12522
    %v12524 = vsel %vm12521, %v12523, %v12519
    %v12525 = vmul.f32 %v11261, %v12524
    %v12526 = vrcp.pop %v9732
    %v12527 = vmul.f32 %v9732, %v12526
    %v12528 = vsub.f32 1.0, %v12527
    %v12529 = vmul.f32 %v12526, %v12528
    %v12530 = vadd.f32 %v12526, %v12529
    %vm12531 = vweird.f32 %v9732
    %vm12532 = vweird.f32 %v12526
    %vm12533 = vmor %vm12531, %vm12532
    %v12534 = vsel %vm12533, %v12526, %v12530
    %v12535 = vand.u32 2147483647, %v9732
    %vm12536 = vcmp.eq.f32.partialorder %v12535, 8.507059e+37
    %v12537 = vand.u32 %v9732, 2147483648
    %v12538 = vor.u32 1.1754944e-38, %v12537
    %v12539 = vsel %vm12536, %v12538, %v12534
    %v12540 = vmul.f32 %v11268, %v12539
    %v12541 = vrcp.pop %v9739
    %v12542 = vmul.f32 %v9739, %v12541
    %v12543 = vsub.f32 1.0, %v12542
    %v12544 = vmul.f32 %v12541, %v12543
    %v12545 = vadd.f32 %v12541, %v12544
    %vm12546 = vweird.f32 %v9739
    %vm12547 = vweird.f32 %v12541
    %vm12548 = vmor %vm12546, %vm12547
    %v12549 = vsel %vm12548, %v12541, %v12545
    %v12550 = vand.u32 2147483647, %v9739
    %vm12551 = vcmp.eq.f32.partialorder %v12550, 8.507059e+37
    %v12552 = vand.u32 %v9739, 2147483648
    %v12553 = vor.u32 1.1754944e-38, %v12552
    %v12554 = vsel %vm12551, %v12553, %v12549
    %v12555 = vmul.f32 %v11275, %v12554
    %v12556 = vrcp.pop %v9746
    %v12557 = vmul.f32 %v9746, %v12556
    %v12558 = vsub.f32 1.0, %v12557
    %v12559 = vmul.f32 %v12556, %v12558
    %v12560 = vadd.f32 %v12556, %v12559
    %vm12561 = vweird.f32 %v9746
    %vm12562 = vweird.f32 %v12556
    %vm12563 = vmor %vm12561, %vm12562
    %v12564 = vsel %vm12563, %v12556, %v12560
    %v12565 = vand.u32 2147483647, %v9746
    %vm12566 = vcmp.eq.f32.partialorder %v12565, 8.507059e+37
    %v12567 = vand.u32 %v9746, 2147483648
    %v12568 = vor.u32 1.1754944e-38, %v12567
    %v12569 = vsel %vm12566, %v12568, %v12564
    %v12570 = vmul.f32 %v11282, %v12569
    %v12571 = vrcp.pop %v9753
    %v12572 = vmul.f32 %v9753, %v12571
    %v12573 = vsub.f32 1.0, %v12572
    %v12574 = vmul.f32 %v12571, %v12573
    %v12575 = vadd.f32 %v12571, %v12574
    %vm12576 = vweird.f32 %v9753
    %vm12577 = vweird.f32 %v12571
    %vm12578 = vmor %vm12576, %vm12577
    %v12579 = vsel %vm12578, %v12571, %v12575
    %v12580 = vand.u32 2147483647, %v9753
    %vm12581 = vcmp.eq.f32.partialorder %v12580, 8.507059e+37
    %v12582 = vand.u32 %v9753, 2147483648
    %v12583 = vor.u32 1.1754944e-38, %v12582
    %v12584 = vsel %vm12581, %v12583, %v12579
    %v12585 = vmul.f32 %v11289, %v12584
    %v12586 = vrcp.pop %v9760
    %v12587 = vmul.f32 %v9760, %v12586
    %v12588 = vsub.f32 1.0, %v12587
    %v12589 = vmul.f32 %v12586, %v12588
    %v12590 = vadd.f32 %v12586, %v12589
    %vm12591 = vweird.f32 %v9760
    %vm12592 = vweird.f32 %v12586
    %vm12593 = vmor %vm12591, %vm12592
    %v12594 = vsel %vm12593, %v12586, %v12590
    %v12595 = vand.u32 2147483647, %v9760
    %vm12596 = vcmp.eq.f32.partialorder %v12595, 8.507059e+37
    %v12597 = vand.u32 %v9760, 2147483648
    %v12598 = vor.u32 1.1754944e-38, %v12597
    %v12599 = vsel %vm12596, %v12598, %v12594
    %v12600 = vmul.f32 %v11296, %v12599
    %v12601 = vrcp.pop %v9767
    %v12602 = vmul.f32 %v9767, %v12601
    %v12603 = vsub.f32 1.0, %v12602
    %v12604 = vmul.f32 %v12601, %v12603
    %v12605 = vadd.f32 %v12601, %v12604
    %vm12606 = vweird.f32 %v9767
    %vm12607 = vweird.f32 %v12601
    %vm12608 = vmor %vm12606, %vm12607
    %v12609 = vsel %vm12608, %v12601, %v12605
    %v12610 = vand.u32 2147483647, %v9767
    %vm12611 = vcmp.eq.f32.partialorder %v12610, 8.507059e+37
    %v12612 = vand.u32 %v9767, 2147483648
    %v12613 = vor.u32 1.1754944e-38, %v12612
    %v12614 = vsel %vm12611, %v12613, %v12609
    %v12615 = vmul.f32 %v11303, %v12614
    %v12616 = vrcp.pop %v9774
    %v12617 = vmul.f32 %v9774, %v12616
    %v12618 = vsub.f32 1.0, %v12617
    %v12619 = vmul.f32 %v12616, %v12618
    %v12620 = vadd.f32 %v12616, %v12619
    %vm12621 = vweird.f32 %v9774
    %vm12622 = vweird.f32 %v12616
    %vm12623 = vmor %vm12621, %vm12622
    %v12624 = vsel %vm12623, %v12616, %v12620
    %v12625 = vand.u32 2147483647, %v9774
    %vm12626 = vcmp.eq.f32.partialorder %v12625, 8.507059e+37
    %v12627 = vand.u32 %v9774, 2147483648
    %v12628 = vor.u32 1.1754944e-38, %v12627
    %v12629 = vsel %vm12626, %v12628, %v12624
    %v12630 = vmul.f32 %v11310, %v12629
    %v12631 = vrcp.pop %v9781
    %v12632 = vmul.f32 %v9781, %v12631
    %v12633 = vsub.f32 1.0, %v12632
    %v12634 = vmul.f32 %v12631, %v12633
    %v12635 = vadd.f32 %v12631, %v12634
    %vm12636 = vweird.f32 %v9781
    %vm12637 = vweird.f32 %v12631
    %vm12638 = vmor %vm12636, %vm12637
    %v12639 = vsel %vm12638, %v12631, %v12635
    %v12640 = vand.u32 2147483647, %v9781
    %vm12641 = vcmp.eq.f32.partialorder %v12640, 8.507059e+37
    %v12642 = vand.u32 %v9781, 2147483648
    %v12643 = vor.u32 1.1754944e-38, %v12642
    %v12644 = vsel %vm12641, %v12643, %v12639
    %v12645 = vmul.f32 %v11317, %v12644
    %v12646 = vrcp.pop %v9788
    %v12647 = vmul.f32 %v9788, %v12646
    %v12648 = vsub.f32 1.0, %v12647
    %v12649 = vmul.f32 %v12646, %v12648
    %v12650 = vadd.f32 %v12646, %v12649
    %vm12651 = vweird.f32 %v9788
    %vm12652 = vweird.f32 %v12646
    %vm12653 = vmor %vm12651, %vm12652
    %v12654 = vsel %vm12653, %v12646, %v12650
    %v12655 = vand.u32 2147483647, %v9788
    %vm12656 = vcmp.eq.f32.partialorder %v12655, 8.507059e+37
    %v12657 = vand.u32 %v9788, 2147483648
    %v12658 = vor.u32 1.1754944e-38, %v12657
    %v12659 = vsel %vm12656, %v12658, %v12654
    %v12660 = vmul.f32 %v11324, %v12659
    %v12661 = vrcp.pop %v9795
    %v12662 = vmul.f32 %v9795, %v12661
    %v12663 = vsub.f32 1.0, %v12662
    %v12664 = vmul.f32 %v12661, %v12663
    %v12665 = vadd.f32 %v12661, %v12664
    %vm12666 = vweird.f32 %v9795
    %vm12667 = vweird.f32 %v12661
    %vm12668 = vmor %vm12666, %vm12667
    %v12669 = vsel %vm12668, %v12661, %v12665
    %v12670 = vand.u32 2147483647, %v9795
    %vm12671 = vcmp.eq.f32.partialorder %v12670, 8.507059e+37
    %v12672 = vand.u32 %v9795, 2147483648
    %v12673 = vor.u32 1.1754944e-38, %v12672
    %v12674 = vsel %vm12671, %v12673, %v12669
    %v12675 = vmul.f32 %v11331, %v12674
    %v12676 = vrcp.pop %v9802
    %v12677 = vmul.f32 %v9802, %v12676
    %v12678 = vsub.f32 1.0, %v12677
    %v12679 = vmul.f32 %v12676, %v12678
    %v12680 = vadd.f32 %v12676, %v12679
    %vm12681 = vweird.f32 %v9802
    %vm12682 = vweird.f32 %v12676
    %vm12683 = vmor %vm12681, %vm12682
    %v12684 = vsel %vm12683, %v12676, %v12680
    %v12685 = vand.u32 2147483647, %v9802
    %vm12686 = vcmp.eq.f32.partialorder %v12685, 8.507059e+37
    %v12687 = vand.u32 %v9802, 2147483648
    %v12688 = vor.u32 1.1754944e-38, %v12687
    %v12689 = vsel %vm12686, %v12688, %v12684
    %v12690 = vmul.f32 %v11338, %v12689
    %v12691 = vrcp.pop %v9809
    %v12692 = vmul.f32 %v9809, %v12691
    %v12693 = vsub.f32 1.0, %v12692
    %v12694 = vmul.f32 %v12691, %v12693
    %v12695 = vadd.f32 %v12691, %v12694
    %vm12696 = vweird.f32 %v9809
    %vm12697 = vweird.f32 %v12691
    %vm12698 = vmor %vm12696, %vm12697
    %v12699 = vsel %vm12698, %v12691, %v12695
    %v12700 = vand.u32 2147483647, %v9809
    %vm12701 = vcmp.eq.f32.partialorder %v12700, 8.507059e+37
    %v12702 = vand.u32 %v9809, 2147483648
    %v12703 = vor.u32 1.1754944e-38, %v12702
    %v12704 = vsel %vm12701, %v12703, %v12699
    %v12705 = vmul.f32 %v11345, %v12704
    %v12706 = vrcp.pop %v9816
    %v12707 = vmul.f32 %v9816, %v12706
    %v12708 = vsub.f32 1.0, %v12707
    %v12709 = vmul.f32 %v12706, %v12708
    %v12710 = vadd.f32 %v12706, %v12709
    %vm12711 = vweird.f32 %v9816
    %vm12712 = vweird.f32 %v12706
    %vm12713 = vmor %vm12711, %vm12712
    %v12714 = vsel %vm12713, %v12706, %v12710
    %v12715 = vand.u32 2147483647, %v9816
    %vm12716 = vcmp.eq.f32.partialorder %v12715, 8.507059e+37
    %v12717 = vand.u32 %v9816, 2147483648
    %v12718 = vor.u32 1.1754944e-38, %v12717
    %v12719 = vsel %vm12716, %v12718, %v12714
    %v12720 = vmul.f32 %v11352, %v12719
    %v12721 = vrcp.pop %v9823
    %v12722 = vmul.f32 %v9823, %v12721
    %v12723 = vsub.f32 1.0, %v12722
    %v12724 = vmul.f32 %v12721, %v12723
    %v12725 = vadd.f32 %v12721, %v12724
    %vm12726 = vweird.f32 %v9823
    %vm12727 = vweird.f32 %v12721
    %vm12728 = vmor %vm12726, %vm12727
    %v12729 = vsel %vm12728, %v12721, %v12725
    %v12730 = vand.u32 2147483647, %v9823
    %vm12731 = vcmp.eq.f32.partialorder %v12730, 8.507059e+37
    %v12732 = vand.u32 %v9823, 2147483648
    %v12733 = vor.u32 1.1754944e-38, %v12732
    %v12734 = vsel %vm12731, %v12733, %v12729
    %v12735 = vmul.f32 %v11359, %v12734
    %v12736 = vrcp.pop %v9830
    %v12737 = vmul.f32 %v9830, %v12736
    %v12738 = vsub.f32 1.0, %v12737
    %v12739 = vmul.f32 %v12736, %v12738
    %v12740 = vadd.f32 %v12736, %v12739
    %vm12741 = vweird.f32 %v9830
    %vm12742 = vweird.f32 %v12736
    %vm12743 = vmor %vm12741, %vm12742
    %v12744 = vsel %vm12743, %v12736, %v12740
    %v12745 = vand.u32 2147483647, %v9830
    %vm12746 = vcmp.eq.f32.partialorder %v12745, 8.507059e+37
    %v12747 = vand.u32 %v9830, 2147483648
    %v12748 = vor.u32 1.1754944e-38, %v12747
    %v12749 = vsel %vm12746, %v12748, %v12744
    %v12750 = vmul.f32 %v11366, %v12749
    %v12751 = vrcp.pop %v9837
    %v12752 = vmul.f32 %v9837, %v12751
    %v12753 = vsub.f32 1.0, %v12752
    %v12754 = vmul.f32 %v12751, %v12753
    %v12755 = vadd.f32 %v12751, %v12754
    %vm12756 = vweird.f32 %v9837
    %vm12757 = vweird.f32 %v12751
    %vm12758 = vmor %vm12756, %vm12757
    %v12759 = vsel %vm12758, %v12751, %v12755
    %v12760 = vand.u32 2147483647, %v9837
    %vm12761 = vcmp.eq.f32.partialorder %v12760, 8.507059e+37
    %v12762 = vand.u32 %v9837, 2147483648
    %v12763 = vor.u32 1.1754944e-38, %v12762
    %v12764 = vsel %vm12761, %v12763, %v12759
    %v12765 = vmul.f32 %v11373, %v12764
    %v12766 = vrcp.pop %v9844
    %v12767 = vmul.f32 %v9844, %v12766
    %v12768 = vsub.f32 1.0, %v12767
    %v12769 = vmul.f32 %v12766, %v12768
    %v12770 = vadd.f32 %v12766, %v12769
    %vm12771 = vweird.f32 %v9844
    %vm12772 = vweird.f32 %v12766
    %vm12773 = vmor %vm12771, %vm12772
    %v12774 = vsel %vm12773, %v12766, %v12770
    %v12775 = vand.u32 2147483647, %v9844
    %vm12776 = vcmp.eq.f32.partialorder %v12775, 8.507059e+37
    %v12777 = vand.u32 %v9844, 2147483648
    %v12778 = vor.u32 1.1754944e-38, %v12777
    %v12779 = vsel %vm12776, %v12778, %v12774
    %v12780 = vmul.f32 %v11380, %v12779
    %v12781 = vrcp.pop %v9851
    %v12782 = vmul.f32 %v9851, %v12781
    %v12783 = vsub.f32 1.0, %v12782
    %v12784 = vmul.f32 %v12781, %v12783
    %v12785 = vadd.f32 %v12781, %v12784
    %vm12786 = vweird.f32 %v9851
    %vm12787 = vweird.f32 %v12781
    %vm12788 = vmor %vm12786, %vm12787
    %v12789 = vsel %vm12788, %v12781, %v12785
    %v12790 = vand.u32 2147483647, %v9851
    %vm12791 = vcmp.eq.f32.partialorder %v12790, 8.507059e+37
    %v12792 = vand.u32 %v9851, 2147483648
    %v12793 = vor.u32 1.1754944e-38, %v12792
    %v12794 = vsel %vm12791, %v12793, %v12789
    %v12795 = vmul.f32 %v11387, %v12794
    %v12796 = vrcp.pop %v9858
    %v12797 = vmul.f32 %v9858, %v12796
    %v12798 = vsub.f32 1.0, %v12797
    %v12799 = vmul.f32 %v12796, %v12798
    %v12800 = vadd.f32 %v12796, %v12799
    %vm12801 = vweird.f32 %v9858
    %vm12802 = vweird.f32 %v12796
    %vm12803 = vmor %vm12801, %vm12802
    %v12804 = vsel %vm12803, %v12796, %v12800
    %v12805 = vand.u32 2147483647, %v9858
    %vm12806 = vcmp.eq.f32.partialorder %v12805, 8.507059e+37
    %v12807 = vand.u32 %v9858, 2147483648
    %v12808 = vor.u32 1.1754944e-38, %v12807
    %v12809 = vsel %vm12806, %v12808, %v12804
    %v12810 = vmul.f32 %v11394, %v12809
    %v12811 = vrcp.pop %v9865
    %v12812 = vmul.f32 %v9865, %v12811
    %v12813 = vsub.f32 1.0, %v12812
    %v12814 = vmul.f32 %v12811, %v12813
    %v12815 = vadd.f32 %v12811, %v12814
    %vm12816 = vweird.f32 %v9865
    %vm12817 = vweird.f32 %v12811
    %vm12818 = vmor %vm12816, %vm12817
    %v12819 = vsel %vm12818, %v12811, %v12815
    %v12820 = vand.u32 2147483647, %v9865
    %vm12821 = vcmp.eq.f32.partialorder %v12820, 8.507059e+37
    %v12822 = vand.u32 %v9865, 2147483648
    %v12823 = vor.u32 1.1754944e-38, %v12822
    %v12824 = vsel %vm12821, %v12823, %v12819
    %v12825 = vmul.f32 %v11401, %v12824
    %v12826 = vrcp.pop %v9872
    %v12827 = vmul.f32 %v9872, %v12826
    %v12828 = vsub.f32 1.0, %v12827
    %v12829 = vmul.f32 %v12826, %v12828
    %v12830 = vadd.f32 %v12826, %v12829
    %vm12831 = vweird.f32 %v9872
    %vm12832 = vweird.f32 %v12826
    %vm12833 = vmor %vm12831, %vm12832
    %v12834 = vsel %vm12833, %v12826, %v12830
    %v12835 = vand.u32 2147483647, %v9872
    %vm12836 = vcmp.eq.f32.partialorder %v12835, 8.507059e+37
    %v12837 = vand.u32 %v9872, 2147483648
    %v12838 = vor.u32 1.1754944e-38, %v12837
    %v12839 = vsel %vm12836, %v12838, %v12834
    %v12840 = vmul.f32 %v11408, %v12839
    %v12841 = vrcp.pop %v9879
    %v12842 = vmul.f32 %v9879, %v12841
    %v12843 = vsub.f32 1.0, %v12842
    %v12844 = vmul.f32 %v12841, %v12843
    %v12845 = vadd.f32 %v12841, %v12844
    %vm12846 = vweird.f32 %v9879
    %vm12847 = vweird.f32 %v12841
    %vm12848 = vmor %vm12846, %vm12847
    %v12849 = vsel %vm12848, %v12841, %v12845
    %v12850 = vand.u32 2147483647, %v9879
    %vm12851 = vcmp.eq.f32.partialorder %v12850, 8.507059e+37
    %v12852 = vand.u32 %v9879, 2147483648
    %v12853 = vor.u32 1.1754944e-38, %v12852
    %v12854 = vsel %vm12851, %v12853, %v12849
    %v12855 = vmul.f32 %v11415, %v12854
    %v12856 = vrcp.pop %v9886
    %v12857 = vmul.f32 %v9886, %v12856
    %v12858 = vsub.f32 1.0, %v12857
    %v12859 = vmul.f32 %v12856, %v12858
    %v12860 = vadd.f32 %v12856, %v12859
    %vm12861 = vweird.f32 %v9886
    %vm12862 = vweird.f32 %v12856
    %vm12863 = vmor %vm12861, %vm12862
    %v12864 = vsel %vm12863, %v12856, %v12860
    %v12865 = vand.u32 2147483647, %v9886
    %vm12866 = vcmp.eq.f32.partialorder %v12865, 8.507059e+37
    %v12867 = vand.u32 %v9886, 2147483648
    %v12868 = vor.u32 1.1754944e-38, %v12867
    %v12869 = vsel %vm12866, %v12868, %v12864
    %v12870 = vmul.f32 %v11422, %v12869
    %v12871 = vrcp.pop %v9893
    %v12872 = vmul.f32 %v9893, %v12871
    %v12873 = vsub.f32 1.0, %v12872
    %v12874 = vmul.f32 %v12871, %v12873
    %v12875 = vadd.f32 %v12871, %v12874
    %vm12876 = vweird.f32 %v9893
    %vm12877 = vweird.f32 %v12871
    %vm12878 = vmor %vm12876, %vm12877
    %v12879 = vsel %vm12878, %v12871, %v12875
    %v12880 = vand.u32 2147483647, %v9893
    %vm12881 = vcmp.eq.f32.partialorder %v12880, 8.507059e+37
    %v12882 = vand.u32 %v9893, 2147483648
    %v12883 = vor.u32 1.1754944e-38, %v12882
    %v12884 = vsel %vm12881, %v12883, %v12879
    %v12885 = vmul.f32 %v11429, %v12884
    %v12886 = vrcp.pop %v9900
    %v12887 = vmul.f32 %v9900, %v12886
    %v12888 = vsub.f32 1.0, %v12887
    %v12889 = vmul.f32 %v12886, %v12888
    %v12890 = vadd.f32 %v12886, %v12889
    %vm12891 = vweird.f32 %v9900
    %vm12892 = vweird.f32 %v12886
    %vm12893 = vmor %vm12891, %vm12892
    %v12894 = vsel %vm12893, %v12886, %v12890
    %v12895 = vand.u32 2147483647, %v9900
    %vm12896 = vcmp.eq.f32.partialorder %v12895, 8.507059e+37
    %v12897 = vand.u32 %v9900, 2147483648
    %v12898 = vor.u32 1.1754944e-38, %v12897
    %v12899 = vsel %vm12896, %v12898, %v12894
    %v12900 = vmul.f32 %v11436, %v12899
    %v12901 = vrcp.pop %v9907
    %v12902 = vmul.f32 %v9907, %v12901
    %v12903 = vsub.f32 1.0, %v12902
    %v12904 = vmul.f32 %v12901, %v12903
    %v12905 = vadd.f32 %v12901, %v12904
    %vm12906 = vweird.f32 %v9907
    %vm12907 = vweird.f32 %v12901
    %vm12908 = vmor %vm12906, %vm12907
    %v12909 = vsel %vm12908, %v12901, %v12905
    %v12910 = vand.u32 2147483647, %v9907
    %vm12911 = vcmp.eq.f32.partialorder %v12910, 8.507059e+37
    %v12912 = vand.u32 %v9907, 2147483648
    %v12913 = vor.u32 1.1754944e-38, %v12912
    %v12914 = vsel %vm12911, %v12913, %v12909
    %v12915 = vmul.f32 %v11443, %v12914
    %v12916 = vrcp.pop %v9914
    %v12917 = vmul.f32 %v9914, %v12916
    %v12918 = vsub.f32 1.0, %v12917
    %v12919 = vmul.f32 %v12916, %v12918
    %v12920 = vadd.f32 %v12916, %v12919
    %vm12921 = vweird.f32 %v9914
    %vm12922 = vweird.f32 %v12916
    %vm12923 = vmor %vm12921, %vm12922
    %v12924 = vsel %vm12923, %v12916, %v12920
    %v12925 = vand.u32 2147483647, %v9914
    %vm12926 = vcmp.eq.f32.partialorder %v12925, 8.507059e+37
    %v12927 = vand.u32 %v9914, 2147483648
    %v12928 = vor.u32 1.1754944e-38, %v12927
    %v12929 = vsel %vm12926, %v12928, %v12924
    %v12930 = vmul.f32 %v11450, %v12929
    %v12931 = vrcp.pop %v9921
    %v12932 = vmul.f32 %v9921, %v12931
    %v12933 = vsub.f32 1.0, %v12932
    %v12934 = vmul.f32 %v12931, %v12933
    %v12935 = vadd.f32 %v12931, %v12934
    %vm12936 = vweird.f32 %v9921
    %vm12937 = vweird.f32 %v12931
    %vm12938 = vmor %vm12936, %vm12937
    %v12939 = vsel %vm12938, %v12931, %v12935
    %v12940 = vand.u32 2147483647, %v9921
    %vm12941 = vcmp.eq.f32.partialorder %v12940, 8.507059e+37
    %v12942 = vand.u32 %v9921, 2147483648
    %v12943 = vor.u32 1.1754944e-38, %v12942
    %v12944 = vsel %vm12941, %v12943, %v12939
    %v12945 = vmul.f32 %v11457, %v12944
    %v12946 = vrcp.pop %v9928
    %v12947 = vmul.f32 %v9928, %v12946
    %v12948 = vsub.f32 1.0, %v12947
    %v12949 = vmul.f32 %v12946, %v12948
    %v12950 = vadd.f32 %v12946, %v12949
    %vm12951 = vweird.f32 %v9928
    %vm12952 = vweird.f32 %v12946
    %vm12953 = vmor %vm12951, %vm12952
    %v12954 = vsel %vm12953, %v12946, %v12950
    %v12955 = vand.u32 2147483647, %v9928
    %vm12956 = vcmp.eq.f32.partialorder %v12955, 8.507059e+37
    %v12957 = vand.u32 %v9928, 2147483648
    %v12958 = vor.u32 1.1754944e-38, %v12957
    %v12959 = vsel %vm12956, %v12958, %v12954
    %v12960 = vmul.f32 %v11464, %v12959
    %v12961 = vrcp.pop %v9935
    %v12962 = vmul.f32 %v9935, %v12961
    %v12963 = vsub.f32 1.0, %v12962
    %v12964 = vmul.f32 %v12961, %v12963
    %v12965 = vadd.f32 %v12961, %v12964
    %vm12966 = vweird.f32 %v9935
    %vm12967 = vweird.f32 %v12961
    %vm12968 = vmor %vm12966, %vm12967
    %v12969 = vsel %vm12968, %v12961, %v12965
    %v12970 = vand.u32 2147483647, %v9935
    %vm12971 = vcmp.eq.f32.partialorder %v12970, 8.507059e+37
    %v12972 = vand.u32 %v9935, 2147483648
    %v12973 = vor.u32 1.1754944e-38, %v12972
    %v12974 = vsel %vm12971, %v12973, %v12969
    %v12975 = vmul.f32 %v11471, %v12974
    %v12976 = vrcp.pop %v9942
    %v12977 = vmul.f32 %v9942, %v12976
    %v12978 = vsub.f32 1.0, %v12977
    %v12979 = vmul.f32 %v12976, %v12978
    %v12980 = vadd.f32 %v12976, %v12979
    %vm12981 = vweird.f32 %v9942
    %vm12982 = vweird.f32 %v12976
    %vm12983 = vmor %vm12981, %vm12982
    %v12984 = vsel %vm12983, %v12976, %v12980
    %v12985 = vand.u32 2147483647, %v9942
    %vm12986 = vcmp.eq.f32.partialorder %v12985, 8.507059e+37
    %v12987 = vand.u32 %v9942, 2147483648
    %v12988 = vor.u32 1.1754944e-38, %v12987
    %v12989 = vsel %vm12986, %v12988, %v12984
    %v12990 = vmul.f32 %v11478, %v12989
    %v12991 = vrcp.pop %v9949
    %v12992 = vmul.f32 %v9949, %v12991
    %v12993 = vsub.f32 1.0, %v12992
    %v12994 = vmul.f32 %v12991, %v12993
    %v12995 = vadd.f32 %v12991, %v12994
    %vm12996 = vweird.f32 %v9949
    %vm12997 = vweird.f32 %v12991
    %vm12998 = vmor %vm12996, %vm12997
    %v12999 = vsel %vm12998, %v12991, %v12995
    %v13000 = vand.u32 2147483647, %v9949
    %vm13001 = vcmp.eq.f32.partialorder %v13000, 8.507059e+37
    %v13002 = vand.u32 %v9949, 2147483648
    %v13003 = vor.u32 1.1754944e-38, %v13002
    %v13004 = vsel %vm13001, %v13003, %v12999
    %v13005 = vmul.f32 %v11485, %v13004
    %v13006 = vrcp.pop %v9956
    %v13007 = vmul.f32 %v9956, %v13006
    %v13008 = vsub.f32 1.0, %v13007
    %v13009 = vmul.f32 %v13006, %v13008
    %v13010 = vadd.f32 %v13006, %v13009
    %vm13011 = vweird.f32 %v9956
    %vm13012 = vweird.f32 %v13006
    %vm13013 = vmor %vm13011, %vm13012
    %v13014 = vsel %vm13013, %v13006, %v13010
    %v13015 = vand.u32 2147483647, %v9956
    %vm13016 = vcmp.eq.f32.partialorder %v13015, 8.507059e+37
    %v13017 = vand.u32 %v9956, 2147483648
    %v13018 = vor.u32 1.1754944e-38, %v13017
    %v13019 = vsel %vm13016, %v13018, %v13014
    %v13020 = vmul.f32 %v11492, %v13019
    %v13021 = vrcp.pop %v9963
    %v13022 = vmul.f32 %v9963, %v13021
    %v13023 = vsub.f32 1.0, %v13022
    %v13024 = vmul.f32 %v13021, %v13023
    %v13025 = vadd.f32 %v13021, %v13024
    %vm13026 = vweird.f32 %v9963
    %vm13027 = vweird.f32 %v13021
    %vm13028 = vmor %vm13026, %vm13027
    %v13029 = vsel %vm13028, %v13021, %v13025
    %v13030 = vand.u32 2147483647, %v9963
    %vm13031 = vcmp.eq.f32.partialorder %v13030, 8.507059e+37
    %v13032 = vand.u32 %v9963, 2147483648
    %v13033 = vor.u32 1.1754944e-38, %v13032
    %v13034 = vsel %vm13031, %v13033, %v13029
    %v13035 = vmul.f32 %v11499, %v13034
    %v13036 = vrcp.pop %v9970
    %v13037 = vmul.f32 %v9970, %v13036
    %v13038 = vsub.f32 1.0, %v13037
    %v13039 = vmul.f32 %v13036, %v13038
    %v13040 = vadd.f32 %v13036, %v13039
    %vm13041 = vweird.f32 %v9970
    %vm13042 = vweird.f32 %v13036
    %vm13043 = vmor %vm13041, %vm13042
    %v13044 = vsel %vm13043, %v13036, %v13040
    %v13045 = vand.u32 2147483647, %v9970
    %vm13046 = vcmp.eq.f32.partialorder %v13045, 8.507059e+37
    %v13047 = vand.u32 %v9970, 2147483648
    %v13048 = vor.u32 1.1754944e-38, %v13047
    %v13049 = vsel %vm13046, %v13048, %v13044
    %v13050 = vmul.f32 %v11506, %v13049
    %v13051 = vrcp.pop %v9977
    %v13052 = vmul.f32 %v9977, %v13051
    %v13053 = vsub.f32 1.0, %v13052
    %v13054 = vmul.f32 %v13051, %v13053
    %v13055 = vadd.f32 %v13051, %v13054
    %vm13056 = vweird.f32 %v9977
    %vm13057 = vweird.f32 %v13051
    %vm13058 = vmor %vm13056, %vm13057
    %v13059 = vsel %vm13058, %v13051, %v13055
    %v13060 = vand.u32 2147483647, %v9977
    %vm13061 = vcmp.eq.f32.partialorder %v13060, 8.507059e+37
    %v13062 = vand.u32 %v9977, 2147483648
    %v13063 = vor.u32 1.1754944e-38, %v13062
    %v13064 = vsel %vm13061, %v13063, %v13059
    %v13065 = vmul.f32 %v11513, %v13064
    %v13066 = vrcp.pop %v9984
    %v13067 = vmul.f32 %v9984, %v13066
    %v13068 = vsub.f32 1.0, %v13067
    %v13069 = vmul.f32 %v13066, %v13068
    %v13070 = vadd.f32 %v13066, %v13069
    %vm13071 = vweird.f32 %v9984
    %vm13072 = vweird.f32 %v13066
    %vm13073 = vmor %vm13071, %vm13072
    %v13074 = vsel %vm13073, %v13066, %v13070
    %v13075 = vand.u32 2147483647, %v9984
    %vm13076 = vcmp.eq.f32.partialorder %v13075, 8.507059e+37
    %v13077 = vand.u32 %v9984, 2147483648
    %v13078 = vor.u32 1.1754944e-38, %v13077
    %v13079 = vsel %vm13076, %v13078, %v13074
    %v13080 = vmul.f32 %v11520, %v13079
    %v13081 = vrcp.pop %v9991
    %v13082 = vmul.f32 %v9991, %v13081
    %v13083 = vsub.f32 1.0, %v13082
    %v13084 = vmul.f32 %v13081, %v13083
    %v13085 = vadd.f32 %v13081, %v13084
    %vm13086 = vweird.f32 %v9991
    %vm13087 = vweird.f32 %v13081
    %vm13088 = vmor %vm13086, %vm13087
    %v13089 = vsel %vm13088, %v13081, %v13085
    %v13090 = vand.u32 2147483647, %v9991
    %vm13091 = vcmp.eq.f32.partialorder %v13090, 8.507059e+37
    %v13092 = vand.u32 %v9991, 2147483648
    %v13093 = vor.u32 1.1754944e-38, %v13092
    %v13094 = vsel %vm13091, %v13093, %v13089
    %v13095 = vmul.f32 %v11527, %v13094
    %v13096 = vrcp.pop %v9998
    %v13097 = vmul.f32 %v9998, %v13096
    %v13098 = vsub.f32 1.0, %v13097
    %v13099 = vmul.f32 %v13096, %v13098
    %v13100 = vadd.f32 %v13096, %v13099
    %vm13101 = vweird.f32 %v9998
    %vm13102 = vweird.f32 %v13096
    %vm13103 = vmor %vm13101, %vm13102
    %v13104 = vsel %vm13103, %v13096, %v13100
    %v13105 = vand.u32 2147483647, %v9998
    %vm13106 = vcmp.eq.f32.partialorder %v13105, 8.507059e+37
    %v13107 = vand.u32 %v9998, 2147483648
    %v13108 = vor.u32 1.1754944e-38, %v13107
    %v13109 = vsel %vm13106, %v13108, %v13104
    %v13110 = vmul.f32 %v11534, %v13109
    %v13111 = vrcp.pop %v10005
    %v13112 = vmul.f32 %v10005, %v13111
    %v13113 = vsub.f32 1.0, %v13112
    %v13114 = vmul.f32 %v13111, %v13113
    %v13115 = vadd.f32 %v13111, %v13114
    %vm13116 = vweird.f32 %v10005
    %vm13117 = vweird.f32 %v13111
    %vm13118 = vmor %vm13116, %vm13117
    %v13119 = vsel %vm13118, %v13111, %v13115
    %v13120 = vand.u32 2147483647, %v10005
    %vm13121 = vcmp.eq.f32.partialorder %v13120, 8.507059e+37
    %v13122 = vand.u32 %v10005, 2147483648
    %v13123 = vor.u32 1.1754944e-38, %v13122
    %v13124 = vsel %vm13121, %v13123, %v13119
    %v13125 = vmul.f32 %v11541, %v13124
    %v13126 = vrcp.pop %v10012
    %v13127 = vmul.f32 %v10012, %v13126
    %v13128 = vsub.f32 1.0, %v13127
    %v13129 = vmul.f32 %v13126, %v13128
    %v13130 = vadd.f32 %v13126, %v13129
    %vm13131 = vweird.f32 %v10012
    %vm13132 = vweird.f32 %v13126
    %vm13133 = vmor %vm13131, %vm13132
    %v13134 = vsel %vm13133, %v13126, %v13130
    %v13135 = vand.u32 2147483647, %v10012
    %vm13136 = vcmp.eq.f32.partialorder %v13135, 8.507059e+37
    %v13137 = vand.u32 %v10012, 2147483648
    %v13138 = vor.u32 1.1754944e-38, %v13137
    %v13139 = vsel %vm13136, %v13138, %v13134
    %v13140 = vmul.f32 %v11548, %v13139
    %v13141 = vrcp.pop %v10019
    %v13142 = vmul.f32 %v10019, %v13141
    %v13143 = vsub.f32 1.0, %v13142
    %v13144 = vmul.f32 %v13141, %v13143
    %v13145 = vadd.f32 %v13141, %v13144
    %vm13146 = vweird.f32 %v10019
    %vm13147 = vweird.f32 %v13141
    %vm13148 = vmor %vm13146, %vm13147
    %v13149 = vsel %vm13148, %v13141, %v13145
    %v13150 = vand.u32 2147483647, %v10019
    %vm13151 = vcmp.eq.f32.partialorder %v13150, 8.507059e+37
    %v13152 = vand.u32 %v10019, 2147483648
    %v13153 = vor.u32 1.1754944e-38, %v13152
    %v13154 = vsel %vm13151, %v13153, %v13149
    %v13155 = vmul.f32 %v11555, %v13154
    %v13156 = vrcp.pop %v10026
    %v13157 = vmul.f32 %v10026, %v13156
    %v13158 = vsub.f32 1.0, %v13157
    %v13159 = vmul.f32 %v13156, %v13158
    %v13160 = vadd.f32 %v13156, %v13159
    %vm13161 = vweird.f32 %v10026
    %vm13162 = vweird.f32 %v13156
    %vm13163 = vmor %vm13161, %vm13162
    %v13164 = vsel %vm13163, %v13156, %v13160
    %v13165 = vand.u32 2147483647, %v10026
    %vm13166 = vcmp.eq.f32.partialorder %v13165, 8.507059e+37
    %v13167 = vand.u32 %v10026, 2147483648
    %v13168 = vor.u32 1.1754944e-38, %v13167
    %v13169 = vsel %vm13166, %v13168, %v13164
    %v13170 = vmul.f32 %v11562, %v13169
    %v13171 = vrcp.pop %v10033
    %v13172 = vmul.f32 %v10033, %v13171
    %v13173 = vsub.f32 1.0, %v13172
    %v13174 = vmul.f32 %v13171, %v13173
    %v13175 = vadd.f32 %v13171, %v13174
    %vm13176 = vweird.f32 %v10033
    %vm13177 = vweird.f32 %v13171
    %vm13178 = vmor %vm13176, %vm13177
    %v13179 = vsel %vm13178, %v13171, %v13175
    %v13180 = vand.u32 2147483647, %v10033
    %vm13181 = vcmp.eq.f32.partialorder %v13180, 8.507059e+37
    %v13182 = vand.u32 %v10033, 2147483648
    %v13183 = vor.u32 1.1754944e-38, %v13182
    %v13184 = vsel %vm13181, %v13183, %v13179
    %v13185 = vmul.f32 %v11569, %v13184
    %v13186 = vrcp.pop %v10040
    %v13187 = vmul.f32 %v10040, %v13186
    %v13188 = vsub.f32 1.0, %v13187
    %v13189 = vmul.f32 %v13186, %v13188
    %v13190 = vadd.f32 %v13186, %v13189
    %vm13191 = vweird.f32 %v10040
    %vm13192 = vweird.f32 %v13186
    %vm13193 = vmor %vm13191, %vm13192
    %v13194 = vsel %vm13193, %v13186, %v13190
    %v13195 = vand.u32 2147483647, %v10040
    %vm13196 = vcmp.eq.f32.partialorder %v13195, 8.507059e+37
    %v13197 = vand.u32 %v10040, 2147483648
    %v13198 = vor.u32 1.1754944e-38, %v13197
    %v13199 = vsel %vm13196, %v13198, %v13194
    %v13200 = vmul.f32 %v11576, %v13199
    %v13201 = vrcp.pop %v10047
    %v13202 = vmul.f32 %v10047, %v13201
    %v13203 = vsub.f32 1.0, %v13202
    %v13204 = vmul.f32 %v13201, %v13203
    %v13205 = vadd.f32 %v13201, %v13204
    %vm13206 = vweird.f32 %v10047
    %vm13207 = vweird.f32 %v13201
    %vm13208 = vmor %vm13206, %vm13207
    %v13209 = vsel %vm13208, %v13201, %v13205
    %v13210 = vand.u32 2147483647, %v10047
    %vm13211 = vcmp.eq.f32.partialorder %v13210, 8.507059e+37
    %v13212 = vand.u32 %v10047, 2147483648
    %v13213 = vor.u32 1.1754944e-38, %v13212
    %v13214 = vsel %vm13211, %v13213, %v13209
    %v13215 = vmul.f32 %v11583, %v13214
    %v13216 = vrcp.pop %v10054
    %v13217 = vmul.f32 %v10054, %v13216
    %v13218 = vsub.f32 1.0, %v13217
    %v13219 = vmul.f32 %v13216, %v13218
    %v13220 = vadd.f32 %v13216, %v13219
    %vm13221 = vweird.f32 %v10054
    %vm13222 = vweird.f32 %v13216
    %vm13223 = vmor %vm13221, %vm13222
    %v13224 = vsel %vm13223, %v13216, %v13220
    %v13225 = vand.u32 2147483647, %v10054
    %vm13226 = vcmp.eq.f32.partialorder %v13225, 8.507059e+37
    %v13227 = vand.u32 %v10054, 2147483648
    %v13228 = vor.u32 1.1754944e-38, %v13227
    %v13229 = vsel %vm13226, %v13228, %v13224
    %v13230 = vmul.f32 %v11590, %v13229
    %v13231 = vrcp.pop %v10061
    %v13232 = vmul.f32 %v10061, %v13231
    %v13233 = vsub.f32 1.0, %v13232
    %v13234 = vmul.f32 %v13231, %v13233
    %v13235 = vadd.f32 %v13231, %v13234
    %vm13236 = vweird.f32 %v10061
    %vm13237 = vweird.f32 %v13231
    %vm13238 = vmor %vm13236, %vm13237
    %v13239 = vsel %vm13238, %v13231, %v13235
    %v13240 = vand.u32 2147483647, %v10061
    %vm13241 = vcmp.eq.f32.partialorder %v13240, 8.507059e+37
    %v13242 = vand.u32 %v10061, 2147483648
    %v13243 = vor.u32 1.1754944e-38, %v13242
    %v13244 = vsel %vm13241, %v13243, %v13239
    %v13245 = vmul.f32 %v11597, %v13244
    %v13246 = vrcp.pop %v10068
    %v13247 = vmul.f32 %v10068, %v13246
    %v13248 = vsub.f32 1.0, %v13247
    %v13249 = vmul.f32 %v13246, %v13248
    %v13250 = vadd.f32 %v13246, %v13249
    %vm13251 = vweird.f32 %v10068
    %vm13252 = vweird.f32 %v13246
    %vm13253 = vmor %vm13251, %vm13252
    %v13254 = vsel %vm13253, %v13246, %v13250
    %v13255 = vand.u32 2147483647, %v10068
    %vm13256 = vcmp.eq.f32.partialorder %v13255, 8.507059e+37
    %v13257 = vand.u32 %v10068, 2147483648
    %v13258 = vor.u32 1.1754944e-38, %v13257
    %v13259 = vsel %vm13256, %v13258, %v13254
    %v13260 = vmul.f32 %v11604, %v13259
    %v13261 = vrcp.pop %v10075
    %v13262 = vmul.f32 %v10075, %v13261
    %v13263 = vsub.f32 1.0, %v13262
    %v13264 = vmul.f32 %v13261, %v13263
    %v13265 = vadd.f32 %v13261, %v13264
    %vm13266 = vweird.f32 %v10075
    %vm13267 = vweird.f32 %v13261
    %vm13268 = vmor %vm13266, %vm13267
    %v13269 = vsel %vm13268, %v13261, %v13265
    %v13270 = vand.u32 2147483647, %v10075
    %vm13271 = vcmp.eq.f32.partialorder %v13270, 8.507059e+37
    %v13272 = vand.u32 %v10075, 2147483648
    %v13273 = vor.u32 1.1754944e-38, %v13272
    %v13274 = vsel %vm13271, %v13273, %v13269
    %v13275 = vmul.f32 %v11611, %v13274
    %v13276 = vrcp.pop %v10082
    %v13277 = vmul.f32 %v10082, %v13276
    %v13278 = vsub.f32 1.0, %v13277
    %v13279 = vmul.f32 %v13276, %v13278
    %v13280 = vadd.f32 %v13276, %v13279
    %vm13281 = vweird.f32 %v10082
    %vm13282 = vweird.f32 %v13276
    %vm13283 = vmor %vm13281, %vm13282
    %v13284 = vsel %vm13283, %v13276, %v13280
    %v13285 = vand.u32 2147483647, %v10082
    %vm13286 = vcmp.eq.f32.partialorder %v13285, 8.507059e+37
    %v13287 = vand.u32 %v10082, 2147483648
    %v13288 = vor.u32 1.1754944e-38, %v13287
    %v13289 = vsel %vm13286, %v13288, %v13284
    %v13290 = vmul.f32 %v11618, %v13289
    %v13291 = vrcp.pop %v10089
    %v13292 = vmul.f32 %v10089, %v13291
    %v13293 = vsub.f32 1.0, %v13292
    %v13294 = vmul.f32 %v13291, %v13293
    %v13295 = vadd.f32 %v13291, %v13294
    %vm13296 = vweird.f32 %v10089
    %vm13297 = vweird.f32 %v13291
    %vm13298 = vmor %vm13296, %vm13297
    %v13299 = vsel %vm13298, %v13291, %v13295
    %v13300 = vand.u32 2147483647, %v10089
    %vm13301 = vcmp.eq.f32.partialorder %v13300, 8.507059e+37
    %v13302 = vand.u32 %v10089, 2147483648
    %v13303 = vor.u32 1.1754944e-38, %v13302
    %v13304 = vsel %vm13301, %v13303, %v13299
    %v13305 = vmul.f32 %v11625, %v13304
    %v13306 = vrcp.pop %v10096
    %v13307 = vmul.f32 %v10096, %v13306
    %v13308 = vsub.f32 1.0, %v13307
    %v13309 = vmul.f32 %v13306, %v13308
    %v13310 = vadd.f32 %v13306, %v13309
    %vm13311 = vweird.f32 %v10096
    %vm13312 = vweird.f32 %v13306
    %vm13313 = vmor %vm13311, %vm13312
    %v13314 = vsel %vm13313, %v13306, %v13310
    %v13315 = vand.u32 2147483647, %v10096
    %vm13316 = vcmp.eq.f32.partialorder %v13315, 8.507059e+37
    %v13317 = vand.u32 %v10096, 2147483648
    %v13318 = vor.u32 1.1754944e-38, %v13317
    %v13319 = vsel %vm13316, %v13318, %v13314
    %v13320 = vmul.f32 %v11632, %v13319
    %v13321 = vrcp.pop %v10103
    %v13322 = vmul.f32 %v10103, %v13321
    %v13323 = vsub.f32 1.0, %v13322
    %v13324 = vmul.f32 %v13321, %v13323
    %v13325 = vadd.f32 %v13321, %v13324
    %vm13326 = vweird.f32 %v10103
    %vm13327 = vweird.f32 %v13321
    %vm13328 = vmor %vm13326, %vm13327
    %v13329 = vsel %vm13328, %v13321, %v13325
    %v13330 = vand.u32 2147483647, %v10103
    %vm13331 = vcmp.eq.f32.partialorder %v13330, 8.507059e+37
    %v13332 = vand.u32 %v10103, 2147483648
    %v13333 = vor.u32 1.1754944e-38, %v13332
    %v13334 = vsel %vm13331, %v13333, %v13329
    %v13335 = vmul.f32 %v11639, %v13334
    %v13336 = vrcp.pop %v10110
    %v13337 = vmul.f32 %v10110, %v13336
    %v13338 = vsub.f32 1.0, %v13337
    %v13339 = vmul.f32 %v13336, %v13338
    %v13340 = vadd.f32 %v13336, %v13339
    %vm13341 = vweird.f32 %v10110
    %vm13342 = vweird.f32 %v13336
    %vm13343 = vmor %vm13341, %vm13342
    %v13344 = vsel %vm13343, %v13336, %v13340
    %v13345 = vand.u32 2147483647, %v10110
    %vm13346 = vcmp.eq.f32.partialorder %v13345, 8.507059e+37
    %v13347 = vand.u32 %v10110, 2147483648
    %v13348 = vor.u32 1.1754944e-38, %v13347
    %v13349 = vsel %vm13346, %v13348, %v13344
    %v13350 = vmul.f32 %v11646, %v13349
    %v13351 = vrcp.pop %v10117
    %v13352 = vmul.f32 %v10117, %v13351
    %v13353 = vsub.f32 1.0, %v13352
    %v13354 = vmul.f32 %v13351, %v13353
    %v13355 = vadd.f32 %v13351, %v13354
    %vm13356 = vweird.f32 %v10117
    %vm13357 = vweird.f32 %v13351
    %vm13358 = vmor %vm13356, %vm13357
    %v13359 = vsel %vm13358, %v13351, %v13355
    %v13360 = vand.u32 2147483647, %v10117
    %vm13361 = vcmp.eq.f32.partialorder %v13360, 8.507059e+37
    %v13362 = vand.u32 %v10117, 2147483648
    %v13363 = vor.u32 1.1754944e-38, %v13362
    %v13364 = vsel %vm13361, %v13363, %v13359
    %v13365 = vmul.f32 %v11653, %v13364
    %v13366 = vrcp.pop %v10124
    %v13367 = vmul.f32 %v10124, %v13366
    %v13368 = vsub.f32 1.0, %v13367
    %v13369 = vmul.f32 %v13366, %v13368
    %v13370 = vadd.f32 %v13366, %v13369
    %vm13371 = vweird.f32 %v10124
    %vm13372 = vweird.f32 %v13366
    %vm13373 = vmor %vm13371, %vm13372
    %v13374 = vsel %vm13373, %v13366, %v13370
    %v13375 = vand.u32 2147483647, %v10124
    %vm13376 = vcmp.eq.f32.partialorder %v13375, 8.507059e+37
    %v13377 = vand.u32 %v10124, 2147483648
    %v13378 = vor.u32 1.1754944e-38, %v13377
    %v13379 = vsel %vm13376, %v13378, %v13374
    %v13380 = vmul.f32 %v11660, %v13379
    %v13381 = vrcp.pop %v10131
    %v13382 = vmul.f32 %v10131, %v13381
    %v13383 = vsub.f32 1.0, %v13382
    %v13384 = vmul.f32 %v13381, %v13383
    %v13385 = vadd.f32 %v13381, %v13384
    %vm13386 = vweird.f32 %v10131
    %vm13387 = vweird.f32 %v13381
    %vm13388 = vmor %vm13386, %vm13387
    %v13389 = vsel %vm13388, %v13381, %v13385
    %v13390 = vand.u32 2147483647, %v10131
    %vm13391 = vcmp.eq.f32.partialorder %v13390, 8.507059e+37
    %v13392 = vand.u32 %v10131, 2147483648
    %v13393 = vor.u32 1.1754944e-38, %v13392
    %v13394 = vsel %vm13391, %v13393, %v13389
    %v13395 = vmul.f32 %v11667, %v13394
    %v13396 = vrcp.pop %v10138
    %v13397 = vmul.f32 %v10138, %v13396
    %v13398 = vsub.f32 1.0, %v13397
    %v13399 = vmul.f32 %v13396, %v13398
    %v13400 = vadd.f32 %v13396, %v13399
    %vm13401 = vweird.f32 %v10138
    %vm13402 = vweird.f32 %v13396
    %vm13403 = vmor %vm13401, %vm13402
    %v13404 = vsel %vm13403, %v13396, %v13400
    %v13405 = vand.u32 2147483647, %v10138
    %vm13406 = vcmp.eq.f32.partialorder %v13405, 8.507059e+37
    %v13407 = vand.u32 %v10138, 2147483648
    %v13408 = vor.u32 1.1754944e-38, %v13407
    %v13409 = vsel %vm13406, %v13408, %v13404
    %v13410 = vmul.f32 %v11674, %v13409
    %v13411 = vrcp.pop %v10145
    %v13412 = vmul.f32 %v10145, %v13411
    %v13413 = vsub.f32 1.0, %v13412
    %v13414 = vmul.f32 %v13411, %v13413
    %v13415 = vadd.f32 %v13411, %v13414
    %vm13416 = vweird.f32 %v10145
    %vm13417 = vweird.f32 %v13411
    %vm13418 = vmor %vm13416, %vm13417
    %v13419 = vsel %vm13418, %v13411, %v13415
    %v13420 = vand.u32 2147483647, %v10145
    %vm13421 = vcmp.eq.f32.partialorder %v13420, 8.507059e+37
    %v13422 = vand.u32 %v10145, 2147483648
    %v13423 = vor.u32 1.1754944e-38, %v13422
    %v13424 = vsel %vm13421, %v13423, %v13419
    %v13425 = vmul.f32 %v11681, %v13424
    %v13426 = vrcp.pop %v10152
    %v13427 = vmul.f32 %v10152, %v13426
    %v13428 = vsub.f32 1.0, %v13427
    %v13429 = vmul.f32 %v13426, %v13428
    %v13430 = vadd.f32 %v13426, %v13429
    %vm13431 = vweird.f32 %v10152
    %vm13432 = vweird.f32 %v13426
    %vm13433 = vmor %vm13431, %vm13432
    %v13434 = vsel %vm13433, %v13426, %v13430
    %v13435 = vand.u32 2147483647, %v10152
    %vm13436 = vcmp.eq.f32.partialorder %v13435, 8.507059e+37
    %v13437 = vand.u32 %v10152, 2147483648
    %v13438 = vor.u32 1.1754944e-38, %v13437
    %v13439 = vsel %vm13436, %v13438, %v13434
    %v13440 = vmul.f32 %v11688, %v13439
    %v13441 = vrcp.pop %v10159
    %v13442 = vmul.f32 %v10159, %v13441
    %v13443 = vsub.f32 1.0, %v13442
    %v13444 = vmul.f32 %v13441, %v13443
    %v13445 = vadd.f32 %v13441, %v13444
    %vm13446 = vweird.f32 %v10159
    %vm13447 = vweird.f32 %v13441
    %vm13448 = vmor %vm13446, %vm13447
    %v13449 = vsel %vm13448, %v13441, %v13445
    %v13450 = vand.u32 2147483647, %v10159
    %vm13451 = vcmp.eq.f32.partialorder %v13450, 8.507059e+37
    %v13452 = vand.u32 %v10159, 2147483648
    %v13453 = vor.u32 1.1754944e-38, %v13452
    %v13454 = vsel %vm13451, %v13453, %v13449
    %v13455 = vmul.f32 %v11695, %v13454
    %v13456 = vrcp.pop %v10166
    %v13457 = vmul.f32 %v10166, %v13456
    %v13458 = vsub.f32 1.0, %v13457
    %v13459 = vmul.f32 %v13456, %v13458
    %v13460 = vadd.f32 %v13456, %v13459
    %vm13461 = vweird.f32 %v10166
    %vm13462 = vweird.f32 %v13456
    %vm13463 = vmor %vm13461, %vm13462
    %v13464 = vsel %vm13463, %v13456, %v13460
    %v13465 = vand.u32 2147483647, %v10166
    %vm13466 = vcmp.eq.f32.partialorder %v13465, 8.507059e+37
    %v13467 = vand.u32 %v10166, 2147483648
    %v13468 = vor.u32 1.1754944e-38, %v13467
    %v13469 = vsel %vm13466, %v13468, %v13464
    %v13470 = vmul.f32 %v11702, %v13469
    %v13471 = vrcp.pop %v10173
    %v13472 = vmul.f32 %v10173, %v13471
    %v13473 = vsub.f32 1.0, %v13472
    %v13474 = vmul.f32 %v13471, %v13473
    %v13475 = vadd.f32 %v13471, %v13474
    %vm13476 = vweird.f32 %v10173
    %vm13477 = vweird.f32 %v13471
    %vm13478 = vmor %vm13476, %vm13477
    %v13479 = vsel %vm13478, %v13471, %v13475
    %v13480 = vand.u32 2147483647, %v10173
    %vm13481 = vcmp.eq.f32.partialorder %v13480, 8.507059e+37
    %v13482 = vand.u32 %v10173, 2147483648
    %v13483 = vor.u32 1.1754944e-38, %v13482
    %v13484 = vsel %vm13481, %v13483, %v13479
    %v13485 = vmul.f32 %v11709, %v13484
    %v13486 = vrcp.pop %v10180
    %v13487 = vmul.f32 %v10180, %v13486
    %v13488 = vsub.f32 1.0, %v13487
    %v13489 = vmul.f32 %v13486, %v13488
    %v13490 = vadd.f32 %v13486, %v13489
    %vm13491 = vweird.f32 %v10180
    %vm13492 = vweird.f32 %v13486
    %vm13493 = vmor %vm13491, %vm13492
    %v13494 = vsel %vm13493, %v13486, %v13490
    %v13495 = vand.u32 2147483647, %v10180
    %vm13496 = vcmp.eq.f32.partialorder %v13495, 8.507059e+37
    %v13497 = vand.u32 %v10180, 2147483648
    %v13498 = vor.u32 1.1754944e-38, %v13497
    %v13499 = vsel %vm13496, %v13498, %v13494
    %v13500 = vmul.f32 %v11716, %v13499
    %v13501 = vrcp.pop %v10187
    %v13502 = vmul.f32 %v10187, %v13501
    %v13503 = vsub.f32 1.0, %v13502
    %v13504 = vmul.f32 %v13501, %v13503
    %v13505 = vadd.f32 %v13501, %v13504
    %vm13506 = vweird.f32 %v10187
    %vm13507 = vweird.f32 %v13501
    %vm13508 = vmor %vm13506, %vm13507
    %v13509 = vsel %vm13508, %v13501, %v13505
    %v13510 = vand.u32 2147483647, %v10187
    %vm13511 = vcmp.eq.f32.partialorder %v13510, 8.507059e+37
    %v13512 = vand.u32 %v10187, 2147483648
    %v13513 = vor.u32 1.1754944e-38, %v13512
    %v13514 = vsel %vm13511, %v13513, %v13509
    %v13515 = vmul.f32 %v11723, %v13514
    %v13516 = vrcp.pop %v10194
    %v13517 = vmul.f32 %v10194, %v13516
    %v13518 = vsub.f32 1.0, %v13517
    %v13519 = vmul.f32 %v13516, %v13518
    %v13520 = vadd.f32 %v13516, %v13519
    %vm13521 = vweird.f32 %v10194
    %vm13522 = vweird.f32 %v13516
    %vm13523 = vmor %vm13521, %vm13522
    %v13524 = vsel %vm13523, %v13516, %v13520
    %v13525 = vand.u32 2147483647, %v10194
    %vm13526 = vcmp.eq.f32.partialorder %v13525, 8.507059e+37
    %v13527 = vand.u32 %v10194, 2147483648
    %v13528 = vor.u32 1.1754944e-38, %v13527
    %v13529 = vsel %vm13526, %v13528, %v13524
    %v13530 = vmul.f32 %v11730, %v13529
    %v13531 = vrcp.pop %v10201
    %v13532 = vmul.f32 %v10201, %v13531
    %v13533 = vsub.f32 1.0, %v13532
    %v13534 = vmul.f32 %v13531, %v13533
    %v13535 = vadd.f32 %v13531, %v13534
    %vm13536 = vweird.f32 %v10201
    %vm13537 = vweird.f32 %v13531
    %vm13538 = vmor %vm13536, %vm13537
    %v13539 = vsel %vm13538, %v13531, %v13535
    %v13540 = vand.u32 2147483647, %v10201
    %vm13541 = vcmp.eq.f32.partialorder %v13540, 8.507059e+37
    %v13542 = vand.u32 %v10201, 2147483648
    %v13543 = vor.u32 1.1754944e-38, %v13542
    %v13544 = vsel %vm13541, %v13543, %v13539
    %v13545 = vmul.f32 %v11737, %v13544
    %v13546 = vrcp.pop %v10208
    %v13547 = vmul.f32 %v10208, %v13546
    %v13548 = vsub.f32 1.0, %v13547
    %v13549 = vmul.f32 %v13546, %v13548
    %v13550 = vadd.f32 %v13546, %v13549
    %vm13551 = vweird.f32 %v10208
    %vm13552 = vweird.f32 %v13546
    %vm13553 = vmor %vm13551, %vm13552
    %v13554 = vsel %vm13553, %v13546, %v13550
    %v13555 = vand.u32 2147483647, %v10208
    %vm13556 = vcmp.eq.f32.partialorder %v13555, 8.507059e+37
    %v13557 = vand.u32 %v10208, 2147483648
    %v13558 = vor.u32 1.1754944e-38, %v13557
    %v13559 = vsel %vm13556, %v13558, %v13554
    %v13560 = vmul.f32 %v11744, %v13559
    %v13561 = vrcp.pop %v10215
    %v13562 = vmul.f32 %v10215, %v13561
    %v13563 = vsub.f32 1.0, %v13562
    %v13564 = vmul.f32 %v13561, %v13563
    %v13565 = vadd.f32 %v13561, %v13564
    %vm13566 = vweird.f32 %v10215
    %vm13567 = vweird.f32 %v13561
    %vm13568 = vmor %vm13566, %vm13567
    %v13569 = vsel %vm13568, %v13561, %v13565
    %v13570 = vand.u32 2147483647, %v10215
    %vm13571 = vcmp.eq.f32.partialorder %v13570, 8.507059e+37
    %v13572 = vand.u32 %v10215, 2147483648
    %v13573 = vor.u32 1.1754944e-38, %v13572
    %v13574 = vsel %vm13571, %v13573, %v13569
    %v13575 = vmul.f32 %v11751, %v13574
    %v13576 = vrcp.pop %v10222
    %v13577 = vmul.f32 %v10222, %v13576
    %v13578 = vsub.f32 1.0, %v13577
    %v13579 = vmul.f32 %v13576, %v13578
    %v13580 = vadd.f32 %v13576, %v13579
    %vm13581 = vweird.f32 %v10222
    %vm13582 = vweird.f32 %v13576
    %vm13583 = vmor %vm13581, %vm13582
    %v13584 = vsel %vm13583, %v13576, %v13580
    %v13585 = vand.u32 2147483647, %v10222
    %vm13586 = vcmp.eq.f32.partialorder %v13585, 8.507059e+37
    %v13587 = vand.u32 %v10222, 2147483648
    %v13588 = vor.u32 1.1754944e-38, %v13587
    %v13589 = vsel %vm13586, %v13588, %v13584
    %v13590 = vmul.f32 %v11758, %v13589
    %v13591 = vrcp.pop %v10229
    %v13592 = vmul.f32 %v10229, %v13591
    %v13593 = vsub.f32 1.0, %v13592
    %v13594 = vmul.f32 %v13591, %v13593
    %v13595 = vadd.f32 %v13591, %v13594
    %vm13596 = vweird.f32 %v10229
    %vm13597 = vweird.f32 %v13591
    %vm13598 = vmor %vm13596, %vm13597
    %v13599 = vsel %vm13598, %v13591, %v13595
    %v13600 = vand.u32 2147483647, %v10229
    %vm13601 = vcmp.eq.f32.partialorder %v13600, 8.507059e+37
    %v13602 = vand.u32 %v10229, 2147483648
    %v13603 = vor.u32 1.1754944e-38, %v13602
    %v13604 = vsel %vm13601, %v13603, %v13599
    %v13605 = vmul.f32 %v11765, %v13604
    %v13606 = vrcp.pop %v10236
    %v13607 = vmul.f32 %v10236, %v13606
    %v13608 = vsub.f32 1.0, %v13607
    %v13609 = vmul.f32 %v13606, %v13608
    %v13610 = vadd.f32 %v13606, %v13609
    %vm13611 = vweird.f32 %v10236
    %vm13612 = vweird.f32 %v13606
    %vm13613 = vmor %vm13611, %vm13612
    %v13614 = vsel %vm13613, %v13606, %v13610
    %v13615 = vand.u32 2147483647, %v10236
    %vm13616 = vcmp.eq.f32.partialorder %v13615, 8.507059e+37
    %v13617 = vand.u32 %v10236, 2147483648
    %v13618 = vor.u32 1.1754944e-38, %v13617
    %v13619 = vsel %vm13616, %v13618, %v13614
    %v13620 = vmul.f32 %v11772, %v13619
    %v13621 = vrcp.pop %v10243
    %v13622 = vmul.f32 %v10243, %v13621
    %v13623 = vsub.f32 1.0, %v13622
    %v13624 = vmul.f32 %v13621, %v13623
    %v13625 = vadd.f32 %v13621, %v13624
    %vm13626 = vweird.f32 %v10243
    %vm13627 = vweird.f32 %v13621
    %vm13628 = vmor %vm13626, %vm13627
    %v13629 = vsel %vm13628, %v13621, %v13625
    %v13630 = vand.u32 2147483647, %v10243
    %vm13631 = vcmp.eq.f32.partialorder %v13630, 8.507059e+37
    %v13632 = vand.u32 %v10243, 2147483648
    %v13633 = vor.u32 1.1754944e-38, %v13632
    %v13634 = vsel %vm13631, %v13633, %v13629
    %v13635 = vmul.f32 %v11779, %v13634
    %v13636 = vrcp.pop %v10250
    %v13637 = vmul.f32 %v10250, %v13636
    %v13638 = vsub.f32 1.0, %v13637
    %v13639 = vmul.f32 %v13636, %v13638
    %v13640 = vadd.f32 %v13636, %v13639
    %vm13641 = vweird.f32 %v10250
    %vm13642 = vweird.f32 %v13636
    %vm13643 = vmor %vm13641, %vm13642
    %v13644 = vsel %vm13643, %v13636, %v13640
    %v13645 = vand.u32 2147483647, %v10250
    %vm13646 = vcmp.eq.f32.partialorder %v13645, 8.507059e+37
    %v13647 = vand.u32 %v10250, 2147483648
    %v13648 = vor.u32 1.1754944e-38, %v13647
    %v13649 = vsel %vm13646, %v13648, %v13644
    %v13650 = vmul.f32 %v11786, %v13649
    %v13651 = vrcp.pop %v10257
    %v13652 = vmul.f32 %v10257, %v13651
    %v13653 = vsub.f32 1.0, %v13652
    %v13654 = vmul.f32 %v13651, %v13653
    %v13655 = vadd.f32 %v13651, %v13654
    %vm13656 = vweird.f32 %v10257
    %vm13657 = vweird.f32 %v13651
    %vm13658 = vmor %vm13656, %vm13657
    %v13659 = vsel %vm13658, %v13651, %v13655
    %v13660 = vand.u32 2147483647, %v10257
    %vm13661 = vcmp.eq.f32.partialorder %v13660, 8.507059e+37
    %v13662 = vand.u32 %v10257, 2147483648
    %v13663 = vor.u32 1.1754944e-38, %v13662
    %v13664 = vsel %vm13661, %v13663, %v13659
    %v13665 = vmul.f32 %v11793, %v13664
    %v13666 = vrcp.pop %v10264
    %v13667 = vmul.f32 %v10264, %v13666
    %v13668 = vsub.f32 1.0, %v13667
    %v13669 = vmul.f32 %v13666, %v13668
    %v13670 = vadd.f32 %v13666, %v13669
    %vm13671 = vweird.f32 %v10264
    %vm13672 = vweird.f32 %v13666
    %vm13673 = vmor %vm13671, %vm13672
    %v13674 = vsel %vm13673, %v13666, %v13670
    %v13675 = vand.u32 2147483647, %v10264
    %vm13676 = vcmp.eq.f32.partialorder %v13675, 8.507059e+37
    %v13677 = vand.u32 %v10264, 2147483648
    %v13678 = vor.u32 1.1754944e-38, %v13677
    %v13679 = vsel %vm13676, %v13678, %v13674
    %v13680 = vmul.f32 %v11800, %v13679
    %v13681 = vrcp.pop %v10271
    %v13682 = vmul.f32 %v10271, %v13681
    %v13683 = vsub.f32 1.0, %v13682
    %v13684 = vmul.f32 %v13681, %v13683
    %v13685 = vadd.f32 %v13681, %v13684
    %vm13686 = vweird.f32 %v10271
    %vm13687 = vweird.f32 %v13681
    %vm13688 = vmor %vm13686, %vm13687
    %v13689 = vsel %vm13688, %v13681, %v13685
    %v13690 = vand.u32 2147483647, %v10271
    %vm13691 = vcmp.eq.f32.partialorder %v13690, 8.507059e+37
    %v13692 = vand.u32 %v10271, 2147483648
    %v13693 = vor.u32 1.1754944e-38, %v13692
    %v13694 = vsel %vm13691, %v13693, %v13689
    %v13695 = vmul.f32 %v11807, %v13694
    %v13696 = vrcp.pop %v10278
    %v13697 = vmul.f32 %v10278, %v13696
    %v13698 = vsub.f32 1.0, %v13697
    %v13699 = vmul.f32 %v13696, %v13698
    %v13700 = vadd.f32 %v13696, %v13699
    %vm13701 = vweird.f32 %v10278
    %vm13702 = vweird.f32 %v13696
    %vm13703 = vmor %vm13701, %vm13702
    %v13704 = vsel %vm13703, %v13696, %v13700
    %v13705 = vand.u32 2147483647, %v10278
    %vm13706 = vcmp.eq.f32.partialorder %v13705, 8.507059e+37
    %v13707 = vand.u32 %v10278, 2147483648
    %v13708 = vor.u32 1.1754944e-38, %v13707
    %v13709 = vsel %vm13706, %v13708, %v13704
    %v13710 = vmul.f32 %v11814, %v13709
    %v13711 = vrcp.pop %v10285
    %v13712 = vmul.f32 %v10285, %v13711
    %v13713 = vsub.f32 1.0, %v13712
    %v13714 = vmul.f32 %v13711, %v13713
    %v13715 = vadd.f32 %v13711, %v13714
    %vm13716 = vweird.f32 %v10285
    %vm13717 = vweird.f32 %v13711
    %vm13718 = vmor %vm13716, %vm13717
    %v13719 = vsel %vm13718, %v13711, %v13715
    %v13720 = vand.u32 2147483647, %v10285
    %vm13721 = vcmp.eq.f32.partialorder %v13720, 8.507059e+37
    %v13722 = vand.u32 %v10285, 2147483648
    %v13723 = vor.u32 1.1754944e-38, %v13722
    %v13724 = vsel %vm13721, %v13723, %v13719
    %v13725 = vmul.f32 %v11821, %v13724
    %v13726 = vrcp.pop %v10292
    %v13727 = vmul.f32 %v10292, %v13726
    %v13728 = vsub.f32 1.0, %v13727
    %v13729 = vmul.f32 %v13726, %v13728
    %v13730 = vadd.f32 %v13726, %v13729
    %vm13731 = vweird.f32 %v10292
    %vm13732 = vweird.f32 %v13726
    %vm13733 = vmor %vm13731, %vm13732
    %v13734 = vsel %vm13733, %v13726, %v13730
    %v13735 = vand.u32 2147483647, %v10292
    %vm13736 = vcmp.eq.f32.partialorder %v13735, 8.507059e+37
    %v13737 = vand.u32 %v10292, 2147483648
    %v13738 = vor.u32 1.1754944e-38, %v13737
    %v13739 = vsel %vm13736, %v13738, %v13734
    %v13740 = vmul.f32 %v11828, %v13739
    %v13741 = vrcp.pop %v10299
    %v13742 = vmul.f32 %v10299, %v13741
    %v13743 = vsub.f32 1.0, %v13742
    %v13744 = vmul.f32 %v13741, %v13743
    %v13745 = vadd.f32 %v13741, %v13744
    %vm13746 = vweird.f32 %v10299
    %vm13747 = vweird.f32 %v13741
    %vm13748 = vmor %vm13746, %vm13747
    %v13749 = vsel %vm13748, %v13741, %v13745
    %v13750 = vand.u32 2147483647, %v10299
    %vm13751 = vcmp.eq.f32.partialorder %v13750, 8.507059e+37
    %v13752 = vand.u32 %v10299, 2147483648
    %v13753 = vor.u32 1.1754944e-38, %v13752
    %v13754 = vsel %vm13751, %v13753, %v13749
    %v13755 = vmul.f32 %v11835, %v13754
    %vm13788 = vcmask 1041409
    %v13789 = vsel %vm13788, %v11910, %v11850
    %vm13790 = vcmask 1042434
    %v13791 = vsel %vm13790, %v11970, %v13789
    %vm13792 = vcmask 1043459
    %v13793 = vsel %vm13792, %v12030, %v13791
    %vm13794 = vcmask 1044484
    %v13795 = vsel %vm13794, %v12090, %v13793
    %vm13796 = vcmask 1045509
    %v13797 = vsel %vm13796, %v12150, %v13795
    %vm13798 = vcmask 1046534
    %v13799 = vsel %vm13798, %v12210, %v13797
    %vm13800 = vcmask 1047559
    %v13801 = vsel %vm13800, %v12270, %v13799
    %v13802 = vsel %vm13788, %v12390, %v12330
    %v13803 = vsel %vm13790, %v12450, %v13802
    %v13804 = vsel %vm13792, %v12510, %v13803
    %v13805 = vsel %vm13794, %v12570, %v13804
    %v13806 = vsel %vm13796, %v12630, %v13805
    %v13807 = vsel %vm13798, %v12690, %v13806
    %v13808 = vsel %vm13800, %v12750, %v13807
    %v13809 = vsel %vm13788, %v12870, %v12810
    %v13810 = vsel %vm13790, %v12930, %v13809
    %v13811 = vsel %vm13792, %v12990, %v13810
    %v13812 = vsel %vm13794, %v13050, %v13811
    %v13813 = vsel %vm13796, %v13110, %v13812
    %v13814 = vsel %vm13798, %v13170, %v13813
    %v13815 = vsel %vm13800, %v13230, %v13814
    %v13816 = vsel %vm13788, %v13350, %v13290
    %v13817 = vsel %vm13790, %v13410, %v13816
    %v13818 = vsel %vm13792, %v13470, %v13817
    %v13819 = vsel %vm13794, %v13530, %v13818
    %v13820 = vsel %vm13796, %v13590, %v13819
    %v13821 = vsel %vm13798, %v13650, %v13820
    %v13822 = vsel %vm13800, %v13710, %v13821
    %v13859 = vsel %vm13788, %v11925, %v11865
    %v13860 = vsel %vm13790, %v11985, %v13859
    %v13861 = vsel %vm13792, %v12045, %v13860
    %v13862 = vsel %vm13794, %v12105, %v13861
    %v13863 = vsel %vm13796, %v12165, %v13862
    %v13864 = vsel %vm13798, %v12225, %v13863
    %v13865 = vsel %vm13800, %v12285, %v13864
    %v13866 = vsel %vm13788, %v12405, %v12345
    %v13867 = vsel %vm13790, %v12465, %v13866
    %v13868 = vsel %vm13792, %v12525, %v13867
    %v13869 = vsel %vm13794, %v12585, %v13868
    %v13870 = vsel %vm13796, %v12645, %v13869
    %v13871 = vsel %vm13798, %v12705, %v13870
    %v13872 = vsel %vm13800, %v12765, %v13871
    %v13873 = vsel %vm13788, %v12885, %v12825
    %v13874 = vsel %vm13790, %v12945, %v13873
    %v13875 = vsel %vm13792, %v13005, %v13874
    %v13876 = vsel %vm13794, %v13065, %v13875
    %v13877 = vsel %vm13796, %v13125, %v13876
    %v13878 = vsel %vm13798, %v13185, %v13877
    %v13879 = vsel %vm13800, %v13245, %v13878
    %v13880 = vsel %vm13788, %v13365, %v13305
    %v13881 = vsel %vm13790, %v13425, %v13880
    %v13882 = vsel %vm13792, %v13485, %v13881
    %v13883 = vsel %vm13794, %v13545, %v13882
    %v13884 = vsel %vm13796, %v13605, %v13883
    %v13885 = vsel %vm13798, %v13665, %v13884
    %v13886 = vsel %vm13800, %v13725, %v13885
    %13887 = vrot.lane.b32.xlu0 %v13865, 32
    %v13888 = vpop.permute.xlu0 %13887
    %13889 = vrot.lane.b32.xlu0 %v13872, 32
    %v13890 = vpop.permute.xlu0 %13889
    %13891 = vrot.lane.b32.xlu0 %v13879, 32
    %v13892 = vpop.permute.xlu0 %13891
    %13893 = vrot.lane.b32.xlu0 %v13886, 32
    %v13894 = vpop.permute.xlu0 %13893
    %v13931 = vsel %vm13788, %v11940, %v11880
    %v13932 = vsel %vm13790, %v12000, %v13931
    %v13933 = vsel %vm13792, %v12060, %v13932
    %v13934 = vsel %vm13794, %v12120, %v13933
    %v13935 = vsel %vm13796, %v12180, %v13934
    %v13936 = vsel %vm13798, %v12240, %v13935
    %v13937 = vsel %vm13800, %v12300, %v13936
    %v13938 = vsel %vm13788, %v12420, %v12360
    %v13939 = vsel %vm13790, %v12480, %v13938
    %v13940 = vsel %vm13792, %v12540, %v13939
    %v13941 = vsel %vm13794, %v12600, %v13940
    %v13942 = vsel %vm13796, %v12660, %v13941
    %v13943 = vsel %vm13798, %v12720, %v13942
    %v13944 = vsel %vm13800, %v12780, %v13943
    %v13945 = vsel %vm13788, %v12900, %v12840
    %v13946 = vsel %vm13790, %v12960, %v13945
    %v13947 = vsel %vm13792, %v13020, %v13946
    %v13948 = vsel %vm13794, %v13080, %v13947
    %v13949 = vsel %vm13796, %v13140, %v13948
    %v13950 = vsel %vm13798, %v13200, %v13949
    %v13951 = vsel %vm13800, %v13260, %v13950
    %v13952 = vsel %vm13788, %v13380, %v13320
    %v13953 = vsel %vm13790, %v13440, %v13952
    %v13954 = vsel %vm13792, %v13500, %v13953
    %v13955 = vsel %vm13794, %v13560, %v13954
    %v13956 = vsel %vm13796, %v13620, %v13955
    %v13957 = vsel %vm13798, %v13680, %v13956
    %v13958 = vsel %vm13800, %v13740, %v13957
    %13959 = vrot.lane.b32.xlu0 %v13937, 64
    %v13960 = vpop.permute.xlu0 %13959
    %13961 = vrot.lane.b32.xlu0 %v13944, 64
    %v13962 = vpop.permute.xlu0 %13961
    %13963 = vrot.lane.b32.xlu0 %v13951, 64
    %v13964 = vpop.permute.xlu0 %13963
    %13965 = vrot.lane.b32.xlu0 %v13958, 64
    %v13966 = vpop.permute.xlu0 %13965
    %v14003 = vsel %vm13788, %v11955, %v11895
    %v14004 = vsel %vm13790, %v12015, %v14003
    %v14005 = vsel %vm13792, %v12075, %v14004
    %v14006 = vsel %vm13794, %v12135, %v14005
    %v14007 = vsel %vm13796, %v12195, %v14006
    %v14008 = vsel %vm13798, %v12255, %v14007
    %v14009 = vsel %vm13800, %v12315, %v14008
    %v14010 = vsel %vm13788, %v12435, %v12375
    %v14011 = vsel %vm13790, %v12495, %v14010
    %v14012 = vsel %vm13792, %v12555, %v14011
    %v14013 = vsel %vm13794, %v12615, %v14012
    %v14014 = vsel %vm13796, %v12675, %v14013
    %v14015 = vsel %vm13798, %v12735, %v14014
    %v14016 = vsel %vm13800, %v12795, %v14015
    %v14017 = vsel %vm13788, %v12915, %v12855
    %v14018 = vsel %vm13790, %v12975, %v14017
    %v14019 = vsel %vm13792, %v13035, %v14018
    %v14020 = vsel %vm13794, %v13095, %v14019
    %v14021 = vsel %vm13796, %v13155, %v14020
    %v14022 = vsel %vm13798, %v13215, %v14021
    %v14023 = vsel %vm13800, %v13275, %v14022
    %v14024 = vsel %vm13788, %v13395, %v13335
    %v14025 = vsel %vm13790, %v13455, %v14024
    %v14026 = vsel %vm13792, %v13515, %v14025
    %v14027 = vsel %vm13794, %v13575, %v14026
    %v14028 = vsel %vm13796, %v13635, %v14027
    %v14029 = vsel %vm13798, %v13695, %v14028
    %v14030 = vsel %vm13800, %v13755, %v14029
    %14031 = vrot.lane.b32.xlu0 %v14009, 96
    %v14032 = vpop.permute.xlu0 %14031
    %14033 = vrot.lane.b32.xlu0 %v14016, 96
    %v14034 = vpop.permute.xlu0 %14033
    %14035 = vrot.lane.b32.xlu0 %v14023, 96
    %v14036 = vpop.permute.xlu0 %14035
    %14037 = vrot.lane.b32.xlu0 %v14030, 96
    %v14038 = vpop.permute.xlu0 %14037
    %v14043 = vsel %vm3430, %v13801, %v13888
    %v14044 = vsel %vm3430, %v13808, %v13890
    %v14045 = vsel %vm3430, %v13815, %v13892
    %v14046 = vsel %vm3430, %v13822, %v13894
    %vm14047 = vcmask 523264
    %v14048 = vsel %vm14047, %v14043, %v13960
    %v14049 = vsel %vm14047, %v14044, %v13962
    %v14050 = vsel %vm14047, %v14045, %v13964
    %v14051 = vsel %vm14047, %v14046, %v13966
    %vm14052 = vcmask 785408
    %v14053 = vsel %vm14052, %v14048, %v14032
    %v14054 = vsel %vm14052, %v14049, %v14034
    %v14055 = vsel %vm14052, %v14050, %v14036
    %v14056 = vsel %vm14052, %v14051, %v14038
    %14057 = vst [vmem:[#allocation2] sm:$0xff] %v14053
    %14058 = vst [vmem:[#allocation2 + $0x8] sm:$0xff] %v14054
    %14059 = vst [vmem:[#allocation2 + $0x10] sm:$0xff] %v14055
    %14060 = vst [vmem:[#allocation2 + $0x18] sm:$0xff] %v14056
    // Predicated region
    $region66: #{tpu_custom_call.1} parent=1 // pred_check
      _
    $region67: #{tpu_custom_call.1} parent=1 // pred_check_branch
      %14062 = sbr.rel (0) target = $region69
    $region68: #{tpu_custom_call.1} parent=1 // pred_region
      %14064 = vsyncadd [#allocation3], 0
      %s14065 = sshll.u32 [#allocation2], 4
      %s14066 = int_to_ptr.vmem [resolvable:$true] %s14065
      %s14067 = sshll.u32 %s16, 4
      %s14068 = int_to_ptr.hbm [resolvable:$true] %s14067
      %14073 = dma.vmem_to_hbm [thread:$0]  %s14066, 512, %s14068, [#allocation3], 128, 128, 8
    $region69: #{tpu_custom_call.1} parent=1 // pred_fallthru
      _
    // Predicated region
    $region70: #{tpu_custom_call.1} parent=1 // pred_check
      _
    $region71: #{tpu_custom_call.1} parent=1 // pred_check_branch
      %14075 = sbr.rel (0) target = $region73
    $region72: #{tpu_custom_call.1} parent=1 // pred_region
      %14077 = dma.done [#allocation3], 512
    $region73: #{tpu_custom_call.1} parent=1 // pred_fallthru
      _
    %14078 = vsyncpa [#allocation3], 1

</llo_original>
